<compile_context>
chip_gen: v6e
topology: v6e:2x2x1
jax: 0.10.0
libtpu: 0.0.40
codegen_flags: <defaults>
</compile_context>

<pallas_src>
import functools

import jax
import jax.numpy as jnp
from jax import lax
from jax.experimental import pallas as pl
from jax.experimental.pallas import tpu as pltpu

HIDDEN = 512
NUM_LAYERS = 6
CONV_K = 5
LANE = 128
SUBLANE = 8


def _round_up(x, m):
    return (x + m - 1) // m * m


def _cdiv(a, b):
    return -(-a // b)


# --------------------------------------------------------------------------- #
# Kernel
# --------------------------------------------------------------------------- #
def relfeat_kernel(x_ref, w_m_ref, b_m_ref,
                   w_r1_ref, b_r1_ref, w_r2_ref, b_r2_ref,
                   w_out_ref, b_out_ref, o_ref):
    f32 = jnp.float32
    wdt = w_r1_ref.dtype  # matmul operand dtype (bf16 or f32); accumulation is f32

    # merge_layer (Conv1d folded into the projections on the host):
    #   e = [x_i | x_j | geo] @ W_merge + b_merge
    r = jnp.dot(x_ref[...], w_m_ref[...], preferred_element_type=f32) + b_m_ref[...]

    # res_blocks: num_layers x (Linear -> ReLU -> Linear, + skip, ReLU).
    for blk in range(w_r1_ref.shape[0]):
        h = jnp.dot(r.astype(wdt), w_r1_ref[blk], preferred_element_type=f32) + b_r1_ref[blk]
        h = jnp.maximum(h, 0.0)
        h = jnp.dot(h.astype(wdt), w_r2_ref[blk], preferred_element_type=f32) + b_r2_ref[blk]
        r = jnp.maximum(r + h, 0.0)

    # fc_out
    out = jnp.dot(r.astype(wdt), w_out_ref[...], preferred_element_type=f32) + b_out_ref[...]
    o_ref[...] = out.astype(o_ref.dtype)


# --------------------------------------------------------------------------- #
# Host-side parameter preparation (conv folding, padding, dtype cast)
# --------------------------------------------------------------------------- #
def _fold_conv_into_proj(params):
    """Fold Conv1d(3->1, k=5, 'same') over the hidden axis into the projections.

    Returns W_merge of shape (2*input_dim + geo_dim, HIDDEN) and b_merge (1, HIDDEN)
    such that  e = [x_i | x_j | geo] @ W_merge + b_merge  equals the original
    obj/geo projections followed by the merge conv.
    """
    w_obj = params["w_obj"].astype(jnp.float32)
    b_obj = params["b_obj"].astype(jnp.float32)
    w_geo = params["w_geo"].astype(jnp.float32)
    b_geo = params["b_geo"].astype(jnp.float32)
    cw = params["conv_w"].astype(jnp.float32)   # (3, 5)
    cb = params["conv_b"].astype(jnp.float32)   # (1,)

    def shift_cols(w, off):
        # result[:, l] = w[:, l + off], zero-filled out of bounds (== SAME zero pad).
        if off == 0:
            return w
        if off > 0:
            return jnp.pad(w[:, off:], ((0, 0), (0, off)))
        return jnp.pad(w[:, :off], ((0, 0), (-off, 0)))

    w1 = jnp.zeros_like(w_obj)
    w2 = jnp.zeros_like(w_obj)
    w3 = jnp.zeros_like(w_geo)
    bm = jnp.zeros_like(b_obj)
    for k in range(CONV_K):
        off = k - CONV_K // 2              # -2 .. +2  (cross-correlation, pad=2)
        so_w, so_b = shift_cols(w_obj, off), shift_cols(b_obj, off)
        sg_w, sg_b = shift_cols(w_geo, off), shift_cols(b_geo, off)
        w1 = w1 + cw[0, k] * so_w
        w2 = w2 + cw[1, k] * so_w
        w3 = w3 + cw[2, k] * sg_w
        bm = bm + cw[0, k] * so_b + cw[1, k] * so_b + cw[2, k] * sg_b
    bm = bm + cb[0]
    w_merge = jnp.concatenate([w1, w2, w3], axis=0)
    return w_merge, bm


def _prepare_operands(params, compute_dtype):
    w_merge, b_merge = _fold_conv_into_proj(params)
    k_cat = w_merge.shape[0]                       # natural K: no 128-lane padding

    out_dim = params["w_out"].shape[1]
    out_pad = _round_up(out_dim, LANE)             # lane-dense output stores
    w_out = jnp.pad(params["w_out"], ((0, 0), (0, out_pad - out_dim)))
    b_out = jnp.pad(params["b_out"], ((0, 0), (0, out_pad - out_dim)))

    ops = dict(
        w_merge=w_merge.astype(compute_dtype),
        b_merge=b_merge.astype(jnp.float32),
        w_r1=params["w_r1"].astype(compute_dtype),
        b_r1=params["b_r1"].astype(jnp.float32),
        w_r2=params["w_r2"].astype(compute_dtype),
        b_r2=params["b_r2"].astype(jnp.float32),
        w_out=w_out.astype(compute_dtype),
        b_out=b_out.astype(jnp.float32),
    )
    return ops, k_cat, out_dim, out_pad


# --------------------------------------------------------------------------- #
# Generation-aware sizing helpers
# --------------------------------------------------------------------------- #
def _num_tensorcores():
    """Best-effort TensorCore count per chip (1 on v5e/v6e, 2 on v7x)."""
    try:
        info = pltpu.get_tpu_info()
        for attr in ("num_tensorcores", "tensorcore_count", "num_cores", "core_count"):
            v = getattr(info, attr, None)
            if isinstance(v, int) and v > 0:
                return v
    except Exception:
        pass
    try:
        v = getattr(jax.devices()[0], "num_cores", None)
        if isinstance(v, int) and v > 0:
            return v
    except Exception:
        pass
    return 1


def _vmem_capacity_bytes():
    try:
        v = getattr(pltpu.get_tpu_info(), "vmem_capacity_bytes", None)
        if isinstance(v, int) and v > 0:
            return v
    except Exception:
        pass
    return 64 << 20  # conservative (v7x per-TC)


def _choose_tm(N, tm, num_cores):
    """Row tile: large for MXU M-utilization; split across cores only when useful."""
    n_r = _round_up(max(N, 1), SUBLANE)
    tm = max(SUBLANE, min(_round_up(tm, SUBLANE), n_r))
    if num_cores > 1 and N >= num_cores * LANE:
        steps = _cdiv(n_r, tm)
        if steps < num_cores or steps % num_cores:
            target = max(num_cores, _round_up(steps, num_cores))
            tm = max(SUBLANE, _round_up(_cdiv(n_r, target), SUBLANE))
    return tm


def _vmem_limit_bytes(tm, k_cat, out_pad, num_layers, compute_dtype, out_dtype):
    wb = jnp.dtype(compute_dtype).itemsize
    ob = jnp.dtype(out_dtype).itemsize
    weights = wb * (k_cat * HIDDEN + 2 * num_layers * HIDDEN * HIDDEN + HIDDEN * out_pad)
    biases = 4 * (HIDDEN + 2 * num_layers * HIDDEN + out_pad)
    io = 2 * tm * (k_cat * wb + out_pad * ob)          # double-buffered x / out tiles
    acts = tm * HIDDEN * (3 * 4 + 2 * wb)              # r/h f32 temps + bf16 casts
    budget = int((weights + biases + io + acts) * 1.5) + (8 << 20)
    cap = int(_vmem_capacity_bytes() * 0.85)
    return max(16 << 20, min(budget, cap))


# --------------------------------------------------------------------------- #
# Forward
# --------------------------------------------------------------------------- #
def _const_spec(shape):
    """Constant-index operand: fetched once, single-buffered (no double-buffer waste)."""
    zeros = (0,) * len(shape)
    return pl.BlockSpec(shape, lambda i, _z=zeros: _z, pipeline_mode=pl.Buffered(1))


def _forward_impl(ops, x_i, x_j, geo_feats, *, k_cat, out_dim, out_pad,
                  tm, compute_dtype, out_dtype, num_cores):
    N = x_i.shape[0]
    num_layers = ops["w_r1"].shape[0]

    # One fused input (natural K; full-dim block is exempt from the 128-lane rule).
    x_cat = jnp.concatenate([x_i, x_j, geo_feats], axis=1).astype(compute_dtype)

    tm = _choose_tm(N, tm, num_cores)
    n_pad = _round_up(N, tm) - N
    if n_pad:
        x_cat = jnp.pad(x_cat, ((0, n_pad), (0, 0)))
    Np = N + n_pad

    in_specs = [
        pl.BlockSpec((tm, k_cat), lambda i: (i, 0)),                 # x_cat (pipelined)
        _const_spec((k_cat, HIDDEN)),                                # w_merge
        _const_spec((1, HIDDEN)),                                    # b_merge
        _const_spec((num_layers, HIDDEN, HIDDEN)),                   # w_r1
        _const_spec((num_layers, 1, HIDDEN)),                        # b_r1
        _const_spec((num_layers, HIDDEN, HIDDEN)),                   # w_r2
        _const_spec((num_layers, 1, HIDDEN)),                        # b_r2
        _const_spec((HIDDEN, out_pad)),                              # w_out
        _const_spec((1, out_pad)),                                   # b_out
    ]

    vmem_limit = _vmem_limit_bytes(tm, k_cat, out_pad, num_layers, compute_dtype, out_dtype)

    out = pl.pallas_call(
        relfeat_kernel,
        out_shape=jax.ShapeDtypeStruct((Np, out_pad), out_dtype),
        grid=(Np // tm,),
        in_specs=in_specs,
        out_specs=pl.BlockSpec((tm, out_pad), lambda i: (i, 0)),
        compiler_params=pltpu.CompilerParams(
            dimension_semantics=("parallel",),
            vmem_limit_bytes=vmem_limit,
        ),
    )(x_cat, ops["w_merge"], ops["b_merge"],
      ops["w_r1"], ops["b_r1"], ops["w_r2"], ops["b_r2"],
      ops["w_out"], ops["b_out"])
    return out[:N, :out_dim]


def make_relfeat_forward(params, *, tm=512, compute_dtype=jnp.bfloat16,
                         out_dtype=jnp.float32, num_cores=None):
    """Prepare (fold/pad/cast) the weights ONCE and return a jitted forward."""
    ops, k_cat, out_dim, out_pad = _prepare_operands(params, compute_dtype)
    ops = jax.tree_util.tree_map(jnp.asarray, ops)
    if num_cores is None:
        num_cores = _num_tensorcores()

    @jax.jit
    def fwd(x_i, x_j, geo_feats):
        return _forward_impl(ops, x_i, x_j, geo_feats,
                             k_cat=k_cat, out_dim=out_dim, out_pad=out_pad,
                             tm=tm, compute_dtype=compute_dtype,
                             out_dtype=out_dtype, num_cores=num_cores)
    return fwd


def relfeat_forward(params, x_i, x_j, geo_feats, *, tm=512,
                    compute_dtype=jnp.bfloat16, out_dtype=jnp.float32,
                    num_cores=None):
    """One-shot convenience wrapper (prefer make_relfeat_forward for serving loops)."""
    ops, k_cat, out_dim, out_pad = _prepare_operands(params, compute_dtype)
    if num_cores is None:
        num_cores = _num_tensorcores()
    return _forward_impl(ops, x_i, x_j, geo_feats,
                         k_cat=k_cat, out_dim=out_dim, out_pad=out_pad,
                         tm=tm, compute_dtype=compute_dtype,
                         out_dtype=out_dtype, num_cores=num_cores)


# --------------------------------------------------------------------------- #
# References
# --------------------------------------------------------------------------- #
def ref_forward(params, x_i, x_j, geo_feats):
    """Pure-JAX f32 reference mirroring the PyTorch forward semantics."""
    p_i = x_i @ params["w_obj"] + params["b_obj"][0]
    p_j = x_j @ params["w_obj"] + params["b_obj"][0]
    g = geo_feats @ params["w_geo"] + params["b_geo"][0]
    m = jnp.stack([p_i, p_j, g], axis=1)                 # (N, 3, 512)  -- NCH
    w = params["conv_w"][None]                           # (1, 3, 5)    -- OIH
    e = lax.conv_general_dilated(
        m, w, window_strides=(1,), padding="SAME",
        dimension_numbers=("NCH", "OIH", "NCH"))[:, 0, :] + params["conv_b"][0]
    r = e
    for blk in range(params["w_r1"].shape[0]):
        h = jax.nn.relu(r @ params["w_r1"][blk] + params["b_r1"][blk, 0])
        h = h @ params["w_r2"][blk] + params["b_r2"][blk, 0]
        r = jax.nn.relu(r + h)
    return r @ params["w_out"] + params["b_out"][0]


def mirror_forward(params, x_i, x_j, geo_feats, compute_dtype=jnp.bfloat16):
    """Pure-JAX computation numerically mirroring the kernel (folded conv + bf16 matmuls)."""
    ops, k_cat, out_dim, out_pad = _prepare_operands(params, compute_dtype)
    x_cat = jnp.concatenate([x_i, x_j, geo_feats], axis=1).astype(compute_dtype)
    f32 = jnp.float32
    r = jnp.dot(x_cat, ops["w_merge"], preferred_element_type=f32) + ops["b_merge"]
    for blk in range(ops["w_r1"].shape[0]):
        h = jnp.dot(r.astype(compute_dtype), ops["w_r1"][blk],
                    preferred_element_type=f32) + ops["b_r1"][blk]
        h = jnp.maximum(h, 0.0)
        h = jnp.dot(h.astype(compute_dtype), ops["w_r2"][blk],
                    preferred_element_type=f32) + ops["b_r2"][blk]
        r = jnp.maximum(r + h, 0.0)
    out = jnp.dot(r.astype(compute_dtype), ops["w_out"],
                  preferred_element_type=f32) + ops["b_out"]
    return out[:, :out_dim]


# --------------------------------------------------------------------------- #
# Params
# --------------------------------------------------------------------------- #
def init_params(key, input_dim, geo_dim, out_dim, num_layers=NUM_LAYERS):
    ks = jax.random.split(key, 10)

    def lin(k, fan_in, fan_out):
        kw, kb = jax.random.split(k)
        w = jax.random.normal(kw, (fan_in, fan_out), jnp.float32) / jnp.sqrt(fan_in)
        b = jax.random.normal(kb, (1, fan_out), jnp.float32) * 0.01
        return w, b

    w_obj, b_obj = lin(ks[0], input_dim, HIDDEN)
    w_geo, b_geo = lin(ks[1], geo_dim, HIDDEN)
    conv_w = jax.random.normal(ks[2], (3, CONV_K), jnp.float32) / jnp.sqrt(3 * CONV_K)
    conv_b = jax.random.normal(ks[3], (1,), jnp.float32) * 0.01
    w_r1 = jax.random.normal(ks[4], (num_layers, HIDDEN, HIDDEN), jnp.float32) / jnp.sqrt(HIDDEN)
    b_r1 = jax.random.normal(ks[5], (num_layers, 1, HIDDEN), jnp.float32) * 0.01
    w_r2 = jax.random.normal(ks[6], (num_layers, HIDDEN, HIDDEN), jnp.float32) / jnp.sqrt(HIDDEN)
    b_r2 = jax.random.normal(ks[7], (num_layers, 1, HIDDEN), jnp.float32) * 0.01
    w_out, b_out = lin(ks[8], HIDDEN, out_dim)
    return dict(w_obj=w_obj, b_obj=b_obj, w_geo=w_geo, b_geo=b_geo,
                conv_w=conv_w, conv_b=conv_b,
                w_r1=w_r1, b_r1=b_r1, w_r2=w_r2, b_r2=b_r2,
                w_out=w_out, b_out=b_out)


if __name__ == "__main__":
    N, input_dim, geo_dim, out_dim = 8, 32, 16, 32
    key = jax.random.PRNGKey(0)
    kp, k1, k2, k3 = jax.random.split(key, 4)
    params = init_params(kp, input_dim, geo_dim, out_dim)
    x_i = jax.random.normal(k1, (N, input_dim), jnp.float32)
    x_j = jax.random.normal(k2, (N, input_dim), jnp.float32)
    geo_feats = jax.random.normal(k3, (N, geo_dim), jnp.float32)

    fwd = make_relfeat_forward(params)          # weight prep done once, forward jitted
    out = fwd(x_i, x_j, geo_feats)
    jax.block_until_ready(out)
    assert out.shape == (N, out_dim), out.shape

    # 1) Exact-computation check: kernel vs pure-JAX mirror with identical folded
    #    weights and bf16 casts (isolates kernel bugs from bf16 rounding).
    mir = mirror_forward(params, x_i, x_j, geo_feats)
    mir_err = float(jnp.max(jnp.abs(out - mir)))
    assert jnp.allclose(out, mir, rtol=1e-2, atol=1e-2), mir_err

    # 2) Semantic check vs the full-f32 PyTorch-style reference, with a tolerance
    #    appropriate to bf16 matmul accumulation through 6 residual blocks.
    ref = ref_forward(params, x_i, x_j, geo_feats)
    rel_err = float(jnp.max(jnp.abs(out - ref)) / (jnp.max(jnp.abs(ref)) + 1e-6))
    assert rel_err < 5e-2, rel_err

    print("KERNEL_OK")
</pallas_src>

<mosaic_0001>
module attributes {stable_mosaic.version = 11 : i64} {
  func.func @relfeat_kernel(%arg0: i32, %arg1: memref<8x80xbf16, #tpu.memory_space<vmem>>, %arg2: memref<80x512xbf16, #tpu.memory_space<vmem>>, %arg3: memref<1x512xf32, #tpu.memory_space<vmem>>, %arg4: memref<6x512x512xbf16, #tpu.memory_space<vmem>>, %arg5: memref<6x1x512xf32, #tpu.memory_space<vmem>>, %arg6: memref<6x512x512xbf16, #tpu.memory_space<vmem>>, %arg7: memref<6x1x512xf32, #tpu.memory_space<vmem>>, %arg8: memref<512x128xbf16, #tpu.memory_space<vmem>>, %arg9: memref<1x128xf32, #tpu.memory_space<vmem>>, %arg10: memref<8x128xf32, #tpu.memory_space<vmem>>) attributes {dimension_semantics = [#tpu.dimension_semantics<parallel>], iteration_bounds = array<i64: 1>, scalar_prefetch = 0 : i64, scratch_operands = 0 : i64, tpu.core_type = #tpu.core_type<tc>, window_params = [{transform_indices = @transform_0, window_bounds = array<i64: 8, 80>}, {pipeline_mode = #tpu.pipeline_mode<synchronous>, transform_indices = @transform_1, window_bounds = array<i64: 80, 512>}, {pipeline_mode = #tpu.pipeline_mode<synchronous>, transform_indices = @transform_2, window_bounds = array<i64: 1, 512>}, {pipeline_mode = #tpu.pipeline_mode<synchronous>, transform_indices = @transform_3, window_bounds = array<i64: 6, 512, 512>}, {pipeline_mode = #tpu.pipeline_mode<synchronous>, transform_indices = @transform_4, window_bounds = array<i64: 6, 1, 512>}, {pipeline_mode = #tpu.pipeline_mode<synchronous>, transform_indices = @transform_5, window_bounds = array<i64: 6, 512, 512>}, {pipeline_mode = #tpu.pipeline_mode<synchronous>, transform_indices = @transform_6, window_bounds = array<i64: 6, 1, 512>}, {pipeline_mode = #tpu.pipeline_mode<synchronous>, transform_indices = @transform_7, window_bounds = array<i64: 512, 128>}, {pipeline_mode = #tpu.pipeline_mode<synchronous>, transform_indices = @transform_8, window_bounds = array<i64: 1, 128>}, {transform_indices = @transform_9, window_bounds = array<i64: 8, 128>}]} {
    %c0 = arith.constant 0 : index
    %c0_0 = arith.constant 0 : index
    %0 = vector.load %arg1[%c0, %c0_0] : memref<8x80xbf16, #tpu.memory_space<vmem>>, vector<8x80xbf16>
    %c0_1 = arith.constant 0 : index
    %c0_2 = arith.constant 0 : index
    %1 = vector.load %arg2[%c0_1, %c0_2] : memref<80x512xbf16, #tpu.memory_space<vmem>>, vector<80x512xbf16>
    %cst = arith.constant dense<0.000000e+00> : vector<8x512xf32>
    %2 = tpu.matmul %0, %1, %cst {dimension_numbers = #tpu.dot_dimension_numbers<[1], [0], [0], [1], [0, 0, 1, 1], [], []>} : vector<8x80xbf16>, vector<80x512xbf16>, vector<8x512xf32> -> vector<8x512xf32>
    %c0_3 = arith.constant 0 : index
    %c0_4 = arith.constant 0 : index
    %3 = vector.load %arg3[%c0_3, %c0_4] : memref<1x512xf32, #tpu.memory_space<vmem>>, vector<1x512xf32>
    %4 = vector.broadcast %3 : vector<1x512xf32> to vector<8x512xf32>
    %5 = arith.addf %2, %4 : vector<8x512xf32>
    %6 = arith.truncf %5 : vector<8x512xf32> to vector<8x512xbf16>
    %c0_5 = arith.constant 0 : index
    %c0_6 = arith.constant 0 : index
    %c0_7 = arith.constant 0 : index
    %7 = vector.load %arg4[%c0_5, %c0_6, %c0_7] : memref<6x512x512xbf16, #tpu.memory_space<vmem>>, vector<1x512x512xbf16>
    %8 = vector.shape_cast %7 : vector<1x512x512xbf16> to vector<512x512xbf16>
    %cst_8 = arith.constant dense<0.000000e+00> : vector<8x512xf32>
    %9 = tpu.matmul %6, %8, %cst_8 {dimension_numbers = #tpu.dot_dimension_numbers<[1], [0], [0], [1], [0, 0, 1, 1], [], []>} : vector<8x512xbf16>, vector<512x512xbf16>, vector<8x512xf32> -> vector<8x512xf32>
    %c0_9 = arith.constant 0 : index
    %c0_10 = arith.constant 0 : index
    %c0_11 = arith.constant 0 : index
    %10 = vector.load %arg5[%c0_9, %c0_10, %c0_11] : memref<6x1x512xf32, #tpu.memory_space<vmem>>, vector<1x1x512xf32>
    %11 = vector.shape_cast %10 : vector<1x1x512xf32> to vector<1x512xf32>
    %12 = vector.broadcast %11 : vector<1x512xf32> to vector<8x512xf32>
    %13 = arith.addf %9, %12 : vector<8x512xf32>
    %cst_12 = arith.constant 0.000000e+00 : f32
    %14 = vector.broadcast %cst_12 : f32 to vector<8x512xf32>
    %15 = arith.maximumf %13, %14 : vector<8x512xf32>
    %16 = arith.truncf %15 : vector<8x512xf32> to vector<8x512xbf16>
    %c0_13 = arith.constant 0 : index
    %c0_14 = arith.constant 0 : index
    %c0_15 = arith.constant 0 : index
    %17 = vector.load %arg6[%c0_13, %c0_14, %c0_15] : memref<6x512x512xbf16, #tpu.memory_space<vmem>>, vector<1x512x512xbf16>
    %18 = vector.shape_cast %17 : vector<1x512x512xbf16> to vector<512x512xbf16>
    %cst_16 = arith.constant dense<0.000000e+00> : vector<8x512xf32>
    %19 = tpu.matmul %16, %18, %cst_16 {dimension_numbers = #tpu.dot_dimension_numbers<[1], [0], [0], [1], [0, 0, 1, 1], [], []>} : vector<8x512xbf16>, vector<512x512xbf16>, vector<8x512xf32> -> vector<8x512xf32>
    %c0_17 = arith.constant 0 : index
    %c0_18 = arith.constant 0 : index
    %c0_19 = arith.constant 0 : index
    %20 = vector.load %arg7[%c0_17, %c0_18, %c0_19] : memref<6x1x512xf32, #tpu.memory_space<vmem>>, vector<1x1x512xf32>
    %21 = vector.shape_cast %20 : vector<1x1x512xf32> to vector<1x512xf32>
    %22 = vector.broadcast %21 : vector<1x512xf32> to vector<8x512xf32>
    %23 = arith.addf %19, %22 : vector<8x512xf32>
    %24 = arith.addf %5, %23 : vector<8x512xf32>
    %cst_20 = arith.constant 0.000000e+00 : f32
    %25 = vector.broadcast %cst_20 : f32 to vector<8x512xf32>
    %26 = arith.maximumf %24, %25 : vector<8x512xf32>
    %27 = arith.truncf %26 : vector<8x512xf32> to vector<8x512xbf16>
    %c1 = arith.constant 1 : index
    %c0_21 = arith.constant 0 : index
    %c0_22 = arith.constant 0 : index
    %28 = vector.load %arg4[%c1, %c0_21, %c0_22] : memref<6x512x512xbf16, #tpu.memory_space<vmem>>, vector<1x512x512xbf16>
    %29 = vector.shape_cast %28 : vector<1x512x512xbf16> to vector<512x512xbf16>
    %cst_23 = arith.constant dense<0.000000e+00> : vector<8x512xf32>
    %30 = tpu.matmul %27, %29, %cst_23 {dimension_numbers = #tpu.dot_dimension_numbers<[1], [0], [0], [1], [0, 0, 1, 1], [], []>} : vector<8x512xbf16>, vector<512x512xbf16>, vector<8x512xf32> -> vector<8x512xf32>
    %c1_24 = arith.constant 1 : index
    %c0_25 = arith.constant 0 : index
    %c0_26 = arith.constant 0 : index
    %31 = vector.load %arg5[%c1_24, %c0_25, %c0_26] : memref<6x1x512xf32, #tpu.memory_space<vmem>>, vector<1x1x512xf32>
    %32 = vector.shape_cast %31 : vector<1x1x512xf32> to vector<1x512xf32>
    %33 = vector.broadcast %32 : vector<1x512xf32> to vector<8x512xf32>
    %34 = arith.addf %30, %33 : vector<8x512xf32>
    %cst_27 = arith.constant 0.000000e+00 : f32
    %35 = vector.broadcast %cst_27 : f32 to vector<8x512xf32>
    %36 = arith.maximumf %34, %35 : vector<8x512xf32>
    %37 = arith.truncf %36 : vector<8x512xf32> to vector<8x512xbf16>
    %c1_28 = arith.constant 1 : index
    %c0_29 = arith.constant 0 : index
    %c0_30 = arith.constant 0 : index
    %38 = vector.load %arg6[%c1_28, %c0_29, %c0_30] : memref<6x512x512xbf16, #tpu.memory_space<vmem>>, vector<1x512x512xbf16>
    %39 = vector.shape_cast %38 : vector<1x512x512xbf16> to vector<512x512xbf16>
    %cst_31 = arith.constant dense<0.000000e+00> : vector<8x512xf32>
    %40 = tpu.matmul %37, %39, %cst_31 {dimension_numbers = #tpu.dot_dimension_numbers<[1], [0], [0], [1], [0, 0, 1, 1], [], []>} : vector<8x512xbf16>, vector<512x512xbf16>, vector<8x512xf32> -> vector<8x512xf32>
    %c1_32 = arith.constant 1 : index
    %c0_33 = arith.constant 0 : index
    %c0_34 = arith.constant 0 : index
    %41 = vector.load %arg7[%c1_32, %c0_33, %c0_34] : memref<6x1x512xf32, #tpu.memory_space<vmem>>, vector<1x1x512xf32>
    %42 = vector.shape_cast %41 : vector<1x1x512xf32> to vector<1x512xf32>
    %43 = vector.broadcast %42 : vector<1x512xf32> to vector<8x512xf32>
    %44 = arith.addf %40, %43 : vector<8x512xf32>
    %45 = arith.addf %26, %44 : vector<8x512xf32>
    %cst_35 = arith.constant 0.000000e+00 : f32
    %46 = vector.broadcast %cst_35 : f32 to vector<8x512xf32>
    %47 = arith.maximumf %45, %46 : vector<8x512xf32>
    %48 = arith.truncf %47 : vector<8x512xf32> to vector<8x512xbf16>
    %c2 = arith.constant 2 : index
    %c0_36 = arith.constant 0 : index
    %c0_37 = arith.constant 0 : index
    %49 = vector.load %arg4[%c2, %c0_36, %c0_37] : memref<6x512x512xbf16, #tpu.memory_space<vmem>>, vector<1x512x512xbf16>
    %50 = vector.shape_cast %49 : vector<1x512x512xbf16> to vector<512x512xbf16>
    %cst_38 = arith.constant dense<0.000000e+00> : vector<8x512xf32>
    %51 = tpu.matmul %48, %50, %cst_38 {dimension_numbers = #tpu.dot_dimension_numbers<[1], [0], [0], [1], [0, 0, 1, 1], [], []>} : vector<8x512xbf16>, vector<512x512xbf16>, vector<8x512xf32> -> vector<8x512xf32>
    %c2_39 = arith.constant 2 : index
    %c0_40 = arith.constant 0 : index
    %c0_41 = arith.constant 0 : index
    %52 = vector.load %arg5[%c2_39, %c0_40, %c0_41] : memref<6x1x512xf32, #tpu.memory_space<vmem>>, vector<1x1x512xf32>
    %53 = vector.shape_cast %52 : vector<1x1x512xf32> to vector<1x512xf32>
    %54 = vector.broadcast %53 : vector<1x512xf32> to vector<8x512xf32>
    %55 = arith.addf %51, %54 : vector<8x512xf32>
    %cst_42 = arith.constant 0.000000e+00 : f32
    %56 = vector.broadcast %cst_42 : f32 to vector<8x512xf32>
    %57 = arith.maximumf %55, %56 : vector<8x512xf32>
    %58 = arith.truncf %57 : vector<8x512xf32> to vector<8x512xbf16>
    %c2_43 = arith.constant 2 : index
    %c0_44 = arith.constant 0 : index
    %c0_45 = arith.constant 0 : index
    %59 = vector.load %arg6[%c2_43, %c0_44, %c0_45] : memref<6x512x512xbf16, #tpu.memory_space<vmem>>, vector<1x512x512xbf16>
    %60 = vector.shape_cast %59 : vector<1x512x512xbf16> to vector<512x512xbf16>
    %cst_46 = arith.constant dense<0.000000e+00> : vector<8x512xf32>
    %61 = tpu.matmul %58, %60, %cst_46 {dimension_numbers = #tpu.dot_dimension_numbers<[1], [0], [0], [1], [0, 0, 1, 1], [], []>} : vector<8x512xbf16>, vector<512x512xbf16>, vector<8x512xf32> -> vector<8x512xf32>
    %c2_47 = arith.constant 2 : index
    %c0_48 = arith.constant 0 : index
    %c0_49 = arith.constant 0 : index
    %62 = vector.load %arg7[%c2_47, %c0_48, %c0_49] : memref<6x1x512xf32, #tpu.memory_space<vmem>>, vector<1x1x512xf32>
    %63 = vector.shape_cast %62 : vector<1x1x512xf32> to vector<1x512xf32>
    %64 = vector.broadcast %63 : vector<1x512xf32> to vector<8x512xf32>
    %65 = arith.addf %61, %64 : vector<8x512xf32>
    %66 = arith.addf %47, %65 : vector<8x512xf32>
    %cst_50 = arith.constant 0.000000e+00 : f32
    %67 = vector.broadcast %cst_50 : f32 to vector<8x512xf32>
    %68 = arith.maximumf %66, %67 : vector<8x512xf32>
    %69 = arith.truncf %68 : vector<8x512xf32> to vector<8x512xbf16>
    %c3 = arith.constant 3 : index
    %c0_51 = arith.constant 0 : index
    %c0_52 = arith.constant 0 : index
    %70 = vector.load %arg4[%c3, %c0_51, %c0_52] : memref<6x512x512xbf16, #tpu.memory_space<vmem>>, vector<1x512x512xbf16>
    %71 = vector.shape_cast %70 : vector<1x512x512xbf16> to vector<512x512xbf16>
    %cst_53 = arith.constant dense<0.000000e+00> : vector<8x512xf32>
    %72 = tpu.matmul %69, %71, %cst_53 {dimension_numbers = #tpu.dot_dimension_numbers<[1], [0], [0], [1], [0, 0, 1, 1], [], []>} : vector<8x512xbf16>, vector<512x512xbf16>, vector<8x512xf32> -> vector<8x512xf32>
    %c3_54 = arith.constant 3 : index
    %c0_55 = arith.constant 0 : index
    %c0_56 = arith.constant 0 : index
    %73 = vector.load %arg5[%c3_54, %c0_55, %c0_56] : memref<6x1x512xf32, #tpu.memory_space<vmem>>, vector<1x1x512xf32>
    %74 = vector.shape_cast %73 : vector<1x1x512xf32> to vector<1x512xf32>
    %75 = vector.broadcast %74 : vector<1x512xf32> to vector<8x512xf32>
    %76 = arith.addf %72, %75 : vector<8x512xf32>
    %cst_57 = arith.constant 0.000000e+00 : f32
    %77 = vector.broadcast %cst_57 : f32 to vector<8x512xf32>
    %78 = arith.maximumf %76, %77 : vector<8x512xf32>
    %79 = arith.truncf %78 : vector<8x512xf32> to vector<8x512xbf16>
    %c3_58 = arith.constant 3 : index
    %c0_59 = arith.constant 0 : index
    %c0_60 = arith.constant 0 : index
    %80 = vector.load %arg6[%c3_58, %c0_59, %c0_60] : memref<6x512x512xbf16, #tpu.memory_space<vmem>>, vector<1x512x512xbf16>
    %81 = vector.shape_cast %80 : vector<1x512x512xbf16> to vector<512x512xbf16>
    %cst_61 = arith.constant dense<0.000000e+00> : vector<8x512xf32>
    %82 = tpu.matmul %79, %81, %cst_61 {dimension_numbers = #tpu.dot_dimension_numbers<[1], [0], [0], [1], [0, 0, 1, 1], [], []>} : vector<8x512xbf16>, vector<512x512xbf16>, vector<8x512xf32> -> vector<8x512xf32>
    %c3_62 = arith.constant 3 : index
    %c0_63 = arith.constant 0 : index
    %c0_64 = arith.constant 0 : index
    %83 = vector.load %arg7[%c3_62, %c0_63, %c0_64] : memref<6x1x512xf32, #tpu.memory_space<vmem>>, vector<1x1x512xf32>
    %84 = vector.shape_cast %83 : vector<1x1x512xf32> to vector<1x512xf32>
    %85 = vector.broadcast %84 : vector<1x512xf32> to vector<8x512xf32>
    %86 = arith.addf %82, %85 : vector<8x512xf32>
    %87 = arith.addf %68, %86 : vector<8x512xf32>
    %cst_65 = arith.constant 0.000000e+00 : f32
    %88 = vector.broadcast %cst_65 : f32 to vector<8x512xf32>
    %89 = arith.maximumf %87, %88 : vector<8x512xf32>
    %90 = arith.truncf %89 : vector<8x512xf32> to vector<8x512xbf16>
    %c4 = arith.constant 4 : index
    %c0_66 = arith.constant 0 : index
    %c0_67 = arith.constant 0 : index
    %91 = vector.load %arg4[%c4, %c0_66, %c0_67] : memref<6x512x512xbf16, #tpu.memory_space<vmem>>, vector<1x512x512xbf16>
    %92 = vector.shape_cast %91 : vector<1x512x512xbf16> to vector<512x512xbf16>
    %cst_68 = arith.constant dense<0.000000e+00> : vector<8x512xf32>
    %93 = tpu.matmul %90, %92, %cst_68 {dimension_numbers = #tpu.dot_dimension_numbers<[1], [0], [0], [1], [0, 0, 1, 1], [], []>} : vector<8x512xbf16>, vector<512x512xbf16>, vector<8x512xf32> -> vector<8x512xf32>
    %c4_69 = arith.constant 4 : index
    %c0_70 = arith.constant 0 : index
    %c0_71 = arith.constant 0 : index
    %94 = vector.load %arg5[%c4_69, %c0_70, %c0_71] : memref<6x1x512xf32, #tpu.memory_space<vmem>>, vector<1x1x512xf32>
    %95 = vector.shape_cast %94 : vector<1x1x512xf32> to vector<1x512xf32>
    %96 = vector.broadcast %95 : vector<1x512xf32> to vector<8x512xf32>
    %97 = arith.addf %93, %96 : vector<8x512xf32>
    %cst_72 = arith.constant 0.000000e+00 : f32
    %98 = vector.broadcast %cst_72 : f32 to vector<8x512xf32>
    %99 = arith.maximumf %97, %98 : vector<8x512xf32>
    %100 = arith.truncf %99 : vector<8x512xf32> to vector<8x512xbf16>
    %c4_73 = arith.constant 4 : index
    %c0_74 = arith.constant 0 : index
    %c0_75 = arith.constant 0 : index
    %101 = vector.load %arg6[%c4_73, %c0_74, %c0_75] : memref<6x512x512xbf16, #tpu.memory_space<vmem>>, vector<1x512x512xbf16>
    %102 = vector.shape_cast %101 : vector<1x512x512xbf16> to vector<512x512xbf16>
    %cst_76 = arith.constant dense<0.000000e+00> : vector<8x512xf32>
    %103 = tpu.matmul %100, %102, %cst_76 {dimension_numbers = #tpu.dot_dimension_numbers<[1], [0], [0], [1], [0, 0, 1, 1], [], []>} : vector<8x512xbf16>, vector<512x512xbf16>, vector<8x512xf32> -> vector<8x512xf32>
    %c4_77 = arith.constant 4 : index
    %c0_78 = arith.constant 0 : index
    %c0_79 = arith.constant 0 : index
    %104 = vector.load %arg7[%c4_77, %c0_78, %c0_79] : memref<6x1x512xf32, #tpu.memory_space<vmem>>, vector<1x1x512xf32>
    %105 = vector.shape_cast %104 : vector<1x1x512xf32> to vector<1x512xf32>
    %106 = vector.broadcast %105 : vector<1x512xf32> to vector<8x512xf32>
    %107 = arith.addf %103, %106 : vector<8x512xf32>
    %108 = arith.addf %89, %107 : vector<8x512xf32>
    %cst_80 = arith.constant 0.000000e+00 : f32
    %109 = vector.broadcast %cst_80 : f32 to vector<8x512xf32>
    %110 = arith.maximumf %108, %109 : vector<8x512xf32>
    %111 = arith.truncf %110 : vector<8x512xf32> to vector<8x512xbf16>
    %c5 = arith.constant 5 : index
    %c0_81 = arith.constant 0 : index
    %c0_82 = arith.constant 0 : index
    %112 = vector.load %arg4[%c5, %c0_81, %c0_82] : memref<6x512x512xbf16, #tpu.memory_space<vmem>>, vector<1x512x512xbf16>
    %113 = vector.shape_cast %112 : vector<1x512x512xbf16> to vector<512x512xbf16>
    %cst_83 = arith.constant dense<0.000000e+00> : vector<8x512xf32>
    %114 = tpu.matmul %111, %113, %cst_83 {dimension_numbers = #tpu.dot_dimension_numbers<[1], [0], [0], [1], [0, 0, 1, 1], [], []>} : vector<8x512xbf16>, vector<512x512xbf16>, vector<8x512xf32> -> vector<8x512xf32>
    %c5_84 = arith.constant 5 : index
    %c0_85 = arith.constant 0 : index
    %c0_86 = arith.constant 0 : index
    %115 = vector.load %arg5[%c5_84, %c0_85, %c0_86] : memref<6x1x512xf32, #tpu.memory_space<vmem>>, vector<1x1x512xf32>
    %116 = vector.shape_cast %115 : vector<1x1x512xf32> to vector<1x512xf32>
    %117 = vector.broadcast %116 : vector<1x512xf32> to vector<8x512xf32>
    %118 = arith.addf %114, %117 : vector<8x512xf32>
    %cst_87 = arith.constant 0.000000e+00 : f32
    %119 = vector.broadcast %cst_87 : f32 to vector<8x512xf32>
    %120 = arith.maximumf %118, %119 : vector<8x512xf32>
    %121 = arith.truncf %120 : vector<8x512xf32> to vector<8x512xbf16>
    %c5_88 = arith.constant 5 : index
    %c0_89 = arith.constant 0 : index
    %c0_90 = arith.constant 0 : index
    %122 = vector.load %arg6[%c5_88, %c0_89, %c0_90] : memref<6x512x512xbf16, #tpu.memory_space<vmem>>, vector<1x512x512xbf16>
    %123 = vector.shape_cast %122 : vector<1x512x512xbf16> to vector<512x512xbf16>
    %cst_91 = arith.constant dense<0.000000e+00> : vector<8x512xf32>
    %124 = tpu.matmul %121, %123, %cst_91 {dimension_numbers = #tpu.dot_dimension_numbers<[1], [0], [0], [1], [0, 0, 1, 1], [], []>} : vector<8x512xbf16>, vector<512x512xbf16>, vector<8x512xf32> -> vector<8x512xf32>
    %c5_92 = arith.constant 5 : index
    %c0_93 = arith.constant 0 : index
    %c0_94 = arith.constant 0 : index
    %125 = vector.load %arg7[%c5_92, %c0_93, %c0_94] : memref<6x1x512xf32, #tpu.memory_space<vmem>>, vector<1x1x512xf32>
    %126 = vector.shape_cast %125 : vector<1x1x512xf32> to vector<1x512xf32>
    %127 = vector.broadcast %126 : vector<1x512xf32> to vector<8x512xf32>
    %128 = arith.addf %124, %127 : vector<8x512xf32>
    %129 = arith.addf %110, %128 : vector<8x512xf32>
    %cst_95 = arith.constant 0.000000e+00 : f32
    %130 = vector.broadcast %cst_95 : f32 to vector<8x512xf32>
    %131 = arith.maximumf %129, %130 : vector<8x512xf32>
    %132 = arith.truncf %131 : vector<8x512xf32> to vector<8x512xbf16>
    %c0_96 = arith.constant 0 : index
    %c0_97 = arith.constant 0 : index
    %133 = vector.load %arg8[%c0_96, %c0_97] : memref<512x128xbf16, #tpu.memory_space<vmem>>, vector<512x128xbf16>
    %cst_98 = arith.constant dense<0.000000e+00> : vector<8x128xf32>
    %134 = tpu.matmul %132, %133, %cst_98 {dimension_numbers = #tpu.dot_dimension_numbers<[1], [0], [0], [1], [0, 0, 1, 1], [], []>} : vector<8x512xbf16>, vector<512x128xbf16>, vector<8x128xf32> -> vector<8x128xf32>
    %c0_99 = arith.constant 0 : index
    %c0_100 = arith.constant 0 : index
    %135 = vector.load %arg9[%c0_99, %c0_100] : memref<1x128xf32, #tpu.memory_space<vmem>>, vector<1x128xf32>
    %136 = vector.broadcast %135 : vector<1x128xf32> to vector<8x128xf32>
    %137 = arith.addf %134, %136 : vector<8x128xf32>
    %c0_101 = arith.constant 0 : index
    %c0_102 = arith.constant 0 : index
    %138 = vector.load %arg10[%c0_101, %c0_102] : memref<8x128xf32, #tpu.memory_space<vmem>>, vector<8x128xf32>
    tpu.vector_store %arg10[%c0_101, %c0_102], %137 {strides = array<i32>} : memref<8x128xf32, #tpu.memory_space<vmem>>, vector<8x128xf32>,
    return
  }
  func.func @transform_0(%arg0: i32) -> (i32, i32) {
    %c0_i32 = arith.constant 0 : i32
    %c0_i32_0 = arith.constant 0 : i32
    return %arg0, %c0_i32 : i32, i32
  }
  func.func @transform_1(%arg0: i32) -> (i32, i32) {
    %c0_i32 = arith.constant 0 : i32
    %c0_i32_0 = arith.constant 0 : i32
    %c0_i32_1 = arith.constant 0 : i32
    return %c0_i32, %c0_i32_0 : i32, i32
  }
  func.func @transform_2(%arg0: i32) -> (i32, i32) {
    %c0_i32 = arith.constant 0 : i32
    %c0_i32_0 = arith.constant 0 : i32
    %c0_i32_1 = arith.constant 0 : i32
    return %c0_i32, %c0_i32_0 : i32, i32
  }
  func.func @transform_3(%arg0: i32) -> (i32, i32, i32) {
    %c0_i32 = arith.constant 0 : i32
    %c0_i32_0 = arith.constant 0 : i32
    %c0_i32_1 = arith.constant 0 : i32
    %c0_i32_2 = arith.constant 0 : i32
    return %c0_i32, %c0_i32_0, %c0_i32_1 : i32, i32, i32
  }
  func.func @transform_4(%arg0: i32) -> (i32, i32, i32) {
    %c0_i32 = arith.constant 0 : i32
    %c0_i32_0 = arith.constant 0 : i32
    %c0_i32_1 = arith.constant 0 : i32
    %c0_i32_2 = arith.constant 0 : i32
    return %c0_i32, %c0_i32_0, %c0_i32_1 : i32, i32, i32
  }
  func.func @transform_5(%arg0: i32) -> (i32, i32, i32) {
    %c0_i32 = arith.constant 0 : i32
    %c0_i32_0 = arith.constant 0 : i32
    %c0_i32_1 = arith.constant 0 : i32
    %c0_i32_2 = arith.constant 0 : i32
    return %c0_i32, %c0_i32_0, %c0_i32_1 : i32, i32, i32
  }
  func.func @transform_6(%arg0: i32) -> (i32, i32, i32) {
    %c0_i32 = arith.constant 0 : i32
    %c0_i32_0 = arith.constant 0 : i32
    %c0_i32_1 = arith.constant 0 : i32
    %c0_i32_2 = arith.constant 0 : i32
    return %c0_i32, %c0_i32_0, %c0_i32_1 : i32, i32, i32
  }
  func.func @transform_7(%arg0: i32) -> (i32, i32) {
    %c0_i32 = arith.constant 0 : i32
    %c0_i32_0 = arith.constant 0 : i32
    %c0_i32_1 = arith.constant 0 : i32
    return %c0_i32, %c0_i32_0 : i32, i32
  }
  func.func @transform_8(%arg0: i32) -> (i32, i32) {
    %c0_i32 = arith.constant 0 : i32
    %c0_i32_0 = arith.constant 0 : i32
    %c0_i32_1 = arith.constant 0 : i32
    return %c0_i32, %c0_i32_0 : i32, i32
  }
  func.func @transform_9(%arg0: i32) -> (i32, i32) {
    %c0_i32 = arith.constant 0 : i32
    %c0_i32_0 = arith.constant 0 : i32
    return %arg0, %c0_i32 : i32, i32
  }
}

</mosaic_0001>

<llo_original>
// kernel: fwd.1
$region0: #{fwd.1}
  #allocation0 [shape = 'u32[]', space=smem, size = 0x4, offset = 0x4, fixed_abs, tag = 'smem constant byte address 0x4 - core index']
  #allocation1 [shape = 'u32[144,128]{1,0:T(1,128)}', space=vmem, size = 0x12000, scoped, tag = 'internal scratch']
  %s0 = inlined_call_operand.vmem [shape: bf16[8,80], index: 0, kind: input, shape index: {}]
  %s1 = inlined_call_operand.hbm [shape: bf16[80,512], index: 1, kind: input, shape index: {}]
  %s2 = inlined_call_operand.hbm [shape: f32[1,512], index: 2, kind: input, shape index: {}]
  %s3 = inlined_call_operand.hbm [shape: bf16[6,512,512], index: 3, kind: input, shape index: {}]
  %s4 = inlined_call_operand.hbm [shape: f32[6,1,512], index: 4, kind: input, shape index: {}]
  %s5 = inlined_call_operand.hbm [shape: bf16[6,512,512], index: 5, kind: input, shape index: {}]
  %s6 = inlined_call_operand.hbm [shape: f32[6,1,512], index: 6, kind: input, shape index: {}]
  %s7 = inlined_call_operand.hbm [shape: bf16[512,128], index: 7, kind: input, shape index: {}]
  %s8 = inlined_call_operand.hbm [shape: f32[1,128], index: 8, kind: input, shape index: {}]
  %s9 = inlined_call_operand.hbm [shape: f32[8,128], index: 9, kind: output, shape index: {}]
  %s10 = sld [smem:[#allocation0]]
  $region78: #{fwd.1} parent=0
    _
  %s12 = ssub.s32 1, %s10
  %s13 = scalar_select 0, %s12, %s10
  $region1: #{fwd.1} parent=0
    #allocation2 [shape = 'u8[81920]{0}', space=vmem, size = 0x14000, scoped, tag = 'input window, operand 1, single buffered']
    #allocation3 [shape = 's32[1]{0}', space=sflag, size = 0x4, scoped, tag = 'scoped memory for fwd.1']
    #allocation4 [shape = 's32[1]{0}', space=sflag, size = 0x4, scoped, tag = 'scoped memory for fwd.1']
    #allocation5 [shape = 'u8[2048]{0}', space=vmem, size = 0x800, scoped, tag = 'input window, operand 2, single buffered']
    #allocation6 [shape = 's32[1]{0}', space=sflag, size = 0x4, scoped, tag = 'scoped memory for fwd.1']
    #allocation7 [shape = 'u8[3145728]{0}', space=vmem, size = 0x300000, scoped, tag = 'input window, operand 3, single buffered']
    #allocation8 [shape = 'u8[12288]{0}', space=vmem, size = 0x3000, scoped, tag = 'input window, operand 4, single buffered']
    #allocation9 [shape = 's32[1]{0}', space=sflag, size = 0x4, scoped, tag = 'scoped memory for fwd.1']
    #allocation10 [shape = 'u8[3145728]{0}', space=vmem, size = 0x300000, scoped, tag = 'input window, operand 5, single buffered']
    #allocation11 [shape = 'u8[12288]{0}', space=vmem, size = 0x3000, scoped, tag = 'input window, operand 6, single buffered']
    #allocation12 [shape = 's32[1]{0}', space=sflag, size = 0x4, scoped, tag = 'scoped memory for fwd.1']
    #allocation13 [shape = 'u8[131072]{0}', space=vmem, size = 0x20000, scoped, tag = 'input window, operand 7, single buffered']
    #allocation14 [shape = 'u8[512]{0}', space=vmem, size = 0x400, scoped, tag = 'input window, operand 8, single buffered']
    #allocation15 [shape = 's32[1]{0}', space=sflag, size = 0x4, scoped, tag = 'scoped memory for fwd.1']
    #allocation16 [shape = 'u8[4096]{0}', space=vmem, size = 0x1000, scoped, tag = 'output window, operand 0, single buffered']
    %14 = vsyncpa [#allocation3], 0
    %15 = vsyncpa [#allocation6], 0
    %16 = vsyncpa [#allocation9], 0
    %17 = vsyncpa [#allocation12], 0
    %18 = vsyncpa [#allocation15], 0
    %19 = vsyncpa [#allocation4], 0
    // Predicated region
    $region2: #{fwd.1} parent=1 // pred_check
      _
    $region3: #{fwd.1} parent=1 // pred_check_branch
      %21 = sbr.rel (0) target = $region5
    $region4: #{fwd.1} parent=1 // pred_region
      _
    $region5: #{fwd.1} parent=1 // pred_fallthru
      _
    // Predicated region
    $region6: #{fwd.1} parent=1 // pred_check
      _
    $region7: #{fwd.1} parent=1 // pred_check_branch
      %23 = sbr.rel (0) target = $region9
    $region8: #{fwd.1} parent=1 // pred_region
      %s25 = ssub.s32 2560, 2560
      %26 = vsyncadd [#allocation3], %s25
      %s27 = sshll.u32 [#allocation2], 4
      %s28 = int_to_ptr.vmem [resolvable:$true] %s27
      %33 = dma.hbm_to_vmem [thread:$0]  %s1, 2560, %s28, [#allocation3], 256, 256, 16
    $region9: #{fwd.1} parent=1 // pred_fallthru
      _
    // Predicated region
    $region10: #{fwd.1} parent=1 // pred_check
      _
    $region11: #{fwd.1} parent=1 // pred_check_branch
      %35 = sbr.rel (0) target = $region13
    $region12: #{fwd.1} parent=1 // pred_region
      %s37 = ssub.s32 64, 64
      %38 = vsyncadd [#allocation6], %s37
      %s40 = sshll.u32 [#allocation5], 4
      %s41 = int_to_ptr.vmem [resolvable:$true] %s40
      %43 = dma.hbm_to_vmem [thread:$0]  %s2, 64, %s41, [#allocation6]
    $region13: #{fwd.1} parent=1 // pred_fallthru
      _
    // Predicated region
    $region14: #{fwd.1} parent=1 // pred_check
      _
    $region15: #{fwd.1} parent=1 // pred_check_branch
      %45 = sbr.rel (0) target = $region17
    $region16: #{fwd.1} parent=1 // pred_region
      %s47 = ssub.s32 98304, 98304
      %48 = vsyncadd [#allocation6], %s47
      %s49 = sshll.u32 [#allocation7], 4
      %s50 = int_to_ptr.vmem [resolvable:$true] %s49
      %55 = dma.hbm_to_vmem [thread:$0]  %s3, 98304, %s50, [#allocation6], 256, 256, 16
    $region17: #{fwd.1} parent=1 // pred_fallthru
      _
    // Predicated region
    $region18: #{fwd.1} parent=1 // pred_check
      _
    $region19: #{fwd.1} parent=1 // pred_check_branch
      %57 = sbr.rel (0) target = $region21
    $region20: #{fwd.1} parent=1 // pred_region
      %s59 = ssub.s32 384, 384
      %60 = vsyncadd [#allocation9], %s59
      %s61 = sshll.u32 [#allocation8], 4
      %s62 = int_to_ptr.vmem [resolvable:$true] %s61
      %67 = dma.hbm_to_vmem [thread:$0]  %s4, 384, %s62, [#allocation9], 64, 64, 4
    $region21: #{fwd.1} parent=1 // pred_fallthru
      _
    // Predicated region
    $region22: #{fwd.1} parent=1 // pred_check
      _
    $region23: #{fwd.1} parent=1 // pred_check_branch
      %69 = sbr.rel (0) target = $region25
    $region24: #{fwd.1} parent=1 // pred_region
      %s71 = ssub.s32 98304, 98304
      %72 = vsyncadd [#allocation9], %s71
      %s73 = sshll.u32 [#allocation10], 4
      %s74 = int_to_ptr.vmem [resolvable:$true] %s73
      %79 = dma.hbm_to_vmem [thread:$0]  %s5, 98304, %s74, [#allocation9], 256, 256, 16
    $region25: #{fwd.1} parent=1 // pred_fallthru
      _
    // Predicated region
    $region26: #{fwd.1} parent=1 // pred_check
      _
    $region27: #{fwd.1} parent=1 // pred_check_branch
      %81 = sbr.rel (0) target = $region29
    $region28: #{fwd.1} parent=1 // pred_region
      %s83 = ssub.s32 384, 384
      %84 = vsyncadd [#allocation12], %s83
      %s85 = sshll.u32 [#allocation11], 4
      %s86 = int_to_ptr.vmem [resolvable:$true] %s85
      %91 = dma.hbm_to_vmem [thread:$0]  %s6, 384, %s86, [#allocation12], 64, 64, 4
    $region29: #{fwd.1} parent=1 // pred_fallthru
      _
    // Predicated region
    $region30: #{fwd.1} parent=1 // pred_check
      _
    $region31: #{fwd.1} parent=1 // pred_check_branch
      %93 = sbr.rel (0) target = $region33
    $region32: #{fwd.1} parent=1 // pred_region
      %s95 = ssub.s32 4096, 4096
      %96 = vsyncadd [#allocation12], %s95
      %s97 = sshll.u32 [#allocation13], 4
      %s98 = int_to_ptr.vmem [resolvable:$true] %s97
      %103 = dma.hbm_to_vmem [thread:$0]  %s7, 4096, %s98, [#allocation12], 64, 64, 4
    $region33: #{fwd.1} parent=1 // pred_fallthru
      _
    // Predicated region
    $region34: #{fwd.1} parent=1 // pred_check
      _
    $region35: #{fwd.1} parent=1 // pred_check_branch
      %105 = sbr.rel (0) target = $region37
    $region36: #{fwd.1} parent=1 // pred_region
      %s107 = ssub.s32 16, 16
      %108 = vsyncadd [#allocation15], %s107
      %s110 = sshll.u32 [#allocation14], 4
      %s111 = int_to_ptr.vmem [resolvable:$true] %s110
      %113 = dma.hbm_to_vmem [thread:$0]  %s8, 16, %s111, [#allocation15]
    $region37: #{fwd.1} parent=1 // pred_fallthru
      _
    // Predicated region
    $region38: #{fwd.1} parent=1 // pred_check
      _
    $region39: #{fwd.1} parent=1 // pred_check_branch
      %115 = sbr.rel (0) target = $region41
    $region40: #{fwd.1} parent=1 // pred_region
      %116 = dma.done [#allocation3], 2560
    $region41: #{fwd.1} parent=1 // pred_fallthru
      _
    // Predicated region
    $region42: #{fwd.1} parent=1 // pred_check
      _
    $region43: #{fwd.1} parent=1 // pred_check_branch
      %118 = sbr.rel (0) target = $region45
    $region44: #{fwd.1} parent=1 // pred_region
      %119 = dma.done [#allocation6], 64
    $region45: #{fwd.1} parent=1 // pred_fallthru
      _
    // Predicated region
    $region46: #{fwd.1} parent=1 // pred_check
      _
    $region47: #{fwd.1} parent=1 // pred_check_branch
      %121 = sbr.rel (0) target = $region49
    $region48: #{fwd.1} parent=1 // pred_region
      %122 = dma.done [#allocation6], 98304
    $region49: #{fwd.1} parent=1 // pred_fallthru
      _
    // Predicated region
    $region50: #{fwd.1} parent=1 // pred_check
      _
    $region51: #{fwd.1} parent=1 // pred_check_branch
      %124 = sbr.rel (0) target = $region53
    $region52: #{fwd.1} parent=1 // pred_region
      %125 = dma.done [#allocation9], 384
    $region53: #{fwd.1} parent=1 // pred_fallthru
      _
    // Predicated region
    $region54: #{fwd.1} parent=1 // pred_check
      _
    $region55: #{fwd.1} parent=1 // pred_check_branch
      %127 = sbr.rel (0) target = $region57
    $region56: #{fwd.1} parent=1 // pred_region
      %128 = dma.done [#allocation9], 98304
    $region57: #{fwd.1} parent=1 // pred_fallthru
      _
    // Predicated region
    $region58: #{fwd.1} parent=1 // pred_check
      _
    $region59: #{fwd.1} parent=1 // pred_check_branch
      %130 = sbr.rel (0) target = $region61
    $region60: #{fwd.1} parent=1 // pred_region
      %131 = dma.done [#allocation12], 384
    $region61: #{fwd.1} parent=1 // pred_fallthru
      _
    // Predicated region
    $region62: #{fwd.1} parent=1 // pred_check
      _
    $region63: #{fwd.1} parent=1 // pred_check_branch
      %133 = sbr.rel (0) target = $region65
    $region64: #{fwd.1} parent=1 // pred_region
      %134 = dma.done [#allocation12], 4096
    $region65: #{fwd.1} parent=1 // pred_fallthru
      _
    // Predicated region
    $region66: #{fwd.1} parent=1 // pred_check
      _
    $region67: #{fwd.1} parent=1 // pred_check_branch
      %136 = sbr.rel (0) target = $region69
    $region68: #{fwd.1} parent=1 // pred_region
      %137 = dma.done [#allocation15], 16
    $region69: #{fwd.1} parent=1 // pred_fallthru
      _
    %v139 = vld [vmem:[%s0] sm:$0xf]
    %v140 = vld [vmem:[#allocation2] sm:$0xff]
    %v141 = vld [vmem:[#allocation2 + $0x8] sm:$0xff]
    %v142 = vld [vmem:[#allocation2 + $0x10] sm:$0xff]
    %v143 = vld [vmem:[#allocation2 + $0x18] sm:$0xff]
    %v144 = vld [vmem:[#allocation2 + $0x20] sm:$0xff]
    %v145 = vld [vmem:[#allocation2 + $0x28] sm:$0xff]
    %v146 = vld [vmem:[#allocation2 + $0x30] sm:$0xff]
    %v147 = vld [vmem:[#allocation2 + $0x38] sm:$0xff]
    %v148 = vld [vmem:[#allocation2 + $0x40] sm:$0xff]
    %v149 = vld [vmem:[#allocation2 + $0x48] sm:$0xff]
    %v150 = vld [vmem:[#allocation2 + $0x50] sm:$0xff]
    %v151 = vld [vmem:[#allocation2 + $0x58] sm:$0xff]
    %v152 = vld [vmem:[#allocation2 + $0x60] sm:$0xff]
    %v153 = vld [vmem:[#allocation2 + $0x68] sm:$0xff]
    %v154 = vld [vmem:[#allocation2 + $0x70] sm:$0xff]
    %v155 = vld [vmem:[#allocation2 + $0x78] sm:$0xff]
    %v156 = vld [vmem:[#allocation2 + $0x80] sm:$0xff]
    %v157 = vld [vmem:[#allocation2 + $0x88] sm:$0xff]
    %v158 = vld [vmem:[#allocation2 + $0x90] sm:$0xff]
    %v159 = vld [vmem:[#allocation2 + $0x98] sm:$0xff]
    %v160 = vld [vmem:[#allocation5] sm:$0xf]
    %v162 = vlaneseq
    %v163 = vshrl.u32 %v162, 7
    %v164 = vsub.s32 0, %v163
    %v165 = vrot.slane %v160, %v164
    %v166 = vlaneseq
    %v167 = vshrl.u32 %v166, 7
    %v168 = vsub.s32 1, %v167
    %v169 = vrot.slane %v160, %v168
    %v170 = vlaneseq
    %v171 = vshrl.u32 %v170, 7
    %v172 = vsub.s32 2, %v171
    %v173 = vrot.slane %v160, %v172
    %v174 = vlaneseq
    %v175 = vshrl.u32 %v174, 7
    %v176 = vsub.s32 3, %v175
    %v177 = vrot.slane %v160, %v176
    %v202 = vunpack.c.l.b16 %v140
    %v203 = vunpack.c.h.b16 %v140
    %v204 = vunpack.c.l.b16 %v141
    %v205 = vunpack.c.h.b16 %v141
    %v206 = vunpack.c.l.b16 %v142
    %v207 = vunpack.c.h.b16 %v142
    %v208 = vunpack.c.l.b16 %v143
    %v209 = vunpack.c.h.b16 %v143
    %v210 = vunpack.c.l.b16 %v144
    %v211 = vunpack.c.h.b16 %v144
    %v212 = vunpack.c.l.b16 %v145
    %v213 = vunpack.c.h.b16 %v145
    %v214 = vunpack.c.l.b16 %v146
    %v215 = vunpack.c.h.b16 %v146
    %v216 = vunpack.c.l.b16 %v147
    %v217 = vunpack.c.h.b16 %v147
    %v218 = vunpack.c.l.b16 %v148
    %v219 = vunpack.c.h.b16 %v148
    %v220 = vunpack.c.l.b16 %v149
    %v221 = vunpack.c.h.b16 %v149
    %v222 = vunpack.c.l.b16 %v150
    %v223 = vunpack.c.h.b16 %v150
    %v224 = vunpack.c.l.b16 %v151
    %v225 = vunpack.c.h.b16 %v151
    %v226 = vunpack.c.l.b16 %v152
    %v227 = vunpack.c.h.b16 %v152
    %v228 = vunpack.c.l.b16 %v153
    %v229 = vunpack.c.h.b16 %v153
    %v230 = vunpack.c.l.b16 %v154
    %v231 = vunpack.c.h.b16 %v154
    %v232 = vunpack.c.l.b16 %v155
    %v233 = vunpack.c.h.b16 %v155
    %v234 = vunpack.c.l.b16 %v156
    %v235 = vunpack.c.h.b16 %v156
    %v236 = vunpack.c.l.b16 %v157
    %v237 = vunpack.c.h.b16 %v157
    %v238 = vunpack.c.l.b16 %v158
    %v239 = vunpack.c.h.b16 %v158
    %v240 = vunpack.c.l.b16 %v159
    %v241 = vunpack.c.h.b16 %v159
    %v242 = vpack.c.b16 %v206, %v202
    %v243 = vpack.c.b16 %v207, %v203
    %v244 = vpack.c.b16 %v208, %v204
    %v245 = vpack.c.b16 %v209, %v205
    %v246 = vpack.c.b16 %v214, %v210
    %v247 = vpack.c.b16 %v215, %v211
    %v248 = vpack.c.b16 %v216, %v212
    %v249 = vpack.c.b16 %v217, %v213
    %v250 = vpack.c.b16 %v222, %v218
    %v251 = vpack.c.b16 %v223, %v219
    %v252 = vpack.c.b16 %v224, %v220
    %v253 = vpack.c.b16 %v225, %v221
    %v254 = vpack.c.b16 %v230, %v226
    %v255 = vpack.c.b16 %v231, %v227
    %v256 = vpack.c.b16 %v232, %v228
    %v257 = vpack.c.b16 %v233, %v229
    %v258 = vpack.c.b16 %v238, %v234
    %v259 = vpack.c.b16 %v239, %v235
    %v260 = vpack.c.b16 %v240, %v236
    %v261 = vpack.c.b16 %v241, %v237
    %vm282 = vcmask 654336
    %v284 = vsel %vm282, %v139, 0
    %286 = vmatprep.subr.bf16.mxu0 0
    %287 = vmatpush1.bf16.msra.mxu0 0
    %288 = vmatprep.subr.bf16.mxu0 0
    %289 = vmatpush1.bf16.msra.mxu0 0
    %290 = vmatprep.subr.bf16.mxu0 0
    %291 = vmatpush1.bf16.msra.mxu0 0
    %292 = vmatprep.subr.bf16.mxu0 %v259
    %293 = vmatpush1.bf16.msra.mxu0 %v258
    %294 = vmatprep.subr.bf16.mxu0 %v255
    %295 = vmatpush1.bf16.msra.mxu0 %v254
    %296 = vmatprep.subr.bf16.mxu0 %v251
    %297 = vmatpush1.bf16.msra.mxu0 %v250
    %298 = vmatprep.subr.bf16.mxu0 %v247
    %299 = vmatpush1.bf16.msra.mxu0 %v246
    %300 = vmatprep.subr.bf16.mxu0 %v243
    %301 = vmatpush1.bf16.msra.mxu0 %v242
    %302 = vmatprep.subr.bf16.mxu0 0
    %303 = vmatpush2.bf16.msra.mxu0 0
    %304 = vmatprep.subr.bf16.mxu0 0
    %305 = vmatpush2.bf16.msra.mxu0 0
    %306 = vmatprep.subr.bf16.mxu0 0
    %307 = vmatpush2.bf16.msra.mxu0 0
    %308 = vmatprep.subr.bf16.mxu0 0
    %309 = vmatpush2.bf16.msra.mxu0 0
    %310 = vmatprep.subr.bf16.mxu0 0
    %311 = vmatpush2.bf16.msra.mxu0 0
    %312 = vmatprep.subr.bf16.mxu0 0
    %313 = vmatpush2.bf16.msra.mxu0 0
    %314 = vmatprep.subr.bf16.mxu0 0
    %315 = vmatpush2.bf16.msra.mxu0 0
    %316 = vmatprep.subr.bf16.mxu0 0
    %317 = vmatpush2.bf16.msra.mxu0 0
    %318 = vmatprep.mubr.bf16.mxu0 0
    %319 = vmatmul.mubr.bf16.gmra.mxu0 %v284
    %v320 = vpop.f32.mrf.mxu0
    %v321 = vadd.f32 %v165, %v320
    %v322 = vpop.f32.mrf.mxu0
    %v323 = vadd.f32 %v169, %v322
    %v324 = vpop.f32.mrf.mxu0
    %v325 = vpop.f32.mrf.mxu0
    %326 = vdwg.mxu0
    %327 = vmatprep.subr.bf16.mxu0 0
    %328 = vmatpush1.bf16.msra.mxu0 0
    %329 = vmatprep.subr.bf16.mxu0 0
    %330 = vmatpush1.bf16.msra.mxu0 0
    %331 = vmatprep.subr.bf16.mxu0 0
    %332 = vmatpush1.bf16.msra.mxu0 0
    %333 = vmatprep.subr.bf16.mxu0 %v261
    %334 = vmatpush1.bf16.msra.mxu0 %v260
    %335 = vmatprep.subr.bf16.mxu0 %v257
    %336 = vmatpush1.bf16.msra.mxu0 %v256
    %337 = vmatprep.subr.bf16.mxu0 %v253
    %338 = vmatpush1.bf16.msra.mxu0 %v252
    %339 = vmatprep.subr.bf16.mxu0 %v249
    %340 = vmatpush1.bf16.msra.mxu0 %v248
    %341 = vmatprep.subr.bf16.mxu0 %v245
    %342 = vmatpush1.bf16.msra.mxu0 %v244
    %343 = vmatprep.subr.bf16.mxu0 0
    %344 = vmatpush2.bf16.msra.mxu0 0
    %345 = vmatprep.subr.bf16.mxu0 0
    %346 = vmatpush2.bf16.msra.mxu0 0
    %347 = vmatprep.subr.bf16.mxu0 0
    %348 = vmatpush2.bf16.msra.mxu0 0
    %349 = vmatprep.subr.bf16.mxu0 0
    %350 = vmatpush2.bf16.msra.mxu0 0
    %351 = vmatprep.subr.bf16.mxu0 0
    %352 = vmatpush2.bf16.msra.mxu0 0
    %353 = vmatprep.subr.bf16.mxu0 0
    %354 = vmatpush2.bf16.msra.mxu0 0
    %355 = vmatprep.subr.bf16.mxu0 0
    %356 = vmatpush2.bf16.msra.mxu0 0
    %357 = vmatprep.subr.bf16.mxu0 0
    %358 = vmatpush2.bf16.msra.mxu0 0
    %359 = vmatprep.mubr.bf16.mxu0 0
    %360 = vmatmul.mubr.bf16.gmra.mxu0 %v284
    %v361 = vpop.f32.mrf.mxu0
    %v362 = vadd.f32 %v173, %v361
    %v363 = vpop.f32.mrf.mxu0
    %v364 = vadd.f32 %v177, %v363
    %v365 = vpop.f32.mrf.mxu0
    %v366 = vpop.f32.mrf.mxu0
    %367 = vdwg.mxu0
    %v368 = vpack.c.bf16 %v321, %v321
    %v369 = vpack.c.bf16 %v323, %v323
    %v370 = vpack.c.bf16 %v362, %v362
    %v371 = vpack.c.bf16 %v364, %v364
    %v372 = vld [vmem:[#allocation7] sm:$0xff]
    %v373 = vld [vmem:[#allocation7 + $0x8] sm:$0xff]
    %v374 = vld [vmem:[#allocation7 + $0x10] sm:$0xff]
    %v375 = vld [vmem:[#allocation7 + $0x18] sm:$0xff]
    %v376 = vld [vmem:[#allocation7 + $0x20] sm:$0xff]
    %v377 = vld [vmem:[#allocation7 + $0x28] sm:$0xff]
    %v378 = vld [vmem:[#allocation7 + $0x30] sm:$0xff]
    %v379 = vld [vmem:[#allocation7 + $0x38] sm:$0xff]
    %v380 = vld [vmem:[#allocation7 + $0x40] sm:$0xff]
    %v381 = vld [vmem:[#allocation7 + $0x48] sm:$0xff]
    %v382 = vld [vmem:[#allocation7 + $0x50] sm:$0xff]
    %v383 = vld [vmem:[#allocation7 + $0x58] sm:$0xff]
    %v384 = vld [vmem:[#allocation7 + $0x60] sm:$0xff]
    %v385 = vld [vmem:[#allocation7 + $0x68] sm:$0xff]
    %v386 = vld [vmem:[#allocation7 + $0x70] sm:$0xff]
    %v387 = vld [vmem:[#allocation7 + $0x78] sm:$0xff]
    %v388 = vld [vmem:[#allocation7 + $0x80] sm:$0xff]
    %v389 = vld [vmem:[#allocation7 + $0x88] sm:$0xff]
    %v390 = vld [vmem:[#allocation7 + $0x90] sm:$0xff]
    %v391 = vld [vmem:[#allocation7 + $0x98] sm:$0xff]
    %v392 = vld [vmem:[#allocation7 + $0xa0] sm:$0xff]
    %v393 = vld [vmem:[#allocation7 + $0xa8] sm:$0xff]
    %v394 = vld [vmem:[#allocation7 + $0xb0] sm:$0xff]
    %v395 = vld [vmem:[#allocation7 + $0xb8] sm:$0xff]
    %v396 = vld [vmem:[#allocation7 + $0xc0] sm:$0xff]
    %v397 = vld [vmem:[#allocation7 + $0xc8] sm:$0xff]
    %v398 = vld [vmem:[#allocation7 + $0xd0] sm:$0xff]
    %v399 = vld [vmem:[#allocation7 + $0xd8] sm:$0xff]
    %v400 = vld [vmem:[#allocation7 + $0xe0] sm:$0xff]
    %v401 = vld [vmem:[#allocation7 + $0xe8] sm:$0xff]
    %v402 = vld [vmem:[#allocation7 + $0xf0] sm:$0xff]
    %v403 = vld [vmem:[#allocation7 + $0xf8] sm:$0xff]
    %v404 = vld [vmem:[#allocation7 + $0x100] sm:$0xff]
    %v405 = vld [vmem:[#allocation7 + $0x108] sm:$0xff]
    %v406 = vld [vmem:[#allocation7 + $0x110] sm:$0xff]
    %v407 = vld [vmem:[#allocation7 + $0x118] sm:$0xff]
    %v408 = vld [vmem:[#allocation7 + $0x120] sm:$0xff]
    %v409 = vld [vmem:[#allocation7 + $0x128] sm:$0xff]
    %v410 = vld [vmem:[#allocation7 + $0x130] sm:$0xff]
    %v411 = vld [vmem:[#allocation7 + $0x138] sm:$0xff]
    %v412 = vld [vmem:[#allocation7 + $0x140] sm:$0xff]
    %v413 = vld [vmem:[#allocation7 + $0x148] sm:$0xff]
    %v414 = vld [vmem:[#allocation7 + $0x150] sm:$0xff]
    %v415 = vld [vmem:[#allocation7 + $0x158] sm:$0xff]
    %v416 = vld [vmem:[#allocation7 + $0x160] sm:$0xff]
    %v417 = vld [vmem:[#allocation7 + $0x168] sm:$0xff]
    %v418 = vld [vmem:[#allocation7 + $0x170] sm:$0xff]
    %v419 = vld [vmem:[#allocation7 + $0x178] sm:$0xff]
    %v420 = vld [vmem:[#allocation7 + $0x180] sm:$0xff]
    %v421 = vld [vmem:[#allocation7 + $0x188] sm:$0xff]
    %v422 = vld [vmem:[#allocation7 + $0x190] sm:$0xff]
    %v423 = vld [vmem:[#allocation7 + $0x198] sm:$0xff]
    %v424 = vld [vmem:[#allocation7 + $0x1a0] sm:$0xff]
    %v425 = vld [vmem:[#allocation7 + $0x1a8] sm:$0xff]
    %v426 = vld [vmem:[#allocation7 + $0x1b0] sm:$0xff]
    %v427 = vld [vmem:[#allocation7 + $0x1b8] sm:$0xff]
    %v428 = vld [vmem:[#allocation7 + $0x1c0] sm:$0xff]
    %v429 = vld [vmem:[#allocation7 + $0x1c8] sm:$0xff]
    %v430 = vld [vmem:[#allocation7 + $0x1d0] sm:$0xff]
    %v431 = vld [vmem:[#allocation7 + $0x1d8] sm:$0xff]
    %v432 = vld [vmem:[#allocation7 + $0x1e0] sm:$0xff]
    %v433 = vld [vmem:[#allocation7 + $0x1e8] sm:$0xff]
    %v434 = vld [vmem:[#allocation7 + $0x1f0] sm:$0xff]
    %v435 = vld [vmem:[#allocation7 + $0x1f8] sm:$0xff]
    %v436 = vld [vmem:[#allocation7 + $0x200] sm:$0xff]
    %v437 = vld [vmem:[#allocation7 + $0x208] sm:$0xff]
    %v438 = vld [vmem:[#allocation7 + $0x210] sm:$0xff]
    %v439 = vld [vmem:[#allocation7 + $0x218] sm:$0xff]
    %v440 = vld [vmem:[#allocation7 + $0x220] sm:$0xff]
    %v441 = vld [vmem:[#allocation7 + $0x228] sm:$0xff]
    %v442 = vld [vmem:[#allocation7 + $0x230] sm:$0xff]
    %v443 = vld [vmem:[#allocation7 + $0x238] sm:$0xff]
    %v444 = vld [vmem:[#allocation7 + $0x240] sm:$0xff]
    %v445 = vld [vmem:[#allocation7 + $0x248] sm:$0xff]
    %v446 = vld [vmem:[#allocation7 + $0x250] sm:$0xff]
    %v447 = vld [vmem:[#allocation7 + $0x258] sm:$0xff]
    %v448 = vld [vmem:[#allocation7 + $0x260] sm:$0xff]
    %v449 = vld [vmem:[#allocation7 + $0x268] sm:$0xff]
    %v450 = vld [vmem:[#allocation7 + $0x270] sm:$0xff]
    %v451 = vld [vmem:[#allocation7 + $0x278] sm:$0xff]
    %v452 = vld [vmem:[#allocation7 + $0x280] sm:$0xff]
    %v453 = vld [vmem:[#allocation7 + $0x288] sm:$0xff]
    %v454 = vld [vmem:[#allocation7 + $0x290] sm:$0xff]
    %v455 = vld [vmem:[#allocation7 + $0x298] sm:$0xff]
    %v456 = vld [vmem:[#allocation7 + $0x2a0] sm:$0xff]
    %v457 = vld [vmem:[#allocation7 + $0x2a8] sm:$0xff]
    %v458 = vld [vmem:[#allocation7 + $0x2b0] sm:$0xff]
    %v459 = vld [vmem:[#allocation7 + $0x2b8] sm:$0xff]
    %v460 = vld [vmem:[#allocation7 + $0x2c0] sm:$0xff]
    %v461 = vld [vmem:[#allocation7 + $0x2c8] sm:$0xff]
    %v462 = vld [vmem:[#allocation7 + $0x2d0] sm:$0xff]
    %v463 = vld [vmem:[#allocation7 + $0x2d8] sm:$0xff]
    %v464 = vld [vmem:[#allocation7 + $0x2e0] sm:$0xff]
    %v465 = vld [vmem:[#allocation7 + $0x2e8] sm:$0xff]
    %v466 = vld [vmem:[#allocation7 + $0x2f0] sm:$0xff]
    %v467 = vld [vmem:[#allocation7 + $0x2f8] sm:$0xff]
    %v468 = vld [vmem:[#allocation7 + $0x300] sm:$0xff]
    %v469 = vld [vmem:[#allocation7 + $0x308] sm:$0xff]
    %v470 = vld [vmem:[#allocation7 + $0x310] sm:$0xff]
    %v471 = vld [vmem:[#allocation7 + $0x318] sm:$0xff]
    %v472 = vld [vmem:[#allocation7 + $0x320] sm:$0xff]
    %v473 = vld [vmem:[#allocation7 + $0x328] sm:$0xff]
    %v474 = vld [vmem:[#allocation7 + $0x330] sm:$0xff]
    %v475 = vld [vmem:[#allocation7 + $0x338] sm:$0xff]
    %v476 = vld [vmem:[#allocation7 + $0x340] sm:$0xff]
    %v477 = vld [vmem:[#allocation7 + $0x348] sm:$0xff]
    %v478 = vld [vmem:[#allocation7 + $0x350] sm:$0xff]
    %v479 = vld [vmem:[#allocation7 + $0x358] sm:$0xff]
    %v480 = vld [vmem:[#allocation7 + $0x360] sm:$0xff]
    %v481 = vld [vmem:[#allocation7 + $0x368] sm:$0xff]
    %v482 = vld [vmem:[#allocation7 + $0x370] sm:$0xff]
    %v483 = vld [vmem:[#allocation7 + $0x378] sm:$0xff]
    %v484 = vld [vmem:[#allocation7 + $0x380] sm:$0xff]
    %v485 = vld [vmem:[#allocation7 + $0x388] sm:$0xff]
    %v486 = vld [vmem:[#allocation7 + $0x390] sm:$0xff]
    %v487 = vld [vmem:[#allocation7 + $0x398] sm:$0xff]
    %v488 = vld [vmem:[#allocation7 + $0x3a0] sm:$0xff]
    %v489 = vld [vmem:[#allocation7 + $0x3a8] sm:$0xff]
    %v490 = vld [vmem:[#allocation7 + $0x3b0] sm:$0xff]
    %v491 = vld [vmem:[#allocation7 + $0x3b8] sm:$0xff]
    %v492 = vld [vmem:[#allocation7 + $0x3c0] sm:$0xff]
    %v493 = vld [vmem:[#allocation7 + $0x3c8] sm:$0xff]
    %v494 = vld [vmem:[#allocation7 + $0x3d0] sm:$0xff]
    %v495 = vld [vmem:[#allocation7 + $0x3d8] sm:$0xff]
    %v496 = vld [vmem:[#allocation7 + $0x3e0] sm:$0xff]
    %v497 = vld [vmem:[#allocation7 + $0x3e8] sm:$0xff]
    %v498 = vld [vmem:[#allocation7 + $0x3f0] sm:$0xff]
    %v499 = vld [vmem:[#allocation7 + $0x3f8] sm:$0xff]
    %v500 = vld [vmem:[#allocation8] sm:$0xf]
    %v502 = vlaneseq
    %v503 = vshrl.u32 %v502, 7
    %v504 = vsub.s32 0, %v503
    %v505 = vrot.slane %v500, %v504
    %v506 = vlaneseq
    %v507 = vshrl.u32 %v506, 7
    %v508 = vsub.s32 1, %v507
    %v509 = vrot.slane %v500, %v508
    %v510 = vlaneseq
    %v511 = vshrl.u32 %v510, 7
    %v512 = vsub.s32 2, %v511
    %v513 = vrot.slane %v500, %v512
    %v514 = vlaneseq
    %v515 = vshrl.u32 %v514, 7
    %v516 = vsub.s32 3, %v515
    %v517 = vrot.slane %v500, %v516
    %v650 = vunpack.c.l.b16 %v372
    %v651 = vunpack.c.h.b16 %v372
    %v652 = vunpack.c.l.b16 %v373
    %v653 = vunpack.c.h.b16 %v373
    %v654 = vunpack.c.l.b16 %v374
    %v655 = vunpack.c.h.b16 %v374
    %v656 = vunpack.c.l.b16 %v375
    %v657 = vunpack.c.h.b16 %v375
    %v658 = vunpack.c.l.b16 %v376
    %v659 = vunpack.c.h.b16 %v376
    %v660 = vunpack.c.l.b16 %v377
    %v661 = vunpack.c.h.b16 %v377
    %v662 = vunpack.c.l.b16 %v378
    %v663 = vunpack.c.h.b16 %v378
    %v664 = vunpack.c.l.b16 %v379
    %v665 = vunpack.c.h.b16 %v379
    %v666 = vunpack.c.l.b16 %v380
    %v667 = vunpack.c.h.b16 %v380
    %v668 = vunpack.c.l.b16 %v381
    %v669 = vunpack.c.h.b16 %v381
    %v670 = vunpack.c.l.b16 %v382
    %v671 = vunpack.c.h.b16 %v382
    %v672 = vunpack.c.l.b16 %v383
    %v673 = vunpack.c.h.b16 %v383
    %v674 = vunpack.c.l.b16 %v384
    %v675 = vunpack.c.h.b16 %v384
    %v676 = vunpack.c.l.b16 %v385
    %v677 = vunpack.c.h.b16 %v385
    %v678 = vunpack.c.l.b16 %v386
    %v679 = vunpack.c.h.b16 %v386
    %v680 = vunpack.c.l.b16 %v387
    %v681 = vunpack.c.h.b16 %v387
    %v682 = vunpack.c.l.b16 %v388
    %v683 = vunpack.c.h.b16 %v388
    %v684 = vunpack.c.l.b16 %v389
    %v685 = vunpack.c.h.b16 %v389
    %v686 = vunpack.c.l.b16 %v390
    %v687 = vunpack.c.h.b16 %v390
    %v688 = vunpack.c.l.b16 %v391
    %v689 = vunpack.c.h.b16 %v391
    %v690 = vunpack.c.l.b16 %v392
    %v691 = vunpack.c.h.b16 %v392
    %v692 = vunpack.c.l.b16 %v393
    %v693 = vunpack.c.h.b16 %v393
    %v694 = vunpack.c.l.b16 %v394
    %v695 = vunpack.c.h.b16 %v394
    %v696 = vunpack.c.l.b16 %v395
    %v697 = vunpack.c.h.b16 %v395
    %v698 = vunpack.c.l.b16 %v396
    %v699 = vunpack.c.h.b16 %v396
    %v700 = vunpack.c.l.b16 %v397
    %v701 = vunpack.c.h.b16 %v397
    %v702 = vunpack.c.l.b16 %v398
    %v703 = vunpack.c.h.b16 %v398
    %v704 = vunpack.c.l.b16 %v399
    %v705 = vunpack.c.h.b16 %v399
    %v706 = vunpack.c.l.b16 %v400
    %v707 = vunpack.c.h.b16 %v400
    %v708 = vunpack.c.l.b16 %v401
    %v709 = vunpack.c.h.b16 %v401
    %v710 = vunpack.c.l.b16 %v402
    %v711 = vunpack.c.h.b16 %v402
    %v712 = vunpack.c.l.b16 %v403
    %v713 = vunpack.c.h.b16 %v403
    %v714 = vunpack.c.l.b16 %v404
    %v715 = vunpack.c.h.b16 %v404
    %v716 = vunpack.c.l.b16 %v405
    %v717 = vunpack.c.h.b16 %v405
    %v718 = vunpack.c.l.b16 %v406
    %v719 = vunpack.c.h.b16 %v406
    %v720 = vunpack.c.l.b16 %v407
    %v721 = vunpack.c.h.b16 %v407
    %v722 = vunpack.c.l.b16 %v408
    %v723 = vunpack.c.h.b16 %v408
    %v724 = vunpack.c.l.b16 %v409
    %v725 = vunpack.c.h.b16 %v409
    %v726 = vunpack.c.l.b16 %v410
    %v727 = vunpack.c.h.b16 %v410
    %v728 = vunpack.c.l.b16 %v411
    %v729 = vunpack.c.h.b16 %v411
    %v730 = vunpack.c.l.b16 %v412
    %v731 = vunpack.c.h.b16 %v412
    %v732 = vunpack.c.l.b16 %v413
    %v733 = vunpack.c.h.b16 %v413
    %v734 = vunpack.c.l.b16 %v414
    %v735 = vunpack.c.h.b16 %v414
    %v736 = vunpack.c.l.b16 %v415
    %v737 = vunpack.c.h.b16 %v415
    %v738 = vunpack.c.l.b16 %v416
    %v739 = vunpack.c.h.b16 %v416
    %v740 = vunpack.c.l.b16 %v417
    %v741 = vunpack.c.h.b16 %v417
    %v742 = vunpack.c.l.b16 %v418
    %v743 = vunpack.c.h.b16 %v418
    %v744 = vunpack.c.l.b16 %v419
    %v745 = vunpack.c.h.b16 %v419
    %v746 = vunpack.c.l.b16 %v420
    %v747 = vunpack.c.h.b16 %v420
    %v748 = vunpack.c.l.b16 %v421
    %v749 = vunpack.c.h.b16 %v421
    %v750 = vunpack.c.l.b16 %v422
    %v751 = vunpack.c.h.b16 %v422
    %v752 = vunpack.c.l.b16 %v423
    %v753 = vunpack.c.h.b16 %v423
    %v754 = vunpack.c.l.b16 %v424
    %v755 = vunpack.c.h.b16 %v424
    %v756 = vunpack.c.l.b16 %v425
    %v757 = vunpack.c.h.b16 %v425
    %v758 = vunpack.c.l.b16 %v426
    %v759 = vunpack.c.h.b16 %v426
    %v760 = vunpack.c.l.b16 %v427
    %v761 = vunpack.c.h.b16 %v427
    %v762 = vunpack.c.l.b16 %v428
    %v763 = vunpack.c.h.b16 %v428
    %v764 = vunpack.c.l.b16 %v429
    %v765 = vunpack.c.h.b16 %v429
    %v766 = vunpack.c.l.b16 %v430
    %v767 = vunpack.c.h.b16 %v430
    %v768 = vunpack.c.l.b16 %v431
    %v769 = vunpack.c.h.b16 %v431
    %v770 = vunpack.c.l.b16 %v432
    %v771 = vunpack.c.h.b16 %v432
    %v772 = vunpack.c.l.b16 %v433
    %v773 = vunpack.c.h.b16 %v433
    %v774 = vunpack.c.l.b16 %v434
    %v775 = vunpack.c.h.b16 %v434
    %v776 = vunpack.c.l.b16 %v435
    %v777 = vunpack.c.h.b16 %v435
    %v778 = vunpack.c.l.b16 %v436
    %v779 = vunpack.c.h.b16 %v436
    %v780 = vunpack.c.l.b16 %v437
    %v781 = vunpack.c.h.b16 %v437
    %v782 = vunpack.c.l.b16 %v438
    %v783 = vunpack.c.h.b16 %v438
    %v784 = vunpack.c.l.b16 %v439
    %v785 = vunpack.c.h.b16 %v439
    %v786 = vunpack.c.l.b16 %v440
    %v787 = vunpack.c.h.b16 %v440
    %v788 = vunpack.c.l.b16 %v441
    %v789 = vunpack.c.h.b16 %v441
    %v790 = vunpack.c.l.b16 %v442
    %v791 = vunpack.c.h.b16 %v442
    %v792 = vunpack.c.l.b16 %v443
    %v793 = vunpack.c.h.b16 %v443
    %v794 = vunpack.c.l.b16 %v444
    %v795 = vunpack.c.h.b16 %v444
    %v796 = vunpack.c.l.b16 %v445
    %v797 = vunpack.c.h.b16 %v445
    %v798 = vunpack.c.l.b16 %v446
    %v799 = vunpack.c.h.b16 %v446
    %v800 = vunpack.c.l.b16 %v447
    %v801 = vunpack.c.h.b16 %v447
    %v802 = vunpack.c.l.b16 %v448
    %v803 = vunpack.c.h.b16 %v448
    %v804 = vunpack.c.l.b16 %v449
    %v805 = vunpack.c.h.b16 %v449
    %v806 = vunpack.c.l.b16 %v450
    %v807 = vunpack.c.h.b16 %v450
    %v808 = vunpack.c.l.b16 %v451
    %v809 = vunpack.c.h.b16 %v451
    %v810 = vunpack.c.l.b16 %v452
    %v811 = vunpack.c.h.b16 %v452
    %v812 = vunpack.c.l.b16 %v453
    %v813 = vunpack.c.h.b16 %v453
    %v814 = vunpack.c.l.b16 %v454
    %v815 = vunpack.c.h.b16 %v454
    %v816 = vunpack.c.l.b16 %v455
    %v817 = vunpack.c.h.b16 %v455
    %v818 = vunpack.c.l.b16 %v456
    %v819 = vunpack.c.h.b16 %v456
    %v820 = vunpack.c.l.b16 %v457
    %v821 = vunpack.c.h.b16 %v457
    %v822 = vunpack.c.l.b16 %v458
    %v823 = vunpack.c.h.b16 %v458
    %v824 = vunpack.c.l.b16 %v459
    %v825 = vunpack.c.h.b16 %v459
    %v826 = vunpack.c.l.b16 %v460
    %v827 = vunpack.c.h.b16 %v460
    %v828 = vunpack.c.l.b16 %v461
    %v829 = vunpack.c.h.b16 %v461
    %v830 = vunpack.c.l.b16 %v462
    %v831 = vunpack.c.h.b16 %v462
    %v832 = vunpack.c.l.b16 %v463
    %v833 = vunpack.c.h.b16 %v463
    %v834 = vunpack.c.l.b16 %v464
    %v835 = vunpack.c.h.b16 %v464
    %v836 = vunpack.c.l.b16 %v465
    %v837 = vunpack.c.h.b16 %v465
    %v838 = vunpack.c.l.b16 %v466
    %v839 = vunpack.c.h.b16 %v466
    %v840 = vunpack.c.l.b16 %v467
    %v841 = vunpack.c.h.b16 %v467
    %v842 = vunpack.c.l.b16 %v468
    %v843 = vunpack.c.h.b16 %v468
    %v844 = vunpack.c.l.b16 %v469
    %v845 = vunpack.c.h.b16 %v469
    %v846 = vunpack.c.l.b16 %v470
    %v847 = vunpack.c.h.b16 %v470
    %v848 = vunpack.c.l.b16 %v471
    %v849 = vunpack.c.h.b16 %v471
    %v850 = vunpack.c.l.b16 %v472
    %v851 = vunpack.c.h.b16 %v472
    %v852 = vunpack.c.l.b16 %v473
    %v853 = vunpack.c.h.b16 %v473
    %v854 = vunpack.c.l.b16 %v474
    %v855 = vunpack.c.h.b16 %v474
    %v856 = vunpack.c.l.b16 %v475
    %v857 = vunpack.c.h.b16 %v475
    %v858 = vunpack.c.l.b16 %v476
    %v859 = vunpack.c.h.b16 %v476
    %v860 = vunpack.c.l.b16 %v477
    %v861 = vunpack.c.h.b16 %v477
    %v862 = vunpack.c.l.b16 %v478
    %v863 = vunpack.c.h.b16 %v478
    %v864 = vunpack.c.l.b16 %v479
    %v865 = vunpack.c.h.b16 %v479
    %v866 = vunpack.c.l.b16 %v480
    %v867 = vunpack.c.h.b16 %v480
    %v868 = vunpack.c.l.b16 %v481
    %v869 = vunpack.c.h.b16 %v481
    %v870 = vunpack.c.l.b16 %v482
    %v871 = vunpack.c.h.b16 %v482
    %v872 = vunpack.c.l.b16 %v483
    %v873 = vunpack.c.h.b16 %v483
    %v874 = vunpack.c.l.b16 %v484
    %v875 = vunpack.c.h.b16 %v484
    %v876 = vunpack.c.l.b16 %v485
    %v877 = vunpack.c.h.b16 %v485
    %v878 = vunpack.c.l.b16 %v486
    %v879 = vunpack.c.h.b16 %v486
    %v880 = vunpack.c.l.b16 %v487
    %v881 = vunpack.c.h.b16 %v487
    %v882 = vunpack.c.l.b16 %v488
    %v883 = vunpack.c.h.b16 %v488
    %v884 = vunpack.c.l.b16 %v489
    %v885 = vunpack.c.h.b16 %v489
    %v886 = vunpack.c.l.b16 %v490
    %v887 = vunpack.c.h.b16 %v490
    %v888 = vunpack.c.l.b16 %v491
    %v889 = vunpack.c.h.b16 %v491
    %v890 = vunpack.c.l.b16 %v492
    %v891 = vunpack.c.h.b16 %v492
    %v892 = vunpack.c.l.b16 %v493
    %v893 = vunpack.c.h.b16 %v493
    %v894 = vunpack.c.l.b16 %v494
    %v895 = vunpack.c.h.b16 %v494
    %v896 = vunpack.c.l.b16 %v495
    %v897 = vunpack.c.h.b16 %v495
    %v898 = vunpack.c.l.b16 %v496
    %v899 = vunpack.c.h.b16 %v496
    %v900 = vunpack.c.l.b16 %v497
    %v901 = vunpack.c.h.b16 %v497
    %v902 = vunpack.c.l.b16 %v498
    %v903 = vunpack.c.h.b16 %v498
    %v904 = vunpack.c.l.b16 %v499
    %v905 = vunpack.c.h.b16 %v499
    %v906 = vpack.c.b16 %v654, %v650
    %v907 = vpack.c.b16 %v655, %v651
    %v908 = vpack.c.b16 %v656, %v652
    %v909 = vpack.c.b16 %v657, %v653
    %v910 = vpack.c.b16 %v662, %v658
    %v911 = vpack.c.b16 %v663, %v659
    %v912 = vpack.c.b16 %v664, %v660
    %v913 = vpack.c.b16 %v665, %v661
    %v914 = vpack.c.b16 %v670, %v666
    %v915 = vpack.c.b16 %v671, %v667
    %v916 = vpack.c.b16 %v672, %v668
    %v917 = vpack.c.b16 %v673, %v669
    %v918 = vpack.c.b16 %v678, %v674
    %v919 = vpack.c.b16 %v679, %v675
    %v920 = vpack.c.b16 %v680, %v676
    %v921 = vpack.c.b16 %v681, %v677
    %v922 = vpack.c.b16 %v686, %v682
    %v923 = vpack.c.b16 %v687, %v683
    %v924 = vpack.c.b16 %v688, %v684
    %v925 = vpack.c.b16 %v689, %v685
    %v926 = vpack.c.b16 %v694, %v690
    %v927 = vpack.c.b16 %v695, %v691
    %v928 = vpack.c.b16 %v696, %v692
    %v929 = vpack.c.b16 %v697, %v693
    %v930 = vpack.c.b16 %v702, %v698
    %v931 = vpack.c.b16 %v703, %v699
    %v932 = vpack.c.b16 %v704, %v700
    %v933 = vpack.c.b16 %v705, %v701
    %v934 = vpack.c.b16 %v710, %v706
    %v935 = vpack.c.b16 %v711, %v707
    %v936 = vpack.c.b16 %v712, %v708
    %v937 = vpack.c.b16 %v713, %v709
    %v938 = vpack.c.b16 %v718, %v714
    %v939 = vpack.c.b16 %v719, %v715
    %v940 = vpack.c.b16 %v720, %v716
    %v941 = vpack.c.b16 %v721, %v717
    %v942 = vpack.c.b16 %v726, %v722
    %v943 = vpack.c.b16 %v727, %v723
    %v944 = vpack.c.b16 %v728, %v724
    %v945 = vpack.c.b16 %v729, %v725
    %v946 = vpack.c.b16 %v734, %v730
    %v947 = vpack.c.b16 %v735, %v731
    %v948 = vpack.c.b16 %v736, %v732
    %v949 = vpack.c.b16 %v737, %v733
    %v950 = vpack.c.b16 %v742, %v738
    %v951 = vpack.c.b16 %v743, %v739
    %v952 = vpack.c.b16 %v744, %v740
    %v953 = vpack.c.b16 %v745, %v741
    %v954 = vpack.c.b16 %v750, %v746
    %v955 = vpack.c.b16 %v751, %v747
    %v956 = vpack.c.b16 %v752, %v748
    %v957 = vpack.c.b16 %v753, %v749
    %v958 = vpack.c.b16 %v758, %v754
    %v959 = vpack.c.b16 %v759, %v755
    %v960 = vpack.c.b16 %v760, %v756
    %v961 = vpack.c.b16 %v761, %v757
    %v962 = vpack.c.b16 %v766, %v762
    %v963 = vpack.c.b16 %v767, %v763
    %v964 = vpack.c.b16 %v768, %v764
    %v965 = vpack.c.b16 %v769, %v765
    %v966 = vpack.c.b16 %v774, %v770
    %v967 = vpack.c.b16 %v775, %v771
    %v968 = vpack.c.b16 %v776, %v772
    %v969 = vpack.c.b16 %v777, %v773
    %v970 = vpack.c.b16 %v782, %v778
    %v971 = vpack.c.b16 %v783, %v779
    %v972 = vpack.c.b16 %v784, %v780
    %v973 = vpack.c.b16 %v785, %v781
    %v974 = vpack.c.b16 %v790, %v786
    %v975 = vpack.c.b16 %v791, %v787
    %v976 = vpack.c.b16 %v792, %v788
    %v977 = vpack.c.b16 %v793, %v789
    %v978 = vpack.c.b16 %v798, %v794
    %v979 = vpack.c.b16 %v799, %v795
    %v980 = vpack.c.b16 %v800, %v796
    %v981 = vpack.c.b16 %v801, %v797
    %v982 = vpack.c.b16 %v806, %v802
    %v983 = vpack.c.b16 %v807, %v803
    %v984 = vpack.c.b16 %v808, %v804
    %v985 = vpack.c.b16 %v809, %v805
    %v986 = vpack.c.b16 %v814, %v810
    %v987 = vpack.c.b16 %v815, %v811
    %v988 = vpack.c.b16 %v816, %v812
    %v989 = vpack.c.b16 %v817, %v813
    %v990 = vpack.c.b16 %v822, %v818
    %v991 = vpack.c.b16 %v823, %v819
    %v992 = vpack.c.b16 %v824, %v820
    %v993 = vpack.c.b16 %v825, %v821
    %v994 = vpack.c.b16 %v830, %v826
    %v995 = vpack.c.b16 %v831, %v827
    %v996 = vpack.c.b16 %v832, %v828
    %v997 = vpack.c.b16 %v833, %v829
    %v998 = vpack.c.b16 %v838, %v834
    %v999 = vpack.c.b16 %v839, %v835
    %v1000 = vpack.c.b16 %v840, %v836
    %v1001 = vpack.c.b16 %v841, %v837
    %v1002 = vpack.c.b16 %v846, %v842
    %v1003 = vpack.c.b16 %v847, %v843
    %v1004 = vpack.c.b16 %v848, %v844
    %v1005 = vpack.c.b16 %v849, %v845
    %v1006 = vpack.c.b16 %v854, %v850
    %v1007 = vpack.c.b16 %v855, %v851
    %v1008 = vpack.c.b16 %v856, %v852
    %v1009 = vpack.c.b16 %v857, %v853
    %v1010 = vpack.c.b16 %v862, %v858
    %v1011 = vpack.c.b16 %v863, %v859
    %v1012 = vpack.c.b16 %v864, %v860
    %v1013 = vpack.c.b16 %v865, %v861
    %v1014 = vpack.c.b16 %v870, %v866
    %v1015 = vpack.c.b16 %v871, %v867
    %v1016 = vpack.c.b16 %v872, %v868
    %v1017 = vpack.c.b16 %v873, %v869
    %v1018 = vpack.c.b16 %v878, %v874
    %v1019 = vpack.c.b16 %v879, %v875
    %v1020 = vpack.c.b16 %v880, %v876
    %v1021 = vpack.c.b16 %v881, %v877
    %v1022 = vpack.c.b16 %v886, %v882
    %v1023 = vpack.c.b16 %v887, %v883
    %v1024 = vpack.c.b16 %v888, %v884
    %v1025 = vpack.c.b16 %v889, %v885
    %v1026 = vpack.c.b16 %v894, %v890
    %v1027 = vpack.c.b16 %v895, %v891
    %v1028 = vpack.c.b16 %v896, %v892
    %v1029 = vpack.c.b16 %v897, %v893
    %v1030 = vpack.c.b16 %v902, %v898
    %v1031 = vpack.c.b16 %v903, %v899
    %v1032 = vpack.c.b16 %v904, %v900
    %v1033 = vpack.c.b16 %v905, %v901
    %1162 = vmatprep.subr.bf16.mxu0 %v935
    %1163 = vmatpush1.bf16.msra.mxu0 %v934
    %1164 = vmatprep.subr.bf16.mxu0 %v931
    %1165 = vmatpush1.bf16.msra.mxu0 %v930
    %1166 = vmatprep.subr.bf16.mxu0 %v927
    %1167 = vmatpush1.bf16.msra.mxu0 %v926
    %1168 = vmatprep.subr.bf16.mxu0 %v923
    %1169 = vmatpush1.bf16.msra.mxu0 %v922
    %1170 = vmatprep.subr.bf16.mxu0 %v919
    %1171 = vmatpush1.bf16.msra.mxu0 %v918
    %1172 = vmatprep.subr.bf16.mxu0 %v915
    %1173 = vmatpush1.bf16.msra.mxu0 %v914
    %1174 = vmatprep.subr.bf16.mxu0 %v911
    %1175 = vmatpush1.bf16.msra.mxu0 %v910
    %1176 = vmatprep.subr.bf16.mxu0 %v907
    %1177 = vmatpush1.bf16.msra.mxu0 %v906
    %1178 = vmatprep.subr.bf16.mxu0 %v967
    %1179 = vmatpush2.bf16.msra.mxu0 %v966
    %1180 = vmatprep.subr.bf16.mxu0 %v963
    %1181 = vmatpush2.bf16.msra.mxu0 %v962
    %1182 = vmatprep.subr.bf16.mxu0 %v959
    %1183 = vmatpush2.bf16.msra.mxu0 %v958
    %1184 = vmatprep.subr.bf16.mxu0 %v955
    %1185 = vmatpush2.bf16.msra.mxu0 %v954
    %1186 = vmatprep.subr.bf16.mxu0 %v951
    %1187 = vmatpush2.bf16.msra.mxu0 %v950
    %1188 = vmatprep.subr.bf16.mxu0 %v947
    %1189 = vmatpush2.bf16.msra.mxu0 %v946
    %1190 = vmatprep.subr.bf16.mxu0 %v943
    %1191 = vmatpush2.bf16.msra.mxu0 %v942
    %1192 = vmatprep.subr.bf16.mxu0 %v939
    %1193 = vmatpush2.bf16.msra.mxu0 %v938
    %1194 = vmatprep.mubr.bf16.mxu0 %v369
    %1195 = vmatmul.mubr.bf16.gmra.mxu0 %v368
    %v1196 = vpop.f32.mrf.mxu0
    %v1197 = vadd.f32 %v505, %v1196
    %v1198 = vpop.f32.mrf.mxu0
    %v1199 = vadd.f32 %v509, %v1198
    %v1200 = vpop.f32.mrf.mxu0
    %v1201 = vpop.f32.mrf.mxu0
    %1202 = vdwg.mxu0
    %1203 = vmatprep.subr.bf16.mxu0 %v999
    %1204 = vmatpush1.bf16.msra.mxu0 %v998
    %1205 = vmatprep.subr.bf16.mxu0 %v995
    %1206 = vmatpush1.bf16.msra.mxu0 %v994
    %1207 = vmatprep.subr.bf16.mxu0 %v991
    %1208 = vmatpush1.bf16.msra.mxu0 %v990
    %1209 = vmatprep.subr.bf16.mxu0 %v987
    %1210 = vmatpush1.bf16.msra.mxu0 %v986
    %1211 = vmatprep.subr.bf16.mxu0 %v983
    %1212 = vmatpush1.bf16.msra.mxu0 %v982
    %1213 = vmatprep.subr.bf16.mxu0 %v979
    %1214 = vmatpush1.bf16.msra.mxu0 %v978
    %1215 = vmatprep.subr.bf16.mxu0 %v975
    %1216 = vmatpush1.bf16.msra.mxu0 %v974
    %1217 = vmatprep.subr.bf16.mxu0 %v971
    %1218 = vmatpush1.bf16.msra.mxu0 %v970
    %1219 = vmatprep.subr.bf16.mxu0 %v1031
    %1220 = vmatpush2.bf16.msra.mxu0 %v1030
    %1221 = vmatprep.subr.bf16.mxu0 %v1027
    %1222 = vmatpush2.bf16.msra.mxu0 %v1026
    %1223 = vmatprep.subr.bf16.mxu0 %v1023
    %1224 = vmatpush2.bf16.msra.mxu0 %v1022
    %1225 = vmatprep.subr.bf16.mxu0 %v1019
    %1226 = vmatpush2.bf16.msra.mxu0 %v1018
    %1227 = vmatprep.subr.bf16.mxu0 %v1015
    %1228 = vmatpush2.bf16.msra.mxu0 %v1014
    %1229 = vmatprep.subr.bf16.mxu0 %v1011
    %1230 = vmatpush2.bf16.msra.mxu0 %v1010
    %1231 = vmatprep.subr.bf16.mxu0 %v1007
    %1232 = vmatpush2.bf16.msra.mxu0 %v1006
    %1233 = vmatprep.subr.bf16.mxu0 %v1003
    %1234 = vmatpush2.bf16.msra.mxu0 %v1002
    %1235 = vmatprep.mubr.bf16.mxu0 %v371
    %1236 = vmatmul.mubr.bf16.gmra.mxu0 %v370
    %v1237 = vpop.f32.mrf.mxu0
    %v1238 = vadd.f32 %v1197, %v1237
    %v1239 = vpop.f32.mrf.mxu0
    %v1240 = vadd.f32 %v1199, %v1239
    %v1241 = vpop.f32.mrf.mxu0
    %v1242 = vpop.f32.mrf.mxu0
    %1243 = vdwg.mxu0
    %1244 = vmatprep.subr.bf16.mxu0 %v937
    %1245 = vmatpush1.bf16.msra.mxu0 %v936
    %1246 = vmatprep.subr.bf16.mxu0 %v933
    %1247 = vmatpush1.bf16.msra.mxu0 %v932
    %1248 = vmatprep.subr.bf16.mxu0 %v929
    %1249 = vmatpush1.bf16.msra.mxu0 %v928
    %1250 = vmatprep.subr.bf16.mxu0 %v925
    %1251 = vmatpush1.bf16.msra.mxu0 %v924
    %1252 = vmatprep.subr.bf16.mxu0 %v921
    %1253 = vmatpush1.bf16.msra.mxu0 %v920
    %1254 = vmatprep.subr.bf16.mxu0 %v917
    %1255 = vmatpush1.bf16.msra.mxu0 %v916
    %1256 = vmatprep.subr.bf16.mxu0 %v913
    %1257 = vmatpush1.bf16.msra.mxu0 %v912
    %1258 = vmatprep.subr.bf16.mxu0 %v909
    %1259 = vmatpush1.bf16.msra.mxu0 %v908
    %1260 = vmatprep.subr.bf16.mxu0 %v969
    %1261 = vmatpush2.bf16.msra.mxu0 %v968
    %1262 = vmatprep.subr.bf16.mxu0 %v965
    %1263 = vmatpush2.bf16.msra.mxu0 %v964
    %1264 = vmatprep.subr.bf16.mxu0 %v961
    %1265 = vmatpush2.bf16.msra.mxu0 %v960
    %1266 = vmatprep.subr.bf16.mxu0 %v957
    %1267 = vmatpush2.bf16.msra.mxu0 %v956
    %1268 = vmatprep.subr.bf16.mxu0 %v953
    %1269 = vmatpush2.bf16.msra.mxu0 %v952
    %1270 = vmatprep.subr.bf16.mxu0 %v949
    %1271 = vmatpush2.bf16.msra.mxu0 %v948
    %1272 = vmatprep.subr.bf16.mxu0 %v945
    %1273 = vmatpush2.bf16.msra.mxu0 %v944
    %1274 = vmatprep.subr.bf16.mxu0 %v941
    %1275 = vmatpush2.bf16.msra.mxu0 %v940
    %1276 = vmatprep.mubr.bf16.mxu0 %v369
    %1277 = vmatmul.mubr.bf16.gmra.mxu0 %v368
    %v1278 = vpop.f32.mrf.mxu0
    %v1279 = vadd.f32 %v513, %v1278
    %v1280 = vpop.f32.mrf.mxu0
    %v1281 = vadd.f32 %v517, %v1280
    %v1282 = vpop.f32.mrf.mxu0
    %v1283 = vpop.f32.mrf.mxu0
    %1284 = vdwg.mxu0
    %1285 = vmatprep.subr.bf16.mxu0 %v1001
    %1286 = vmatpush1.bf16.msra.mxu0 %v1000
    %1287 = vmatprep.subr.bf16.mxu0 %v997
    %1288 = vmatpush1.bf16.msra.mxu0 %v996
    %1289 = vmatprep.subr.bf16.mxu0 %v993
    %1290 = vmatpush1.bf16.msra.mxu0 %v992
    %1291 = vmatprep.subr.bf16.mxu0 %v989
    %1292 = vmatpush1.bf16.msra.mxu0 %v988
    %1293 = vmatprep.subr.bf16.mxu0 %v985
    %1294 = vmatpush1.bf16.msra.mxu0 %v984
    %1295 = vmatprep.subr.bf16.mxu0 %v981
    %1296 = vmatpush1.bf16.msra.mxu0 %v980
    %1297 = vmatprep.subr.bf16.mxu0 %v977
    %1298 = vmatpush1.bf16.msra.mxu0 %v976
    %1299 = vmatprep.subr.bf16.mxu0 %v973
    %1300 = vmatpush1.bf16.msra.mxu0 %v972
    %1301 = vmatprep.subr.bf16.mxu0 %v1033
    %1302 = vmatpush2.bf16.msra.mxu0 %v1032
    %1303 = vmatprep.subr.bf16.mxu0 %v1029
    %1304 = vmatpush2.bf16.msra.mxu0 %v1028
    %1305 = vmatprep.subr.bf16.mxu0 %v1025
    %1306 = vmatpush2.bf16.msra.mxu0 %v1024
    %1307 = vmatprep.subr.bf16.mxu0 %v1021
    %1308 = vmatpush2.bf16.msra.mxu0 %v1020
    %1309 = vmatprep.subr.bf16.mxu0 %v1017
    %1310 = vmatpush2.bf16.msra.mxu0 %v1016
    %1311 = vmatprep.subr.bf16.mxu0 %v1013
    %1312 = vmatpush2.bf16.msra.mxu0 %v1012
    %1313 = vmatprep.subr.bf16.mxu0 %v1009
    %1314 = vmatpush2.bf16.msra.mxu0 %v1008
    %1315 = vmatprep.subr.bf16.mxu0 %v1005
    %1316 = vmatpush2.bf16.msra.mxu0 %v1004
    %1317 = vmatprep.mubr.bf16.mxu0 %v371
    %1318 = vmatmul.mubr.bf16.gmra.mxu0 %v370
    %v1319 = vpop.f32.mrf.mxu0
    %v1320 = vadd.f32 %v1279, %v1319
    %v1321 = vpop.f32.mrf.mxu0
    %v1322 = vadd.f32 %v1281, %v1321
    %v1323 = vpop.f32.mrf.mxu0
    %v1324 = vpop.f32.mrf.mxu0
    %1325 = vdwg.mxu0
    %v1326 = vmax.f32 %v1238, 0.0
    %v1327 = vmax.f32 %v1240, 0.0
    %v1328 = vmax.f32 %v1320, 0.0
    %v1329 = vmax.f32 %v1322, 0.0
    %v1330 = vpack.c.bf16 %v1326, %v1326
    %v1331 = vpack.c.bf16 %v1327, %v1327
    %v1332 = vpack.c.bf16 %v1328, %v1328
    %v1333 = vpack.c.bf16 %v1329, %v1329
    %v1334 = vld [vmem:[#allocation10] sm:$0xff]
    %v1335 = vld [vmem:[#allocation10 + $0x8] sm:$0xff]
    %v1336 = vld [vmem:[#allocation10 + $0x10] sm:$0xff]
    %v1337 = vld [vmem:[#allocation10 + $0x18] sm:$0xff]
    %v1338 = vld [vmem:[#allocation10 + $0x20] sm:$0xff]
    %v1339 = vld [vmem:[#allocation10 + $0x28] sm:$0xff]
    %v1340 = vld [vmem:[#allocation10 + $0x30] sm:$0xff]
    %v1341 = vld [vmem:[#allocation10 + $0x38] sm:$0xff]
    %v1342 = vld [vmem:[#allocation10 + $0x40] sm:$0xff]
    %v1343 = vld [vmem:[#allocation10 + $0x48] sm:$0xff]
    %v1344 = vld [vmem:[#allocation10 + $0x50] sm:$0xff]
    %v1345 = vld [vmem:[#allocation10 + $0x58] sm:$0xff]
    %v1346 = vld [vmem:[#allocation10 + $0x60] sm:$0xff]
    %v1347 = vld [vmem:[#allocation10 + $0x68] sm:$0xff]
    %v1348 = vld [vmem:[#allocation10 + $0x70] sm:$0xff]
    %v1349 = vld [vmem:[#allocation10 + $0x78] sm:$0xff]
    %v1350 = vld [vmem:[#allocation10 + $0x80] sm:$0xff]
    %v1351 = vld [vmem:[#allocation10 + $0x88] sm:$0xff]
    %v1352 = vld [vmem:[#allocation10 + $0x90] sm:$0xff]
    %v1353 = vld [vmem:[#allocation10 + $0x98] sm:$0xff]
    %v1354 = vld [vmem:[#allocation10 + $0xa0] sm:$0xff]
    %v1355 = vld [vmem:[#allocation10 + $0xa8] sm:$0xff]
    %v1356 = vld [vmem:[#allocation10 + $0xb0] sm:$0xff]
    %v1357 = vld [vmem:[#allocation10 + $0xb8] sm:$0xff]
    %v1358 = vld [vmem:[#allocation10 + $0xc0] sm:$0xff]
    %v1359 = vld [vmem:[#allocation10 + $0xc8] sm:$0xff]
    %v1360 = vld [vmem:[#allocation10 + $0xd0] sm:$0xff]
    %v1361 = vld [vmem:[#allocation10 + $0xd8] sm:$0xff]
    %v1362 = vld [vmem:[#allocation10 + $0xe0] sm:$0xff]
    %v1363 = vld [vmem:[#allocation10 + $0xe8] sm:$0xff]
    %v1364 = vld [vmem:[#allocation10 + $0xf0] sm:$0xff]
    %v1365 = vld [vmem:[#allocation10 + $0xf8] sm:$0xff]
    %v1366 = vld [vmem:[#allocation10 + $0x100] sm:$0xff]
    %v1367 = vld [vmem:[#allocation10 + $0x108] sm:$0xff]
    %v1368 = vld [vmem:[#allocation10 + $0x110] sm:$0xff]
    %v1369 = vld [vmem:[#allocation10 + $0x118] sm:$0xff]
    %v1370 = vld [vmem:[#allocation10 + $0x120] sm:$0xff]
    %v1371 = vld [vmem:[#allocation10 + $0x128] sm:$0xff]
    %v1372 = vld [vmem:[#allocation10 + $0x130] sm:$0xff]
    %v1373 = vld [vmem:[#allocation10 + $0x138] sm:$0xff]
    %v1374 = vld [vmem:[#allocation10 + $0x140] sm:$0xff]
    %v1375 = vld [vmem:[#allocation10 + $0x148] sm:$0xff]
    %v1376 = vld [vmem:[#allocation10 + $0x150] sm:$0xff]
    %v1377 = vld [vmem:[#allocation10 + $0x158] sm:$0xff]
    %v1378 = vld [vmem:[#allocation10 + $0x160] sm:$0xff]
    %v1379 = vld [vmem:[#allocation10 + $0x168] sm:$0xff]
    %v1380 = vld [vmem:[#allocation10 + $0x170] sm:$0xff]
    %v1381 = vld [vmem:[#allocation10 + $0x178] sm:$0xff]
    %v1382 = vld [vmem:[#allocation10 + $0x180] sm:$0xff]
    %v1383 = vld [vmem:[#allocation10 + $0x188] sm:$0xff]
    %v1384 = vld [vmem:[#allocation10 + $0x190] sm:$0xff]
    %v1385 = vld [vmem:[#allocation10 + $0x198] sm:$0xff]
    %v1386 = vld [vmem:[#allocation10 + $0x1a0] sm:$0xff]
    %v1387 = vld [vmem:[#allocation10 + $0x1a8] sm:$0xff]
    %v1388 = vld [vmem:[#allocation10 + $0x1b0] sm:$0xff]
    %v1389 = vld [vmem:[#allocation10 + $0x1b8] sm:$0xff]
    %v1390 = vld [vmem:[#allocation10 + $0x1c0] sm:$0xff]
    %v1391 = vld [vmem:[#allocation10 + $0x1c8] sm:$0xff]
    %v1392 = vld [vmem:[#allocation10 + $0x1d0] sm:$0xff]
    %v1393 = vld [vmem:[#allocation10 + $0x1d8] sm:$0xff]
    %v1394 = vld [vmem:[#allocation10 + $0x1e0] sm:$0xff]
    %v1395 = vld [vmem:[#allocation10 + $0x1e8] sm:$0xff]
    %v1396 = vld [vmem:[#allocation10 + $0x1f0] sm:$0xff]
    %v1397 = vld [vmem:[#allocation10 + $0x1f8] sm:$0xff]
    %v1398 = vld [vmem:[#allocation10 + $0x200] sm:$0xff]
    %v1399 = vld [vmem:[#allocation10 + $0x208] sm:$0xff]
    %v1400 = vld [vmem:[#allocation10 + $0x210] sm:$0xff]
    %v1401 = vld [vmem:[#allocation10 + $0x218] sm:$0xff]
    %v1402 = vld [vmem:[#allocation10 + $0x220] sm:$0xff]
    %v1403 = vld [vmem:[#allocation10 + $0x228] sm:$0xff]
    %v1404 = vld [vmem:[#allocation10 + $0x230] sm:$0xff]
    %v1405 = vld [vmem:[#allocation10 + $0x238] sm:$0xff]
    %v1406 = vld [vmem:[#allocation10 + $0x240] sm:$0xff]
    %v1407 = vld [vmem:[#allocation10 + $0x248] sm:$0xff]
    %v1408 = vld [vmem:[#allocation10 + $0x250] sm:$0xff]
    %v1409 = vld [vmem:[#allocation10 + $0x258] sm:$0xff]
    %v1410 = vld [vmem:[#allocation10 + $0x260] sm:$0xff]
    %v1411 = vld [vmem:[#allocation10 + $0x268] sm:$0xff]
    %v1412 = vld [vmem:[#allocation10 + $0x270] sm:$0xff]
    %v1413 = vld [vmem:[#allocation10 + $0x278] sm:$0xff]
    %v1414 = vld [vmem:[#allocation10 + $0x280] sm:$0xff]
    %v1415 = vld [vmem:[#allocation10 + $0x288] sm:$0xff]
    %v1416 = vld [vmem:[#allocation10 + $0x290] sm:$0xff]
    %v1417 = vld [vmem:[#allocation10 + $0x298] sm:$0xff]
    %v1418 = vld [vmem:[#allocation10 + $0x2a0] sm:$0xff]
    %v1419 = vld [vmem:[#allocation10 + $0x2a8] sm:$0xff]
    %v1420 = vld [vmem:[#allocation10 + $0x2b0] sm:$0xff]
    %v1421 = vld [vmem:[#allocation10 + $0x2b8] sm:$0xff]
    %v1422 = vld [vmem:[#allocation10 + $0x2c0] sm:$0xff]
    %v1423 = vld [vmem:[#allocation10 + $0x2c8] sm:$0xff]
    %v1424 = vld [vmem:[#allocation10 + $0x2d0] sm:$0xff]
    %v1425 = vld [vmem:[#allocation10 + $0x2d8] sm:$0xff]
    %v1426 = vld [vmem:[#allocation10 + $0x2e0] sm:$0xff]
    %v1427 = vld [vmem:[#allocation10 + $0x2e8] sm:$0xff]
    %v1428 = vld [vmem:[#allocation10 + $0x2f0] sm:$0xff]
    %v1429 = vld [vmem:[#allocation10 + $0x2f8] sm:$0xff]
    %v1430 = vld [vmem:[#allocation10 + $0x300] sm:$0xff]
    %v1431 = vld [vmem:[#allocation10 + $0x308] sm:$0xff]
    %v1432 = vld [vmem:[#allocation10 + $0x310] sm:$0xff]
    %v1433 = vld [vmem:[#allocation10 + $0x318] sm:$0xff]
    %v1434 = vld [vmem:[#allocation10 + $0x320] sm:$0xff]
    %v1435 = vld [vmem:[#allocation10 + $0x328] sm:$0xff]
    %v1436 = vld [vmem:[#allocation10 + $0x330] sm:$0xff]
    %v1437 = vld [vmem:[#allocation10 + $0x338] sm:$0xff]
    %v1438 = vld [vmem:[#allocation10 + $0x340] sm:$0xff]
    %v1439 = vld [vmem:[#allocation10 + $0x348] sm:$0xff]
    %v1440 = vld [vmem:[#allocation10 + $0x350] sm:$0xff]
    %v1441 = vld [vmem:[#allocation10 + $0x358] sm:$0xff]
    %v1442 = vld [vmem:[#allocation10 + $0x360] sm:$0xff]
    %v1443 = vld [vmem:[#allocation10 + $0x368] sm:$0xff]
    %v1444 = vld [vmem:[#allocation10 + $0x370] sm:$0xff]
    %v1445 = vld [vmem:[#allocation10 + $0x378] sm:$0xff]
    %v1446 = vld [vmem:[#allocation10 + $0x380] sm:$0xff]
    %v1447 = vld [vmem:[#allocation10 + $0x388] sm:$0xff]
    %v1448 = vld [vmem:[#allocation10 + $0x390] sm:$0xff]
    %v1449 = vld [vmem:[#allocation10 + $0x398] sm:$0xff]
    %v1450 = vld [vmem:[#allocation10 + $0x3a0] sm:$0xff]
    %v1451 = vld [vmem:[#allocation10 + $0x3a8] sm:$0xff]
    %v1452 = vld [vmem:[#allocation10 + $0x3b0] sm:$0xff]
    %v1453 = vld [vmem:[#allocation10 + $0x3b8] sm:$0xff]
    %v1454 = vld [vmem:[#allocation10 + $0x3c0] sm:$0xff]
    %v1455 = vld [vmem:[#allocation10 + $0x3c8] sm:$0xff]
    %v1456 = vld [vmem:[#allocation10 + $0x3d0] sm:$0xff]
    %v1457 = vld [vmem:[#allocation10 + $0x3d8] sm:$0xff]
    %v1458 = vld [vmem:[#allocation10 + $0x3e0] sm:$0xff]
    %v1459 = vld [vmem:[#allocation10 + $0x3e8] sm:$0xff]
    %v1460 = vld [vmem:[#allocation10 + $0x3f0] sm:$0xff]
    %v1461 = vld [vmem:[#allocation10 + $0x3f8] sm:$0xff]
    %v1462 = vld [vmem:[#allocation11] sm:$0xf]
    %v1464 = vlaneseq
    %v1465 = vshrl.u32 %v1464, 7
    %v1466 = vsub.s32 0, %v1465
    %v1467 = vrot.slane %v1462, %v1466
    %v1468 = vlaneseq
    %v1469 = vshrl.u32 %v1468, 7
    %v1470 = vsub.s32 1, %v1469
    %v1471 = vrot.slane %v1462, %v1470
    %v1472 = vlaneseq
    %v1473 = vshrl.u32 %v1472, 7
    %v1474 = vsub.s32 2, %v1473
    %v1475 = vrot.slane %v1462, %v1474
    %v1476 = vlaneseq
    %v1477 = vshrl.u32 %v1476, 7
    %v1478 = vsub.s32 3, %v1477
    %v1479 = vrot.slane %v1462, %v1478
    %v1612 = vunpack.c.l.b16 %v1334
    %v1613 = vunpack.c.h.b16 %v1334
    %v1614 = vunpack.c.l.b16 %v1335
    %v1615 = vunpack.c.h.b16 %v1335
    %v1616 = vunpack.c.l.b16 %v1336
    %v1617 = vunpack.c.h.b16 %v1336
    %v1618 = vunpack.c.l.b16 %v1337
    %v1619 = vunpack.c.h.b16 %v1337
    %v1620 = vunpack.c.l.b16 %v1338
    %v1621 = vunpack.c.h.b16 %v1338
    %v1622 = vunpack.c.l.b16 %v1339
    %v1623 = vunpack.c.h.b16 %v1339
    %v1624 = vunpack.c.l.b16 %v1340
    %v1625 = vunpack.c.h.b16 %v1340
    %v1626 = vunpack.c.l.b16 %v1341
    %v1627 = vunpack.c.h.b16 %v1341
    %v1628 = vunpack.c.l.b16 %v1342
    %v1629 = vunpack.c.h.b16 %v1342
    %v1630 = vunpack.c.l.b16 %v1343
    %v1631 = vunpack.c.h.b16 %v1343
    %v1632 = vunpack.c.l.b16 %v1344
    %v1633 = vunpack.c.h.b16 %v1344
    %v1634 = vunpack.c.l.b16 %v1345
    %v1635 = vunpack.c.h.b16 %v1345
    %v1636 = vunpack.c.l.b16 %v1346
    %v1637 = vunpack.c.h.b16 %v1346
    %v1638 = vunpack.c.l.b16 %v1347
    %v1639 = vunpack.c.h.b16 %v1347
    %v1640 = vunpack.c.l.b16 %v1348
    %v1641 = vunpack.c.h.b16 %v1348
    %v1642 = vunpack.c.l.b16 %v1349
    %v1643 = vunpack.c.h.b16 %v1349
    %v1644 = vunpack.c.l.b16 %v1350
    %v1645 = vunpack.c.h.b16 %v1350
    %v1646 = vunpack.c.l.b16 %v1351
    %v1647 = vunpack.c.h.b16 %v1351
    %v1648 = vunpack.c.l.b16 %v1352
    %v1649 = vunpack.c.h.b16 %v1352
    %v1650 = vunpack.c.l.b16 %v1353
    %v1651 = vunpack.c.h.b16 %v1353
    %v1652 = vunpack.c.l.b16 %v1354
    %v1653 = vunpack.c.h.b16 %v1354
    %v1654 = vunpack.c.l.b16 %v1355
    %v1655 = vunpack.c.h.b16 %v1355
    %v1656 = vunpack.c.l.b16 %v1356
    %v1657 = vunpack.c.h.b16 %v1356
    %v1658 = vunpack.c.l.b16 %v1357
    %v1659 = vunpack.c.h.b16 %v1357
    %v1660 = vunpack.c.l.b16 %v1358
    %v1661 = vunpack.c.h.b16 %v1358
    %v1662 = vunpack.c.l.b16 %v1359
    %v1663 = vunpack.c.h.b16 %v1359
    %v1664 = vunpack.c.l.b16 %v1360
    %v1665 = vunpack.c.h.b16 %v1360
    %v1666 = vunpack.c.l.b16 %v1361
    %v1667 = vunpack.c.h.b16 %v1361
    %v1668 = vunpack.c.l.b16 %v1362
    %v1669 = vunpack.c.h.b16 %v1362
    %v1670 = vunpack.c.l.b16 %v1363
    %v1671 = vunpack.c.h.b16 %v1363
    %v1672 = vunpack.c.l.b16 %v1364
    %v1673 = vunpack.c.h.b16 %v1364
    %v1674 = vunpack.c.l.b16 %v1365
    %v1675 = vunpack.c.h.b16 %v1365
    %v1676 = vunpack.c.l.b16 %v1366
    %v1677 = vunpack.c.h.b16 %v1366
    %v1678 = vunpack.c.l.b16 %v1367
    %v1679 = vunpack.c.h.b16 %v1367
    %v1680 = vunpack.c.l.b16 %v1368
    %v1681 = vunpack.c.h.b16 %v1368
    %v1682 = vunpack.c.l.b16 %v1369
    %v1683 = vunpack.c.h.b16 %v1369
    %v1684 = vunpack.c.l.b16 %v1370
    %v1685 = vunpack.c.h.b16 %v1370
    %v1686 = vunpack.c.l.b16 %v1371
    %v1687 = vunpack.c.h.b16 %v1371
    %v1688 = vunpack.c.l.b16 %v1372
    %v1689 = vunpack.c.h.b16 %v1372
    %v1690 = vunpack.c.l.b16 %v1373
    %v1691 = vunpack.c.h.b16 %v1373
    %v1692 = vunpack.c.l.b16 %v1374
    %v1693 = vunpack.c.h.b16 %v1374
    %v1694 = vunpack.c.l.b16 %v1375
    %v1695 = vunpack.c.h.b16 %v1375
    %v1696 = vunpack.c.l.b16 %v1376
    %v1697 = vunpack.c.h.b16 %v1376
    %v1698 = vunpack.c.l.b16 %v1377
    %v1699 = vunpack.c.h.b16 %v1377
    %v1700 = vunpack.c.l.b16 %v1378
    %v1701 = vunpack.c.h.b16 %v1378
    %v1702 = vunpack.c.l.b16 %v1379
    %v1703 = vunpack.c.h.b16 %v1379
    %v1704 = vunpack.c.l.b16 %v1380
    %v1705 = vunpack.c.h.b16 %v1380
    %v1706 = vunpack.c.l.b16 %v1381
    %v1707 = vunpack.c.h.b16 %v1381
    %v1708 = vunpack.c.l.b16 %v1382
    %v1709 = vunpack.c.h.b16 %v1382
    %v1710 = vunpack.c.l.b16 %v1383
    %v1711 = vunpack.c.h.b16 %v1383
    %v1712 = vunpack.c.l.b16 %v1384
    %v1713 = vunpack.c.h.b16 %v1384
    %v1714 = vunpack.c.l.b16 %v1385
    %v1715 = vunpack.c.h.b16 %v1385
    %v1716 = vunpack.c.l.b16 %v1386
    %v1717 = vunpack.c.h.b16 %v1386
    %v1718 = vunpack.c.l.b16 %v1387
    %v1719 = vunpack.c.h.b16 %v1387
    %v1720 = vunpack.c.l.b16 %v1388
    %v1721 = vunpack.c.h.b16 %v1388
    %v1722 = vunpack.c.l.b16 %v1389
    %v1723 = vunpack.c.h.b16 %v1389
    %v1724 = vunpack.c.l.b16 %v1390
    %v1725 = vunpack.c.h.b16 %v1390
    %v1726 = vunpack.c.l.b16 %v1391
    %v1727 = vunpack.c.h.b16 %v1391
    %v1728 = vunpack.c.l.b16 %v1392
    %v1729 = vunpack.c.h.b16 %v1392
    %v1730 = vunpack.c.l.b16 %v1393
    %v1731 = vunpack.c.h.b16 %v1393
    %v1732 = vunpack.c.l.b16 %v1394
    %v1733 = vunpack.c.h.b16 %v1394
    %v1734 = vunpack.c.l.b16 %v1395
    %v1735 = vunpack.c.h.b16 %v1395
    %v1736 = vunpack.c.l.b16 %v1396
    %v1737 = vunpack.c.h.b16 %v1396
    %v1738 = vunpack.c.l.b16 %v1397
    %v1739 = vunpack.c.h.b16 %v1397
    %v1740 = vunpack.c.l.b16 %v1398
    %v1741 = vunpack.c.h.b16 %v1398
    %v1742 = vunpack.c.l.b16 %v1399
    %v1743 = vunpack.c.h.b16 %v1399
    %v1744 = vunpack.c.l.b16 %v1400
    %v1745 = vunpack.c.h.b16 %v1400
    %v1746 = vunpack.c.l.b16 %v1401
    %v1747 = vunpack.c.h.b16 %v1401
    %v1748 = vunpack.c.l.b16 %v1402
    %v1749 = vunpack.c.h.b16 %v1402
    %v1750 = vunpack.c.l.b16 %v1403
    %v1751 = vunpack.c.h.b16 %v1403
    %v1752 = vunpack.c.l.b16 %v1404
    %v1753 = vunpack.c.h.b16 %v1404
    %v1754 = vunpack.c.l.b16 %v1405
    %v1755 = vunpack.c.h.b16 %v1405
    %v1756 = vunpack.c.l.b16 %v1406
    %v1757 = vunpack.c.h.b16 %v1406
    %v1758 = vunpack.c.l.b16 %v1407
    %v1759 = vunpack.c.h.b16 %v1407
    %v1760 = vunpack.c.l.b16 %v1408
    %v1761 = vunpack.c.h.b16 %v1408
    %v1762 = vunpack.c.l.b16 %v1409
    %v1763 = vunpack.c.h.b16 %v1409
    %v1764 = vunpack.c.l.b16 %v1410
    %v1765 = vunpack.c.h.b16 %v1410
    %v1766 = vunpack.c.l.b16 %v1411
    %v1767 = vunpack.c.h.b16 %v1411
    %v1768 = vunpack.c.l.b16 %v1412
    %v1769 = vunpack.c.h.b16 %v1412
    %v1770 = vunpack.c.l.b16 %v1413
    %v1771 = vunpack.c.h.b16 %v1413
    %v1772 = vunpack.c.l.b16 %v1414
    %v1773 = vunpack.c.h.b16 %v1414
    %v1774 = vunpack.c.l.b16 %v1415
    %v1775 = vunpack.c.h.b16 %v1415
    %v1776 = vunpack.c.l.b16 %v1416
    %v1777 = vunpack.c.h.b16 %v1416
    %v1778 = vunpack.c.l.b16 %v1417
    %v1779 = vunpack.c.h.b16 %v1417
    %v1780 = vunpack.c.l.b16 %v1418
    %v1781 = vunpack.c.h.b16 %v1418
    %v1782 = vunpack.c.l.b16 %v1419
    %v1783 = vunpack.c.h.b16 %v1419
    %v1784 = vunpack.c.l.b16 %v1420
    %v1785 = vunpack.c.h.b16 %v1420
    %v1786 = vunpack.c.l.b16 %v1421
    %v1787 = vunpack.c.h.b16 %v1421
    %v1788 = vunpack.c.l.b16 %v1422
    %v1789 = vunpack.c.h.b16 %v1422
    %v1790 = vunpack.c.l.b16 %v1423
    %v1791 = vunpack.c.h.b16 %v1423
    %v1792 = vunpack.c.l.b16 %v1424
    %v1793 = vunpack.c.h.b16 %v1424
    %v1794 = vunpack.c.l.b16 %v1425
    %v1795 = vunpack.c.h.b16 %v1425
    %v1796 = vunpack.c.l.b16 %v1426
    %v1797 = vunpack.c.h.b16 %v1426
    %v1798 = vunpack.c.l.b16 %v1427
    %v1799 = vunpack.c.h.b16 %v1427
    %v1800 = vunpack.c.l.b16 %v1428
    %v1801 = vunpack.c.h.b16 %v1428
    %v1802 = vunpack.c.l.b16 %v1429
    %v1803 = vunpack.c.h.b16 %v1429
    %v1804 = vunpack.c.l.b16 %v1430
    %v1805 = vunpack.c.h.b16 %v1430
    %v1806 = vunpack.c.l.b16 %v1431
    %v1807 = vunpack.c.h.b16 %v1431
    %v1808 = vunpack.c.l.b16 %v1432
    %v1809 = vunpack.c.h.b16 %v1432
    %v1810 = vunpack.c.l.b16 %v1433
    %v1811 = vunpack.c.h.b16 %v1433
    %v1812 = vunpack.c.l.b16 %v1434
    %v1813 = vunpack.c.h.b16 %v1434
    %v1814 = vunpack.c.l.b16 %v1435
    %v1815 = vunpack.c.h.b16 %v1435
    %v1816 = vunpack.c.l.b16 %v1436
    %v1817 = vunpack.c.h.b16 %v1436
    %v1818 = vunpack.c.l.b16 %v1437
    %v1819 = vunpack.c.h.b16 %v1437
    %v1820 = vunpack.c.l.b16 %v1438
    %v1821 = vunpack.c.h.b16 %v1438
    %v1822 = vunpack.c.l.b16 %v1439
    %v1823 = vunpack.c.h.b16 %v1439
    %v1824 = vunpack.c.l.b16 %v1440
    %v1825 = vunpack.c.h.b16 %v1440
    %v1826 = vunpack.c.l.b16 %v1441
    %v1827 = vunpack.c.h.b16 %v1441
    %v1828 = vunpack.c.l.b16 %v1442
    %v1829 = vunpack.c.h.b16 %v1442
    %v1830 = vunpack.c.l.b16 %v1443
    %v1831 = vunpack.c.h.b16 %v1443
    %v1832 = vunpack.c.l.b16 %v1444
    %v1833 = vunpack.c.h.b16 %v1444
    %v1834 = vunpack.c.l.b16 %v1445
    %v1835 = vunpack.c.h.b16 %v1445
    %v1836 = vunpack.c.l.b16 %v1446
    %v1837 = vunpack.c.h.b16 %v1446
    %v1838 = vunpack.c.l.b16 %v1447
    %v1839 = vunpack.c.h.b16 %v1447
    %v1840 = vunpack.c.l.b16 %v1448
    %v1841 = vunpack.c.h.b16 %v1448
    %v1842 = vunpack.c.l.b16 %v1449
    %v1843 = vunpack.c.h.b16 %v1449
    %v1844 = vunpack.c.l.b16 %v1450
    %v1845 = vunpack.c.h.b16 %v1450
    %v1846 = vunpack.c.l.b16 %v1451
    %v1847 = vunpack.c.h.b16 %v1451
    %v1848 = vunpack.c.l.b16 %v1452
    %v1849 = vunpack.c.h.b16 %v1452
    %v1850 = vunpack.c.l.b16 %v1453
    %v1851 = vunpack.c.h.b16 %v1453
    %v1852 = vunpack.c.l.b16 %v1454
    %v1853 = vunpack.c.h.b16 %v1454
    %v1854 = vunpack.c.l.b16 %v1455
    %v1855 = vunpack.c.h.b16 %v1455
    %v1856 = vunpack.c.l.b16 %v1456
    %v1857 = vunpack.c.h.b16 %v1456
    %v1858 = vunpack.c.l.b16 %v1457
    %v1859 = vunpack.c.h.b16 %v1457
    %v1860 = vunpack.c.l.b16 %v1458
    %v1861 = vunpack.c.h.b16 %v1458
    %v1862 = vunpack.c.l.b16 %v1459
    %v1863 = vunpack.c.h.b16 %v1459
    %v1864 = vunpack.c.l.b16 %v1460
    %v1865 = vunpack.c.h.b16 %v1460
    %v1866 = vunpack.c.l.b16 %v1461
    %v1867 = vunpack.c.h.b16 %v1461
    %v1868 = vpack.c.b16 %v1616, %v1612
    %v1869 = vpack.c.b16 %v1617, %v1613
    %v1870 = vpack.c.b16 %v1618, %v1614
    %v1871 = vpack.c.b16 %v1619, %v1615
    %v1872 = vpack.c.b16 %v1624, %v1620
    %v1873 = vpack.c.b16 %v1625, %v1621
    %v1874 = vpack.c.b16 %v1626, %v1622
    %v1875 = vpack.c.b16 %v1627, %v1623
    %v1876 = vpack.c.b16 %v1632, %v1628
    %v1877 = vpack.c.b16 %v1633, %v1629
    %v1878 = vpack.c.b16 %v1634, %v1630
    %v1879 = vpack.c.b16 %v1635, %v1631
    %v1880 = vpack.c.b16 %v1640, %v1636
    %v1881 = vpack.c.b16 %v1641, %v1637
    %v1882 = vpack.c.b16 %v1642, %v1638
    %v1883 = vpack.c.b16 %v1643, %v1639
    %v1884 = vpack.c.b16 %v1648, %v1644
    %v1885 = vpack.c.b16 %v1649, %v1645
    %v1886 = vpack.c.b16 %v1650, %v1646
    %v1887 = vpack.c.b16 %v1651, %v1647
    %v1888 = vpack.c.b16 %v1656, %v1652
    %v1889 = vpack.c.b16 %v1657, %v1653
    %v1890 = vpack.c.b16 %v1658, %v1654
    %v1891 = vpack.c.b16 %v1659, %v1655
    %v1892 = vpack.c.b16 %v1664, %v1660
    %v1893 = vpack.c.b16 %v1665, %v1661
    %v1894 = vpack.c.b16 %v1666, %v1662
    %v1895 = vpack.c.b16 %v1667, %v1663
    %v1896 = vpack.c.b16 %v1672, %v1668
    %v1897 = vpack.c.b16 %v1673, %v1669
    %v1898 = vpack.c.b16 %v1674, %v1670
    %v1899 = vpack.c.b16 %v1675, %v1671
    %v1900 = vpack.c.b16 %v1680, %v1676
    %v1901 = vpack.c.b16 %v1681, %v1677
    %v1902 = vpack.c.b16 %v1682, %v1678
    %v1903 = vpack.c.b16 %v1683, %v1679
    %v1904 = vpack.c.b16 %v1688, %v1684
    %v1905 = vpack.c.b16 %v1689, %v1685
    %v1906 = vpack.c.b16 %v1690, %v1686
    %v1907 = vpack.c.b16 %v1691, %v1687
    %v1908 = vpack.c.b16 %v1696, %v1692
    %v1909 = vpack.c.b16 %v1697, %v1693
    %v1910 = vpack.c.b16 %v1698, %v1694
    %v1911 = vpack.c.b16 %v1699, %v1695
    %v1912 = vpack.c.b16 %v1704, %v1700
    %v1913 = vpack.c.b16 %v1705, %v1701
    %v1914 = vpack.c.b16 %v1706, %v1702
    %v1915 = vpack.c.b16 %v1707, %v1703
    %v1916 = vpack.c.b16 %v1712, %v1708
    %v1917 = vpack.c.b16 %v1713, %v1709
    %v1918 = vpack.c.b16 %v1714, %v1710
    %v1919 = vpack.c.b16 %v1715, %v1711
    %v1920 = vpack.c.b16 %v1720, %v1716
    %v1921 = vpack.c.b16 %v1721, %v1717
    %v1922 = vpack.c.b16 %v1722, %v1718
    %v1923 = vpack.c.b16 %v1723, %v1719
    %v1924 = vpack.c.b16 %v1728, %v1724
    %v1925 = vpack.c.b16 %v1729, %v1725
    %v1926 = vpack.c.b16 %v1730, %v1726
    %v1927 = vpack.c.b16 %v1731, %v1727
    %v1928 = vpack.c.b16 %v1736, %v1732
    %v1929 = vpack.c.b16 %v1737, %v1733
    %v1930 = vpack.c.b16 %v1738, %v1734
    %v1931 = vpack.c.b16 %v1739, %v1735
    %v1932 = vpack.c.b16 %v1744, %v1740
    %v1933 = vpack.c.b16 %v1745, %v1741
    %v1934 = vpack.c.b16 %v1746, %v1742
    %v1935 = vpack.c.b16 %v1747, %v1743
    %v1936 = vpack.c.b16 %v1752, %v1748
    %v1937 = vpack.c.b16 %v1753, %v1749
    %v1938 = vpack.c.b16 %v1754, %v1750
    %v1939 = vpack.c.b16 %v1755, %v1751
    %v1940 = vpack.c.b16 %v1760, %v1756
    %v1941 = vpack.c.b16 %v1761, %v1757
    %v1942 = vpack.c.b16 %v1762, %v1758
    %v1943 = vpack.c.b16 %v1763, %v1759
    %v1944 = vpack.c.b16 %v1768, %v1764
    %v1945 = vpack.c.b16 %v1769, %v1765
    %v1946 = vpack.c.b16 %v1770, %v1766
    %v1947 = vpack.c.b16 %v1771, %v1767
    %v1948 = vpack.c.b16 %v1776, %v1772
    %v1949 = vpack.c.b16 %v1777, %v1773
    %v1950 = vpack.c.b16 %v1778, %v1774
    %v1951 = vpack.c.b16 %v1779, %v1775
    %v1952 = vpack.c.b16 %v1784, %v1780
    %v1953 = vpack.c.b16 %v1785, %v1781
    %v1954 = vpack.c.b16 %v1786, %v1782
    %v1955 = vpack.c.b16 %v1787, %v1783
    %v1956 = vpack.c.b16 %v1792, %v1788
    %v1957 = vpack.c.b16 %v1793, %v1789
    %v1958 = vpack.c.b16 %v1794, %v1790
    %v1959 = vpack.c.b16 %v1795, %v1791
    %v1960 = vpack.c.b16 %v1800, %v1796
    %v1961 = vpack.c.b16 %v1801, %v1797
    %v1962 = vpack.c.b16 %v1802, %v1798
    %v1963 = vpack.c.b16 %v1803, %v1799
    %v1964 = vpack.c.b16 %v1808, %v1804
    %v1965 = vpack.c.b16 %v1809, %v1805
    %v1966 = vpack.c.b16 %v1810, %v1806
    %v1967 = vpack.c.b16 %v1811, %v1807
    %v1968 = vpack.c.b16 %v1816, %v1812
    %v1969 = vpack.c.b16 %v1817, %v1813
    %v1970 = vpack.c.b16 %v1818, %v1814
    %v1971 = vpack.c.b16 %v1819, %v1815
    %v1972 = vpack.c.b16 %v1824, %v1820
    %v1973 = vpack.c.b16 %v1825, %v1821
    %v1974 = vpack.c.b16 %v1826, %v1822
    %v1975 = vpack.c.b16 %v1827, %v1823
    %v1976 = vpack.c.b16 %v1832, %v1828
    %v1977 = vpack.c.b16 %v1833, %v1829
    %v1978 = vpack.c.b16 %v1834, %v1830
    %v1979 = vpack.c.b16 %v1835, %v1831
    %v1980 = vpack.c.b16 %v1840, %v1836
    %v1981 = vpack.c.b16 %v1841, %v1837
    %v1982 = vpack.c.b16 %v1842, %v1838
    %v1983 = vpack.c.b16 %v1843, %v1839
    %v1984 = vpack.c.b16 %v1848, %v1844
    %v1985 = vpack.c.b16 %v1849, %v1845
    %v1986 = vpack.c.b16 %v1850, %v1846
    %v1987 = vpack.c.b16 %v1851, %v1847
    %v1988 = vpack.c.b16 %v1856, %v1852
    %v1989 = vpack.c.b16 %v1857, %v1853
    %v1990 = vpack.c.b16 %v1858, %v1854
    %v1991 = vpack.c.b16 %v1859, %v1855
    %v1992 = vpack.c.b16 %v1864, %v1860
    %v1993 = vpack.c.b16 %v1865, %v1861
    %v1994 = vpack.c.b16 %v1866, %v1862
    %v1995 = vpack.c.b16 %v1867, %v1863
    %2124 = vmatprep.subr.bf16.mxu0 %v1897
    %2125 = vmatpush1.bf16.msra.mxu0 %v1896
    %2126 = vmatprep.subr.bf16.mxu0 %v1893
    %2127 = vmatpush1.bf16.msra.mxu0 %v1892
    %2128 = vmatprep.subr.bf16.mxu0 %v1889
    %2129 = vmatpush1.bf16.msra.mxu0 %v1888
    %2130 = vmatprep.subr.bf16.mxu0 %v1885
    %2131 = vmatpush1.bf16.msra.mxu0 %v1884
    %2132 = vmatprep.subr.bf16.mxu0 %v1881
    %2133 = vmatpush1.bf16.msra.mxu0 %v1880
    %2134 = vmatprep.subr.bf16.mxu0 %v1877
    %2135 = vmatpush1.bf16.msra.mxu0 %v1876
    %2136 = vmatprep.subr.bf16.mxu0 %v1873
    %2137 = vmatpush1.bf16.msra.mxu0 %v1872
    %2138 = vmatprep.subr.bf16.mxu0 %v1869
    %2139 = vmatpush1.bf16.msra.mxu0 %v1868
    %2140 = vmatprep.subr.bf16.mxu0 %v1929
    %2141 = vmatpush2.bf16.msra.mxu0 %v1928
    %2142 = vmatprep.subr.bf16.mxu0 %v1925
    %2143 = vmatpush2.bf16.msra.mxu0 %v1924
    %2144 = vmatprep.subr.bf16.mxu0 %v1921
    %2145 = vmatpush2.bf16.msra.mxu0 %v1920
    %2146 = vmatprep.subr.bf16.mxu0 %v1917
    %2147 = vmatpush2.bf16.msra.mxu0 %v1916
    %2148 = vmatprep.subr.bf16.mxu0 %v1913
    %2149 = vmatpush2.bf16.msra.mxu0 %v1912
    %2150 = vmatprep.subr.bf16.mxu0 %v1909
    %2151 = vmatpush2.bf16.msra.mxu0 %v1908
    %2152 = vmatprep.subr.bf16.mxu0 %v1905
    %2153 = vmatpush2.bf16.msra.mxu0 %v1904
    %2154 = vmatprep.subr.bf16.mxu0 %v1901
    %2155 = vmatpush2.bf16.msra.mxu0 %v1900
    %2156 = vmatprep.mubr.bf16.mxu0 %v1331
    %2157 = vmatmul.mubr.bf16.gmra.mxu0 %v1330
    %v2158 = vpop.f32.mrf.mxu0
    %v2159 = vadd.f32 %v1467, %v2158
    %v2160 = vpop.f32.mrf.mxu0
    %v2161 = vadd.f32 %v1471, %v2160
    %v2162 = vpop.f32.mrf.mxu0
    %v2163 = vpop.f32.mrf.mxu0
    %2164 = vdwg.mxu0
    %2165 = vmatprep.subr.bf16.mxu0 %v1961
    %2166 = vmatpush1.bf16.msra.mxu0 %v1960
    %2167 = vmatprep.subr.bf16.mxu0 %v1957
    %2168 = vmatpush1.bf16.msra.mxu0 %v1956
    %2169 = vmatprep.subr.bf16.mxu0 %v1953
    %2170 = vmatpush1.bf16.msra.mxu0 %v1952
    %2171 = vmatprep.subr.bf16.mxu0 %v1949
    %2172 = vmatpush1.bf16.msra.mxu0 %v1948
    %2173 = vmatprep.subr.bf16.mxu0 %v1945
    %2174 = vmatpush1.bf16.msra.mxu0 %v1944
    %2175 = vmatprep.subr.bf16.mxu0 %v1941
    %2176 = vmatpush1.bf16.msra.mxu0 %v1940
    %2177 = vmatprep.subr.bf16.mxu0 %v1937
    %2178 = vmatpush1.bf16.msra.mxu0 %v1936
    %2179 = vmatprep.subr.bf16.mxu0 %v1933
    %2180 = vmatpush1.bf16.msra.mxu0 %v1932
    %2181 = vmatprep.subr.bf16.mxu0 %v1993
    %2182 = vmatpush2.bf16.msra.mxu0 %v1992
    %2183 = vmatprep.subr.bf16.mxu0 %v1989
    %2184 = vmatpush2.bf16.msra.mxu0 %v1988
    %2185 = vmatprep.subr.bf16.mxu0 %v1985
    %2186 = vmatpush2.bf16.msra.mxu0 %v1984
    %2187 = vmatprep.subr.bf16.mxu0 %v1981
    %2188 = vmatpush2.bf16.msra.mxu0 %v1980
    %2189 = vmatprep.subr.bf16.mxu0 %v1977
    %2190 = vmatpush2.bf16.msra.mxu0 %v1976
    %2191 = vmatprep.subr.bf16.mxu0 %v1973
    %2192 = vmatpush2.bf16.msra.mxu0 %v1972
    %2193 = vmatprep.subr.bf16.mxu0 %v1969
    %2194 = vmatpush2.bf16.msra.mxu0 %v1968
    %2195 = vmatprep.subr.bf16.mxu0 %v1965
    %2196 = vmatpush2.bf16.msra.mxu0 %v1964
    %2197 = vmatprep.mubr.bf16.mxu0 %v1333
    %2198 = vmatmul.mubr.bf16.gmra.mxu0 %v1332
    %v2199 = vpop.f32.mrf.mxu0
    %v2200 = vadd.f32 %v2159, %v2199
    %v2201 = vpop.f32.mrf.mxu0
    %v2202 = vadd.f32 %v2161, %v2201
    %v2203 = vpop.f32.mrf.mxu0
    %v2204 = vpop.f32.mrf.mxu0
    %2205 = vdwg.mxu0
    %2206 = vmatprep.subr.bf16.mxu0 %v1899
    %2207 = vmatpush1.bf16.msra.mxu0 %v1898
    %2208 = vmatprep.subr.bf16.mxu0 %v1895
    %2209 = vmatpush1.bf16.msra.mxu0 %v1894
    %2210 = vmatprep.subr.bf16.mxu0 %v1891
    %2211 = vmatpush1.bf16.msra.mxu0 %v1890
    %2212 = vmatprep.subr.bf16.mxu0 %v1887
    %2213 = vmatpush1.bf16.msra.mxu0 %v1886
    %2214 = vmatprep.subr.bf16.mxu0 %v1883
    %2215 = vmatpush1.bf16.msra.mxu0 %v1882
    %2216 = vmatprep.subr.bf16.mxu0 %v1879
    %2217 = vmatpush1.bf16.msra.mxu0 %v1878
    %2218 = vmatprep.subr.bf16.mxu0 %v1875
    %2219 = vmatpush1.bf16.msra.mxu0 %v1874
    %2220 = vmatprep.subr.bf16.mxu0 %v1871
    %2221 = vmatpush1.bf16.msra.mxu0 %v1870
    %2222 = vmatprep.subr.bf16.mxu0 %v1931
    %2223 = vmatpush2.bf16.msra.mxu0 %v1930
    %2224 = vmatprep.subr.bf16.mxu0 %v1927
    %2225 = vmatpush2.bf16.msra.mxu0 %v1926
    %2226 = vmatprep.subr.bf16.mxu0 %v1923
    %2227 = vmatpush2.bf16.msra.mxu0 %v1922
    %2228 = vmatprep.subr.bf16.mxu0 %v1919
    %2229 = vmatpush2.bf16.msra.mxu0 %v1918
    %2230 = vmatprep.subr.bf16.mxu0 %v1915
    %2231 = vmatpush2.bf16.msra.mxu0 %v1914
    %2232 = vmatprep.subr.bf16.mxu0 %v1911
    %2233 = vmatpush2.bf16.msra.mxu0 %v1910
    %2234 = vmatprep.subr.bf16.mxu0 %v1907
    %2235 = vmatpush2.bf16.msra.mxu0 %v1906
    %2236 = vmatprep.subr.bf16.mxu0 %v1903
    %2237 = vmatpush2.bf16.msra.mxu0 %v1902
    %2238 = vmatprep.mubr.bf16.mxu0 %v1331
    %2239 = vmatmul.mubr.bf16.gmra.mxu0 %v1330
    %v2240 = vpop.f32.mrf.mxu0
    %v2241 = vadd.f32 %v1475, %v2240
    %v2242 = vpop.f32.mrf.mxu0
    %v2243 = vadd.f32 %v1479, %v2242
    %v2244 = vpop.f32.mrf.mxu0
    %v2245 = vpop.f32.mrf.mxu0
    %2246 = vdwg.mxu0
    %2247 = vmatprep.subr.bf16.mxu0 %v1963
    %2248 = vmatpush1.bf16.msra.mxu0 %v1962
    %2249 = vmatprep.subr.bf16.mxu0 %v1959
    %2250 = vmatpush1.bf16.msra.mxu0 %v1958
    %2251 = vmatprep.subr.bf16.mxu0 %v1955
    %2252 = vmatpush1.bf16.msra.mxu0 %v1954
    %2253 = vmatprep.subr.bf16.mxu0 %v1951
    %2254 = vmatpush1.bf16.msra.mxu0 %v1950
    %2255 = vmatprep.subr.bf16.mxu0 %v1947
    %2256 = vmatpush1.bf16.msra.mxu0 %v1946
    %2257 = vmatprep.subr.bf16.mxu0 %v1943
    %2258 = vmatpush1.bf16.msra.mxu0 %v1942
    %2259 = vmatprep.subr.bf16.mxu0 %v1939
    %2260 = vmatpush1.bf16.msra.mxu0 %v1938
    %2261 = vmatprep.subr.bf16.mxu0 %v1935
    %2262 = vmatpush1.bf16.msra.mxu0 %v1934
    %2263 = vmatprep.subr.bf16.mxu0 %v1995
    %2264 = vmatpush2.bf16.msra.mxu0 %v1994
    %2265 = vmatprep.subr.bf16.mxu0 %v1991
    %2266 = vmatpush2.bf16.msra.mxu0 %v1990
    %2267 = vmatprep.subr.bf16.mxu0 %v1987
    %2268 = vmatpush2.bf16.msra.mxu0 %v1986
    %2269 = vmatprep.subr.bf16.mxu0 %v1983
    %2270 = vmatpush2.bf16.msra.mxu0 %v1982
    %2271 = vmatprep.subr.bf16.mxu0 %v1979
    %2272 = vmatpush2.bf16.msra.mxu0 %v1978
    %2273 = vmatprep.subr.bf16.mxu0 %v1975
    %2274 = vmatpush2.bf16.msra.mxu0 %v1974
    %2275 = vmatprep.subr.bf16.mxu0 %v1971
    %2276 = vmatpush2.bf16.msra.mxu0 %v1970
    %2277 = vmatprep.subr.bf16.mxu0 %v1967
    %2278 = vmatpush2.bf16.msra.mxu0 %v1966
    %2279 = vmatprep.mubr.bf16.mxu0 %v1333
    %2280 = vmatmul.mubr.bf16.gmra.mxu0 %v1332
    %v2281 = vpop.f32.mrf.mxu0
    %v2282 = vadd.f32 %v2241, %v2281
    %v2283 = vpop.f32.mrf.mxu0
    %v2284 = vadd.f32 %v2243, %v2283
    %v2285 = vpop.f32.mrf.mxu0
    %v2286 = vpop.f32.mrf.mxu0
    %2287 = vdwg.mxu0
    %v2288 = vadd.f32 %v321, %v2200
    %v2289 = vadd.f32 %v323, %v2202
    %v2290 = vadd.f32 %v362, %v2282
    %v2291 = vadd.f32 %v364, %v2284
    %v2292 = vmax.f32 %v2288, 0.0
    %v2293 = vmax.f32 %v2289, 0.0
    %v2294 = vmax.f32 %v2290, 0.0
    %v2295 = vmax.f32 %v2291, 0.0
    %v2296 = vpack.c.bf16 %v2292, %v2292
    %v2297 = vpack.c.bf16 %v2293, %v2293
    %v2298 = vpack.c.bf16 %v2294, %v2294
    %v2299 = vpack.c.bf16 %v2295, %v2295
    %s2300 = scalar_lea.vmem [#allocation7], 1024
    %v2301 = vld [vmem:[%s2300] sm:$0xff]
    %v2302 = vld [vmem:[%s2300 + $0x8] sm:$0xff]
    %v2303 = vld [vmem:[%s2300 + $0x10] sm:$0xff]
    %v2304 = vld [vmem:[%s2300 + $0x18] sm:$0xff]
    %v2305 = vld [vmem:[%s2300 + $0x20] sm:$0xff]
    %v2306 = vld [vmem:[%s2300 + $0x28] sm:$0xff]
    %v2307 = vld [vmem:[%s2300 + $0x30] sm:$0xff]
    %v2308 = vld [vmem:[%s2300 + $0x38] sm:$0xff]
    %v2309 = vld [vmem:[%s2300 + $0x40] sm:$0xff]
    %v2310 = vld [vmem:[%s2300 + $0x48] sm:$0xff]
    %v2311 = vld [vmem:[%s2300 + $0x50] sm:$0xff]
    %v2312 = vld [vmem:[%s2300 + $0x58] sm:$0xff]
    %v2313 = vld [vmem:[%s2300 + $0x60] sm:$0xff]
    %v2314 = vld [vmem:[%s2300 + $0x68] sm:$0xff]
    %v2315 = vld [vmem:[%s2300 + $0x70] sm:$0xff]
    %v2316 = vld [vmem:[%s2300 + $0x78] sm:$0xff]
    %v2317 = vld [vmem:[%s2300 + $0x80] sm:$0xff]
    %v2318 = vld [vmem:[%s2300 + $0x88] sm:$0xff]
    %v2319 = vld [vmem:[%s2300 + $0x90] sm:$0xff]
    %v2320 = vld [vmem:[%s2300 + $0x98] sm:$0xff]
    %v2321 = vld [vmem:[%s2300 + $0xa0] sm:$0xff]
    %v2322 = vld [vmem:[%s2300 + $0xa8] sm:$0xff]
    %v2323 = vld [vmem:[%s2300 + $0xb0] sm:$0xff]
    %v2324 = vld [vmem:[%s2300 + $0xb8] sm:$0xff]
    %v2325 = vld [vmem:[%s2300 + $0xc0] sm:$0xff]
    %v2326 = vld [vmem:[%s2300 + $0xc8] sm:$0xff]
    %v2327 = vld [vmem:[%s2300 + $0xd0] sm:$0xff]
    %v2328 = vld [vmem:[%s2300 + $0xd8] sm:$0xff]
    %v2329 = vld [vmem:[%s2300 + $0xe0] sm:$0xff]
    %v2330 = vld [vmem:[%s2300 + $0xe8] sm:$0xff]
    %v2331 = vld [vmem:[%s2300 + $0xf0] sm:$0xff]
    %v2332 = vld [vmem:[%s2300 + $0xf8] sm:$0xff]
    %v2333 = vld [vmem:[%s2300 + $0x100] sm:$0xff]
    %v2334 = vld [vmem:[%s2300 + $0x108] sm:$0xff]
    %v2335 = vld [vmem:[%s2300 + $0x110] sm:$0xff]
    %v2336 = vld [vmem:[%s2300 + $0x118] sm:$0xff]
    %v2337 = vld [vmem:[%s2300 + $0x120] sm:$0xff]
    %v2338 = vld [vmem:[%s2300 + $0x128] sm:$0xff]
    %v2339 = vld [vmem:[%s2300 + $0x130] sm:$0xff]
    %v2340 = vld [vmem:[%s2300 + $0x138] sm:$0xff]
    %v2341 = vld [vmem:[%s2300 + $0x140] sm:$0xff]
    %v2342 = vld [vmem:[%s2300 + $0x148] sm:$0xff]
    %v2343 = vld [vmem:[%s2300 + $0x150] sm:$0xff]
    %v2344 = vld [vmem:[%s2300 + $0x158] sm:$0xff]
    %v2345 = vld [vmem:[%s2300 + $0x160] sm:$0xff]
    %v2346 = vld [vmem:[%s2300 + $0x168] sm:$0xff]
    %v2347 = vld [vmem:[%s2300 + $0x170] sm:$0xff]
    %v2348 = vld [vmem:[%s2300 + $0x178] sm:$0xff]
    %v2349 = vld [vmem:[%s2300 + $0x180] sm:$0xff]
    %v2350 = vld [vmem:[%s2300 + $0x188] sm:$0xff]
    %v2351 = vld [vmem:[%s2300 + $0x190] sm:$0xff]
    %v2352 = vld [vmem:[%s2300 + $0x198] sm:$0xff]
    %v2353 = vld [vmem:[%s2300 + $0x1a0] sm:$0xff]
    %v2354 = vld [vmem:[%s2300 + $0x1a8] sm:$0xff]
    %v2355 = vld [vmem:[%s2300 + $0x1b0] sm:$0xff]
    %v2356 = vld [vmem:[%s2300 + $0x1b8] sm:$0xff]
    %v2357 = vld [vmem:[%s2300 + $0x1c0] sm:$0xff]
    %v2358 = vld [vmem:[%s2300 + $0x1c8] sm:$0xff]
    %v2359 = vld [vmem:[%s2300 + $0x1d0] sm:$0xff]
    %v2360 = vld [vmem:[%s2300 + $0x1d8] sm:$0xff]
    %v2361 = vld [vmem:[%s2300 + $0x1e0] sm:$0xff]
    %v2362 = vld [vmem:[%s2300 + $0x1e8] sm:$0xff]
    %v2363 = vld [vmem:[%s2300 + $0x1f0] sm:$0xff]
    %v2364 = vld [vmem:[%s2300 + $0x1f8] sm:$0xff]
    %v2365 = vld [vmem:[%s2300 + $0x200] sm:$0xff]
    %v2366 = vld [vmem:[%s2300 + $0x208] sm:$0xff]
    %v2367 = vld [vmem:[%s2300 + $0x210] sm:$0xff]
    %v2368 = vld [vmem:[%s2300 + $0x218] sm:$0xff]
    %v2369 = vld [vmem:[%s2300 + $0x220] sm:$0xff]
    %v2370 = vld [vmem:[%s2300 + $0x228] sm:$0xff]
    %v2371 = vld [vmem:[%s2300 + $0x230] sm:$0xff]
    %v2372 = vld [vmem:[%s2300 + $0x238] sm:$0xff]
    %v2373 = vld [vmem:[%s2300 + $0x240] sm:$0xff]
    %v2374 = vld [vmem:[%s2300 + $0x248] sm:$0xff]
    %v2375 = vld [vmem:[%s2300 + $0x250] sm:$0xff]
    %v2376 = vld [vmem:[%s2300 + $0x258] sm:$0xff]
    %v2377 = vld [vmem:[%s2300 + $0x260] sm:$0xff]
    %v2378 = vld [vmem:[%s2300 + $0x268] sm:$0xff]
    %v2379 = vld [vmem:[%s2300 + $0x270] sm:$0xff]
    %v2380 = vld [vmem:[%s2300 + $0x278] sm:$0xff]
    %v2381 = vld [vmem:[%s2300 + $0x280] sm:$0xff]
    %v2382 = vld [vmem:[%s2300 + $0x288] sm:$0xff]
    %v2383 = vld [vmem:[%s2300 + $0x290] sm:$0xff]
    %v2384 = vld [vmem:[%s2300 + $0x298] sm:$0xff]
    %v2385 = vld [vmem:[%s2300 + $0x2a0] sm:$0xff]
    %v2386 = vld [vmem:[%s2300 + $0x2a8] sm:$0xff]
    %v2387 = vld [vmem:[%s2300 + $0x2b0] sm:$0xff]
    %v2388 = vld [vmem:[%s2300 + $0x2b8] sm:$0xff]
    %v2389 = vld [vmem:[%s2300 + $0x2c0] sm:$0xff]
    %v2390 = vld [vmem:[%s2300 + $0x2c8] sm:$0xff]
    %v2391 = vld [vmem:[%s2300 + $0x2d0] sm:$0xff]
    %v2392 = vld [vmem:[%s2300 + $0x2d8] sm:$0xff]
    %v2393 = vld [vmem:[%s2300 + $0x2e0] sm:$0xff]
    %v2394 = vld [vmem:[%s2300 + $0x2e8] sm:$0xff]
    %v2395 = vld [vmem:[%s2300 + $0x2f0] sm:$0xff]
    %v2396 = vld [vmem:[%s2300 + $0x2f8] sm:$0xff]
    %v2397 = vld [vmem:[%s2300 + $0x300] sm:$0xff]
    %v2398 = vld [vmem:[%s2300 + $0x308] sm:$0xff]
    %v2399 = vld [vmem:[%s2300 + $0x310] sm:$0xff]
    %v2400 = vld [vmem:[%s2300 + $0x318] sm:$0xff]
    %v2401 = vld [vmem:[%s2300 + $0x320] sm:$0xff]
    %v2402 = vld [vmem:[%s2300 + $0x328] sm:$0xff]
    %v2403 = vld [vmem:[%s2300 + $0x330] sm:$0xff]
    %v2404 = vld [vmem:[%s2300 + $0x338] sm:$0xff]
    %v2405 = vld [vmem:[%s2300 + $0x340] sm:$0xff]
    %v2406 = vld [vmem:[%s2300 + $0x348] sm:$0xff]
    %v2407 = vld [vmem:[%s2300 + $0x350] sm:$0xff]
    %v2408 = vld [vmem:[%s2300 + $0x358] sm:$0xff]
    %v2409 = vld [vmem:[%s2300 + $0x360] sm:$0xff]
    %v2410 = vld [vmem:[%s2300 + $0x368] sm:$0xff]
    %v2411 = vld [vmem:[%s2300 + $0x370] sm:$0xff]
    %v2412 = vld [vmem:[%s2300 + $0x378] sm:$0xff]
    %v2413 = vld [vmem:[%s2300 + $0x380] sm:$0xff]
    %v2414 = vld [vmem:[%s2300 + $0x388] sm:$0xff]
    %v2415 = vld [vmem:[%s2300 + $0x390] sm:$0xff]
    %v2416 = vld [vmem:[%s2300 + $0x398] sm:$0xff]
    %v2417 = vld [vmem:[%s2300 + $0x3a0] sm:$0xff]
    %v2418 = vld [vmem:[%s2300 + $0x3a8] sm:$0xff]
    %v2419 = vld [vmem:[%s2300 + $0x3b0] sm:$0xff]
    %v2420 = vld [vmem:[%s2300 + $0x3b8] sm:$0xff]
    %v2421 = vld [vmem:[%s2300 + $0x3c0] sm:$0xff]
    %v2422 = vld [vmem:[%s2300 + $0x3c8] sm:$0xff]
    %v2423 = vld [vmem:[%s2300 + $0x3d0] sm:$0xff]
    %v2424 = vld [vmem:[%s2300 + $0x3d8] sm:$0xff]
    %v2425 = vld [vmem:[%s2300 + $0x3e0] sm:$0xff]
    %v2426 = vld [vmem:[%s2300 + $0x3e8] sm:$0xff]
    %v2427 = vld [vmem:[%s2300 + $0x3f0] sm:$0xff]
    %v2428 = vld [vmem:[%s2300 + $0x3f8] sm:$0xff]
    %s2429 = scalar_lea.vmem [#allocation8], 4
    %v2430 = vld [vmem:[%s2429] sm:$0xf]
    %v2432 = vlaneseq
    %v2433 = vshrl.u32 %v2432, 7
    %v2434 = vsub.s32 0, %v2433
    %v2435 = vrot.slane %v2430, %v2434
    %v2436 = vlaneseq
    %v2437 = vshrl.u32 %v2436, 7
    %v2438 = vsub.s32 1, %v2437
    %v2439 = vrot.slane %v2430, %v2438
    %v2440 = vlaneseq
    %v2441 = vshrl.u32 %v2440, 7
    %v2442 = vsub.s32 2, %v2441
    %v2443 = vrot.slane %v2430, %v2442
    %v2444 = vlaneseq
    %v2445 = vshrl.u32 %v2444, 7
    %v2446 = vsub.s32 3, %v2445
    %v2447 = vrot.slane %v2430, %v2446
    %v2580 = vunpack.c.l.b16 %v2301
    %v2581 = vunpack.c.h.b16 %v2301
    %v2582 = vunpack.c.l.b16 %v2302
    %v2583 = vunpack.c.h.b16 %v2302
    %v2584 = vunpack.c.l.b16 %v2303
    %v2585 = vunpack.c.h.b16 %v2303
    %v2586 = vunpack.c.l.b16 %v2304
    %v2587 = vunpack.c.h.b16 %v2304
    %v2588 = vunpack.c.l.b16 %v2305
    %v2589 = vunpack.c.h.b16 %v2305
    %v2590 = vunpack.c.l.b16 %v2306
    %v2591 = vunpack.c.h.b16 %v2306
    %v2592 = vunpack.c.l.b16 %v2307
    %v2593 = vunpack.c.h.b16 %v2307
    %v2594 = vunpack.c.l.b16 %v2308
    %v2595 = vunpack.c.h.b16 %v2308
    %v2596 = vunpack.c.l.b16 %v2309
    %v2597 = vunpack.c.h.b16 %v2309
    %v2598 = vunpack.c.l.b16 %v2310
    %v2599 = vunpack.c.h.b16 %v2310
    %v2600 = vunpack.c.l.b16 %v2311
    %v2601 = vunpack.c.h.b16 %v2311
    %v2602 = vunpack.c.l.b16 %v2312
    %v2603 = vunpack.c.h.b16 %v2312
    %v2604 = vunpack.c.l.b16 %v2313
    %v2605 = vunpack.c.h.b16 %v2313
    %v2606 = vunpack.c.l.b16 %v2314
    %v2607 = vunpack.c.h.b16 %v2314
    %v2608 = vunpack.c.l.b16 %v2315
    %v2609 = vunpack.c.h.b16 %v2315
    %v2610 = vunpack.c.l.b16 %v2316
    %v2611 = vunpack.c.h.b16 %v2316
    %v2612 = vunpack.c.l.b16 %v2317
    %v2613 = vunpack.c.h.b16 %v2317
    %v2614 = vunpack.c.l.b16 %v2318
    %v2615 = vunpack.c.h.b16 %v2318
    %v2616 = vunpack.c.l.b16 %v2319
    %v2617 = vunpack.c.h.b16 %v2319
    %v2618 = vunpack.c.l.b16 %v2320
    %v2619 = vunpack.c.h.b16 %v2320
    %v2620 = vunpack.c.l.b16 %v2321
    %v2621 = vunpack.c.h.b16 %v2321
    %v2622 = vunpack.c.l.b16 %v2322
    %v2623 = vunpack.c.h.b16 %v2322
    %v2624 = vunpack.c.l.b16 %v2323
    %v2625 = vunpack.c.h.b16 %v2323
    %v2626 = vunpack.c.l.b16 %v2324
    %v2627 = vunpack.c.h.b16 %v2324
    %v2628 = vunpack.c.l.b16 %v2325
    %v2629 = vunpack.c.h.b16 %v2325
    %v2630 = vunpack.c.l.b16 %v2326
    %v2631 = vunpack.c.h.b16 %v2326
    %v2632 = vunpack.c.l.b16 %v2327
    %v2633 = vunpack.c.h.b16 %v2327
    %v2634 = vunpack.c.l.b16 %v2328
    %v2635 = vunpack.c.h.b16 %v2328
    %v2636 = vunpack.c.l.b16 %v2329
    %v2637 = vunpack.c.h.b16 %v2329
    %v2638 = vunpack.c.l.b16 %v2330
    %v2639 = vunpack.c.h.b16 %v2330
    %v2640 = vunpack.c.l.b16 %v2331
    %v2641 = vunpack.c.h.b16 %v2331
    %v2642 = vunpack.c.l.b16 %v2332
    %v2643 = vunpack.c.h.b16 %v2332
    %v2644 = vunpack.c.l.b16 %v2333
    %v2645 = vunpack.c.h.b16 %v2333
    %v2646 = vunpack.c.l.b16 %v2334
    %v2647 = vunpack.c.h.b16 %v2334
    %v2648 = vunpack.c.l.b16 %v2335
    %v2649 = vunpack.c.h.b16 %v2335
    %v2650 = vunpack.c.l.b16 %v2336
    %v2651 = vunpack.c.h.b16 %v2336
    %v2652 = vunpack.c.l.b16 %v2337
    %v2653 = vunpack.c.h.b16 %v2337
    %v2654 = vunpack.c.l.b16 %v2338
    %v2655 = vunpack.c.h.b16 %v2338
    %v2656 = vunpack.c.l.b16 %v2339
    %v2657 = vunpack.c.h.b16 %v2339
    %v2658 = vunpack.c.l.b16 %v2340
    %v2659 = vunpack.c.h.b16 %v2340
    %v2660 = vunpack.c.l.b16 %v2341
    %v2661 = vunpack.c.h.b16 %v2341
    %v2662 = vunpack.c.l.b16 %v2342
    %v2663 = vunpack.c.h.b16 %v2342
    %v2664 = vunpack.c.l.b16 %v2343
    %v2665 = vunpack.c.h.b16 %v2343
    %v2666 = vunpack.c.l.b16 %v2344
    %v2667 = vunpack.c.h.b16 %v2344
    %v2668 = vunpack.c.l.b16 %v2345
    %v2669 = vunpack.c.h.b16 %v2345
    %v2670 = vunpack.c.l.b16 %v2346
    %v2671 = vunpack.c.h.b16 %v2346
    %v2672 = vunpack.c.l.b16 %v2347
    %v2673 = vunpack.c.h.b16 %v2347
    %v2674 = vunpack.c.l.b16 %v2348
    %v2675 = vunpack.c.h.b16 %v2348
    %v2676 = vunpack.c.l.b16 %v2349
    %v2677 = vunpack.c.h.b16 %v2349
    %v2678 = vunpack.c.l.b16 %v2350
    %v2679 = vunpack.c.h.b16 %v2350
    %v2680 = vunpack.c.l.b16 %v2351
    %v2681 = vunpack.c.h.b16 %v2351
    %v2682 = vunpack.c.l.b16 %v2352
    %v2683 = vunpack.c.h.b16 %v2352
    %v2684 = vunpack.c.l.b16 %v2353
    %v2685 = vunpack.c.h.b16 %v2353
    %v2686 = vunpack.c.l.b16 %v2354
    %v2687 = vunpack.c.h.b16 %v2354
    %v2688 = vunpack.c.l.b16 %v2355
    %v2689 = vunpack.c.h.b16 %v2355
    %v2690 = vunpack.c.l.b16 %v2356
    %v2691 = vunpack.c.h.b16 %v2356
    %v2692 = vunpack.c.l.b16 %v2357
    %v2693 = vunpack.c.h.b16 %v2357
    %v2694 = vunpack.c.l.b16 %v2358
    %v2695 = vunpack.c.h.b16 %v2358
    %v2696 = vunpack.c.l.b16 %v2359
    %v2697 = vunpack.c.h.b16 %v2359
    %v2698 = vunpack.c.l.b16 %v2360
    %v2699 = vunpack.c.h.b16 %v2360
    %v2700 = vunpack.c.l.b16 %v2361
    %v2701 = vunpack.c.h.b16 %v2361
    %v2702 = vunpack.c.l.b16 %v2362
    %v2703 = vunpack.c.h.b16 %v2362
    %v2704 = vunpack.c.l.b16 %v2363
    %v2705 = vunpack.c.h.b16 %v2363
    %v2706 = vunpack.c.l.b16 %v2364
    %v2707 = vunpack.c.h.b16 %v2364
    %v2708 = vunpack.c.l.b16 %v2365
    %v2709 = vunpack.c.h.b16 %v2365
    %v2710 = vunpack.c.l.b16 %v2366
    %v2711 = vunpack.c.h.b16 %v2366
    %v2712 = vunpack.c.l.b16 %v2367
    %v2713 = vunpack.c.h.b16 %v2367
    %v2714 = vunpack.c.l.b16 %v2368
    %v2715 = vunpack.c.h.b16 %v2368
    %v2716 = vunpack.c.l.b16 %v2369
    %v2717 = vunpack.c.h.b16 %v2369
    %v2718 = vunpack.c.l.b16 %v2370
    %v2719 = vunpack.c.h.b16 %v2370
    %v2720 = vunpack.c.l.b16 %v2371
    %v2721 = vunpack.c.h.b16 %v2371
    %v2722 = vunpack.c.l.b16 %v2372
    %v2723 = vunpack.c.h.b16 %v2372
    %v2724 = vunpack.c.l.b16 %v2373
    %v2725 = vunpack.c.h.b16 %v2373
    %v2726 = vunpack.c.l.b16 %v2374
    %v2727 = vunpack.c.h.b16 %v2374
    %v2728 = vunpack.c.l.b16 %v2375
    %v2729 = vunpack.c.h.b16 %v2375
    %v2730 = vunpack.c.l.b16 %v2376
    %v2731 = vunpack.c.h.b16 %v2376
    %v2732 = vunpack.c.l.b16 %v2377
    %v2733 = vunpack.c.h.b16 %v2377
    %v2734 = vunpack.c.l.b16 %v2378
    %v2735 = vunpack.c.h.b16 %v2378
    %v2736 = vunpack.c.l.b16 %v2379
    %v2737 = vunpack.c.h.b16 %v2379
    %v2738 = vunpack.c.l.b16 %v2380
    %v2739 = vunpack.c.h.b16 %v2380
    %v2740 = vunpack.c.l.b16 %v2381
    %v2741 = vunpack.c.h.b16 %v2381
    %v2742 = vunpack.c.l.b16 %v2382
    %v2743 = vunpack.c.h.b16 %v2382
    %v2744 = vunpack.c.l.b16 %v2383
    %v2745 = vunpack.c.h.b16 %v2383
    %v2746 = vunpack.c.l.b16 %v2384
    %v2747 = vunpack.c.h.b16 %v2384
    %v2748 = vunpack.c.l.b16 %v2385
    %v2749 = vunpack.c.h.b16 %v2385
    %v2750 = vunpack.c.l.b16 %v2386
    %v2751 = vunpack.c.h.b16 %v2386
    %v2752 = vunpack.c.l.b16 %v2387
    %v2753 = vunpack.c.h.b16 %v2387
    %v2754 = vunpack.c.l.b16 %v2388
    %v2755 = vunpack.c.h.b16 %v2388
    %v2756 = vunpack.c.l.b16 %v2389
    %v2757 = vunpack.c.h.b16 %v2389
    %v2758 = vunpack.c.l.b16 %v2390
    %v2759 = vunpack.c.h.b16 %v2390
    %v2760 = vunpack.c.l.b16 %v2391
    %v2761 = vunpack.c.h.b16 %v2391
    %v2762 = vunpack.c.l.b16 %v2392
    %v2763 = vunpack.c.h.b16 %v2392
    %v2764 = vunpack.c.l.b16 %v2393
    %v2765 = vunpack.c.h.b16 %v2393
    %v2766 = vunpack.c.l.b16 %v2394
    %v2767 = vunpack.c.h.b16 %v2394
    %v2768 = vunpack.c.l.b16 %v2395
    %v2769 = vunpack.c.h.b16 %v2395
    %v2770 = vunpack.c.l.b16 %v2396
    %v2771 = vunpack.c.h.b16 %v2396
    %v2772 = vunpack.c.l.b16 %v2397
    %v2773 = vunpack.c.h.b16 %v2397
    %v2774 = vunpack.c.l.b16 %v2398
    %v2775 = vunpack.c.h.b16 %v2398
    %v2776 = vunpack.c.l.b16 %v2399
    %v2777 = vunpack.c.h.b16 %v2399
    %v2778 = vunpack.c.l.b16 %v2400
    %v2779 = vunpack.c.h.b16 %v2400
    %v2780 = vunpack.c.l.b16 %v2401
    %v2781 = vunpack.c.h.b16 %v2401
    %v2782 = vunpack.c.l.b16 %v2402
    %v2783 = vunpack.c.h.b16 %v2402
    %v2784 = vunpack.c.l.b16 %v2403
    %v2785 = vunpack.c.h.b16 %v2403
    %v2786 = vunpack.c.l.b16 %v2404
    %v2787 = vunpack.c.h.b16 %v2404
    %v2788 = vunpack.c.l.b16 %v2405
    %v2789 = vunpack.c.h.b16 %v2405
    %v2790 = vunpack.c.l.b16 %v2406
    %v2791 = vunpack.c.h.b16 %v2406
    %v2792 = vunpack.c.l.b16 %v2407
    %v2793 = vunpack.c.h.b16 %v2407
    %v2794 = vunpack.c.l.b16 %v2408
    %v2795 = vunpack.c.h.b16 %v2408
    %v2796 = vunpack.c.l.b16 %v2409
    %v2797 = vunpack.c.h.b16 %v2409
    %v2798 = vunpack.c.l.b16 %v2410
    %v2799 = vunpack.c.h.b16 %v2410
    %v2800 = vunpack.c.l.b16 %v2411
    %v2801 = vunpack.c.h.b16 %v2411
    %v2802 = vunpack.c.l.b16 %v2412
    %v2803 = vunpack.c.h.b16 %v2412
    %v2804 = vunpack.c.l.b16 %v2413
    %v2805 = vunpack.c.h.b16 %v2413
    %v2806 = vunpack.c.l.b16 %v2414
    %v2807 = vunpack.c.h.b16 %v2414
    %v2808 = vunpack.c.l.b16 %v2415
    %v2809 = vunpack.c.h.b16 %v2415
    %v2810 = vunpack.c.l.b16 %v2416
    %v2811 = vunpack.c.h.b16 %v2416
    %v2812 = vunpack.c.l.b16 %v2417
    %v2813 = vunpack.c.h.b16 %v2417
    %v2814 = vunpack.c.l.b16 %v2418
    %v2815 = vunpack.c.h.b16 %v2418
    %v2816 = vunpack.c.l.b16 %v2419
    %v2817 = vunpack.c.h.b16 %v2419
    %v2818 = vunpack.c.l.b16 %v2420
    %v2819 = vunpack.c.h.b16 %v2420
    %v2820 = vunpack.c.l.b16 %v2421
    %v2821 = vunpack.c.h.b16 %v2421
    %v2822 = vunpack.c.l.b16 %v2422
    %v2823 = vunpack.c.h.b16 %v2422
    %v2824 = vunpack.c.l.b16 %v2423
    %v2825 = vunpack.c.h.b16 %v2423
    %v2826 = vunpack.c.l.b16 %v2424
    %v2827 = vunpack.c.h.b16 %v2424
    %v2828 = vunpack.c.l.b16 %v2425
    %v2829 = vunpack.c.h.b16 %v2425
    %v2830 = vunpack.c.l.b16 %v2426
    %v2831 = vunpack.c.h.b16 %v2426
    %v2832 = vunpack.c.l.b16 %v2427
    %v2833 = vunpack.c.h.b16 %v2427
    %v2834 = vunpack.c.l.b16 %v2428
    %v2835 = vunpack.c.h.b16 %v2428
    %v2836 = vpack.c.b16 %v2584, %v2580
    %v2837 = vpack.c.b16 %v2585, %v2581
    %v2838 = vpack.c.b16 %v2586, %v2582
    %v2839 = vpack.c.b16 %v2587, %v2583
    %v2840 = vpack.c.b16 %v2592, %v2588
    %v2841 = vpack.c.b16 %v2593, %v2589
    %v2842 = vpack.c.b16 %v2594, %v2590
    %v2843 = vpack.c.b16 %v2595, %v2591
    %v2844 = vpack.c.b16 %v2600, %v2596
    %v2845 = vpack.c.b16 %v2601, %v2597
    %v2846 = vpack.c.b16 %v2602, %v2598
    %v2847 = vpack.c.b16 %v2603, %v2599
    %v2848 = vpack.c.b16 %v2608, %v2604
    %v2849 = vpack.c.b16 %v2609, %v2605
    %v2850 = vpack.c.b16 %v2610, %v2606
    %v2851 = vpack.c.b16 %v2611, %v2607
    %v2852 = vpack.c.b16 %v2616, %v2612
    %v2853 = vpack.c.b16 %v2617, %v2613
    %v2854 = vpack.c.b16 %v2618, %v2614
    %v2855 = vpack.c.b16 %v2619, %v2615
    %v2856 = vpack.c.b16 %v2624, %v2620
    %v2857 = vpack.c.b16 %v2625, %v2621
    %v2858 = vpack.c.b16 %v2626, %v2622
    %v2859 = vpack.c.b16 %v2627, %v2623
    %v2860 = vpack.c.b16 %v2632, %v2628
    %v2861 = vpack.c.b16 %v2633, %v2629
    %v2862 = vpack.c.b16 %v2634, %v2630
    %v2863 = vpack.c.b16 %v2635, %v2631
    %v2864 = vpack.c.b16 %v2640, %v2636
    %v2865 = vpack.c.b16 %v2641, %v2637
    %v2866 = vpack.c.b16 %v2642, %v2638
    %v2867 = vpack.c.b16 %v2643, %v2639
    %v2868 = vpack.c.b16 %v2648, %v2644
    %v2869 = vpack.c.b16 %v2649, %v2645
    %v2870 = vpack.c.b16 %v2650, %v2646
    %v2871 = vpack.c.b16 %v2651, %v2647
    %v2872 = vpack.c.b16 %v2656, %v2652
    %v2873 = vpack.c.b16 %v2657, %v2653
    %v2874 = vpack.c.b16 %v2658, %v2654
    %v2875 = vpack.c.b16 %v2659, %v2655
    %v2876 = vpack.c.b16 %v2664, %v2660
    %v2877 = vpack.c.b16 %v2665, %v2661
    %v2878 = vpack.c.b16 %v2666, %v2662
    %v2879 = vpack.c.b16 %v2667, %v2663
    %v2880 = vpack.c.b16 %v2672, %v2668
    %v2881 = vpack.c.b16 %v2673, %v2669
    %v2882 = vpack.c.b16 %v2674, %v2670
    %v2883 = vpack.c.b16 %v2675, %v2671
    %v2884 = vpack.c.b16 %v2680, %v2676
    %v2885 = vpack.c.b16 %v2681, %v2677
    %v2886 = vpack.c.b16 %v2682, %v2678
    %v2887 = vpack.c.b16 %v2683, %v2679
    %v2888 = vpack.c.b16 %v2688, %v2684
    %v2889 = vpack.c.b16 %v2689, %v2685
    %v2890 = vpack.c.b16 %v2690, %v2686
    %v2891 = vpack.c.b16 %v2691, %v2687
    %v2892 = vpack.c.b16 %v2696, %v2692
    %v2893 = vpack.c.b16 %v2697, %v2693
    %v2894 = vpack.c.b16 %v2698, %v2694
    %v2895 = vpack.c.b16 %v2699, %v2695
    %v2896 = vpack.c.b16 %v2704, %v2700
    %v2897 = vpack.c.b16 %v2705, %v2701
    %v2898 = vpack.c.b16 %v2706, %v2702
    %v2899 = vpack.c.b16 %v2707, %v2703
    %v2900 = vpack.c.b16 %v2712, %v2708
    %v2901 = vpack.c.b16 %v2713, %v2709
    %v2902 = vpack.c.b16 %v2714, %v2710
    %v2903 = vpack.c.b16 %v2715, %v2711
    %v2904 = vpack.c.b16 %v2720, %v2716
    %v2905 = vpack.c.b16 %v2721, %v2717
    %v2906 = vpack.c.b16 %v2722, %v2718
    %v2907 = vpack.c.b16 %v2723, %v2719
    %v2908 = vpack.c.b16 %v2728, %v2724
    %v2909 = vpack.c.b16 %v2729, %v2725
    %v2910 = vpack.c.b16 %v2730, %v2726
    %v2911 = vpack.c.b16 %v2731, %v2727
    %v2912 = vpack.c.b16 %v2736, %v2732
    %v2913 = vpack.c.b16 %v2737, %v2733
    %v2914 = vpack.c.b16 %v2738, %v2734
    %v2915 = vpack.c.b16 %v2739, %v2735
    %v2916 = vpack.c.b16 %v2744, %v2740
    %v2917 = vpack.c.b16 %v2745, %v2741
    %v2918 = vpack.c.b16 %v2746, %v2742
    %v2919 = vpack.c.b16 %v2747, %v2743
    %v2920 = vpack.c.b16 %v2752, %v2748
    %v2921 = vpack.c.b16 %v2753, %v2749
    %v2922 = vpack.c.b16 %v2754, %v2750
    %v2923 = vpack.c.b16 %v2755, %v2751
    %v2924 = vpack.c.b16 %v2760, %v2756
    %v2925 = vpack.c.b16 %v2761, %v2757
    %v2926 = vpack.c.b16 %v2762, %v2758
    %v2927 = vpack.c.b16 %v2763, %v2759
    %v2928 = vpack.c.b16 %v2768, %v2764
    %v2929 = vpack.c.b16 %v2769, %v2765
    %v2930 = vpack.c.b16 %v2770, %v2766
    %v2931 = vpack.c.b16 %v2771, %v2767
    %v2932 = vpack.c.b16 %v2776, %v2772
    %v2933 = vpack.c.b16 %v2777, %v2773
    %v2934 = vpack.c.b16 %v2778, %v2774
    %v2935 = vpack.c.b16 %v2779, %v2775
    %v2936 = vpack.c.b16 %v2784, %v2780
    %v2937 = vpack.c.b16 %v2785, %v2781
    %v2938 = vpack.c.b16 %v2786, %v2782
    %v2939 = vpack.c.b16 %v2787, %v2783
    %v2940 = vpack.c.b16 %v2792, %v2788
    %v2941 = vpack.c.b16 %v2793, %v2789
    %v2942 = vpack.c.b16 %v2794, %v2790
    %v2943 = vpack.c.b16 %v2795, %v2791
    %v2944 = vpack.c.b16 %v2800, %v2796
    %v2945 = vpack.c.b16 %v2801, %v2797
    %v2946 = vpack.c.b16 %v2802, %v2798
    %v2947 = vpack.c.b16 %v2803, %v2799
    %v2948 = vpack.c.b16 %v2808, %v2804
    %v2949 = vpack.c.b16 %v2809, %v2805
    %v2950 = vpack.c.b16 %v2810, %v2806
    %v2951 = vpack.c.b16 %v2811, %v2807
    %v2952 = vpack.c.b16 %v2816, %v2812
    %v2953 = vpack.c.b16 %v2817, %v2813
    %v2954 = vpack.c.b16 %v2818, %v2814
    %v2955 = vpack.c.b16 %v2819, %v2815
    %v2956 = vpack.c.b16 %v2824, %v2820
    %v2957 = vpack.c.b16 %v2825, %v2821
    %v2958 = vpack.c.b16 %v2826, %v2822
    %v2959 = vpack.c.b16 %v2827, %v2823
    %v2960 = vpack.c.b16 %v2832, %v2828
    %v2961 = vpack.c.b16 %v2833, %v2829
    %v2962 = vpack.c.b16 %v2834, %v2830
    %v2963 = vpack.c.b16 %v2835, %v2831
    %3092 = vmatprep.subr.bf16.mxu0 %v2865
    %3093 = vmatpush1.bf16.msra.mxu0 %v2864
    %3094 = vmatprep.subr.bf16.mxu0 %v2861
    %3095 = vmatpush1.bf16.msra.mxu0 %v2860
    %3096 = vmatprep.subr.bf16.mxu0 %v2857
    %3097 = vmatpush1.bf16.msra.mxu0 %v2856
    %3098 = vmatprep.subr.bf16.mxu0 %v2853
    %3099 = vmatpush1.bf16.msra.mxu0 %v2852
    %3100 = vmatprep.subr.bf16.mxu0 %v2849
    %3101 = vmatpush1.bf16.msra.mxu0 %v2848
    %3102 = vmatprep.subr.bf16.mxu0 %v2845
    %3103 = vmatpush1.bf16.msra.mxu0 %v2844
    %3104 = vmatprep.subr.bf16.mxu0 %v2841
    %3105 = vmatpush1.bf16.msra.mxu0 %v2840
    %3106 = vmatprep.subr.bf16.mxu0 %v2837
    %3107 = vmatpush1.bf16.msra.mxu0 %v2836
    %3108 = vmatprep.subr.bf16.mxu0 %v2897
    %3109 = vmatpush2.bf16.msra.mxu0 %v2896
    %3110 = vmatprep.subr.bf16.mxu0 %v2893
    %3111 = vmatpush2.bf16.msra.mxu0 %v2892
    %3112 = vmatprep.subr.bf16.mxu0 %v2889
    %3113 = vmatpush2.bf16.msra.mxu0 %v2888
    %3114 = vmatprep.subr.bf16.mxu0 %v2885
    %3115 = vmatpush2.bf16.msra.mxu0 %v2884
    %3116 = vmatprep.subr.bf16.mxu0 %v2881
    %3117 = vmatpush2.bf16.msra.mxu0 %v2880
    %3118 = vmatprep.subr.bf16.mxu0 %v2877
    %3119 = vmatpush2.bf16.msra.mxu0 %v2876
    %3120 = vmatprep.subr.bf16.mxu0 %v2873
    %3121 = vmatpush2.bf16.msra.mxu0 %v2872
    %3122 = vmatprep.subr.bf16.mxu0 %v2869
    %3123 = vmatpush2.bf16.msra.mxu0 %v2868
    %3124 = vmatprep.mubr.bf16.mxu0 %v2297
    %3125 = vmatmul.mubr.bf16.gmra.mxu0 %v2296
    %v3126 = vpop.f32.mrf.mxu0
    %v3127 = vadd.f32 %v2435, %v3126
    %v3128 = vpop.f32.mrf.mxu0
    %v3129 = vadd.f32 %v2439, %v3128
    %v3130 = vpop.f32.mrf.mxu0
    %v3131 = vpop.f32.mrf.mxu0
    %3132 = vdwg.mxu0
    %3133 = vmatprep.subr.bf16.mxu0 %v2929
    %3134 = vmatpush1.bf16.msra.mxu0 %v2928
    %3135 = vmatprep.subr.bf16.mxu0 %v2925
    %3136 = vmatpush1.bf16.msra.mxu0 %v2924
    %3137 = vmatprep.subr.bf16.mxu0 %v2921
    %3138 = vmatpush1.bf16.msra.mxu0 %v2920
    %3139 = vmatprep.subr.bf16.mxu0 %v2917
    %3140 = vmatpush1.bf16.msra.mxu0 %v2916
    %3141 = vmatprep.subr.bf16.mxu0 %v2913
    %3142 = vmatpush1.bf16.msra.mxu0 %v2912
    %3143 = vmatprep.subr.bf16.mxu0 %v2909
    %3144 = vmatpush1.bf16.msra.mxu0 %v2908
    %3145 = vmatprep.subr.bf16.mxu0 %v2905
    %3146 = vmatpush1.bf16.msra.mxu0 %v2904
    %3147 = vmatprep.subr.bf16.mxu0 %v2901
    %3148 = vmatpush1.bf16.msra.mxu0 %v2900
    %3149 = vmatprep.subr.bf16.mxu0 %v2961
    %3150 = vmatpush2.bf16.msra.mxu0 %v2960
    %3151 = vmatprep.subr.bf16.mxu0 %v2957
    %3152 = vmatpush2.bf16.msra.mxu0 %v2956
    %3153 = vmatprep.subr.bf16.mxu0 %v2953
    %3154 = vmatpush2.bf16.msra.mxu0 %v2952
    %3155 = vmatprep.subr.bf16.mxu0 %v2949
    %3156 = vmatpush2.bf16.msra.mxu0 %v2948
    %3157 = vmatprep.subr.bf16.mxu0 %v2945
    %3158 = vmatpush2.bf16.msra.mxu0 %v2944
    %3159 = vmatprep.subr.bf16.mxu0 %v2941
    %3160 = vmatpush2.bf16.msra.mxu0 %v2940
    %3161 = vmatprep.subr.bf16.mxu0 %v2937
    %3162 = vmatpush2.bf16.msra.mxu0 %v2936
    %3163 = vmatprep.subr.bf16.mxu0 %v2933
    %3164 = vmatpush2.bf16.msra.mxu0 %v2932
    %3165 = vmatprep.mubr.bf16.mxu0 %v2299
    %3166 = vmatmul.mubr.bf16.gmra.mxu0 %v2298
    %v3167 = vpop.f32.mrf.mxu0
    %v3168 = vadd.f32 %v3127, %v3167
    %v3169 = vpop.f32.mrf.mxu0
    %v3170 = vadd.f32 %v3129, %v3169
    %v3171 = vpop.f32.mrf.mxu0
    %v3172 = vpop.f32.mrf.mxu0
    %3173 = vdwg.mxu0
    %3174 = vmatprep.subr.bf16.mxu0 %v2867
    %3175 = vmatpush1.bf16.msra.mxu0 %v2866
    %3176 = vmatprep.subr.bf16.mxu0 %v2863
    %3177 = vmatpush1.bf16.msra.mxu0 %v2862
    %3178 = vmatprep.subr.bf16.mxu0 %v2859
    %3179 = vmatpush1.bf16.msra.mxu0 %v2858
    %3180 = vmatprep.subr.bf16.mxu0 %v2855
    %3181 = vmatpush1.bf16.msra.mxu0 %v2854
    %3182 = vmatprep.subr.bf16.mxu0 %v2851
    %3183 = vmatpush1.bf16.msra.mxu0 %v2850
    %3184 = vmatprep.subr.bf16.mxu0 %v2847
    %3185 = vmatpush1.bf16.msra.mxu0 %v2846
    %3186 = vmatprep.subr.bf16.mxu0 %v2843
    %3187 = vmatpush1.bf16.msra.mxu0 %v2842
    %3188 = vmatprep.subr.bf16.mxu0 %v2839
    %3189 = vmatpush1.bf16.msra.mxu0 %v2838
    %3190 = vmatprep.subr.bf16.mxu0 %v2899
    %3191 = vmatpush2.bf16.msra.mxu0 %v2898
    %3192 = vmatprep.subr.bf16.mxu0 %v2895
    %3193 = vmatpush2.bf16.msra.mxu0 %v2894
    %3194 = vmatprep.subr.bf16.mxu0 %v2891
    %3195 = vmatpush2.bf16.msra.mxu0 %v2890
    %3196 = vmatprep.subr.bf16.mxu0 %v2887
    %3197 = vmatpush2.bf16.msra.mxu0 %v2886
    %3198 = vmatprep.subr.bf16.mxu0 %v2883
    %3199 = vmatpush2.bf16.msra.mxu0 %v2882
    %3200 = vmatprep.subr.bf16.mxu0 %v2879
    %3201 = vmatpush2.bf16.msra.mxu0 %v2878
    %3202 = vmatprep.subr.bf16.mxu0 %v2875
    %3203 = vmatpush2.bf16.msra.mxu0 %v2874
    %3204 = vmatprep.subr.bf16.mxu0 %v2871
    %3205 = vmatpush2.bf16.msra.mxu0 %v2870
    %3206 = vmatprep.mubr.bf16.mxu0 %v2297
    %3207 = vmatmul.mubr.bf16.gmra.mxu0 %v2296
    %v3208 = vpop.f32.mrf.mxu0
    %v3209 = vadd.f32 %v2443, %v3208
    %v3210 = vpop.f32.mrf.mxu0
    %v3211 = vadd.f32 %v2447, %v3210
    %v3212 = vpop.f32.mrf.mxu0
    %v3213 = vpop.f32.mrf.mxu0
    %3214 = vdwg.mxu0
    %3215 = vmatprep.subr.bf16.mxu0 %v2931
    %3216 = vmatpush1.bf16.msra.mxu0 %v2930
    %3217 = vmatprep.subr.bf16.mxu0 %v2927
    %3218 = vmatpush1.bf16.msra.mxu0 %v2926
    %3219 = vmatprep.subr.bf16.mxu0 %v2923
    %3220 = vmatpush1.bf16.msra.mxu0 %v2922
    %3221 = vmatprep.subr.bf16.mxu0 %v2919
    %3222 = vmatpush1.bf16.msra.mxu0 %v2918
    %3223 = vmatprep.subr.bf16.mxu0 %v2915
    %3224 = vmatpush1.bf16.msra.mxu0 %v2914
    %3225 = vmatprep.subr.bf16.mxu0 %v2911
    %3226 = vmatpush1.bf16.msra.mxu0 %v2910
    %3227 = vmatprep.subr.bf16.mxu0 %v2907
    %3228 = vmatpush1.bf16.msra.mxu0 %v2906
    %3229 = vmatprep.subr.bf16.mxu0 %v2903
    %3230 = vmatpush1.bf16.msra.mxu0 %v2902
    %3231 = vmatprep.subr.bf16.mxu0 %v2963
    %3232 = vmatpush2.bf16.msra.mxu0 %v2962
    %3233 = vmatprep.subr.bf16.mxu0 %v2959
    %3234 = vmatpush2.bf16.msra.mxu0 %v2958
    %3235 = vmatprep.subr.bf16.mxu0 %v2955
    %3236 = vmatpush2.bf16.msra.mxu0 %v2954
    %3237 = vmatprep.subr.bf16.mxu0 %v2951
    %3238 = vmatpush2.bf16.msra.mxu0 %v2950
    %3239 = vmatprep.subr.bf16.mxu0 %v2947
    %3240 = vmatpush2.bf16.msra.mxu0 %v2946
    %3241 = vmatprep.subr.bf16.mxu0 %v2943
    %3242 = vmatpush2.bf16.msra.mxu0 %v2942
    %3243 = vmatprep.subr.bf16.mxu0 %v2939
    %3244 = vmatpush2.bf16.msra.mxu0 %v2938
    %3245 = vmatprep.subr.bf16.mxu0 %v2935
    %3246 = vmatpush2.bf16.msra.mxu0 %v2934
    %3247 = vmatprep.mubr.bf16.mxu0 %v2299
    %3248 = vmatmul.mubr.bf16.gmra.mxu0 %v2298
    %v3249 = vpop.f32.mrf.mxu0
    %v3250 = vadd.f32 %v3209, %v3249
    %v3251 = vpop.f32.mrf.mxu0
    %v3252 = vadd.f32 %v3211, %v3251
    %v3253 = vpop.f32.mrf.mxu0
    %v3254 = vpop.f32.mrf.mxu0
    %3255 = vdwg.mxu0
    %v3256 = vmax.f32 %v3168, 0.0
    %v3257 = vmax.f32 %v3170, 0.0
    %v3258 = vmax.f32 %v3250, 0.0
    %v3259 = vmax.f32 %v3252, 0.0
    %v3260 = vpack.c.bf16 %v3256, %v3256
    %v3261 = vpack.c.bf16 %v3257, %v3257
    %v3262 = vpack.c.bf16 %v3258, %v3258
    %v3263 = vpack.c.bf16 %v3259, %v3259
    %s3264 = scalar_lea.vmem [#allocation10], 1024
    %v3265 = vld [vmem:[%s3264] sm:$0xff]
    %v3266 = vld [vmem:[%s3264 + $0x8] sm:$0xff]
    %v3267 = vld [vmem:[%s3264 + $0x10] sm:$0xff]
    %v3268 = vld [vmem:[%s3264 + $0x18] sm:$0xff]
    %v3269 = vld [vmem:[%s3264 + $0x20] sm:$0xff]
    %v3270 = vld [vmem:[%s3264 + $0x28] sm:$0xff]
    %v3271 = vld [vmem:[%s3264 + $0x30] sm:$0xff]
    %v3272 = vld [vmem:[%s3264 + $0x38] sm:$0xff]
    %v3273 = vld [vmem:[%s3264 + $0x40] sm:$0xff]
    %v3274 = vld [vmem:[%s3264 + $0x48] sm:$0xff]
    %v3275 = vld [vmem:[%s3264 + $0x50] sm:$0xff]
    %v3276 = vld [vmem:[%s3264 + $0x58] sm:$0xff]
    %v3277 = vld [vmem:[%s3264 + $0x60] sm:$0xff]
    %v3278 = vld [vmem:[%s3264 + $0x68] sm:$0xff]
    %v3279 = vld [vmem:[%s3264 + $0x70] sm:$0xff]
    %v3280 = vld [vmem:[%s3264 + $0x78] sm:$0xff]
    %v3281 = vld [vmem:[%s3264 + $0x80] sm:$0xff]
    %v3282 = vld [vmem:[%s3264 + $0x88] sm:$0xff]
    %v3283 = vld [vmem:[%s3264 + $0x90] sm:$0xff]
    %v3284 = vld [vmem:[%s3264 + $0x98] sm:$0xff]
    %v3285 = vld [vmem:[%s3264 + $0xa0] sm:$0xff]
    %v3286 = vld [vmem:[%s3264 + $0xa8] sm:$0xff]
    %v3287 = vld [vmem:[%s3264 + $0xb0] sm:$0xff]
    %v3288 = vld [vmem:[%s3264 + $0xb8] sm:$0xff]
    %v3289 = vld [vmem:[%s3264 + $0xc0] sm:$0xff]
    %v3290 = vld [vmem:[%s3264 + $0xc8] sm:$0xff]
    %v3291 = vld [vmem:[%s3264 + $0xd0] sm:$0xff]
    %v3292 = vld [vmem:[%s3264 + $0xd8] sm:$0xff]
    %v3293 = vld [vmem:[%s3264 + $0xe0] sm:$0xff]
    %v3294 = vld [vmem:[%s3264 + $0xe8] sm:$0xff]
    %v3295 = vld [vmem:[%s3264 + $0xf0] sm:$0xff]
    %v3296 = vld [vmem:[%s3264 + $0xf8] sm:$0xff]
    %v3297 = vld [vmem:[%s3264 + $0x100] sm:$0xff]
    %v3298 = vld [vmem:[%s3264 + $0x108] sm:$0xff]
    %v3299 = vld [vmem:[%s3264 + $0x110] sm:$0xff]
    %v3300 = vld [vmem:[%s3264 + $0x118] sm:$0xff]
    %v3301 = vld [vmem:[%s3264 + $0x120] sm:$0xff]
    %v3302 = vld [vmem:[%s3264 + $0x128] sm:$0xff]
    %v3303 = vld [vmem:[%s3264 + $0x130] sm:$0xff]
    %v3304 = vld [vmem:[%s3264 + $0x138] sm:$0xff]
    %v3305 = vld [vmem:[%s3264 + $0x140] sm:$0xff]
    %v3306 = vld [vmem:[%s3264 + $0x148] sm:$0xff]
    %v3307 = vld [vmem:[%s3264 + $0x150] sm:$0xff]
    %v3308 = vld [vmem:[%s3264 + $0x158] sm:$0xff]
    %v3309 = vld [vmem:[%s3264 + $0x160] sm:$0xff]
    %v3310 = vld [vmem:[%s3264 + $0x168] sm:$0xff]
    %v3311 = vld [vmem:[%s3264 + $0x170] sm:$0xff]
    %v3312 = vld [vmem:[%s3264 + $0x178] sm:$0xff]
    %v3313 = vld [vmem:[%s3264 + $0x180] sm:$0xff]
    %v3314 = vld [vmem:[%s3264 + $0x188] sm:$0xff]
    %v3315 = vld [vmem:[%s3264 + $0x190] sm:$0xff]
    %v3316 = vld [vmem:[%s3264 + $0x198] sm:$0xff]
    %v3317 = vld [vmem:[%s3264 + $0x1a0] sm:$0xff]
    %v3318 = vld [vmem:[%s3264 + $0x1a8] sm:$0xff]
    %v3319 = vld [vmem:[%s3264 + $0x1b0] sm:$0xff]
    %v3320 = vld [vmem:[%s3264 + $0x1b8] sm:$0xff]
    %v3321 = vld [vmem:[%s3264 + $0x1c0] sm:$0xff]
    %v3322 = vld [vmem:[%s3264 + $0x1c8] sm:$0xff]
    %v3323 = vld [vmem:[%s3264 + $0x1d0] sm:$0xff]
    %v3324 = vld [vmem:[%s3264 + $0x1d8] sm:$0xff]
    %v3325 = vld [vmem:[%s3264 + $0x1e0] sm:$0xff]
    %v3326 = vld [vmem:[%s3264 + $0x1e8] sm:$0xff]
    %v3327 = vld [vmem:[%s3264 + $0x1f0] sm:$0xff]
    %v3328 = vld [vmem:[%s3264 + $0x1f8] sm:$0xff]
    %v3329 = vld [vmem:[%s3264 + $0x200] sm:$0xff]
    %v3330 = vld [vmem:[%s3264 + $0x208] sm:$0xff]
    %v3331 = vld [vmem:[%s3264 + $0x210] sm:$0xff]
    %v3332 = vld [vmem:[%s3264 + $0x218] sm:$0xff]
    %v3333 = vld [vmem:[%s3264 + $0x220] sm:$0xff]
    %v3334 = vld [vmem:[%s3264 + $0x228] sm:$0xff]
    %v3335 = vld [vmem:[%s3264 + $0x230] sm:$0xff]
    %v3336 = vld [vmem:[%s3264 + $0x238] sm:$0xff]
    %v3337 = vld [vmem:[%s3264 + $0x240] sm:$0xff]
    %v3338 = vld [vmem:[%s3264 + $0x248] sm:$0xff]
    %v3339 = vld [vmem:[%s3264 + $0x250] sm:$0xff]
    %v3340 = vld [vmem:[%s3264 + $0x258] sm:$0xff]
    %v3341 = vld [vmem:[%s3264 + $0x260] sm:$0xff]
    %v3342 = vld [vmem:[%s3264 + $0x268] sm:$0xff]
    %v3343 = vld [vmem:[%s3264 + $0x270] sm:$0xff]
    %v3344 = vld [vmem:[%s3264 + $0x278] sm:$0xff]
    %v3345 = vld [vmem:[%s3264 + $0x280] sm:$0xff]
    %v3346 = vld [vmem:[%s3264 + $0x288] sm:$0xff]
    %v3347 = vld [vmem:[%s3264 + $0x290] sm:$0xff]
    %v3348 = vld [vmem:[%s3264 + $0x298] sm:$0xff]
    %v3349 = vld [vmem:[%s3264 + $0x2a0] sm:$0xff]
    %v3350 = vld [vmem:[%s3264 + $0x2a8] sm:$0xff]
    %v3351 = vld [vmem:[%s3264 + $0x2b0] sm:$0xff]
    %v3352 = vld [vmem:[%s3264 + $0x2b8] sm:$0xff]
    %v3353 = vld [vmem:[%s3264 + $0x2c0] sm:$0xff]
    %v3354 = vld [vmem:[%s3264 + $0x2c8] sm:$0xff]
    %v3355 = vld [vmem:[%s3264 + $0x2d0] sm:$0xff]
    %v3356 = vld [vmem:[%s3264 + $0x2d8] sm:$0xff]
    %v3357 = vld [vmem:[%s3264 + $0x2e0] sm:$0xff]
    %v3358 = vld [vmem:[%s3264 + $0x2e8] sm:$0xff]
    %v3359 = vld [vmem:[%s3264 + $0x2f0] sm:$0xff]
    %v3360 = vld [vmem:[%s3264 + $0x2f8] sm:$0xff]
    %v3361 = vld [vmem:[%s3264 + $0x300] sm:$0xff]
    %v3362 = vld [vmem:[%s3264 + $0x308] sm:$0xff]
    %v3363 = vld [vmem:[%s3264 + $0x310] sm:$0xff]
    %v3364 = vld [vmem:[%s3264 + $0x318] sm:$0xff]
    %v3365 = vld [vmem:[%s3264 + $0x320] sm:$0xff]
    %v3366 = vld [vmem:[%s3264 + $0x328] sm:$0xff]
    %v3367 = vld [vmem:[%s3264 + $0x330] sm:$0xff]
    %v3368 = vld [vmem:[%s3264 + $0x338] sm:$0xff]
    %v3369 = vld [vmem:[%s3264 + $0x340] sm:$0xff]
    %v3370 = vld [vmem:[%s3264 + $0x348] sm:$0xff]
    %v3371 = vld [vmem:[%s3264 + $0x350] sm:$0xff]
    %v3372 = vld [vmem:[%s3264 + $0x358] sm:$0xff]
    %v3373 = vld [vmem:[%s3264 + $0x360] sm:$0xff]
    %v3374 = vld [vmem:[%s3264 + $0x368] sm:$0xff]
    %v3375 = vld [vmem:[%s3264 + $0x370] sm:$0xff]
    %v3376 = vld [vmem:[%s3264 + $0x378] sm:$0xff]
    %v3377 = vld [vmem:[%s3264 + $0x380] sm:$0xff]
    %v3378 = vld [vmem:[%s3264 + $0x388] sm:$0xff]
    %v3379 = vld [vmem:[%s3264 + $0x390] sm:$0xff]
    %v3380 = vld [vmem:[%s3264 + $0x398] sm:$0xff]
    %v3381 = vld [vmem:[%s3264 + $0x3a0] sm:$0xff]
    %v3382 = vld [vmem:[%s3264 + $0x3a8] sm:$0xff]
    %v3383 = vld [vmem:[%s3264 + $0x3b0] sm:$0xff]
    %v3384 = vld [vmem:[%s3264 + $0x3b8] sm:$0xff]
    %v3385 = vld [vmem:[%s3264 + $0x3c0] sm:$0xff]
    %v3386 = vld [vmem:[%s3264 + $0x3c8] sm:$0xff]
    %v3387 = vld [vmem:[%s3264 + $0x3d0] sm:$0xff]
    %v3388 = vld [vmem:[%s3264 + $0x3d8] sm:$0xff]
    %v3389 = vld [vmem:[%s3264 + $0x3e0] sm:$0xff]
    %v3390 = vld [vmem:[%s3264 + $0x3e8] sm:$0xff]
    %v3391 = vld [vmem:[%s3264 + $0x3f0] sm:$0xff]
    %v3392 = vld [vmem:[%s3264 + $0x3f8] sm:$0xff]
    %s3393 = scalar_lea.vmem [#allocation11], 4
    %v3394 = vld [vmem:[%s3393] sm:$0xf]
    %v3396 = vlaneseq
    %v3397 = vshrl.u32 %v3396, 7
    %v3398 = vsub.s32 0, %v3397
    %v3399 = vrot.slane %v3394, %v3398
    %v3400 = vlaneseq
    %v3401 = vshrl.u32 %v3400, 7
    %v3402 = vsub.s32 1, %v3401
    %v3403 = vrot.slane %v3394, %v3402
    %v3404 = vlaneseq
    %v3405 = vshrl.u32 %v3404, 7
    %v3406 = vsub.s32 2, %v3405
    %v3407 = vrot.slane %v3394, %v3406
    %v3408 = vlaneseq
    %v3409 = vshrl.u32 %v3408, 7
    %v3410 = vsub.s32 3, %v3409
    %v3411 = vrot.slane %v3394, %v3410
    %v3544 = vunpack.c.l.b16 %v3265
    %v3545 = vunpack.c.h.b16 %v3265
    %v3546 = vunpack.c.l.b16 %v3266
    %v3547 = vunpack.c.h.b16 %v3266
    %v3548 = vunpack.c.l.b16 %v3267
    %v3549 = vunpack.c.h.b16 %v3267
    %v3550 = vunpack.c.l.b16 %v3268
    %v3551 = vunpack.c.h.b16 %v3268
    %v3552 = vunpack.c.l.b16 %v3269
    %v3553 = vunpack.c.h.b16 %v3269
    %v3554 = vunpack.c.l.b16 %v3270
    %v3555 = vunpack.c.h.b16 %v3270
    %v3556 = vunpack.c.l.b16 %v3271
    %v3557 = vunpack.c.h.b16 %v3271
    %v3558 = vunpack.c.l.b16 %v3272
    %v3559 = vunpack.c.h.b16 %v3272
    %v3560 = vunpack.c.l.b16 %v3273
    %v3561 = vunpack.c.h.b16 %v3273
    %v3562 = vunpack.c.l.b16 %v3274
    %v3563 = vunpack.c.h.b16 %v3274
    %v3564 = vunpack.c.l.b16 %v3275
    %v3565 = vunpack.c.h.b16 %v3275
    %v3566 = vunpack.c.l.b16 %v3276
    %v3567 = vunpack.c.h.b16 %v3276
    %v3568 = vunpack.c.l.b16 %v3277
    %v3569 = vunpack.c.h.b16 %v3277
    %v3570 = vunpack.c.l.b16 %v3278
    %v3571 = vunpack.c.h.b16 %v3278
    %v3572 = vunpack.c.l.b16 %v3279
    %v3573 = vunpack.c.h.b16 %v3279
    %v3574 = vunpack.c.l.b16 %v3280
    %v3575 = vunpack.c.h.b16 %v3280
    %v3576 = vunpack.c.l.b16 %v3281
    %v3577 = vunpack.c.h.b16 %v3281
    %v3578 = vunpack.c.l.b16 %v3282
    %v3579 = vunpack.c.h.b16 %v3282
    %v3580 = vunpack.c.l.b16 %v3283
    %v3581 = vunpack.c.h.b16 %v3283
    %v3582 = vunpack.c.l.b16 %v3284
    %v3583 = vunpack.c.h.b16 %v3284
    %v3584 = vunpack.c.l.b16 %v3285
    %v3585 = vunpack.c.h.b16 %v3285
    %v3586 = vunpack.c.l.b16 %v3286
    %v3587 = vunpack.c.h.b16 %v3286
    %v3588 = vunpack.c.l.b16 %v3287
    %v3589 = vunpack.c.h.b16 %v3287
    %v3590 = vunpack.c.l.b16 %v3288
    %v3591 = vunpack.c.h.b16 %v3288
    %v3592 = vunpack.c.l.b16 %v3289
    %v3593 = vunpack.c.h.b16 %v3289
    %v3594 = vunpack.c.l.b16 %v3290
    %v3595 = vunpack.c.h.b16 %v3290
    %v3596 = vunpack.c.l.b16 %v3291
    %v3597 = vunpack.c.h.b16 %v3291
    %v3598 = vunpack.c.l.b16 %v3292
    %v3599 = vunpack.c.h.b16 %v3292
    %v3600 = vunpack.c.l.b16 %v3293
    %v3601 = vunpack.c.h.b16 %v3293
    %v3602 = vunpack.c.l.b16 %v3294
    %v3603 = vunpack.c.h.b16 %v3294
    %v3604 = vunpack.c.l.b16 %v3295
    %v3605 = vunpack.c.h.b16 %v3295
    %v3606 = vunpack.c.l.b16 %v3296
    %v3607 = vunpack.c.h.b16 %v3296
    %v3608 = vunpack.c.l.b16 %v3297
    %v3609 = vunpack.c.h.b16 %v3297
    %v3610 = vunpack.c.l.b16 %v3298
    %v3611 = vunpack.c.h.b16 %v3298
    %v3612 = vunpack.c.l.b16 %v3299
    %v3613 = vunpack.c.h.b16 %v3299
    %v3614 = vunpack.c.l.b16 %v3300
    %v3615 = vunpack.c.h.b16 %v3300
    %v3616 = vunpack.c.l.b16 %v3301
    %v3617 = vunpack.c.h.b16 %v3301
    %v3618 = vunpack.c.l.b16 %v3302
    %v3619 = vunpack.c.h.b16 %v3302
    %v3620 = vunpack.c.l.b16 %v3303
    %v3621 = vunpack.c.h.b16 %v3303
    %v3622 = vunpack.c.l.b16 %v3304
    %v3623 = vunpack.c.h.b16 %v3304
    %v3624 = vunpack.c.l.b16 %v3305
    %v3625 = vunpack.c.h.b16 %v3305
    %v3626 = vunpack.c.l.b16 %v3306
    %v3627 = vunpack.c.h.b16 %v3306
    %v3628 = vunpack.c.l.b16 %v3307
    %v3629 = vunpack.c.h.b16 %v3307
    %v3630 = vunpack.c.l.b16 %v3308
    %v3631 = vunpack.c.h.b16 %v3308
    %v3632 = vunpack.c.l.b16 %v3309
    %v3633 = vunpack.c.h.b16 %v3309
    %v3634 = vunpack.c.l.b16 %v3310
    %v3635 = vunpack.c.h.b16 %v3310
    %v3636 = vunpack.c.l.b16 %v3311
    %v3637 = vunpack.c.h.b16 %v3311
    %v3638 = vunpack.c.l.b16 %v3312
    %v3639 = vunpack.c.h.b16 %v3312
    %v3640 = vunpack.c.l.b16 %v3313
    %v3641 = vunpack.c.h.b16 %v3313
    %v3642 = vunpack.c.l.b16 %v3314
    %v3643 = vunpack.c.h.b16 %v3314
    %v3644 = vunpack.c.l.b16 %v3315
    %v3645 = vunpack.c.h.b16 %v3315
    %v3646 = vunpack.c.l.b16 %v3316
    %v3647 = vunpack.c.h.b16 %v3316
    %v3648 = vunpack.c.l.b16 %v3317
    %v3649 = vunpack.c.h.b16 %v3317
    %v3650 = vunpack.c.l.b16 %v3318
    %v3651 = vunpack.c.h.b16 %v3318
    %v3652 = vunpack.c.l.b16 %v3319
    %v3653 = vunpack.c.h.b16 %v3319
    %v3654 = vunpack.c.l.b16 %v3320
    %v3655 = vunpack.c.h.b16 %v3320
    %v3656 = vunpack.c.l.b16 %v3321
    %v3657 = vunpack.c.h.b16 %v3321
    %v3658 = vunpack.c.l.b16 %v3322
    %v3659 = vunpack.c.h.b16 %v3322
    %v3660 = vunpack.c.l.b16 %v3323
    %v3661 = vunpack.c.h.b16 %v3323
    %v3662 = vunpack.c.l.b16 %v3324
    %v3663 = vunpack.c.h.b16 %v3324
    %v3664 = vunpack.c.l.b16 %v3325
    %v3665 = vunpack.c.h.b16 %v3325
    %v3666 = vunpack.c.l.b16 %v3326
    %v3667 = vunpack.c.h.b16 %v3326
    %v3668 = vunpack.c.l.b16 %v3327
    %v3669 = vunpack.c.h.b16 %v3327
    %v3670 = vunpack.c.l.b16 %v3328
    %v3671 = vunpack.c.h.b16 %v3328
    %v3672 = vunpack.c.l.b16 %v3329
    %v3673 = vunpack.c.h.b16 %v3329
    %v3674 = vunpack.c.l.b16 %v3330
    %v3675 = vunpack.c.h.b16 %v3330
    %v3676 = vunpack.c.l.b16 %v3331
    %v3677 = vunpack.c.h.b16 %v3331
    %v3678 = vunpack.c.l.b16 %v3332
    %v3679 = vunpack.c.h.b16 %v3332
    %v3680 = vunpack.c.l.b16 %v3333
    %v3681 = vunpack.c.h.b16 %v3333
    %v3682 = vunpack.c.l.b16 %v3334
    %v3683 = vunpack.c.h.b16 %v3334
    %v3684 = vunpack.c.l.b16 %v3335
    %v3685 = vunpack.c.h.b16 %v3335
    %v3686 = vunpack.c.l.b16 %v3336
    %v3687 = vunpack.c.h.b16 %v3336
    %v3688 = vunpack.c.l.b16 %v3337
    %v3689 = vunpack.c.h.b16 %v3337
    %v3690 = vunpack.c.l.b16 %v3338
    %v3691 = vunpack.c.h.b16 %v3338
    %v3692 = vunpack.c.l.b16 %v3339
    %v3693 = vunpack.c.h.b16 %v3339
    %v3694 = vunpack.c.l.b16 %v3340
    %v3695 = vunpack.c.h.b16 %v3340
    %v3696 = vunpack.c.l.b16 %v3341
    %v3697 = vunpack.c.h.b16 %v3341
    %v3698 = vunpack.c.l.b16 %v3342
    %v3699 = vunpack.c.h.b16 %v3342
    %v3700 = vunpack.c.l.b16 %v3343
    %v3701 = vunpack.c.h.b16 %v3343
    %v3702 = vunpack.c.l.b16 %v3344
    %v3703 = vunpack.c.h.b16 %v3344
    %v3704 = vunpack.c.l.b16 %v3345
    %v3705 = vunpack.c.h.b16 %v3345
    %v3706 = vunpack.c.l.b16 %v3346
    %v3707 = vunpack.c.h.b16 %v3346
    %v3708 = vunpack.c.l.b16 %v3347
    %v3709 = vunpack.c.h.b16 %v3347
    %v3710 = vunpack.c.l.b16 %v3348
    %v3711 = vunpack.c.h.b16 %v3348
    %v3712 = vunpack.c.l.b16 %v3349
    %v3713 = vunpack.c.h.b16 %v3349
    %v3714 = vunpack.c.l.b16 %v3350
    %v3715 = vunpack.c.h.b16 %v3350
    %v3716 = vunpack.c.l.b16 %v3351
    %v3717 = vunpack.c.h.b16 %v3351
    %v3718 = vunpack.c.l.b16 %v3352
    %v3719 = vunpack.c.h.b16 %v3352
    %v3720 = vunpack.c.l.b16 %v3353
    %v3721 = vunpack.c.h.b16 %v3353
    %v3722 = vunpack.c.l.b16 %v3354
    %v3723 = vunpack.c.h.b16 %v3354
    %v3724 = vunpack.c.l.b16 %v3355
    %v3725 = vunpack.c.h.b16 %v3355
    %v3726 = vunpack.c.l.b16 %v3356
    %v3727 = vunpack.c.h.b16 %v3356
    %v3728 = vunpack.c.l.b16 %v3357
    %v3729 = vunpack.c.h.b16 %v3357
    %v3730 = vunpack.c.l.b16 %v3358
    %v3731 = vunpack.c.h.b16 %v3358
    %v3732 = vunpack.c.l.b16 %v3359
    %v3733 = vunpack.c.h.b16 %v3359
    %v3734 = vunpack.c.l.b16 %v3360
    %v3735 = vunpack.c.h.b16 %v3360
    %v3736 = vunpack.c.l.b16 %v3361
    %v3737 = vunpack.c.h.b16 %v3361
    %v3738 = vunpack.c.l.b16 %v3362
    %v3739 = vunpack.c.h.b16 %v3362
    %v3740 = vunpack.c.l.b16 %v3363
    %v3741 = vunpack.c.h.b16 %v3363
    %v3742 = vunpack.c.l.b16 %v3364
    %v3743 = vunpack.c.h.b16 %v3364
    %v3744 = vunpack.c.l.b16 %v3365
    %v3745 = vunpack.c.h.b16 %v3365
    %v3746 = vunpack.c.l.b16 %v3366
    %v3747 = vunpack.c.h.b16 %v3366
    %v3748 = vunpack.c.l.b16 %v3367
    %v3749 = vunpack.c.h.b16 %v3367
    %v3750 = vunpack.c.l.b16 %v3368
    %v3751 = vunpack.c.h.b16 %v3368
    %v3752 = vunpack.c.l.b16 %v3369
    %v3753 = vunpack.c.h.b16 %v3369
    %v3754 = vunpack.c.l.b16 %v3370
    %v3755 = vunpack.c.h.b16 %v3370
    %v3756 = vunpack.c.l.b16 %v3371
    %v3757 = vunpack.c.h.b16 %v3371
    %v3758 = vunpack.c.l.b16 %v3372
    %v3759 = vunpack.c.h.b16 %v3372
    %v3760 = vunpack.c.l.b16 %v3373
    %v3761 = vunpack.c.h.b16 %v3373
    %v3762 = vunpack.c.l.b16 %v3374
    %v3763 = vunpack.c.h.b16 %v3374
    %v3764 = vunpack.c.l.b16 %v3375
    %v3765 = vunpack.c.h.b16 %v3375
    %v3766 = vunpack.c.l.b16 %v3376
    %v3767 = vunpack.c.h.b16 %v3376
    %v3768 = vunpack.c.l.b16 %v3377
    %v3769 = vunpack.c.h.b16 %v3377
    %v3770 = vunpack.c.l.b16 %v3378
    %v3771 = vunpack.c.h.b16 %v3378
    %v3772 = vunpack.c.l.b16 %v3379
    %v3773 = vunpack.c.h.b16 %v3379
    %v3774 = vunpack.c.l.b16 %v3380
    %v3775 = vunpack.c.h.b16 %v3380
    %v3776 = vunpack.c.l.b16 %v3381
    %v3777 = vunpack.c.h.b16 %v3381
    %v3778 = vunpack.c.l.b16 %v3382
    %v3779 = vunpack.c.h.b16 %v3382
    %v3780 = vunpack.c.l.b16 %v3383
    %v3781 = vunpack.c.h.b16 %v3383
    %v3782 = vunpack.c.l.b16 %v3384
    %v3783 = vunpack.c.h.b16 %v3384
    %v3784 = vunpack.c.l.b16 %v3385
    %v3785 = vunpack.c.h.b16 %v3385
    %v3786 = vunpack.c.l.b16 %v3386
    %v3787 = vunpack.c.h.b16 %v3386
    %v3788 = vunpack.c.l.b16 %v3387
    %v3789 = vunpack.c.h.b16 %v3387
    %v3790 = vunpack.c.l.b16 %v3388
    %v3791 = vunpack.c.h.b16 %v3388
    %v3792 = vunpack.c.l.b16 %v3389
    %v3793 = vunpack.c.h.b16 %v3389
    %v3794 = vunpack.c.l.b16 %v3390
    %v3795 = vunpack.c.h.b16 %v3390
    %v3796 = vunpack.c.l.b16 %v3391
    %v3797 = vunpack.c.h.b16 %v3391
    %v3798 = vunpack.c.l.b16 %v3392
    %v3799 = vunpack.c.h.b16 %v3392
    %v3800 = vpack.c.b16 %v3548, %v3544
    %v3801 = vpack.c.b16 %v3549, %v3545
    %v3802 = vpack.c.b16 %v3550, %v3546
    %v3803 = vpack.c.b16 %v3551, %v3547
    %v3804 = vpack.c.b16 %v3556, %v3552
    %v3805 = vpack.c.b16 %v3557, %v3553
    %v3806 = vpack.c.b16 %v3558, %v3554
    %v3807 = vpack.c.b16 %v3559, %v3555
    %v3808 = vpack.c.b16 %v3564, %v3560
    %v3809 = vpack.c.b16 %v3565, %v3561
    %v3810 = vpack.c.b16 %v3566, %v3562
    %v3811 = vpack.c.b16 %v3567, %v3563
    %v3812 = vpack.c.b16 %v3572, %v3568
    %v3813 = vpack.c.b16 %v3573, %v3569
    %v3814 = vpack.c.b16 %v3574, %v3570
    %v3815 = vpack.c.b16 %v3575, %v3571
    %v3816 = vpack.c.b16 %v3580, %v3576
    %v3817 = vpack.c.b16 %v3581, %v3577
    %v3818 = vpack.c.b16 %v3582, %v3578
    %v3819 = vpack.c.b16 %v3583, %v3579
    %v3820 = vpack.c.b16 %v3588, %v3584
    %v3821 = vpack.c.b16 %v3589, %v3585
    %v3822 = vpack.c.b16 %v3590, %v3586
    %v3823 = vpack.c.b16 %v3591, %v3587
    %v3824 = vpack.c.b16 %v3596, %v3592
    %v3825 = vpack.c.b16 %v3597, %v3593
    %v3826 = vpack.c.b16 %v3598, %v3594
    %v3827 = vpack.c.b16 %v3599, %v3595
    %v3828 = vpack.c.b16 %v3604, %v3600
    %v3829 = vpack.c.b16 %v3605, %v3601
    %v3830 = vpack.c.b16 %v3606, %v3602
    %v3831 = vpack.c.b16 %v3607, %v3603
    %v3832 = vpack.c.b16 %v3612, %v3608
    %v3833 = vpack.c.b16 %v3613, %v3609
    %v3834 = vpack.c.b16 %v3614, %v3610
    %v3835 = vpack.c.b16 %v3615, %v3611
    %v3836 = vpack.c.b16 %v3620, %v3616
    %v3837 = vpack.c.b16 %v3621, %v3617
    %v3838 = vpack.c.b16 %v3622, %v3618
    %v3839 = vpack.c.b16 %v3623, %v3619
    %v3840 = vpack.c.b16 %v3628, %v3624
    %v3841 = vpack.c.b16 %v3629, %v3625
    %v3842 = vpack.c.b16 %v3630, %v3626
    %v3843 = vpack.c.b16 %v3631, %v3627
    %v3844 = vpack.c.b16 %v3636, %v3632
    %v3845 = vpack.c.b16 %v3637, %v3633
    %v3846 = vpack.c.b16 %v3638, %v3634
    %v3847 = vpack.c.b16 %v3639, %v3635
    %v3848 = vpack.c.b16 %v3644, %v3640
    %v3849 = vpack.c.b16 %v3645, %v3641
    %v3850 = vpack.c.b16 %v3646, %v3642
    %v3851 = vpack.c.b16 %v3647, %v3643
    %v3852 = vpack.c.b16 %v3652, %v3648
    %v3853 = vpack.c.b16 %v3653, %v3649
    %v3854 = vpack.c.b16 %v3654, %v3650
    %v3855 = vpack.c.b16 %v3655, %v3651
    %v3856 = vpack.c.b16 %v3660, %v3656
    %v3857 = vpack.c.b16 %v3661, %v3657
    %v3858 = vpack.c.b16 %v3662, %v3658
    %v3859 = vpack.c.b16 %v3663, %v3659
    %v3860 = vpack.c.b16 %v3668, %v3664
    %v3861 = vpack.c.b16 %v3669, %v3665
    %v3862 = vpack.c.b16 %v3670, %v3666
    %v3863 = vpack.c.b16 %v3671, %v3667
    %v3864 = vpack.c.b16 %v3676, %v3672
    %v3865 = vpack.c.b16 %v3677, %v3673
    %v3866 = vpack.c.b16 %v3678, %v3674
    %v3867 = vpack.c.b16 %v3679, %v3675
    %v3868 = vpack.c.b16 %v3684, %v3680
    %v3869 = vpack.c.b16 %v3685, %v3681
    %v3870 = vpack.c.b16 %v3686, %v3682
    %v3871 = vpack.c.b16 %v3687, %v3683
    %v3872 = vpack.c.b16 %v3692, %v3688
    %v3873 = vpack.c.b16 %v3693, %v3689
    %v3874 = vpack.c.b16 %v3694, %v3690
    %v3875 = vpack.c.b16 %v3695, %v3691
    %v3876 = vpack.c.b16 %v3700, %v3696
    %v3877 = vpack.c.b16 %v3701, %v3697
    %v3878 = vpack.c.b16 %v3702, %v3698
    %v3879 = vpack.c.b16 %v3703, %v3699
    %v3880 = vpack.c.b16 %v3708, %v3704
    %v3881 = vpack.c.b16 %v3709, %v3705
    %v3882 = vpack.c.b16 %v3710, %v3706
    %v3883 = vpack.c.b16 %v3711, %v3707
    %v3884 = vpack.c.b16 %v3716, %v3712
    %v3885 = vpack.c.b16 %v3717, %v3713
    %v3886 = vpack.c.b16 %v3718, %v3714
    %v3887 = vpack.c.b16 %v3719, %v3715
    %v3888 = vpack.c.b16 %v3724, %v3720
    %v3889 = vpack.c.b16 %v3725, %v3721
    %v3890 = vpack.c.b16 %v3726, %v3722
    %v3891 = vpack.c.b16 %v3727, %v3723
    %v3892 = vpack.c.b16 %v3732, %v3728
    %v3893 = vpack.c.b16 %v3733, %v3729
    %v3894 = vpack.c.b16 %v3734, %v3730
    %v3895 = vpack.c.b16 %v3735, %v3731
    %v3896 = vpack.c.b16 %v3740, %v3736
    %v3897 = vpack.c.b16 %v3741, %v3737
    %v3898 = vpack.c.b16 %v3742, %v3738
    %v3899 = vpack.c.b16 %v3743, %v3739
    %v3900 = vpack.c.b16 %v3748, %v3744
    %v3901 = vpack.c.b16 %v3749, %v3745
    %v3902 = vpack.c.b16 %v3750, %v3746
    %v3903 = vpack.c.b16 %v3751, %v3747
    %v3904 = vpack.c.b16 %v3756, %v3752
    %v3905 = vpack.c.b16 %v3757, %v3753
    %v3906 = vpack.c.b16 %v3758, %v3754
    %v3907 = vpack.c.b16 %v3759, %v3755
    %v3908 = vpack.c.b16 %v3764, %v3760
    %v3909 = vpack.c.b16 %v3765, %v3761
    %v3910 = vpack.c.b16 %v3766, %v3762
    %v3911 = vpack.c.b16 %v3767, %v3763
    %v3912 = vpack.c.b16 %v3772, %v3768
    %v3913 = vpack.c.b16 %v3773, %v3769
    %v3914 = vpack.c.b16 %v3774, %v3770
    %v3915 = vpack.c.b16 %v3775, %v3771
    %v3916 = vpack.c.b16 %v3780, %v3776
    %v3917 = vpack.c.b16 %v3781, %v3777
    %v3918 = vpack.c.b16 %v3782, %v3778
    %v3919 = vpack.c.b16 %v3783, %v3779
    %v3920 = vpack.c.b16 %v3788, %v3784
    %v3921 = vpack.c.b16 %v3789, %v3785
    %v3922 = vpack.c.b16 %v3790, %v3786
    %v3923 = vpack.c.b16 %v3791, %v3787
    %v3924 = vpack.c.b16 %v3796, %v3792
    %v3925 = vpack.c.b16 %v3797, %v3793
    %v3926 = vpack.c.b16 %v3798, %v3794
    %v3927 = vpack.c.b16 %v3799, %v3795
    %4056 = vmatprep.subr.bf16.mxu0 %v3829
    %4057 = vmatpush1.bf16.msra.mxu0 %v3828
    %4058 = vmatprep.subr.bf16.mxu0 %v3825
    %4059 = vmatpush1.bf16.msra.mxu0 %v3824
    %4060 = vmatprep.subr.bf16.mxu0 %v3821
    %4061 = vmatpush1.bf16.msra.mxu0 %v3820
    %4062 = vmatprep.subr.bf16.mxu0 %v3817
    %4063 = vmatpush1.bf16.msra.mxu0 %v3816
    %4064 = vmatprep.subr.bf16.mxu0 %v3813
    %4065 = vmatpush1.bf16.msra.mxu0 %v3812
    %4066 = vmatprep.subr.bf16.mxu0 %v3809
    %4067 = vmatpush1.bf16.msra.mxu0 %v3808
    %4068 = vmatprep.subr.bf16.mxu0 %v3805
    %4069 = vmatpush1.bf16.msra.mxu0 %v3804
    %4070 = vmatprep.subr.bf16.mxu0 %v3801
    %4071 = vmatpush1.bf16.msra.mxu0 %v3800
    %4072 = vmatprep.subr.bf16.mxu0 %v3861
    %4073 = vmatpush2.bf16.msra.mxu0 %v3860
    %4074 = vmatprep.subr.bf16.mxu0 %v3857
    %4075 = vmatpush2.bf16.msra.mxu0 %v3856
    %4076 = vmatprep.subr.bf16.mxu0 %v3853
    %4077 = vmatpush2.bf16.msra.mxu0 %v3852
    %4078 = vmatprep.subr.bf16.mxu0 %v3849
    %4079 = vmatpush2.bf16.msra.mxu0 %v3848
    %4080 = vmatprep.subr.bf16.mxu0 %v3845
    %4081 = vmatpush2.bf16.msra.mxu0 %v3844
    %4082 = vmatprep.subr.bf16.mxu0 %v3841
    %4083 = vmatpush2.bf16.msra.mxu0 %v3840
    %4084 = vmatprep.subr.bf16.mxu0 %v3837
    %4085 = vmatpush2.bf16.msra.mxu0 %v3836
    %4086 = vmatprep.subr.bf16.mxu0 %v3833
    %4087 = vmatpush2.bf16.msra.mxu0 %v3832
    %4088 = vmatprep.mubr.bf16.mxu0 %v3261
    %4089 = vmatmul.mubr.bf16.gmra.mxu0 %v3260
    %v4090 = vpop.f32.mrf.mxu0
    %v4091 = vadd.f32 %v3399, %v4090
    %v4092 = vpop.f32.mrf.mxu0
    %v4093 = vadd.f32 %v3403, %v4092
    %v4094 = vpop.f32.mrf.mxu0
    %v4095 = vpop.f32.mrf.mxu0
    %4096 = vdwg.mxu0
    %4097 = vmatprep.subr.bf16.mxu0 %v3893
    %4098 = vmatpush1.bf16.msra.mxu0 %v3892
    %4099 = vmatprep.subr.bf16.mxu0 %v3889
    %4100 = vmatpush1.bf16.msra.mxu0 %v3888
    %4101 = vmatprep.subr.bf16.mxu0 %v3885
    %4102 = vmatpush1.bf16.msra.mxu0 %v3884
    %4103 = vmatprep.subr.bf16.mxu0 %v3881
    %4104 = vmatpush1.bf16.msra.mxu0 %v3880
    %4105 = vmatprep.subr.bf16.mxu0 %v3877
    %4106 = vmatpush1.bf16.msra.mxu0 %v3876
    %4107 = vmatprep.subr.bf16.mxu0 %v3873
    %4108 = vmatpush1.bf16.msra.mxu0 %v3872
    %4109 = vmatprep.subr.bf16.mxu0 %v3869
    %4110 = vmatpush1.bf16.msra.mxu0 %v3868
    %4111 = vmatprep.subr.bf16.mxu0 %v3865
    %4112 = vmatpush1.bf16.msra.mxu0 %v3864
    %4113 = vmatprep.subr.bf16.mxu0 %v3925
    %4114 = vmatpush2.bf16.msra.mxu0 %v3924
    %4115 = vmatprep.subr.bf16.mxu0 %v3921
    %4116 = vmatpush2.bf16.msra.mxu0 %v3920
    %4117 = vmatprep.subr.bf16.mxu0 %v3917
    %4118 = vmatpush2.bf16.msra.mxu0 %v3916
    %4119 = vmatprep.subr.bf16.mxu0 %v3913
    %4120 = vmatpush2.bf16.msra.mxu0 %v3912
    %4121 = vmatprep.subr.bf16.mxu0 %v3909
    %4122 = vmatpush2.bf16.msra.mxu0 %v3908
    %4123 = vmatprep.subr.bf16.mxu0 %v3905
    %4124 = vmatpush2.bf16.msra.mxu0 %v3904
    %4125 = vmatprep.subr.bf16.mxu0 %v3901
    %4126 = vmatpush2.bf16.msra.mxu0 %v3900
    %4127 = vmatprep.subr.bf16.mxu0 %v3897
    %4128 = vmatpush2.bf16.msra.mxu0 %v3896
    %4129 = vmatprep.mubr.bf16.mxu0 %v3263
    %4130 = vmatmul.mubr.bf16.gmra.mxu0 %v3262
    %v4131 = vpop.f32.mrf.mxu0
    %v4132 = vadd.f32 %v4091, %v4131
    %v4133 = vpop.f32.mrf.mxu0
    %v4134 = vadd.f32 %v4093, %v4133
    %v4135 = vpop.f32.mrf.mxu0
    %v4136 = vpop.f32.mrf.mxu0
    %4137 = vdwg.mxu0
    %4138 = vmatprep.subr.bf16.mxu0 %v3831
    %4139 = vmatpush1.bf16.msra.mxu0 %v3830
    %4140 = vmatprep.subr.bf16.mxu0 %v3827
    %4141 = vmatpush1.bf16.msra.mxu0 %v3826
    %4142 = vmatprep.subr.bf16.mxu0 %v3823
    %4143 = vmatpush1.bf16.msra.mxu0 %v3822
    %4144 = vmatprep.subr.bf16.mxu0 %v3819
    %4145 = vmatpush1.bf16.msra.mxu0 %v3818
    %4146 = vmatprep.subr.bf16.mxu0 %v3815
    %4147 = vmatpush1.bf16.msra.mxu0 %v3814
    %4148 = vmatprep.subr.bf16.mxu0 %v3811
    %4149 = vmatpush1.bf16.msra.mxu0 %v3810
    %4150 = vmatprep.subr.bf16.mxu0 %v3807
    %4151 = vmatpush1.bf16.msra.mxu0 %v3806
    %4152 = vmatprep.subr.bf16.mxu0 %v3803
    %4153 = vmatpush1.bf16.msra.mxu0 %v3802
    %4154 = vmatprep.subr.bf16.mxu0 %v3863
    %4155 = vmatpush2.bf16.msra.mxu0 %v3862
    %4156 = vmatprep.subr.bf16.mxu0 %v3859
    %4157 = vmatpush2.bf16.msra.mxu0 %v3858
    %4158 = vmatprep.subr.bf16.mxu0 %v3855
    %4159 = vmatpush2.bf16.msra.mxu0 %v3854
    %4160 = vmatprep.subr.bf16.mxu0 %v3851
    %4161 = vmatpush2.bf16.msra.mxu0 %v3850
    %4162 = vmatprep.subr.bf16.mxu0 %v3847
    %4163 = vmatpush2.bf16.msra.mxu0 %v3846
    %4164 = vmatprep.subr.bf16.mxu0 %v3843
    %4165 = vmatpush2.bf16.msra.mxu0 %v3842
    %4166 = vmatprep.subr.bf16.mxu0 %v3839
    %4167 = vmatpush2.bf16.msra.mxu0 %v3838
    %4168 = vmatprep.subr.bf16.mxu0 %v3835
    %4169 = vmatpush2.bf16.msra.mxu0 %v3834
    %4170 = vmatprep.mubr.bf16.mxu0 %v3261
    %4171 = vmatmul.mubr.bf16.gmra.mxu0 %v3260
    %v4172 = vpop.f32.mrf.mxu0
    %v4173 = vadd.f32 %v3407, %v4172
    %v4174 = vpop.f32.mrf.mxu0
    %v4175 = vadd.f32 %v3411, %v4174
    %v4176 = vpop.f32.mrf.mxu0
    %v4177 = vpop.f32.mrf.mxu0
    %4178 = vdwg.mxu0
    %4179 = vmatprep.subr.bf16.mxu0 %v3895
    %4180 = vmatpush1.bf16.msra.mxu0 %v3894
    %4181 = vmatprep.subr.bf16.mxu0 %v3891
    %4182 = vmatpush1.bf16.msra.mxu0 %v3890
    %4183 = vmatprep.subr.bf16.mxu0 %v3887
    %4184 = vmatpush1.bf16.msra.mxu0 %v3886
    %4185 = vmatprep.subr.bf16.mxu0 %v3883
    %4186 = vmatpush1.bf16.msra.mxu0 %v3882
    %4187 = vmatprep.subr.bf16.mxu0 %v3879
    %4188 = vmatpush1.bf16.msra.mxu0 %v3878
    %4189 = vmatprep.subr.bf16.mxu0 %v3875
    %4190 = vmatpush1.bf16.msra.mxu0 %v3874
    %4191 = vmatprep.subr.bf16.mxu0 %v3871
    %4192 = vmatpush1.bf16.msra.mxu0 %v3870
    %4193 = vmatprep.subr.bf16.mxu0 %v3867
    %4194 = vmatpush1.bf16.msra.mxu0 %v3866
    %4195 = vmatprep.subr.bf16.mxu0 %v3927
    %4196 = vmatpush2.bf16.msra.mxu0 %v3926
    %4197 = vmatprep.subr.bf16.mxu0 %v3923
    %4198 = vmatpush2.bf16.msra.mxu0 %v3922
    %4199 = vmatprep.subr.bf16.mxu0 %v3919
    %4200 = vmatpush2.bf16.msra.mxu0 %v3918
    %4201 = vmatprep.subr.bf16.mxu0 %v3915
    %4202 = vmatpush2.bf16.msra.mxu0 %v3914
    %4203 = vmatprep.subr.bf16.mxu0 %v3911
    %4204 = vmatpush2.bf16.msra.mxu0 %v3910
    %4205 = vmatprep.subr.bf16.mxu0 %v3907
    %4206 = vmatpush2.bf16.msra.mxu0 %v3906
    %4207 = vmatprep.subr.bf16.mxu0 %v3903
    %4208 = vmatpush2.bf16.msra.mxu0 %v3902
    %4209 = vmatprep.subr.bf16.mxu0 %v3899
    %4210 = vmatpush2.bf16.msra.mxu0 %v3898
    %4211 = vmatprep.mubr.bf16.mxu0 %v3263
    %4212 = vmatmul.mubr.bf16.gmra.mxu0 %v3262
    %v4213 = vpop.f32.mrf.mxu0
    %v4214 = vadd.f32 %v4173, %v4213
    %v4215 = vpop.f32.mrf.mxu0
    %v4216 = vadd.f32 %v4175, %v4215
    %v4217 = vpop.f32.mrf.mxu0
    %v4218 = vpop.f32.mrf.mxu0
    %4219 = vdwg.mxu0
    %v4220 = vadd.f32 %v2292, %v4132
    %v4221 = vadd.f32 %v2293, %v4134
    %v4222 = vadd.f32 %v2294, %v4214
    %v4223 = vadd.f32 %v2295, %v4216
    %v4224 = vmax.f32 %v4220, 0.0
    %v4225 = vmax.f32 %v4221, 0.0
    %v4226 = vmax.f32 %v4222, 0.0
    %v4227 = vmax.f32 %v4223, 0.0
    %v4228 = vpack.c.bf16 %v4224, %v4224
    %v4229 = vpack.c.bf16 %v4225, %v4225
    %v4230 = vpack.c.bf16 %v4226, %v4226
    %v4231 = vpack.c.bf16 %v4227, %v4227
    %s4232 = scalar_lea.vmem [#allocation7], 2048
    %v4233 = vld [vmem:[%s4232] sm:$0xff]
    %v4234 = vld [vmem:[%s4232 + $0x8] sm:$0xff]
    %v4235 = vld [vmem:[%s4232 + $0x10] sm:$0xff]
    %v4236 = vld [vmem:[%s4232 + $0x18] sm:$0xff]
    %v4237 = vld [vmem:[%s4232 + $0x20] sm:$0xff]
    %v4238 = vld [vmem:[%s4232 + $0x28] sm:$0xff]
    %v4239 = vld [vmem:[%s4232 + $0x30] sm:$0xff]
    %v4240 = vld [vmem:[%s4232 + $0x38] sm:$0xff]
    %v4241 = vld [vmem:[%s4232 + $0x40] sm:$0xff]
    %v4242 = vld [vmem:[%s4232 + $0x48] sm:$0xff]
    %v4243 = vld [vmem:[%s4232 + $0x50] sm:$0xff]
    %v4244 = vld [vmem:[%s4232 + $0x58] sm:$0xff]
    %v4245 = vld [vmem:[%s4232 + $0x60] sm:$0xff]
    %v4246 = vld [vmem:[%s4232 + $0x68] sm:$0xff]
    %v4247 = vld [vmem:[%s4232 + $0x70] sm:$0xff]
    %v4248 = vld [vmem:[%s4232 + $0x78] sm:$0xff]
    %v4249 = vld [vmem:[%s4232 + $0x80] sm:$0xff]
    %v4250 = vld [vmem:[%s4232 + $0x88] sm:$0xff]
    %v4251 = vld [vmem:[%s4232 + $0x90] sm:$0xff]
    %v4252 = vld [vmem:[%s4232 + $0x98] sm:$0xff]
    %v4253 = vld [vmem:[%s4232 + $0xa0] sm:$0xff]
    %v4254 = vld [vmem:[%s4232 + $0xa8] sm:$0xff]
    %v4255 = vld [vmem:[%s4232 + $0xb0] sm:$0xff]
    %v4256 = vld [vmem:[%s4232 + $0xb8] sm:$0xff]
    %v4257 = vld [vmem:[%s4232 + $0xc0] sm:$0xff]
    %v4258 = vld [vmem:[%s4232 + $0xc8] sm:$0xff]
    %v4259 = vld [vmem:[%s4232 + $0xd0] sm:$0xff]
    %v4260 = vld [vmem:[%s4232 + $0xd8] sm:$0xff]
    %v4261 = vld [vmem:[%s4232 + $0xe0] sm:$0xff]
    %v4262 = vld [vmem:[%s4232 + $0xe8] sm:$0xff]
    %v4263 = vld [vmem:[%s4232 + $0xf0] sm:$0xff]
    %v4264 = vld [vmem:[%s4232 + $0xf8] sm:$0xff]
    %v4265 = vld [vmem:[%s4232 + $0x100] sm:$0xff]
    %v4266 = vld [vmem:[%s4232 + $0x108] sm:$0xff]
    %v4267 = vld [vmem:[%s4232 + $0x110] sm:$0xff]
    %v4268 = vld [vmem:[%s4232 + $0x118] sm:$0xff]
    %v4269 = vld [vmem:[%s4232 + $0x120] sm:$0xff]
    %v4270 = vld [vmem:[%s4232 + $0x128] sm:$0xff]
    %v4271 = vld [vmem:[%s4232 + $0x130] sm:$0xff]
    %v4272 = vld [vmem:[%s4232 + $0x138] sm:$0xff]
    %v4273 = vld [vmem:[%s4232 + $0x140] sm:$0xff]
    %v4274 = vld [vmem:[%s4232 + $0x148] sm:$0xff]
    %v4275 = vld [vmem:[%s4232 + $0x150] sm:$0xff]
    %v4276 = vld [vmem:[%s4232 + $0x158] sm:$0xff]
    %v4277 = vld [vmem:[%s4232 + $0x160] sm:$0xff]
    %v4278 = vld [vmem:[%s4232 + $0x168] sm:$0xff]
    %v4279 = vld [vmem:[%s4232 + $0x170] sm:$0xff]
    %v4280 = vld [vmem:[%s4232 + $0x178] sm:$0xff]
    %v4281 = vld [vmem:[%s4232 + $0x180] sm:$0xff]
    %v4282 = vld [vmem:[%s4232 + $0x188] sm:$0xff]
    %v4283 = vld [vmem:[%s4232 + $0x190] sm:$0xff]
    %v4284 = vld [vmem:[%s4232 + $0x198] sm:$0xff]
    %v4285 = vld [vmem:[%s4232 + $0x1a0] sm:$0xff]
    %v4286 = vld [vmem:[%s4232 + $0x1a8] sm:$0xff]
    %v4287 = vld [vmem:[%s4232 + $0x1b0] sm:$0xff]
    %v4288 = vld [vmem:[%s4232 + $0x1b8] sm:$0xff]
    %v4289 = vld [vmem:[%s4232 + $0x1c0] sm:$0xff]
    %v4290 = vld [vmem:[%s4232 + $0x1c8] sm:$0xff]
    %v4291 = vld [vmem:[%s4232 + $0x1d0] sm:$0xff]
    %v4292 = vld [vmem:[%s4232 + $0x1d8] sm:$0xff]
    %v4293 = vld [vmem:[%s4232 + $0x1e0] sm:$0xff]
    %v4294 = vld [vmem:[%s4232 + $0x1e8] sm:$0xff]
    %v4295 = vld [vmem:[%s4232 + $0x1f0] sm:$0xff]
    %v4296 = vld [vmem:[%s4232 + $0x1f8] sm:$0xff]
    %v4297 = vld [vmem:[%s4232 + $0x200] sm:$0xff]
    %v4298 = vld [vmem:[%s4232 + $0x208] sm:$0xff]
    %v4299 = vld [vmem:[%s4232 + $0x210] sm:$0xff]
    %v4300 = vld [vmem:[%s4232 + $0x218] sm:$0xff]
    %v4301 = vld [vmem:[%s4232 + $0x220] sm:$0xff]
    %v4302 = vld [vmem:[%s4232 + $0x228] sm:$0xff]
    %v4303 = vld [vmem:[%s4232 + $0x230] sm:$0xff]
    %v4304 = vld [vmem:[%s4232 + $0x238] sm:$0xff]
    %v4305 = vld [vmem:[%s4232 + $0x240] sm:$0xff]
    %v4306 = vld [vmem:[%s4232 + $0x248] sm:$0xff]
    %v4307 = vld [vmem:[%s4232 + $0x250] sm:$0xff]
    %v4308 = vld [vmem:[%s4232 + $0x258] sm:$0xff]
    %v4309 = vld [vmem:[%s4232 + $0x260] sm:$0xff]
    %v4310 = vld [vmem:[%s4232 + $0x268] sm:$0xff]
    %v4311 = vld [vmem:[%s4232 + $0x270] sm:$0xff]
    %v4312 = vld [vmem:[%s4232 + $0x278] sm:$0xff]
    %v4313 = vld [vmem:[%s4232 + $0x280] sm:$0xff]
    %v4314 = vld [vmem:[%s4232 + $0x288] sm:$0xff]
    %v4315 = vld [vmem:[%s4232 + $0x290] sm:$0xff]
    %v4316 = vld [vmem:[%s4232 + $0x298] sm:$0xff]
    %v4317 = vld [vmem:[%s4232 + $0x2a0] sm:$0xff]
    %v4318 = vld [vmem:[%s4232 + $0x2a8] sm:$0xff]
    %v4319 = vld [vmem:[%s4232 + $0x2b0] sm:$0xff]
    %v4320 = vld [vmem:[%s4232 + $0x2b8] sm:$0xff]
    %v4321 = vld [vmem:[%s4232 + $0x2c0] sm:$0xff]
    %v4322 = vld [vmem:[%s4232 + $0x2c8] sm:$0xff]
    %v4323 = vld [vmem:[%s4232 + $0x2d0] sm:$0xff]
    %v4324 = vld [vmem:[%s4232 + $0x2d8] sm:$0xff]
    %v4325 = vld [vmem:[%s4232 + $0x2e0] sm:$0xff]
    %v4326 = vld [vmem:[%s4232 + $0x2e8] sm:$0xff]
    %v4327 = vld [vmem:[%s4232 + $0x2f0] sm:$0xff]
    %v4328 = vld [vmem:[%s4232 + $0x2f8] sm:$0xff]
    %v4329 = vld [vmem:[%s4232 + $0x300] sm:$0xff]
    %v4330 = vld [vmem:[%s4232 + $0x308] sm:$0xff]
    %v4331 = vld [vmem:[%s4232 + $0x310] sm:$0xff]
    %v4332 = vld [vmem:[%s4232 + $0x318] sm:$0xff]
    %v4333 = vld [vmem:[%s4232 + $0x320] sm:$0xff]
    %v4334 = vld [vmem:[%s4232 + $0x328] sm:$0xff]
    %v4335 = vld [vmem:[%s4232 + $0x330] sm:$0xff]
    %v4336 = vld [vmem:[%s4232 + $0x338] sm:$0xff]
    %v4337 = vld [vmem:[%s4232 + $0x340] sm:$0xff]
    %v4338 = vld [vmem:[%s4232 + $0x348] sm:$0xff]
    %v4339 = vld [vmem:[%s4232 + $0x350] sm:$0xff]
    %v4340 = vld [vmem:[%s4232 + $0x358] sm:$0xff]
    %v4341 = vld [vmem:[%s4232 + $0x360] sm:$0xff]
    %v4342 = vld [vmem:[%s4232 + $0x368] sm:$0xff]
    %v4343 = vld [vmem:[%s4232 + $0x370] sm:$0xff]
    %v4344 = vld [vmem:[%s4232 + $0x378] sm:$0xff]
    %v4345 = vld [vmem:[%s4232 + $0x380] sm:$0xff]
    %v4346 = vld [vmem:[%s4232 + $0x388] sm:$0xff]
    %v4347 = vld [vmem:[%s4232 + $0x390] sm:$0xff]
    %v4348 = vld [vmem:[%s4232 + $0x398] sm:$0xff]
    %v4349 = vld [vmem:[%s4232 + $0x3a0] sm:$0xff]
    %v4350 = vld [vmem:[%s4232 + $0x3a8] sm:$0xff]
    %v4351 = vld [vmem:[%s4232 + $0x3b0] sm:$0xff]
    %v4352 = vld [vmem:[%s4232 + $0x3b8] sm:$0xff]
    %v4353 = vld [vmem:[%s4232 + $0x3c0] sm:$0xff]
    %v4354 = vld [vmem:[%s4232 + $0x3c8] sm:$0xff]
    %v4355 = vld [vmem:[%s4232 + $0x3d0] sm:$0xff]
    %v4356 = vld [vmem:[%s4232 + $0x3d8] sm:$0xff]
    %v4357 = vld [vmem:[%s4232 + $0x3e0] sm:$0xff]
    %v4358 = vld [vmem:[%s4232 + $0x3e8] sm:$0xff]
    %v4359 = vld [vmem:[%s4232 + $0x3f0] sm:$0xff]
    %v4360 = vld [vmem:[%s4232 + $0x3f8] sm:$0xff]
    %s4361 = scalar_lea.vmem [#allocation8], 8
    %v4362 = vld [vmem:[%s4361] sm:$0xf]
    %v4364 = vlaneseq
    %v4365 = vshrl.u32 %v4364, 7
    %v4366 = vsub.s32 0, %v4365
    %v4367 = vrot.slane %v4362, %v4366
    %v4368 = vlaneseq
    %v4369 = vshrl.u32 %v4368, 7
    %v4370 = vsub.s32 1, %v4369
    %v4371 = vrot.slane %v4362, %v4370
    %v4372 = vlaneseq
    %v4373 = vshrl.u32 %v4372, 7
    %v4374 = vsub.s32 2, %v4373
    %v4375 = vrot.slane %v4362, %v4374
    %v4376 = vlaneseq
    %v4377 = vshrl.u32 %v4376, 7
    %v4378 = vsub.s32 3, %v4377
    %v4379 = vrot.slane %v4362, %v4378
    %v4512 = vunpack.c.l.b16 %v4233
    %v4513 = vunpack.c.h.b16 %v4233
    %v4514 = vunpack.c.l.b16 %v4234
    %v4515 = vunpack.c.h.b16 %v4234
    %v4516 = vunpack.c.l.b16 %v4235
    %v4517 = vunpack.c.h.b16 %v4235
    %v4518 = vunpack.c.l.b16 %v4236
    %v4519 = vunpack.c.h.b16 %v4236
    %v4520 = vunpack.c.l.b16 %v4237
    %v4521 = vunpack.c.h.b16 %v4237
    %v4522 = vunpack.c.l.b16 %v4238
    %v4523 = vunpack.c.h.b16 %v4238
    %v4524 = vunpack.c.l.b16 %v4239
    %v4525 = vunpack.c.h.b16 %v4239
    %v4526 = vunpack.c.l.b16 %v4240
    %v4527 = vunpack.c.h.b16 %v4240
    %v4528 = vunpack.c.l.b16 %v4241
    %v4529 = vunpack.c.h.b16 %v4241
    %v4530 = vunpack.c.l.b16 %v4242
    %v4531 = vunpack.c.h.b16 %v4242
    %v4532 = vunpack.c.l.b16 %v4243
    %v4533 = vunpack.c.h.b16 %v4243
    %v4534 = vunpack.c.l.b16 %v4244
    %v4535 = vunpack.c.h.b16 %v4244
    %v4536 = vunpack.c.l.b16 %v4245
    %v4537 = vunpack.c.h.b16 %v4245
    %v4538 = vunpack.c.l.b16 %v4246
    %v4539 = vunpack.c.h.b16 %v4246
    %v4540 = vunpack.c.l.b16 %v4247
    %v4541 = vunpack.c.h.b16 %v4247
    %v4542 = vunpack.c.l.b16 %v4248
    %v4543 = vunpack.c.h.b16 %v4248
    %v4544 = vunpack.c.l.b16 %v4249
    %v4545 = vunpack.c.h.b16 %v4249
    %v4546 = vunpack.c.l.b16 %v4250
    %v4547 = vunpack.c.h.b16 %v4250
    %v4548 = vunpack.c.l.b16 %v4251
    %v4549 = vunpack.c.h.b16 %v4251
    %v4550 = vunpack.c.l.b16 %v4252
    %v4551 = vunpack.c.h.b16 %v4252
    %v4552 = vunpack.c.l.b16 %v4253
    %v4553 = vunpack.c.h.b16 %v4253
    %v4554 = vunpack.c.l.b16 %v4254
    %v4555 = vunpack.c.h.b16 %v4254
    %v4556 = vunpack.c.l.b16 %v4255
    %v4557 = vunpack.c.h.b16 %v4255
    %v4558 = vunpack.c.l.b16 %v4256
    %v4559 = vunpack.c.h.b16 %v4256
    %v4560 = vunpack.c.l.b16 %v4257
    %v4561 = vunpack.c.h.b16 %v4257
    %v4562 = vunpack.c.l.b16 %v4258
    %v4563 = vunpack.c.h.b16 %v4258
    %v4564 = vunpack.c.l.b16 %v4259
    %v4565 = vunpack.c.h.b16 %v4259
    %v4566 = vunpack.c.l.b16 %v4260
    %v4567 = vunpack.c.h.b16 %v4260
    %v4568 = vunpack.c.l.b16 %v4261
    %v4569 = vunpack.c.h.b16 %v4261
    %v4570 = vunpack.c.l.b16 %v4262
    %v4571 = vunpack.c.h.b16 %v4262
    %v4572 = vunpack.c.l.b16 %v4263
    %v4573 = vunpack.c.h.b16 %v4263
    %v4574 = vunpack.c.l.b16 %v4264
    %v4575 = vunpack.c.h.b16 %v4264
    %v4576 = vunpack.c.l.b16 %v4265
    %v4577 = vunpack.c.h.b16 %v4265
    %v4578 = vunpack.c.l.b16 %v4266
    %v4579 = vunpack.c.h.b16 %v4266
    %v4580 = vunpack.c.l.b16 %v4267
    %v4581 = vunpack.c.h.b16 %v4267
    %v4582 = vunpack.c.l.b16 %v4268
    %v4583 = vunpack.c.h.b16 %v4268
    %v4584 = vunpack.c.l.b16 %v4269
    %v4585 = vunpack.c.h.b16 %v4269
    %v4586 = vunpack.c.l.b16 %v4270
    %v4587 = vunpack.c.h.b16 %v4270
    %v4588 = vunpack.c.l.b16 %v4271
    %v4589 = vunpack.c.h.b16 %v4271
    %v4590 = vunpack.c.l.b16 %v4272
    %v4591 = vunpack.c.h.b16 %v4272
    %v4592 = vunpack.c.l.b16 %v4273
    %v4593 = vunpack.c.h.b16 %v4273
    %v4594 = vunpack.c.l.b16 %v4274
    %v4595 = vunpack.c.h.b16 %v4274
    %v4596 = vunpack.c.l.b16 %v4275
    %v4597 = vunpack.c.h.b16 %v4275
    %v4598 = vunpack.c.l.b16 %v4276
    %v4599 = vunpack.c.h.b16 %v4276
    %v4600 = vunpack.c.l.b16 %v4277
    %v4601 = vunpack.c.h.b16 %v4277
    %v4602 = vunpack.c.l.b16 %v4278
    %v4603 = vunpack.c.h.b16 %v4278
    %v4604 = vunpack.c.l.b16 %v4279
    %v4605 = vunpack.c.h.b16 %v4279
    %v4606 = vunpack.c.l.b16 %v4280
    %v4607 = vunpack.c.h.b16 %v4280
    %v4608 = vunpack.c.l.b16 %v4281
    %v4609 = vunpack.c.h.b16 %v4281
    %v4610 = vunpack.c.l.b16 %v4282
    %v4611 = vunpack.c.h.b16 %v4282
    %v4612 = vunpack.c.l.b16 %v4283
    %v4613 = vunpack.c.h.b16 %v4283
    %v4614 = vunpack.c.l.b16 %v4284
    %v4615 = vunpack.c.h.b16 %v4284
    %v4616 = vunpack.c.l.b16 %v4285
    %v4617 = vunpack.c.h.b16 %v4285
    %v4618 = vunpack.c.l.b16 %v4286
    %v4619 = vunpack.c.h.b16 %v4286
    %v4620 = vunpack.c.l.b16 %v4287
    %v4621 = vunpack.c.h.b16 %v4287
    %v4622 = vunpack.c.l.b16 %v4288
    %v4623 = vunpack.c.h.b16 %v4288
    %v4624 = vunpack.c.l.b16 %v4289
    %v4625 = vunpack.c.h.b16 %v4289
    %v4626 = vunpack.c.l.b16 %v4290
    %v4627 = vunpack.c.h.b16 %v4290
    %v4628 = vunpack.c.l.b16 %v4291
    %v4629 = vunpack.c.h.b16 %v4291
    %v4630 = vunpack.c.l.b16 %v4292
    %v4631 = vunpack.c.h.b16 %v4292
    %v4632 = vunpack.c.l.b16 %v4293
    %v4633 = vunpack.c.h.b16 %v4293
    %v4634 = vunpack.c.l.b16 %v4294
    %v4635 = vunpack.c.h.b16 %v4294
    %v4636 = vunpack.c.l.b16 %v4295
    %v4637 = vunpack.c.h.b16 %v4295
    %v4638 = vunpack.c.l.b16 %v4296
    %v4639 = vunpack.c.h.b16 %v4296
    %v4640 = vunpack.c.l.b16 %v4297
    %v4641 = vunpack.c.h.b16 %v4297
    %v4642 = vunpack.c.l.b16 %v4298
    %v4643 = vunpack.c.h.b16 %v4298
    %v4644 = vunpack.c.l.b16 %v4299
    %v4645 = vunpack.c.h.b16 %v4299
    %v4646 = vunpack.c.l.b16 %v4300
    %v4647 = vunpack.c.h.b16 %v4300
    %v4648 = vunpack.c.l.b16 %v4301
    %v4649 = vunpack.c.h.b16 %v4301
    %v4650 = vunpack.c.l.b16 %v4302
    %v4651 = vunpack.c.h.b16 %v4302
    %v4652 = vunpack.c.l.b16 %v4303
    %v4653 = vunpack.c.h.b16 %v4303
    %v4654 = vunpack.c.l.b16 %v4304
    %v4655 = vunpack.c.h.b16 %v4304
    %v4656 = vunpack.c.l.b16 %v4305
    %v4657 = vunpack.c.h.b16 %v4305
    %v4658 = vunpack.c.l.b16 %v4306
    %v4659 = vunpack.c.h.b16 %v4306
    %v4660 = vunpack.c.l.b16 %v4307
    %v4661 = vunpack.c.h.b16 %v4307
    %v4662 = vunpack.c.l.b16 %v4308
    %v4663 = vunpack.c.h.b16 %v4308
    %v4664 = vunpack.c.l.b16 %v4309
    %v4665 = vunpack.c.h.b16 %v4309
    %v4666 = vunpack.c.l.b16 %v4310
    %v4667 = vunpack.c.h.b16 %v4310
    %v4668 = vunpack.c.l.b16 %v4311
    %v4669 = vunpack.c.h.b16 %v4311
    %v4670 = vunpack.c.l.b16 %v4312
    %v4671 = vunpack.c.h.b16 %v4312
    %v4672 = vunpack.c.l.b16 %v4313
    %v4673 = vunpack.c.h.b16 %v4313
    %v4674 = vunpack.c.l.b16 %v4314
    %v4675 = vunpack.c.h.b16 %v4314
    %v4676 = vunpack.c.l.b16 %v4315
    %v4677 = vunpack.c.h.b16 %v4315
    %v4678 = vunpack.c.l.b16 %v4316
    %v4679 = vunpack.c.h.b16 %v4316
    %v4680 = vunpack.c.l.b16 %v4317
    %v4681 = vunpack.c.h.b16 %v4317
    %v4682 = vunpack.c.l.b16 %v4318
    %v4683 = vunpack.c.h.b16 %v4318
    %v4684 = vunpack.c.l.b16 %v4319
    %v4685 = vunpack.c.h.b16 %v4319
    %v4686 = vunpack.c.l.b16 %v4320
    %v4687 = vunpack.c.h.b16 %v4320
    %v4688 = vunpack.c.l.b16 %v4321
    %v4689 = vunpack.c.h.b16 %v4321
    %v4690 = vunpack.c.l.b16 %v4322
    %v4691 = vunpack.c.h.b16 %v4322
    %v4692 = vunpack.c.l.b16 %v4323
    %v4693 = vunpack.c.h.b16 %v4323
    %v4694 = vunpack.c.l.b16 %v4324
    %v4695 = vunpack.c.h.b16 %v4324
    %v4696 = vunpack.c.l.b16 %v4325
    %v4697 = vunpack.c.h.b16 %v4325
    %v4698 = vunpack.c.l.b16 %v4326
    %v4699 = vunpack.c.h.b16 %v4326
    %v4700 = vunpack.c.l.b16 %v4327
    %v4701 = vunpack.c.h.b16 %v4327
    %v4702 = vunpack.c.l.b16 %v4328
    %v4703 = vunpack.c.h.b16 %v4328
    %v4704 = vunpack.c.l.b16 %v4329
    %v4705 = vunpack.c.h.b16 %v4329
    %v4706 = vunpack.c.l.b16 %v4330
    %v4707 = vunpack.c.h.b16 %v4330
    %v4708 = vunpack.c.l.b16 %v4331
    %v4709 = vunpack.c.h.b16 %v4331
    %v4710 = vunpack.c.l.b16 %v4332
    %v4711 = vunpack.c.h.b16 %v4332
    %v4712 = vunpack.c.l.b16 %v4333
    %v4713 = vunpack.c.h.b16 %v4333
    %v4714 = vunpack.c.l.b16 %v4334
    %v4715 = vunpack.c.h.b16 %v4334
    %v4716 = vunpack.c.l.b16 %v4335
    %v4717 = vunpack.c.h.b16 %v4335
    %v4718 = vunpack.c.l.b16 %v4336
    %v4719 = vunpack.c.h.b16 %v4336
    %v4720 = vunpack.c.l.b16 %v4337
    %v4721 = vunpack.c.h.b16 %v4337
    %v4722 = vunpack.c.l.b16 %v4338
    %v4723 = vunpack.c.h.b16 %v4338
    %v4724 = vunpack.c.l.b16 %v4339
    %v4725 = vunpack.c.h.b16 %v4339
    %v4726 = vunpack.c.l.b16 %v4340
    %v4727 = vunpack.c.h.b16 %v4340
    %v4728 = vunpack.c.l.b16 %v4341
    %v4729 = vunpack.c.h.b16 %v4341
    %v4730 = vunpack.c.l.b16 %v4342
    %v4731 = vunpack.c.h.b16 %v4342
    %v4732 = vunpack.c.l.b16 %v4343
    %v4733 = vunpack.c.h.b16 %v4343
    %v4734 = vunpack.c.l.b16 %v4344
    %v4735 = vunpack.c.h.b16 %v4344
    %v4736 = vunpack.c.l.b16 %v4345
    %v4737 = vunpack.c.h.b16 %v4345
    %v4738 = vunpack.c.l.b16 %v4346
    %v4739 = vunpack.c.h.b16 %v4346
    %v4740 = vunpack.c.l.b16 %v4347
    %v4741 = vunpack.c.h.b16 %v4347
    %v4742 = vunpack.c.l.b16 %v4348
    %v4743 = vunpack.c.h.b16 %v4348
    %v4744 = vunpack.c.l.b16 %v4349
    %v4745 = vunpack.c.h.b16 %v4349
    %v4746 = vunpack.c.l.b16 %v4350
    %v4747 = vunpack.c.h.b16 %v4350
    %v4748 = vunpack.c.l.b16 %v4351
    %v4749 = vunpack.c.h.b16 %v4351
    %v4750 = vunpack.c.l.b16 %v4352
    %v4751 = vunpack.c.h.b16 %v4352
    %v4752 = vunpack.c.l.b16 %v4353
    %v4753 = vunpack.c.h.b16 %v4353
    %v4754 = vunpack.c.l.b16 %v4354
    %v4755 = vunpack.c.h.b16 %v4354
    %v4756 = vunpack.c.l.b16 %v4355
    %v4757 = vunpack.c.h.b16 %v4355
    %v4758 = vunpack.c.l.b16 %v4356
    %v4759 = vunpack.c.h.b16 %v4356
    %v4760 = vunpack.c.l.b16 %v4357
    %v4761 = vunpack.c.h.b16 %v4357
    %v4762 = vunpack.c.l.b16 %v4358
    %v4763 = vunpack.c.h.b16 %v4358
    %v4764 = vunpack.c.l.b16 %v4359
    %v4765 = vunpack.c.h.b16 %v4359
    %v4766 = vunpack.c.l.b16 %v4360
    %v4767 = vunpack.c.h.b16 %v4360
    %v4768 = vpack.c.b16 %v4516, %v4512
    %v4769 = vpack.c.b16 %v4517, %v4513
    %v4770 = vpack.c.b16 %v4518, %v4514
    %v4771 = vpack.c.b16 %v4519, %v4515
    %v4772 = vpack.c.b16 %v4524, %v4520
    %v4773 = vpack.c.b16 %v4525, %v4521
    %v4774 = vpack.c.b16 %v4526, %v4522
    %v4775 = vpack.c.b16 %v4527, %v4523
    %v4776 = vpack.c.b16 %v4532, %v4528
    %v4777 = vpack.c.b16 %v4533, %v4529
    %v4778 = vpack.c.b16 %v4534, %v4530
    %v4779 = vpack.c.b16 %v4535, %v4531
    %v4780 = vpack.c.b16 %v4540, %v4536
    %v4781 = vpack.c.b16 %v4541, %v4537
    %v4782 = vpack.c.b16 %v4542, %v4538
    %v4783 = vpack.c.b16 %v4543, %v4539
    %v4784 = vpack.c.b16 %v4548, %v4544
    %v4785 = vpack.c.b16 %v4549, %v4545
    %v4786 = vpack.c.b16 %v4550, %v4546
    %v4787 = vpack.c.b16 %v4551, %v4547
    %v4788 = vpack.c.b16 %v4556, %v4552
    %v4789 = vpack.c.b16 %v4557, %v4553
    %v4790 = vpack.c.b16 %v4558, %v4554
    %v4791 = vpack.c.b16 %v4559, %v4555
    %v4792 = vpack.c.b16 %v4564, %v4560
    %v4793 = vpack.c.b16 %v4565, %v4561
    %v4794 = vpack.c.b16 %v4566, %v4562
    %v4795 = vpack.c.b16 %v4567, %v4563
    %v4796 = vpack.c.b16 %v4572, %v4568
    %v4797 = vpack.c.b16 %v4573, %v4569
    %v4798 = vpack.c.b16 %v4574, %v4570
    %v4799 = vpack.c.b16 %v4575, %v4571
    %v4800 = vpack.c.b16 %v4580, %v4576
    %v4801 = vpack.c.b16 %v4581, %v4577
    %v4802 = vpack.c.b16 %v4582, %v4578
    %v4803 = vpack.c.b16 %v4583, %v4579
    %v4804 = vpack.c.b16 %v4588, %v4584
    %v4805 = vpack.c.b16 %v4589, %v4585
    %v4806 = vpack.c.b16 %v4590, %v4586
    %v4807 = vpack.c.b16 %v4591, %v4587
    %v4808 = vpack.c.b16 %v4596, %v4592
    %v4809 = vpack.c.b16 %v4597, %v4593
    %v4810 = vpack.c.b16 %v4598, %v4594
    %v4811 = vpack.c.b16 %v4599, %v4595
    %v4812 = vpack.c.b16 %v4604, %v4600
    %v4813 = vpack.c.b16 %v4605, %v4601
    %v4814 = vpack.c.b16 %v4606, %v4602
    %v4815 = vpack.c.b16 %v4607, %v4603
    %v4816 = vpack.c.b16 %v4612, %v4608
    %v4817 = vpack.c.b16 %v4613, %v4609
    %v4818 = vpack.c.b16 %v4614, %v4610
    %v4819 = vpack.c.b16 %v4615, %v4611
    %v4820 = vpack.c.b16 %v4620, %v4616
    %v4821 = vpack.c.b16 %v4621, %v4617
    %v4822 = vpack.c.b16 %v4622, %v4618
    %v4823 = vpack.c.b16 %v4623, %v4619
    %v4824 = vpack.c.b16 %v4628, %v4624
    %v4825 = vpack.c.b16 %v4629, %v4625
    %v4826 = vpack.c.b16 %v4630, %v4626
    %v4827 = vpack.c.b16 %v4631, %v4627
    %v4828 = vpack.c.b16 %v4636, %v4632
    %v4829 = vpack.c.b16 %v4637, %v4633
    %v4830 = vpack.c.b16 %v4638, %v4634
    %v4831 = vpack.c.b16 %v4639, %v4635
    %v4832 = vpack.c.b16 %v4644, %v4640
    %v4833 = vpack.c.b16 %v4645, %v4641
    %v4834 = vpack.c.b16 %v4646, %v4642
    %v4835 = vpack.c.b16 %v4647, %v4643
    %v4836 = vpack.c.b16 %v4652, %v4648
    %v4837 = vpack.c.b16 %v4653, %v4649
    %v4838 = vpack.c.b16 %v4654, %v4650
    %v4839 = vpack.c.b16 %v4655, %v4651
    %v4840 = vpack.c.b16 %v4660, %v4656
    %v4841 = vpack.c.b16 %v4661, %v4657
    %v4842 = vpack.c.b16 %v4662, %v4658
    %v4843 = vpack.c.b16 %v4663, %v4659
    %v4844 = vpack.c.b16 %v4668, %v4664
    %v4845 = vpack.c.b16 %v4669, %v4665
    %v4846 = vpack.c.b16 %v4670, %v4666
    %v4847 = vpack.c.b16 %v4671, %v4667
    %v4848 = vpack.c.b16 %v4676, %v4672
    %v4849 = vpack.c.b16 %v4677, %v4673
    %v4850 = vpack.c.b16 %v4678, %v4674
    %v4851 = vpack.c.b16 %v4679, %v4675
    %v4852 = vpack.c.b16 %v4684, %v4680
    %v4853 = vpack.c.b16 %v4685, %v4681
    %v4854 = vpack.c.b16 %v4686, %v4682
    %v4855 = vpack.c.b16 %v4687, %v4683
    %v4856 = vpack.c.b16 %v4692, %v4688
    %v4857 = vpack.c.b16 %v4693, %v4689
    %v4858 = vpack.c.b16 %v4694, %v4690
    %v4859 = vpack.c.b16 %v4695, %v4691
    %v4860 = vpack.c.b16 %v4700, %v4696
    %v4861 = vpack.c.b16 %v4701, %v4697
    %v4862 = vpack.c.b16 %v4702, %v4698
    %v4863 = vpack.c.b16 %v4703, %v4699
    %v4864 = vpack.c.b16 %v4708, %v4704
    %v4865 = vpack.c.b16 %v4709, %v4705
    %v4866 = vpack.c.b16 %v4710, %v4706
    %v4867 = vpack.c.b16 %v4711, %v4707
    %v4868 = vpack.c.b16 %v4716, %v4712
    %v4869 = vpack.c.b16 %v4717, %v4713
    %v4870 = vpack.c.b16 %v4718, %v4714
    %v4871 = vpack.c.b16 %v4719, %v4715
    %v4872 = vpack.c.b16 %v4724, %v4720
    %v4873 = vpack.c.b16 %v4725, %v4721
    %v4874 = vpack.c.b16 %v4726, %v4722
    %v4875 = vpack.c.b16 %v4727, %v4723
    %v4876 = vpack.c.b16 %v4732, %v4728
    %v4877 = vpack.c.b16 %v4733, %v4729
    %v4878 = vpack.c.b16 %v4734, %v4730
    %v4879 = vpack.c.b16 %v4735, %v4731
    %v4880 = vpack.c.b16 %v4740, %v4736
    %v4881 = vpack.c.b16 %v4741, %v4737
    %v4882 = vpack.c.b16 %v4742, %v4738
    %v4883 = vpack.c.b16 %v4743, %v4739
    %v4884 = vpack.c.b16 %v4748, %v4744
    %v4885 = vpack.c.b16 %v4749, %v4745
    %v4886 = vpack.c.b16 %v4750, %v4746
    %v4887 = vpack.c.b16 %v4751, %v4747
    %v4888 = vpack.c.b16 %v4756, %v4752
    %v4889 = vpack.c.b16 %v4757, %v4753
    %v4890 = vpack.c.b16 %v4758, %v4754
    %v4891 = vpack.c.b16 %v4759, %v4755
    %v4892 = vpack.c.b16 %v4764, %v4760
    %v4893 = vpack.c.b16 %v4765, %v4761
    %v4894 = vpack.c.b16 %v4766, %v4762
    %v4895 = vpack.c.b16 %v4767, %v4763
    %5024 = vmatprep.subr.bf16.mxu0 %v4797
    %5025 = vmatpush1.bf16.msra.mxu0 %v4796
    %5026 = vmatprep.subr.bf16.mxu0 %v4793
    %5027 = vmatpush1.bf16.msra.mxu0 %v4792
    %5028 = vmatprep.subr.bf16.mxu0 %v4789
    %5029 = vmatpush1.bf16.msra.mxu0 %v4788
    %5030 = vmatprep.subr.bf16.mxu0 %v4785
    %5031 = vmatpush1.bf16.msra.mxu0 %v4784
    %5032 = vmatprep.subr.bf16.mxu0 %v4781
    %5033 = vmatpush1.bf16.msra.mxu0 %v4780
    %5034 = vmatprep.subr.bf16.mxu0 %v4777
    %5035 = vmatpush1.bf16.msra.mxu0 %v4776
    %5036 = vmatprep.subr.bf16.mxu0 %v4773
    %5037 = vmatpush1.bf16.msra.mxu0 %v4772
    %5038 = vmatprep.subr.bf16.mxu0 %v4769
    %5039 = vmatpush1.bf16.msra.mxu0 %v4768
    %5040 = vmatprep.subr.bf16.mxu0 %v4829
    %5041 = vmatpush2.bf16.msra.mxu0 %v4828
    %5042 = vmatprep.subr.bf16.mxu0 %v4825
    %5043 = vmatpush2.bf16.msra.mxu0 %v4824
    %5044 = vmatprep.subr.bf16.mxu0 %v4821
    %5045 = vmatpush2.bf16.msra.mxu0 %v4820
    %5046 = vmatprep.subr.bf16.mxu0 %v4817
    %5047 = vmatpush2.bf16.msra.mxu0 %v4816
    %5048 = vmatprep.subr.bf16.mxu0 %v4813
    %5049 = vmatpush2.bf16.msra.mxu0 %v4812
    %5050 = vmatprep.subr.bf16.mxu0 %v4809
    %5051 = vmatpush2.bf16.msra.mxu0 %v4808
    %5052 = vmatprep.subr.bf16.mxu0 %v4805
    %5053 = vmatpush2.bf16.msra.mxu0 %v4804
    %5054 = vmatprep.subr.bf16.mxu0 %v4801
    %5055 = vmatpush2.bf16.msra.mxu0 %v4800
    %5056 = vmatprep.mubr.bf16.mxu0 %v4229
    %5057 = vmatmul.mubr.bf16.gmra.mxu0 %v4228
    %v5058 = vpop.f32.mrf.mxu0
    %v5059 = vadd.f32 %v4367, %v5058
    %v5060 = vpop.f32.mrf.mxu0
    %v5061 = vadd.f32 %v4371, %v5060
    %v5062 = vpop.f32.mrf.mxu0
    %v5063 = vpop.f32.mrf.mxu0
    %5064 = vdwg.mxu0
    %5065 = vmatprep.subr.bf16.mxu0 %v4861
    %5066 = vmatpush1.bf16.msra.mxu0 %v4860
    %5067 = vmatprep.subr.bf16.mxu0 %v4857
    %5068 = vmatpush1.bf16.msra.mxu0 %v4856
    %5069 = vmatprep.subr.bf16.mxu0 %v4853
    %5070 = vmatpush1.bf16.msra.mxu0 %v4852
    %5071 = vmatprep.subr.bf16.mxu0 %v4849
    %5072 = vmatpush1.bf16.msra.mxu0 %v4848
    %5073 = vmatprep.subr.bf16.mxu0 %v4845
    %5074 = vmatpush1.bf16.msra.mxu0 %v4844
    %5075 = vmatprep.subr.bf16.mxu0 %v4841
    %5076 = vmatpush1.bf16.msra.mxu0 %v4840
    %5077 = vmatprep.subr.bf16.mxu0 %v4837
    %5078 = vmatpush1.bf16.msra.mxu0 %v4836
    %5079 = vmatprep.subr.bf16.mxu0 %v4833
    %5080 = vmatpush1.bf16.msra.mxu0 %v4832
    %5081 = vmatprep.subr.bf16.mxu0 %v4893
    %5082 = vmatpush2.bf16.msra.mxu0 %v4892
    %5083 = vmatprep.subr.bf16.mxu0 %v4889
    %5084 = vmatpush2.bf16.msra.mxu0 %v4888
    %5085 = vmatprep.subr.bf16.mxu0 %v4885
    %5086 = vmatpush2.bf16.msra.mxu0 %v4884
    %5087 = vmatprep.subr.bf16.mxu0 %v4881
    %5088 = vmatpush2.bf16.msra.mxu0 %v4880
    %5089 = vmatprep.subr.bf16.mxu0 %v4877
    %5090 = vmatpush2.bf16.msra.mxu0 %v4876
    %5091 = vmatprep.subr.bf16.mxu0 %v4873
    %5092 = vmatpush2.bf16.msra.mxu0 %v4872
    %5093 = vmatprep.subr.bf16.mxu0 %v4869
    %5094 = vmatpush2.bf16.msra.mxu0 %v4868
    %5095 = vmatprep.subr.bf16.mxu0 %v4865
    %5096 = vmatpush2.bf16.msra.mxu0 %v4864
    %5097 = vmatprep.mubr.bf16.mxu0 %v4231
    %5098 = vmatmul.mubr.bf16.gmra.mxu0 %v4230
    %v5099 = vpop.f32.mrf.mxu0
    %v5100 = vadd.f32 %v5059, %v5099
    %v5101 = vpop.f32.mrf.mxu0
    %v5102 = vadd.f32 %v5061, %v5101
    %v5103 = vpop.f32.mrf.mxu0
    %v5104 = vpop.f32.mrf.mxu0
    %5105 = vdwg.mxu0
    %5106 = vmatprep.subr.bf16.mxu0 %v4799
    %5107 = vmatpush1.bf16.msra.mxu0 %v4798
    %5108 = vmatprep.subr.bf16.mxu0 %v4795
    %5109 = vmatpush1.bf16.msra.mxu0 %v4794
    %5110 = vmatprep.subr.bf16.mxu0 %v4791
    %5111 = vmatpush1.bf16.msra.mxu0 %v4790
    %5112 = vmatprep.subr.bf16.mxu0 %v4787
    %5113 = vmatpush1.bf16.msra.mxu0 %v4786
    %5114 = vmatprep.subr.bf16.mxu0 %v4783
    %5115 = vmatpush1.bf16.msra.mxu0 %v4782
    %5116 = vmatprep.subr.bf16.mxu0 %v4779
    %5117 = vmatpush1.bf16.msra.mxu0 %v4778
    %5118 = vmatprep.subr.bf16.mxu0 %v4775
    %5119 = vmatpush1.bf16.msra.mxu0 %v4774
    %5120 = vmatprep.subr.bf16.mxu0 %v4771
    %5121 = vmatpush1.bf16.msra.mxu0 %v4770
    %5122 = vmatprep.subr.bf16.mxu0 %v4831
    %5123 = vmatpush2.bf16.msra.mxu0 %v4830
    %5124 = vmatprep.subr.bf16.mxu0 %v4827
    %5125 = vmatpush2.bf16.msra.mxu0 %v4826
    %5126 = vmatprep.subr.bf16.mxu0 %v4823
    %5127 = vmatpush2.bf16.msra.mxu0 %v4822
    %5128 = vmatprep.subr.bf16.mxu0 %v4819
    %5129 = vmatpush2.bf16.msra.mxu0 %v4818
    %5130 = vmatprep.subr.bf16.mxu0 %v4815
    %5131 = vmatpush2.bf16.msra.mxu0 %v4814
    %5132 = vmatprep.subr.bf16.mxu0 %v4811
    %5133 = vmatpush2.bf16.msra.mxu0 %v4810
    %5134 = vmatprep.subr.bf16.mxu0 %v4807
    %5135 = vmatpush2.bf16.msra.mxu0 %v4806
    %5136 = vmatprep.subr.bf16.mxu0 %v4803
    %5137 = vmatpush2.bf16.msra.mxu0 %v4802
    %5138 = vmatprep.mubr.bf16.mxu0 %v4229
    %5139 = vmatmul.mubr.bf16.gmra.mxu0 %v4228
    %v5140 = vpop.f32.mrf.mxu0
    %v5141 = vadd.f32 %v4375, %v5140
    %v5142 = vpop.f32.mrf.mxu0
    %v5143 = vadd.f32 %v4379, %v5142
    %v5144 = vpop.f32.mrf.mxu0
    %v5145 = vpop.f32.mrf.mxu0
    %5146 = vdwg.mxu0
    %5147 = vmatprep.subr.bf16.mxu0 %v4863
    %5148 = vmatpush1.bf16.msra.mxu0 %v4862
    %5149 = vmatprep.subr.bf16.mxu0 %v4859
    %5150 = vmatpush1.bf16.msra.mxu0 %v4858
    %5151 = vmatprep.subr.bf16.mxu0 %v4855
    %5152 = vmatpush1.bf16.msra.mxu0 %v4854
    %5153 = vmatprep.subr.bf16.mxu0 %v4851
    %5154 = vmatpush1.bf16.msra.mxu0 %v4850
    %5155 = vmatprep.subr.bf16.mxu0 %v4847
    %5156 = vmatpush1.bf16.msra.mxu0 %v4846
    %5157 = vmatprep.subr.bf16.mxu0 %v4843
    %5158 = vmatpush1.bf16.msra.mxu0 %v4842
    %5159 = vmatprep.subr.bf16.mxu0 %v4839
    %5160 = vmatpush1.bf16.msra.mxu0 %v4838
    %5161 = vmatprep.subr.bf16.mxu0 %v4835
    %5162 = vmatpush1.bf16.msra.mxu0 %v4834
    %5163 = vmatprep.subr.bf16.mxu0 %v4895
    %5164 = vmatpush2.bf16.msra.mxu0 %v4894
    %5165 = vmatprep.subr.bf16.mxu0 %v4891
    %5166 = vmatpush2.bf16.msra.mxu0 %v4890
    %5167 = vmatprep.subr.bf16.mxu0 %v4887
    %5168 = vmatpush2.bf16.msra.mxu0 %v4886
    %5169 = vmatprep.subr.bf16.mxu0 %v4883
    %5170 = vmatpush2.bf16.msra.mxu0 %v4882
    %5171 = vmatprep.subr.bf16.mxu0 %v4879
    %5172 = vmatpush2.bf16.msra.mxu0 %v4878
    %5173 = vmatprep.subr.bf16.mxu0 %v4875
    %5174 = vmatpush2.bf16.msra.mxu0 %v4874
    %5175 = vmatprep.subr.bf16.mxu0 %v4871
    %5176 = vmatpush2.bf16.msra.mxu0 %v4870
    %5177 = vmatprep.subr.bf16.mxu0 %v4867
    %5178 = vmatpush2.bf16.msra.mxu0 %v4866
    %5179 = vmatprep.mubr.bf16.mxu0 %v4231
    %5180 = vmatmul.mubr.bf16.gmra.mxu0 %v4230
    %v5181 = vpop.f32.mrf.mxu0
    %v5182 = vadd.f32 %v5141, %v5181
    %v5183 = vpop.f32.mrf.mxu0
    %v5184 = vadd.f32 %v5143, %v5183
    %v5185 = vpop.f32.mrf.mxu0
    %v5186 = vpop.f32.mrf.mxu0
    %5187 = vdwg.mxu0
    %v5188 = vmax.f32 %v5100, 0.0
    %v5189 = vmax.f32 %v5102, 0.0
    %v5190 = vmax.f32 %v5182, 0.0
    %v5191 = vmax.f32 %v5184, 0.0
    %v5192 = vpack.c.bf16 %v5188, %v5188
    %v5193 = vpack.c.bf16 %v5189, %v5189
    %v5194 = vpack.c.bf16 %v5190, %v5190
    %v5195 = vpack.c.bf16 %v5191, %v5191
    %s5196 = scalar_lea.vmem [#allocation10], 2048
    %v5197 = vld [vmem:[%s5196] sm:$0xff]
    %v5198 = vld [vmem:[%s5196 + $0x8] sm:$0xff]
    %v5199 = vld [vmem:[%s5196 + $0x10] sm:$0xff]
    %v5200 = vld [vmem:[%s5196 + $0x18] sm:$0xff]
    %v5201 = vld [vmem:[%s5196 + $0x20] sm:$0xff]
    %v5202 = vld [vmem:[%s5196 + $0x28] sm:$0xff]
    %v5203 = vld [vmem:[%s5196 + $0x30] sm:$0xff]
    %v5204 = vld [vmem:[%s5196 + $0x38] sm:$0xff]
    %v5205 = vld [vmem:[%s5196 + $0x40] sm:$0xff]
    %v5206 = vld [vmem:[%s5196 + $0x48] sm:$0xff]
    %v5207 = vld [vmem:[%s5196 + $0x50] sm:$0xff]
    %v5208 = vld [vmem:[%s5196 + $0x58] sm:$0xff]
    %v5209 = vld [vmem:[%s5196 + $0x60] sm:$0xff]
    %v5210 = vld [vmem:[%s5196 + $0x68] sm:$0xff]
    %v5211 = vld [vmem:[%s5196 + $0x70] sm:$0xff]
    %v5212 = vld [vmem:[%s5196 + $0x78] sm:$0xff]
    %v5213 = vld [vmem:[%s5196 + $0x80] sm:$0xff]
    %v5214 = vld [vmem:[%s5196 + $0x88] sm:$0xff]
    %v5215 = vld [vmem:[%s5196 + $0x90] sm:$0xff]
    %v5216 = vld [vmem:[%s5196 + $0x98] sm:$0xff]
    %v5217 = vld [vmem:[%s5196 + $0xa0] sm:$0xff]
    %v5218 = vld [vmem:[%s5196 + $0xa8] sm:$0xff]
    %v5219 = vld [vmem:[%s5196 + $0xb0] sm:$0xff]
    %v5220 = vld [vmem:[%s5196 + $0xb8] sm:$0xff]
    %v5221 = vld [vmem:[%s5196 + $0xc0] sm:$0xff]
    %v5222 = vld [vmem:[%s5196 + $0xc8] sm:$0xff]
    %v5223 = vld [vmem:[%s5196 + $0xd0] sm:$0xff]
    %v5224 = vld [vmem:[%s5196 + $0xd8] sm:$0xff]
    %v5225 = vld [vmem:[%s5196 + $0xe0] sm:$0xff]
    %v5226 = vld [vmem:[%s5196 + $0xe8] sm:$0xff]
    %v5227 = vld [vmem:[%s5196 + $0xf0] sm:$0xff]
    %v5228 = vld [vmem:[%s5196 + $0xf8] sm:$0xff]
    %v5229 = vld [vmem:[%s5196 + $0x100] sm:$0xff]
    %v5230 = vld [vmem:[%s5196 + $0x108] sm:$0xff]
    %v5231 = vld [vmem:[%s5196 + $0x110] sm:$0xff]
    %v5232 = vld [vmem:[%s5196 + $0x118] sm:$0xff]
    %v5233 = vld [vmem:[%s5196 + $0x120] sm:$0xff]
    %v5234 = vld [vmem:[%s5196 + $0x128] sm:$0xff]
    %v5235 = vld [vmem:[%s5196 + $0x130] sm:$0xff]
    %v5236 = vld [vmem:[%s5196 + $0x138] sm:$0xff]
    %v5237 = vld [vmem:[%s5196 + $0x140] sm:$0xff]
    %v5238 = vld [vmem:[%s5196 + $0x148] sm:$0xff]
    %v5239 = vld [vmem:[%s5196 + $0x150] sm:$0xff]
    %v5240 = vld [vmem:[%s5196 + $0x158] sm:$0xff]
    %v5241 = vld [vmem:[%s5196 + $0x160] sm:$0xff]
    %v5242 = vld [vmem:[%s5196 + $0x168] sm:$0xff]
    %v5243 = vld [vmem:[%s5196 + $0x170] sm:$0xff]
    %v5244 = vld [vmem:[%s5196 + $0x178] sm:$0xff]
    %v5245 = vld [vmem:[%s5196 + $0x180] sm:$0xff]
    %v5246 = vld [vmem:[%s5196 + $0x188] sm:$0xff]
    %v5247 = vld [vmem:[%s5196 + $0x190] sm:$0xff]
    %v5248 = vld [vmem:[%s5196 + $0x198] sm:$0xff]
    %v5249 = vld [vmem:[%s5196 + $0x1a0] sm:$0xff]
    %v5250 = vld [vmem:[%s5196 + $0x1a8] sm:$0xff]
    %v5251 = vld [vmem:[%s5196 + $0x1b0] sm:$0xff]
    %v5252 = vld [vmem:[%s5196 + $0x1b8] sm:$0xff]
    %v5253 = vld [vmem:[%s5196 + $0x1c0] sm:$0xff]
    %v5254 = vld [vmem:[%s5196 + $0x1c8] sm:$0xff]
    %v5255 = vld [vmem:[%s5196 + $0x1d0] sm:$0xff]
    %v5256 = vld [vmem:[%s5196 + $0x1d8] sm:$0xff]
    %v5257 = vld [vmem:[%s5196 + $0x1e0] sm:$0xff]
    %v5258 = vld [vmem:[%s5196 + $0x1e8] sm:$0xff]
    %v5259 = vld [vmem:[%s5196 + $0x1f0] sm:$0xff]
    %v5260 = vld [vmem:[%s5196 + $0x1f8] sm:$0xff]
    %v5261 = vld [vmem:[%s5196 + $0x200] sm:$0xff]
    %v5262 = vld [vmem:[%s5196 + $0x208] sm:$0xff]
    %v5263 = vld [vmem:[%s5196 + $0x210] sm:$0xff]
    %v5264 = vld [vmem:[%s5196 + $0x218] sm:$0xff]
    %v5265 = vld [vmem:[%s5196 + $0x220] sm:$0xff]
    %v5266 = vld [vmem:[%s5196 + $0x228] sm:$0xff]
    %v5267 = vld [vmem:[%s5196 + $0x230] sm:$0xff]
    %v5268 = vld [vmem:[%s5196 + $0x238] sm:$0xff]
    %v5269 = vld [vmem:[%s5196 + $0x240] sm:$0xff]
    %v5270 = vld [vmem:[%s5196 + $0x248] sm:$0xff]
    %v5271 = vld [vmem:[%s5196 + $0x250] sm:$0xff]
    %v5272 = vld [vmem:[%s5196 + $0x258] sm:$0xff]
    %v5273 = vld [vmem:[%s5196 + $0x260] sm:$0xff]
    %v5274 = vld [vmem:[%s5196 + $0x268] sm:$0xff]
    %v5275 = vld [vmem:[%s5196 + $0x270] sm:$0xff]
    %v5276 = vld [vmem:[%s5196 + $0x278] sm:$0xff]
    %v5277 = vld [vmem:[%s5196 + $0x280] sm:$0xff]
    %v5278 = vld [vmem:[%s5196 + $0x288] sm:$0xff]
    %v5279 = vld [vmem:[%s5196 + $0x290] sm:$0xff]
    %v5280 = vld [vmem:[%s5196 + $0x298] sm:$0xff]
    %v5281 = vld [vmem:[%s5196 + $0x2a0] sm:$0xff]
    %v5282 = vld [vmem:[%s5196 + $0x2a8] sm:$0xff]
    %v5283 = vld [vmem:[%s5196 + $0x2b0] sm:$0xff]
    %v5284 = vld [vmem:[%s5196 + $0x2b8] sm:$0xff]
    %v5285 = vld [vmem:[%s5196 + $0x2c0] sm:$0xff]
    %v5286 = vld [vmem:[%s5196 + $0x2c8] sm:$0xff]
    %v5287 = vld [vmem:[%s5196 + $0x2d0] sm:$0xff]
    %v5288 = vld [vmem:[%s5196 + $0x2d8] sm:$0xff]
    %v5289 = vld [vmem:[%s5196 + $0x2e0] sm:$0xff]
    %v5290 = vld [vmem:[%s5196 + $0x2e8] sm:$0xff]
    %v5291 = vld [vmem:[%s5196 + $0x2f0] sm:$0xff]
    %v5292 = vld [vmem:[%s5196 + $0x2f8] sm:$0xff]
    %v5293 = vld [vmem:[%s5196 + $0x300] sm:$0xff]
    %v5294 = vld [vmem:[%s5196 + $0x308] sm:$0xff]
    %v5295 = vld [vmem:[%s5196 + $0x310] sm:$0xff]
    %v5296 = vld [vmem:[%s5196 + $0x318] sm:$0xff]
    %v5297 = vld [vmem:[%s5196 + $0x320] sm:$0xff]
    %v5298 = vld [vmem:[%s5196 + $0x328] sm:$0xff]
    %v5299 = vld [vmem:[%s5196 + $0x330] sm:$0xff]
    %v5300 = vld [vmem:[%s5196 + $0x338] sm:$0xff]
    %v5301 = vld [vmem:[%s5196 + $0x340] sm:$0xff]
    %v5302 = vld [vmem:[%s5196 + $0x348] sm:$0xff]
    %v5303 = vld [vmem:[%s5196 + $0x350] sm:$0xff]
    %v5304 = vld [vmem:[%s5196 + $0x358] sm:$0xff]
    %v5305 = vld [vmem:[%s5196 + $0x360] sm:$0xff]
    %v5306 = vld [vmem:[%s5196 + $0x368] sm:$0xff]
    %v5307 = vld [vmem:[%s5196 + $0x370] sm:$0xff]
    %v5308 = vld [vmem:[%s5196 + $0x378] sm:$0xff]
    %v5309 = vld [vmem:[%s5196 + $0x380] sm:$0xff]
    %v5310 = vld [vmem:[%s5196 + $0x388] sm:$0xff]
    %v5311 = vld [vmem:[%s5196 + $0x390] sm:$0xff]
    %v5312 = vld [vmem:[%s5196 + $0x398] sm:$0xff]
    %v5313 = vld [vmem:[%s5196 + $0x3a0] sm:$0xff]
    %v5314 = vld [vmem:[%s5196 + $0x3a8] sm:$0xff]
    %v5315 = vld [vmem:[%s5196 + $0x3b0] sm:$0xff]
    %v5316 = vld [vmem:[%s5196 + $0x3b8] sm:$0xff]
    %v5317 = vld [vmem:[%s5196 + $0x3c0] sm:$0xff]
    %v5318 = vld [vmem:[%s5196 + $0x3c8] sm:$0xff]
    %v5319 = vld [vmem:[%s5196 + $0x3d0] sm:$0xff]
    %v5320 = vld [vmem:[%s5196 + $0x3d8] sm:$0xff]
    %v5321 = vld [vmem:[%s5196 + $0x3e0] sm:$0xff]
    %v5322 = vld [vmem:[%s5196 + $0x3e8] sm:$0xff]
    %v5323 = vld [vmem:[%s5196 + $0x3f0] sm:$0xff]
    %v5324 = vld [vmem:[%s5196 + $0x3f8] sm:$0xff]
    %s5325 = scalar_lea.vmem [#allocation11], 8
    %v5326 = vld [vmem:[%s5325] sm:$0xf]
    %v5328 = vlaneseq
    %v5329 = vshrl.u32 %v5328, 7
    %v5330 = vsub.s32 0, %v5329
    %v5331 = vrot.slane %v5326, %v5330
    %v5332 = vlaneseq
    %v5333 = vshrl.u32 %v5332, 7
    %v5334 = vsub.s32 1, %v5333
    %v5335 = vrot.slane %v5326, %v5334
    %v5336 = vlaneseq
    %v5337 = vshrl.u32 %v5336, 7
    %v5338 = vsub.s32 2, %v5337
    %v5339 = vrot.slane %v5326, %v5338
    %v5340 = vlaneseq
    %v5341 = vshrl.u32 %v5340, 7
    %v5342 = vsub.s32 3, %v5341
    %v5343 = vrot.slane %v5326, %v5342
    %v5476 = vunpack.c.l.b16 %v5197
    %v5477 = vunpack.c.h.b16 %v5197
    %v5478 = vunpack.c.l.b16 %v5198
    %v5479 = vunpack.c.h.b16 %v5198
    %v5480 = vunpack.c.l.b16 %v5199
    %v5481 = vunpack.c.h.b16 %v5199
    %v5482 = vunpack.c.l.b16 %v5200
    %v5483 = vunpack.c.h.b16 %v5200
    %v5484 = vunpack.c.l.b16 %v5201
    %v5485 = vunpack.c.h.b16 %v5201
    %v5486 = vunpack.c.l.b16 %v5202
    %v5487 = vunpack.c.h.b16 %v5202
    %v5488 = vunpack.c.l.b16 %v5203
    %v5489 = vunpack.c.h.b16 %v5203
    %v5490 = vunpack.c.l.b16 %v5204
    %v5491 = vunpack.c.h.b16 %v5204
    %v5492 = vunpack.c.l.b16 %v5205
    %v5493 = vunpack.c.h.b16 %v5205
    %v5494 = vunpack.c.l.b16 %v5206
    %v5495 = vunpack.c.h.b16 %v5206
    %v5496 = vunpack.c.l.b16 %v5207
    %v5497 = vunpack.c.h.b16 %v5207
    %v5498 = vunpack.c.l.b16 %v5208
    %v5499 = vunpack.c.h.b16 %v5208
    %v5500 = vunpack.c.l.b16 %v5209
    %v5501 = vunpack.c.h.b16 %v5209
    %v5502 = vunpack.c.l.b16 %v5210
    %v5503 = vunpack.c.h.b16 %v5210
    %v5504 = vunpack.c.l.b16 %v5211
    %v5505 = vunpack.c.h.b16 %v5211
    %v5506 = vunpack.c.l.b16 %v5212
    %v5507 = vunpack.c.h.b16 %v5212
    %v5508 = vunpack.c.l.b16 %v5213
    %v5509 = vunpack.c.h.b16 %v5213
    %v5510 = vunpack.c.l.b16 %v5214
    %v5511 = vunpack.c.h.b16 %v5214
    %v5512 = vunpack.c.l.b16 %v5215
    %v5513 = vunpack.c.h.b16 %v5215
    %v5514 = vunpack.c.l.b16 %v5216
    %v5515 = vunpack.c.h.b16 %v5216
    %v5516 = vunpack.c.l.b16 %v5217
    %v5517 = vunpack.c.h.b16 %v5217
    %v5518 = vunpack.c.l.b16 %v5218
    %v5519 = vunpack.c.h.b16 %v5218
    %v5520 = vunpack.c.l.b16 %v5219
    %v5521 = vunpack.c.h.b16 %v5219
    %v5522 = vunpack.c.l.b16 %v5220
    %v5523 = vunpack.c.h.b16 %v5220
    %v5524 = vunpack.c.l.b16 %v5221
    %v5525 = vunpack.c.h.b16 %v5221
    %v5526 = vunpack.c.l.b16 %v5222
    %v5527 = vunpack.c.h.b16 %v5222
    %v5528 = vunpack.c.l.b16 %v5223
    %v5529 = vunpack.c.h.b16 %v5223
    %v5530 = vunpack.c.l.b16 %v5224
    %v5531 = vunpack.c.h.b16 %v5224
    %v5532 = vunpack.c.l.b16 %v5225
    %v5533 = vunpack.c.h.b16 %v5225
    %v5534 = vunpack.c.l.b16 %v5226
    %v5535 = vunpack.c.h.b16 %v5226
    %v5536 = vunpack.c.l.b16 %v5227
    %v5537 = vunpack.c.h.b16 %v5227
    %v5538 = vunpack.c.l.b16 %v5228
    %v5539 = vunpack.c.h.b16 %v5228
    %v5540 = vunpack.c.l.b16 %v5229
    %v5541 = vunpack.c.h.b16 %v5229
    %v5542 = vunpack.c.l.b16 %v5230
    %v5543 = vunpack.c.h.b16 %v5230
    %v5544 = vunpack.c.l.b16 %v5231
    %v5545 = vunpack.c.h.b16 %v5231
    %v5546 = vunpack.c.l.b16 %v5232
    %v5547 = vunpack.c.h.b16 %v5232
    %v5548 = vunpack.c.l.b16 %v5233
    %v5549 = vunpack.c.h.b16 %v5233
    %v5550 = vunpack.c.l.b16 %v5234
    %v5551 = vunpack.c.h.b16 %v5234
    %v5552 = vunpack.c.l.b16 %v5235
    %v5553 = vunpack.c.h.b16 %v5235
    %v5554 = vunpack.c.l.b16 %v5236
    %v5555 = vunpack.c.h.b16 %v5236
    %v5556 = vunpack.c.l.b16 %v5237
    %v5557 = vunpack.c.h.b16 %v5237
    %v5558 = vunpack.c.l.b16 %v5238
    %v5559 = vunpack.c.h.b16 %v5238
    %v5560 = vunpack.c.l.b16 %v5239
    %v5561 = vunpack.c.h.b16 %v5239
    %v5562 = vunpack.c.l.b16 %v5240
    %v5563 = vunpack.c.h.b16 %v5240
    %v5564 = vunpack.c.l.b16 %v5241
    %v5565 = vunpack.c.h.b16 %v5241
    %v5566 = vunpack.c.l.b16 %v5242
    %v5567 = vunpack.c.h.b16 %v5242
    %v5568 = vunpack.c.l.b16 %v5243
    %v5569 = vunpack.c.h.b16 %v5243
    %v5570 = vunpack.c.l.b16 %v5244
    %v5571 = vunpack.c.h.b16 %v5244
    %v5572 = vunpack.c.l.b16 %v5245
    %v5573 = vunpack.c.h.b16 %v5245
    %v5574 = vunpack.c.l.b16 %v5246
    %v5575 = vunpack.c.h.b16 %v5246
    %v5576 = vunpack.c.l.b16 %v5247
    %v5577 = vunpack.c.h.b16 %v5247
    %v5578 = vunpack.c.l.b16 %v5248
    %v5579 = vunpack.c.h.b16 %v5248
    %v5580 = vunpack.c.l.b16 %v5249
    %v5581 = vunpack.c.h.b16 %v5249
    %v5582 = vunpack.c.l.b16 %v5250
    %v5583 = vunpack.c.h.b16 %v5250
    %v5584 = vunpack.c.l.b16 %v5251
    %v5585 = vunpack.c.h.b16 %v5251
    %v5586 = vunpack.c.l.b16 %v5252
    %v5587 = vunpack.c.h.b16 %v5252
    %v5588 = vunpack.c.l.b16 %v5253
    %v5589 = vunpack.c.h.b16 %v5253
    %v5590 = vunpack.c.l.b16 %v5254
    %v5591 = vunpack.c.h.b16 %v5254
    %v5592 = vunpack.c.l.b16 %v5255
    %v5593 = vunpack.c.h.b16 %v5255
    %v5594 = vunpack.c.l.b16 %v5256
    %v5595 = vunpack.c.h.b16 %v5256
    %v5596 = vunpack.c.l.b16 %v5257
    %v5597 = vunpack.c.h.b16 %v5257
    %v5598 = vunpack.c.l.b16 %v5258
    %v5599 = vunpack.c.h.b16 %v5258
    %v5600 = vunpack.c.l.b16 %v5259
    %v5601 = vunpack.c.h.b16 %v5259
    %v5602 = vunpack.c.l.b16 %v5260
    %v5603 = vunpack.c.h.b16 %v5260
    %v5604 = vunpack.c.l.b16 %v5261
    %v5605 = vunpack.c.h.b16 %v5261
    %v5606 = vunpack.c.l.b16 %v5262
    %v5607 = vunpack.c.h.b16 %v5262
    %v5608 = vunpack.c.l.b16 %v5263
    %v5609 = vunpack.c.h.b16 %v5263
    %v5610 = vunpack.c.l.b16 %v5264
    %v5611 = vunpack.c.h.b16 %v5264
    %v5612 = vunpack.c.l.b16 %v5265
    %v5613 = vunpack.c.h.b16 %v5265
    %v5614 = vunpack.c.l.b16 %v5266
    %v5615 = vunpack.c.h.b16 %v5266
    %v5616 = vunpack.c.l.b16 %v5267
    %v5617 = vunpack.c.h.b16 %v5267
    %v5618 = vunpack.c.l.b16 %v5268
    %v5619 = vunpack.c.h.b16 %v5268
    %v5620 = vunpack.c.l.b16 %v5269
    %v5621 = vunpack.c.h.b16 %v5269
    %v5622 = vunpack.c.l.b16 %v5270
    %v5623 = vunpack.c.h.b16 %v5270
    %v5624 = vunpack.c.l.b16 %v5271
    %v5625 = vunpack.c.h.b16 %v5271
    %v5626 = vunpack.c.l.b16 %v5272
    %v5627 = vunpack.c.h.b16 %v5272
    %v5628 = vunpack.c.l.b16 %v5273
    %v5629 = vunpack.c.h.b16 %v5273
    %v5630 = vunpack.c.l.b16 %v5274
    %v5631 = vunpack.c.h.b16 %v5274
    %v5632 = vunpack.c.l.b16 %v5275
    %v5633 = vunpack.c.h.b16 %v5275
    %v5634 = vunpack.c.l.b16 %v5276
    %v5635 = vunpack.c.h.b16 %v5276
    %v5636 = vunpack.c.l.b16 %v5277
    %v5637 = vunpack.c.h.b16 %v5277
    %v5638 = vunpack.c.l.b16 %v5278
    %v5639 = vunpack.c.h.b16 %v5278
    %v5640 = vunpack.c.l.b16 %v5279
    %v5641 = vunpack.c.h.b16 %v5279
    %v5642 = vunpack.c.l.b16 %v5280
    %v5643 = vunpack.c.h.b16 %v5280
    %v5644 = vunpack.c.l.b16 %v5281
    %v5645 = vunpack.c.h.b16 %v5281
    %v5646 = vunpack.c.l.b16 %v5282
    %v5647 = vunpack.c.h.b16 %v5282
    %v5648 = vunpack.c.l.b16 %v5283
    %v5649 = vunpack.c.h.b16 %v5283
    %v5650 = vunpack.c.l.b16 %v5284
    %v5651 = vunpack.c.h.b16 %v5284
    %v5652 = vunpack.c.l.b16 %v5285
    %v5653 = vunpack.c.h.b16 %v5285
    %v5654 = vunpack.c.l.b16 %v5286
    %v5655 = vunpack.c.h.b16 %v5286
    %v5656 = vunpack.c.l.b16 %v5287
    %v5657 = vunpack.c.h.b16 %v5287
    %v5658 = vunpack.c.l.b16 %v5288
    %v5659 = vunpack.c.h.b16 %v5288
    %v5660 = vunpack.c.l.b16 %v5289
    %v5661 = vunpack.c.h.b16 %v5289
    %v5662 = vunpack.c.l.b16 %v5290
    %v5663 = vunpack.c.h.b16 %v5290
    %v5664 = vunpack.c.l.b16 %v5291
    %v5665 = vunpack.c.h.b16 %v5291
    %v5666 = vunpack.c.l.b16 %v5292
    %v5667 = vunpack.c.h.b16 %v5292
    %v5668 = vunpack.c.l.b16 %v5293
    %v5669 = vunpack.c.h.b16 %v5293
    %v5670 = vunpack.c.l.b16 %v5294
    %v5671 = vunpack.c.h.b16 %v5294
    %v5672 = vunpack.c.l.b16 %v5295
    %v5673 = vunpack.c.h.b16 %v5295
    %v5674 = vunpack.c.l.b16 %v5296
    %v5675 = vunpack.c.h.b16 %v5296
    %v5676 = vunpack.c.l.b16 %v5297
    %v5677 = vunpack.c.h.b16 %v5297
    %v5678 = vunpack.c.l.b16 %v5298
    %v5679 = vunpack.c.h.b16 %v5298
    %v5680 = vunpack.c.l.b16 %v5299
    %v5681 = vunpack.c.h.b16 %v5299
    %v5682 = vunpack.c.l.b16 %v5300
    %v5683 = vunpack.c.h.b16 %v5300
    %v5684 = vunpack.c.l.b16 %v5301
    %v5685 = vunpack.c.h.b16 %v5301
    %v5686 = vunpack.c.l.b16 %v5302
    %v5687 = vunpack.c.h.b16 %v5302
    %v5688 = vunpack.c.l.b16 %v5303
    %v5689 = vunpack.c.h.b16 %v5303
    %v5690 = vunpack.c.l.b16 %v5304
    %v5691 = vunpack.c.h.b16 %v5304
    %v5692 = vunpack.c.l.b16 %v5305
    %v5693 = vunpack.c.h.b16 %v5305
    %v5694 = vunpack.c.l.b16 %v5306
    %v5695 = vunpack.c.h.b16 %v5306
    %v5696 = vunpack.c.l.b16 %v5307
    %v5697 = vunpack.c.h.b16 %v5307
    %v5698 = vunpack.c.l.b16 %v5308
    %v5699 = vunpack.c.h.b16 %v5308
    %v5700 = vunpack.c.l.b16 %v5309
    %v5701 = vunpack.c.h.b16 %v5309
    %v5702 = vunpack.c.l.b16 %v5310
    %v5703 = vunpack.c.h.b16 %v5310
    %v5704 = vunpack.c.l.b16 %v5311
    %v5705 = vunpack.c.h.b16 %v5311
    %v5706 = vunpack.c.l.b16 %v5312
    %v5707 = vunpack.c.h.b16 %v5312
    %v5708 = vunpack.c.l.b16 %v5313
    %v5709 = vunpack.c.h.b16 %v5313
    %v5710 = vunpack.c.l.b16 %v5314
    %v5711 = vunpack.c.h.b16 %v5314
    %v5712 = vunpack.c.l.b16 %v5315
    %v5713 = vunpack.c.h.b16 %v5315
    %v5714 = vunpack.c.l.b16 %v5316
    %v5715 = vunpack.c.h.b16 %v5316
    %v5716 = vunpack.c.l.b16 %v5317
    %v5717 = vunpack.c.h.b16 %v5317
    %v5718 = vunpack.c.l.b16 %v5318
    %v5719 = vunpack.c.h.b16 %v5318
    %v5720 = vunpack.c.l.b16 %v5319
    %v5721 = vunpack.c.h.b16 %v5319
    %v5722 = vunpack.c.l.b16 %v5320
    %v5723 = vunpack.c.h.b16 %v5320
    %v5724 = vunpack.c.l.b16 %v5321
    %v5725 = vunpack.c.h.b16 %v5321
    %v5726 = vunpack.c.l.b16 %v5322
    %v5727 = vunpack.c.h.b16 %v5322
    %v5728 = vunpack.c.l.b16 %v5323
    %v5729 = vunpack.c.h.b16 %v5323
    %v5730 = vunpack.c.l.b16 %v5324
    %v5731 = vunpack.c.h.b16 %v5324
    %v5732 = vpack.c.b16 %v5480, %v5476
    %v5733 = vpack.c.b16 %v5481, %v5477
    %v5734 = vpack.c.b16 %v5482, %v5478
    %v5735 = vpack.c.b16 %v5483, %v5479
    %v5736 = vpack.c.b16 %v5488, %v5484
    %v5737 = vpack.c.b16 %v5489, %v5485
    %v5738 = vpack.c.b16 %v5490, %v5486
    %v5739 = vpack.c.b16 %v5491, %v5487
    %v5740 = vpack.c.b16 %v5496, %v5492
    %v5741 = vpack.c.b16 %v5497, %v5493
    %v5742 = vpack.c.b16 %v5498, %v5494
    %v5743 = vpack.c.b16 %v5499, %v5495
    %v5744 = vpack.c.b16 %v5504, %v5500
    %v5745 = vpack.c.b16 %v5505, %v5501
    %v5746 = vpack.c.b16 %v5506, %v5502
    %v5747 = vpack.c.b16 %v5507, %v5503
    %v5748 = vpack.c.b16 %v5512, %v5508
    %v5749 = vpack.c.b16 %v5513, %v5509
    %v5750 = vpack.c.b16 %v5514, %v5510
    %v5751 = vpack.c.b16 %v5515, %v5511
    %v5752 = vpack.c.b16 %v5520, %v5516
    %v5753 = vpack.c.b16 %v5521, %v5517
    %v5754 = vpack.c.b16 %v5522, %v5518
    %v5755 = vpack.c.b16 %v5523, %v5519
    %v5756 = vpack.c.b16 %v5528, %v5524
    %v5757 = vpack.c.b16 %v5529, %v5525
    %v5758 = vpack.c.b16 %v5530, %v5526
    %v5759 = vpack.c.b16 %v5531, %v5527
    %v5760 = vpack.c.b16 %v5536, %v5532
    %v5761 = vpack.c.b16 %v5537, %v5533
    %v5762 = vpack.c.b16 %v5538, %v5534
    %v5763 = vpack.c.b16 %v5539, %v5535
    %v5764 = vpack.c.b16 %v5544, %v5540
    %v5765 = vpack.c.b16 %v5545, %v5541
    %v5766 = vpack.c.b16 %v5546, %v5542
    %v5767 = vpack.c.b16 %v5547, %v5543
    %v5768 = vpack.c.b16 %v5552, %v5548
    %v5769 = vpack.c.b16 %v5553, %v5549
    %v5770 = vpack.c.b16 %v5554, %v5550
    %v5771 = vpack.c.b16 %v5555, %v5551
    %v5772 = vpack.c.b16 %v5560, %v5556
    %v5773 = vpack.c.b16 %v5561, %v5557
    %v5774 = vpack.c.b16 %v5562, %v5558
    %v5775 = vpack.c.b16 %v5563, %v5559
    %v5776 = vpack.c.b16 %v5568, %v5564
    %v5777 = vpack.c.b16 %v5569, %v5565
    %v5778 = vpack.c.b16 %v5570, %v5566
    %v5779 = vpack.c.b16 %v5571, %v5567
    %v5780 = vpack.c.b16 %v5576, %v5572
    %v5781 = vpack.c.b16 %v5577, %v5573
    %v5782 = vpack.c.b16 %v5578, %v5574
    %v5783 = vpack.c.b16 %v5579, %v5575
    %v5784 = vpack.c.b16 %v5584, %v5580
    %v5785 = vpack.c.b16 %v5585, %v5581
    %v5786 = vpack.c.b16 %v5586, %v5582
    %v5787 = vpack.c.b16 %v5587, %v5583
    %v5788 = vpack.c.b16 %v5592, %v5588
    %v5789 = vpack.c.b16 %v5593, %v5589
    %v5790 = vpack.c.b16 %v5594, %v5590
    %v5791 = vpack.c.b16 %v5595, %v5591
    %v5792 = vpack.c.b16 %v5600, %v5596
    %v5793 = vpack.c.b16 %v5601, %v5597
    %v5794 = vpack.c.b16 %v5602, %v5598
    %v5795 = vpack.c.b16 %v5603, %v5599
    %v5796 = vpack.c.b16 %v5608, %v5604
    %v5797 = vpack.c.b16 %v5609, %v5605
    %v5798 = vpack.c.b16 %v5610, %v5606
    %v5799 = vpack.c.b16 %v5611, %v5607
    %v5800 = vpack.c.b16 %v5616, %v5612
    %v5801 = vpack.c.b16 %v5617, %v5613
    %v5802 = vpack.c.b16 %v5618, %v5614
    %v5803 = vpack.c.b16 %v5619, %v5615
    %v5804 = vpack.c.b16 %v5624, %v5620
    %v5805 = vpack.c.b16 %v5625, %v5621
    %v5806 = vpack.c.b16 %v5626, %v5622
    %v5807 = vpack.c.b16 %v5627, %v5623
    %v5808 = vpack.c.b16 %v5632, %v5628
    %v5809 = vpack.c.b16 %v5633, %v5629
    %v5810 = vpack.c.b16 %v5634, %v5630
    %v5811 = vpack.c.b16 %v5635, %v5631
    %v5812 = vpack.c.b16 %v5640, %v5636
    %v5813 = vpack.c.b16 %v5641, %v5637
    %v5814 = vpack.c.b16 %v5642, %v5638
    %v5815 = vpack.c.b16 %v5643, %v5639
    %v5816 = vpack.c.b16 %v5648, %v5644
    %v5817 = vpack.c.b16 %v5649, %v5645
    %v5818 = vpack.c.b16 %v5650, %v5646
    %v5819 = vpack.c.b16 %v5651, %v5647
    %v5820 = vpack.c.b16 %v5656, %v5652
    %v5821 = vpack.c.b16 %v5657, %v5653
    %v5822 = vpack.c.b16 %v5658, %v5654
    %v5823 = vpack.c.b16 %v5659, %v5655
    %v5824 = vpack.c.b16 %v5664, %v5660
    %v5825 = vpack.c.b16 %v5665, %v5661
    %v5826 = vpack.c.b16 %v5666, %v5662
    %v5827 = vpack.c.b16 %v5667, %v5663
    %v5828 = vpack.c.b16 %v5672, %v5668
    %v5829 = vpack.c.b16 %v5673, %v5669
    %v5830 = vpack.c.b16 %v5674, %v5670
    %v5831 = vpack.c.b16 %v5675, %v5671
    %v5832 = vpack.c.b16 %v5680, %v5676
    %v5833 = vpack.c.b16 %v5681, %v5677
    %v5834 = vpack.c.b16 %v5682, %v5678
    %v5835 = vpack.c.b16 %v5683, %v5679
    %v5836 = vpack.c.b16 %v5688, %v5684
    %v5837 = vpack.c.b16 %v5689, %v5685
    %v5838 = vpack.c.b16 %v5690, %v5686
    %v5839 = vpack.c.b16 %v5691, %v5687
    %v5840 = vpack.c.b16 %v5696, %v5692
    %v5841 = vpack.c.b16 %v5697, %v5693
    %v5842 = vpack.c.b16 %v5698, %v5694
    %v5843 = vpack.c.b16 %v5699, %v5695
    %v5844 = vpack.c.b16 %v5704, %v5700
    %v5845 = vpack.c.b16 %v5705, %v5701
    %v5846 = vpack.c.b16 %v5706, %v5702
    %v5847 = vpack.c.b16 %v5707, %v5703
    %v5848 = vpack.c.b16 %v5712, %v5708
    %v5849 = vpack.c.b16 %v5713, %v5709
    %v5850 = vpack.c.b16 %v5714, %v5710
    %v5851 = vpack.c.b16 %v5715, %v5711
    %v5852 = vpack.c.b16 %v5720, %v5716
    %v5853 = vpack.c.b16 %v5721, %v5717
    %v5854 = vpack.c.b16 %v5722, %v5718
    %v5855 = vpack.c.b16 %v5723, %v5719
    %v5856 = vpack.c.b16 %v5728, %v5724
    %v5857 = vpack.c.b16 %v5729, %v5725
    %v5858 = vpack.c.b16 %v5730, %v5726
    %v5859 = vpack.c.b16 %v5731, %v5727
    %5988 = vmatprep.subr.bf16.mxu0 %v5761
    %5989 = vmatpush1.bf16.msra.mxu0 %v5760
    %5990 = vmatprep.subr.bf16.mxu0 %v5757
    %5991 = vmatpush1.bf16.msra.mxu0 %v5756
    %5992 = vmatprep.subr.bf16.mxu0 %v5753
    %5993 = vmatpush1.bf16.msra.mxu0 %v5752
    %5994 = vmatprep.subr.bf16.mxu0 %v5749
    %5995 = vmatpush1.bf16.msra.mxu0 %v5748
    %5996 = vmatprep.subr.bf16.mxu0 %v5745
    %5997 = vmatpush1.bf16.msra.mxu0 %v5744
    %5998 = vmatprep.subr.bf16.mxu0 %v5741
    %5999 = vmatpush1.bf16.msra.mxu0 %v5740
    %6000 = vmatprep.subr.bf16.mxu0 %v5737
    %6001 = vmatpush1.bf16.msra.mxu0 %v5736
    %6002 = vmatprep.subr.bf16.mxu0 %v5733
    %6003 = vmatpush1.bf16.msra.mxu0 %v5732
    %6004 = vmatprep.subr.bf16.mxu0 %v5793
    %6005 = vmatpush2.bf16.msra.mxu0 %v5792
    %6006 = vmatprep.subr.bf16.mxu0 %v5789
    %6007 = vmatpush2.bf16.msra.mxu0 %v5788
    %6008 = vmatprep.subr.bf16.mxu0 %v5785
    %6009 = vmatpush2.bf16.msra.mxu0 %v5784
    %6010 = vmatprep.subr.bf16.mxu0 %v5781
    %6011 = vmatpush2.bf16.msra.mxu0 %v5780
    %6012 = vmatprep.subr.bf16.mxu0 %v5777
    %6013 = vmatpush2.bf16.msra.mxu0 %v5776
    %6014 = vmatprep.subr.bf16.mxu0 %v5773
    %6015 = vmatpush2.bf16.msra.mxu0 %v5772
    %6016 = vmatprep.subr.bf16.mxu0 %v5769
    %6017 = vmatpush2.bf16.msra.mxu0 %v5768
    %6018 = vmatprep.subr.bf16.mxu0 %v5765
    %6019 = vmatpush2.bf16.msra.mxu0 %v5764
    %6020 = vmatprep.mubr.bf16.mxu0 %v5193
    %6021 = vmatmul.mubr.bf16.gmra.mxu0 %v5192
    %v6022 = vpop.f32.mrf.mxu0
    %v6023 = vadd.f32 %v5331, %v6022
    %v6024 = vpop.f32.mrf.mxu0
    %v6025 = vadd.f32 %v5335, %v6024
    %v6026 = vpop.f32.mrf.mxu0
    %v6027 = vpop.f32.mrf.mxu0
    %6028 = vdwg.mxu0
    %6029 = vmatprep.subr.bf16.mxu0 %v5825
    %6030 = vmatpush1.bf16.msra.mxu0 %v5824
    %6031 = vmatprep.subr.bf16.mxu0 %v5821
    %6032 = vmatpush1.bf16.msra.mxu0 %v5820
    %6033 = vmatprep.subr.bf16.mxu0 %v5817
    %6034 = vmatpush1.bf16.msra.mxu0 %v5816
    %6035 = vmatprep.subr.bf16.mxu0 %v5813
    %6036 = vmatpush1.bf16.msra.mxu0 %v5812
    %6037 = vmatprep.subr.bf16.mxu0 %v5809
    %6038 = vmatpush1.bf16.msra.mxu0 %v5808
    %6039 = vmatprep.subr.bf16.mxu0 %v5805
    %6040 = vmatpush1.bf16.msra.mxu0 %v5804
    %6041 = vmatprep.subr.bf16.mxu0 %v5801
    %6042 = vmatpush1.bf16.msra.mxu0 %v5800
    %6043 = vmatprep.subr.bf16.mxu0 %v5797
    %6044 = vmatpush1.bf16.msra.mxu0 %v5796
    %6045 = vmatprep.subr.bf16.mxu0 %v5857
    %6046 = vmatpush2.bf16.msra.mxu0 %v5856
    %6047 = vmatprep.subr.bf16.mxu0 %v5853
    %6048 = vmatpush2.bf16.msra.mxu0 %v5852
    %6049 = vmatprep.subr.bf16.mxu0 %v5849
    %6050 = vmatpush2.bf16.msra.mxu0 %v5848
    %6051 = vmatprep.subr.bf16.mxu0 %v5845
    %6052 = vmatpush2.bf16.msra.mxu0 %v5844
    %6053 = vmatprep.subr.bf16.mxu0 %v5841
    %6054 = vmatpush2.bf16.msra.mxu0 %v5840
    %6055 = vmatprep.subr.bf16.mxu0 %v5837
    %6056 = vmatpush2.bf16.msra.mxu0 %v5836
    %6057 = vmatprep.subr.bf16.mxu0 %v5833
    %6058 = vmatpush2.bf16.msra.mxu0 %v5832
    %6059 = vmatprep.subr.bf16.mxu0 %v5829
    %6060 = vmatpush2.bf16.msra.mxu0 %v5828
    %6061 = vmatprep.mubr.bf16.mxu0 %v5195
    %6062 = vmatmul.mubr.bf16.gmra.mxu0 %v5194
    %v6063 = vpop.f32.mrf.mxu0
    %v6064 = vadd.f32 %v6023, %v6063
    %v6065 = vpop.f32.mrf.mxu0
    %v6066 = vadd.f32 %v6025, %v6065
    %v6067 = vpop.f32.mrf.mxu0
    %v6068 = vpop.f32.mrf.mxu0
    %6069 = vdwg.mxu0
    %6070 = vmatprep.subr.bf16.mxu0 %v5763
    %6071 = vmatpush1.bf16.msra.mxu0 %v5762
    %6072 = vmatprep.subr.bf16.mxu0 %v5759
    %6073 = vmatpush1.bf16.msra.mxu0 %v5758
    %6074 = vmatprep.subr.bf16.mxu0 %v5755
    %6075 = vmatpush1.bf16.msra.mxu0 %v5754
    %6076 = vmatprep.subr.bf16.mxu0 %v5751
    %6077 = vmatpush1.bf16.msra.mxu0 %v5750
    %6078 = vmatprep.subr.bf16.mxu0 %v5747
    %6079 = vmatpush1.bf16.msra.mxu0 %v5746
    %6080 = vmatprep.subr.bf16.mxu0 %v5743
    %6081 = vmatpush1.bf16.msra.mxu0 %v5742
    %6082 = vmatprep.subr.bf16.mxu0 %v5739
    %6083 = vmatpush1.bf16.msra.mxu0 %v5738
    %6084 = vmatprep.subr.bf16.mxu0 %v5735
    %6085 = vmatpush1.bf16.msra.mxu0 %v5734
    %6086 = vmatprep.subr.bf16.mxu0 %v5795
    %6087 = vmatpush2.bf16.msra.mxu0 %v5794
    %6088 = vmatprep.subr.bf16.mxu0 %v5791
    %6089 = vmatpush2.bf16.msra.mxu0 %v5790
    %6090 = vmatprep.subr.bf16.mxu0 %v5787
    %6091 = vmatpush2.bf16.msra.mxu0 %v5786
    %6092 = vmatprep.subr.bf16.mxu0 %v5783
    %6093 = vmatpush2.bf16.msra.mxu0 %v5782
    %6094 = vmatprep.subr.bf16.mxu0 %v5779
    %6095 = vmatpush2.bf16.msra.mxu0 %v5778
    %6096 = vmatprep.subr.bf16.mxu0 %v5775
    %6097 = vmatpush2.bf16.msra.mxu0 %v5774
    %6098 = vmatprep.subr.bf16.mxu0 %v5771
    %6099 = vmatpush2.bf16.msra.mxu0 %v5770
    %6100 = vmatprep.subr.bf16.mxu0 %v5767
    %6101 = vmatpush2.bf16.msra.mxu0 %v5766
    %6102 = vmatprep.mubr.bf16.mxu0 %v5193
    %6103 = vmatmul.mubr.bf16.gmra.mxu0 %v5192
    %v6104 = vpop.f32.mrf.mxu0
    %v6105 = vadd.f32 %v5339, %v6104
    %v6106 = vpop.f32.mrf.mxu0
    %v6107 = vadd.f32 %v5343, %v6106
    %v6108 = vpop.f32.mrf.mxu0
    %v6109 = vpop.f32.mrf.mxu0
    %6110 = vdwg.mxu0
    %6111 = vmatprep.subr.bf16.mxu0 %v5827
    %6112 = vmatpush1.bf16.msra.mxu0 %v5826
    %6113 = vmatprep.subr.bf16.mxu0 %v5823
    %6114 = vmatpush1.bf16.msra.mxu0 %v5822
    %6115 = vmatprep.subr.bf16.mxu0 %v5819
    %6116 = vmatpush1.bf16.msra.mxu0 %v5818
    %6117 = vmatprep.subr.bf16.mxu0 %v5815
    %6118 = vmatpush1.bf16.msra.mxu0 %v5814
    %6119 = vmatprep.subr.bf16.mxu0 %v5811
    %6120 = vmatpush1.bf16.msra.mxu0 %v5810
    %6121 = vmatprep.subr.bf16.mxu0 %v5807
    %6122 = vmatpush1.bf16.msra.mxu0 %v5806
    %6123 = vmatprep.subr.bf16.mxu0 %v5803
    %6124 = vmatpush1.bf16.msra.mxu0 %v5802
    %6125 = vmatprep.subr.bf16.mxu0 %v5799
    %6126 = vmatpush1.bf16.msra.mxu0 %v5798
    %6127 = vmatprep.subr.bf16.mxu0 %v5859
    %6128 = vmatpush2.bf16.msra.mxu0 %v5858
    %6129 = vmatprep.subr.bf16.mxu0 %v5855
    %6130 = vmatpush2.bf16.msra.mxu0 %v5854
    %6131 = vmatprep.subr.bf16.mxu0 %v5851
    %6132 = vmatpush2.bf16.msra.mxu0 %v5850
    %6133 = vmatprep.subr.bf16.mxu0 %v5847
    %6134 = vmatpush2.bf16.msra.mxu0 %v5846
    %6135 = vmatprep.subr.bf16.mxu0 %v5843
    %6136 = vmatpush2.bf16.msra.mxu0 %v5842
    %6137 = vmatprep.subr.bf16.mxu0 %v5839
    %6138 = vmatpush2.bf16.msra.mxu0 %v5838
    %6139 = vmatprep.subr.bf16.mxu0 %v5835
    %6140 = vmatpush2.bf16.msra.mxu0 %v5834
    %6141 = vmatprep.subr.bf16.mxu0 %v5831
    %6142 = vmatpush2.bf16.msra.mxu0 %v5830
    %6143 = vmatprep.mubr.bf16.mxu0 %v5195
    %6144 = vmatmul.mubr.bf16.gmra.mxu0 %v5194
    %v6145 = vpop.f32.mrf.mxu0
    %v6146 = vadd.f32 %v6105, %v6145
    %v6147 = vpop.f32.mrf.mxu0
    %v6148 = vadd.f32 %v6107, %v6147
    %v6149 = vpop.f32.mrf.mxu0
    %v6150 = vpop.f32.mrf.mxu0
    %6151 = vdwg.mxu0
    %v6152 = vadd.f32 %v4224, %v6064
    %v6153 = vadd.f32 %v4225, %v6066
    %v6154 = vadd.f32 %v4226, %v6146
    %v6155 = vadd.f32 %v4227, %v6148
    %v6156 = vmax.f32 %v6152, 0.0
    %v6157 = vmax.f32 %v6153, 0.0
    %v6158 = vmax.f32 %v6154, 0.0
    %v6159 = vmax.f32 %v6155, 0.0
    %v6160 = vpack.c.bf16 %v6156, %v6156
    %v6161 = vpack.c.bf16 %v6157, %v6157
    %v6162 = vpack.c.bf16 %v6158, %v6158
    %v6163 = vpack.c.bf16 %v6159, %v6159
    %s6164 = scalar_lea.vmem [#allocation7], 3072
    %v6165 = vld [vmem:[%s6164] sm:$0xff]
    %v6166 = vld [vmem:[%s6164 + $0x8] sm:$0xff]
    %v6167 = vld [vmem:[%s6164 + $0x10] sm:$0xff]
    %v6168 = vld [vmem:[%s6164 + $0x18] sm:$0xff]
    %v6169 = vld [vmem:[%s6164 + $0x20] sm:$0xff]
    %v6170 = vld [vmem:[%s6164 + $0x28] sm:$0xff]
    %v6171 = vld [vmem:[%s6164 + $0x30] sm:$0xff]
    %v6172 = vld [vmem:[%s6164 + $0x38] sm:$0xff]
    %v6173 = vld [vmem:[%s6164 + $0x40] sm:$0xff]
    %v6174 = vld [vmem:[%s6164 + $0x48] sm:$0xff]
    %v6175 = vld [vmem:[%s6164 + $0x50] sm:$0xff]
    %v6176 = vld [vmem:[%s6164 + $0x58] sm:$0xff]
    %v6177 = vld [vmem:[%s6164 + $0x60] sm:$0xff]
    %v6178 = vld [vmem:[%s6164 + $0x68] sm:$0xff]
    %v6179 = vld [vmem:[%s6164 + $0x70] sm:$0xff]
    %v6180 = vld [vmem:[%s6164 + $0x78] sm:$0xff]
    %v6181 = vld [vmem:[%s6164 + $0x80] sm:$0xff]
    %v6182 = vld [vmem:[%s6164 + $0x88] sm:$0xff]
    %v6183 = vld [vmem:[%s6164 + $0x90] sm:$0xff]
    %v6184 = vld [vmem:[%s6164 + $0x98] sm:$0xff]
    %v6185 = vld [vmem:[%s6164 + $0xa0] sm:$0xff]
    %v6186 = vld [vmem:[%s6164 + $0xa8] sm:$0xff]
    %v6187 = vld [vmem:[%s6164 + $0xb0] sm:$0xff]
    %v6188 = vld [vmem:[%s6164 + $0xb8] sm:$0xff]
    %v6189 = vld [vmem:[%s6164 + $0xc0] sm:$0xff]
    %v6190 = vld [vmem:[%s6164 + $0xc8] sm:$0xff]
    %v6191 = vld [vmem:[%s6164 + $0xd0] sm:$0xff]
    %v6192 = vld [vmem:[%s6164 + $0xd8] sm:$0xff]
    %v6193 = vld [vmem:[%s6164 + $0xe0] sm:$0xff]
    %v6194 = vld [vmem:[%s6164 + $0xe8] sm:$0xff]
    %v6195 = vld [vmem:[%s6164 + $0xf0] sm:$0xff]
    %v6196 = vld [vmem:[%s6164 + $0xf8] sm:$0xff]
    %v6197 = vld [vmem:[%s6164 + $0x100] sm:$0xff]
    %v6198 = vld [vmem:[%s6164 + $0x108] sm:$0xff]
    %v6199 = vld [vmem:[%s6164 + $0x110] sm:$0xff]
    %v6200 = vld [vmem:[%s6164 + $0x118] sm:$0xff]
    %v6201 = vld [vmem:[%s6164 + $0x120] sm:$0xff]
    %v6202 = vld [vmem:[%s6164 + $0x128] sm:$0xff]
    %v6203 = vld [vmem:[%s6164 + $0x130] sm:$0xff]
    %v6204 = vld [vmem:[%s6164 + $0x138] sm:$0xff]
    %v6205 = vld [vmem:[%s6164 + $0x140] sm:$0xff]
    %v6206 = vld [vmem:[%s6164 + $0x148] sm:$0xff]
    %v6207 = vld [vmem:[%s6164 + $0x150] sm:$0xff]
    %v6208 = vld [vmem:[%s6164 + $0x158] sm:$0xff]
    %v6209 = vld [vmem:[%s6164 + $0x160] sm:$0xff]
    %v6210 = vld [vmem:[%s6164 + $0x168] sm:$0xff]
    %v6211 = vld [vmem:[%s6164 + $0x170] sm:$0xff]
    %v6212 = vld [vmem:[%s6164 + $0x178] sm:$0xff]
    %v6213 = vld [vmem:[%s6164 + $0x180] sm:$0xff]
    %v6214 = vld [vmem:[%s6164 + $0x188] sm:$0xff]
    %v6215 = vld [vmem:[%s6164 + $0x190] sm:$0xff]
    %v6216 = vld [vmem:[%s6164 + $0x198] sm:$0xff]
    %v6217 = vld [vmem:[%s6164 + $0x1a0] sm:$0xff]
    %v6218 = vld [vmem:[%s6164 + $0x1a8] sm:$0xff]
    %v6219 = vld [vmem:[%s6164 + $0x1b0] sm:$0xff]
    %v6220 = vld [vmem:[%s6164 + $0x1b8] sm:$0xff]
    %v6221 = vld [vmem:[%s6164 + $0x1c0] sm:$0xff]
    %v6222 = vld [vmem:[%s6164 + $0x1c8] sm:$0xff]
    %v6223 = vld [vmem:[%s6164 + $0x1d0] sm:$0xff]
    %v6224 = vld [vmem:[%s6164 + $0x1d8] sm:$0xff]
    %v6225 = vld [vmem:[%s6164 + $0x1e0] sm:$0xff]
    %v6226 = vld [vmem:[%s6164 + $0x1e8] sm:$0xff]
    %v6227 = vld [vmem:[%s6164 + $0x1f0] sm:$0xff]
    %v6228 = vld [vmem:[%s6164 + $0x1f8] sm:$0xff]
    %v6229 = vld [vmem:[%s6164 + $0x200] sm:$0xff]
    %v6230 = vld [vmem:[%s6164 + $0x208] sm:$0xff]
    %v6231 = vld [vmem:[%s6164 + $0x210] sm:$0xff]
    %v6232 = vld [vmem:[%s6164 + $0x218] sm:$0xff]
    %v6233 = vld [vmem:[%s6164 + $0x220] sm:$0xff]
    %v6234 = vld [vmem:[%s6164 + $0x228] sm:$0xff]
    %v6235 = vld [vmem:[%s6164 + $0x230] sm:$0xff]
    %v6236 = vld [vmem:[%s6164 + $0x238] sm:$0xff]
    %v6237 = vld [vmem:[%s6164 + $0x240] sm:$0xff]
    %v6238 = vld [vmem:[%s6164 + $0x248] sm:$0xff]
    %v6239 = vld [vmem:[%s6164 + $0x250] sm:$0xff]
    %v6240 = vld [vmem:[%s6164 + $0x258] sm:$0xff]
    %v6241 = vld [vmem:[%s6164 + $0x260] sm:$0xff]
    %v6242 = vld [vmem:[%s6164 + $0x268] sm:$0xff]
    %v6243 = vld [vmem:[%s6164 + $0x270] sm:$0xff]
    %v6244 = vld [vmem:[%s6164 + $0x278] sm:$0xff]
    %v6245 = vld [vmem:[%s6164 + $0x280] sm:$0xff]
    %v6246 = vld [vmem:[%s6164 + $0x288] sm:$0xff]
    %v6247 = vld [vmem:[%s6164 + $0x290] sm:$0xff]
    %v6248 = vld [vmem:[%s6164 + $0x298] sm:$0xff]
    %v6249 = vld [vmem:[%s6164 + $0x2a0] sm:$0xff]
    %v6250 = vld [vmem:[%s6164 + $0x2a8] sm:$0xff]
    %v6251 = vld [vmem:[%s6164 + $0x2b0] sm:$0xff]
    %v6252 = vld [vmem:[%s6164 + $0x2b8] sm:$0xff]
    %v6253 = vld [vmem:[%s6164 + $0x2c0] sm:$0xff]
    %v6254 = vld [vmem:[%s6164 + $0x2c8] sm:$0xff]
    %v6255 = vld [vmem:[%s6164 + $0x2d0] sm:$0xff]
    %v6256 = vld [vmem:[%s6164 + $0x2d8] sm:$0xff]
    %v6257 = vld [vmem:[%s6164 + $0x2e0] sm:$0xff]
    %v6258 = vld [vmem:[%s6164 + $0x2e8] sm:$0xff]
    %v6259 = vld [vmem:[%s6164 + $0x2f0] sm:$0xff]
    %v6260 = vld [vmem:[%s6164 + $0x2f8] sm:$0xff]
    %v6261 = vld [vmem:[%s6164 + $0x300] sm:$0xff]
    %v6262 = vld [vmem:[%s6164 + $0x308] sm:$0xff]
    %v6263 = vld [vmem:[%s6164 + $0x310] sm:$0xff]
    %v6264 = vld [vmem:[%s6164 + $0x318] sm:$0xff]
    %v6265 = vld [vmem:[%s6164 + $0x320] sm:$0xff]
    %v6266 = vld [vmem:[%s6164 + $0x328] sm:$0xff]
    %v6267 = vld [vmem:[%s6164 + $0x330] sm:$0xff]
    %v6268 = vld [vmem:[%s6164 + $0x338] sm:$0xff]
    %v6269 = vld [vmem:[%s6164 + $0x340] sm:$0xff]
    %v6270 = vld [vmem:[%s6164 + $0x348] sm:$0xff]
    %v6271 = vld [vmem:[%s6164 + $0x350] sm:$0xff]
    %v6272 = vld [vmem:[%s6164 + $0x358] sm:$0xff]
    %v6273 = vld [vmem:[%s6164 + $0x360] sm:$0xff]
    %v6274 = vld [vmem:[%s6164 + $0x368] sm:$0xff]
    %v6275 = vld [vmem:[%s6164 + $0x370] sm:$0xff]
    %v6276 = vld [vmem:[%s6164 + $0x378] sm:$0xff]
    %v6277 = vld [vmem:[%s6164 + $0x380] sm:$0xff]
    %v6278 = vld [vmem:[%s6164 + $0x388] sm:$0xff]
    %v6279 = vld [vmem:[%s6164 + $0x390] sm:$0xff]
    %v6280 = vld [vmem:[%s6164 + $0x398] sm:$0xff]
    %v6281 = vld [vmem:[%s6164 + $0x3a0] sm:$0xff]
    %v6282 = vld [vmem:[%s6164 + $0x3a8] sm:$0xff]
    %v6283 = vld [vmem:[%s6164 + $0x3b0] sm:$0xff]
    %v6284 = vld [vmem:[%s6164 + $0x3b8] sm:$0xff]
    %v6285 = vld [vmem:[%s6164 + $0x3c0] sm:$0xff]
    %v6286 = vld [vmem:[%s6164 + $0x3c8] sm:$0xff]
    %v6287 = vld [vmem:[%s6164 + $0x3d0] sm:$0xff]
    %v6288 = vld [vmem:[%s6164 + $0x3d8] sm:$0xff]
    %v6289 = vld [vmem:[%s6164 + $0x3e0] sm:$0xff]
    %v6290 = vld [vmem:[%s6164 + $0x3e8] sm:$0xff]
    %v6291 = vld [vmem:[%s6164 + $0x3f0] sm:$0xff]
    %v6292 = vld [vmem:[%s6164 + $0x3f8] sm:$0xff]
    %s6293 = scalar_lea.vmem [#allocation8], 12
    %v6294 = vld [vmem:[%s6293] sm:$0xf]
    %v6296 = vlaneseq
    %v6297 = vshrl.u32 %v6296, 7
    %v6298 = vsub.s32 0, %v6297
    %v6299 = vrot.slane %v6294, %v6298
    %v6300 = vlaneseq
    %v6301 = vshrl.u32 %v6300, 7
    %v6302 = vsub.s32 1, %v6301
    %v6303 = vrot.slane %v6294, %v6302
    %v6304 = vlaneseq
    %v6305 = vshrl.u32 %v6304, 7
    %v6306 = vsub.s32 2, %v6305
    %v6307 = vrot.slane %v6294, %v6306
    %v6308 = vlaneseq
    %v6309 = vshrl.u32 %v6308, 7
    %v6310 = vsub.s32 3, %v6309
    %v6311 = vrot.slane %v6294, %v6310
    %v6444 = vunpack.c.l.b16 %v6165
    %v6445 = vunpack.c.h.b16 %v6165
    %v6446 = vunpack.c.l.b16 %v6166
    %v6447 = vunpack.c.h.b16 %v6166
    %v6448 = vunpack.c.l.b16 %v6167
    %v6449 = vunpack.c.h.b16 %v6167
    %v6450 = vunpack.c.l.b16 %v6168
    %v6451 = vunpack.c.h.b16 %v6168
    %v6452 = vunpack.c.l.b16 %v6169
    %v6453 = vunpack.c.h.b16 %v6169
    %v6454 = vunpack.c.l.b16 %v6170
    %v6455 = vunpack.c.h.b16 %v6170
    %v6456 = vunpack.c.l.b16 %v6171
    %v6457 = vunpack.c.h.b16 %v6171
    %v6458 = vunpack.c.l.b16 %v6172
    %v6459 = vunpack.c.h.b16 %v6172
    %v6460 = vunpack.c.l.b16 %v6173
    %v6461 = vunpack.c.h.b16 %v6173
    %v6462 = vunpack.c.l.b16 %v6174
    %v6463 = vunpack.c.h.b16 %v6174
    %v6464 = vunpack.c.l.b16 %v6175
    %v6465 = vunpack.c.h.b16 %v6175
    %v6466 = vunpack.c.l.b16 %v6176
    %v6467 = vunpack.c.h.b16 %v6176
    %v6468 = vunpack.c.l.b16 %v6177
    %v6469 = vunpack.c.h.b16 %v6177
    %v6470 = vunpack.c.l.b16 %v6178
    %v6471 = vunpack.c.h.b16 %v6178
    %v6472 = vunpack.c.l.b16 %v6179
    %v6473 = vunpack.c.h.b16 %v6179
    %v6474 = vunpack.c.l.b16 %v6180
    %v6475 = vunpack.c.h.b16 %v6180
    %v6476 = vunpack.c.l.b16 %v6181
    %v6477 = vunpack.c.h.b16 %v6181
    %v6478 = vunpack.c.l.b16 %v6182
    %v6479 = vunpack.c.h.b16 %v6182
    %v6480 = vunpack.c.l.b16 %v6183
    %v6481 = vunpack.c.h.b16 %v6183
    %v6482 = vunpack.c.l.b16 %v6184
    %v6483 = vunpack.c.h.b16 %v6184
    %v6484 = vunpack.c.l.b16 %v6185
    %v6485 = vunpack.c.h.b16 %v6185
    %v6486 = vunpack.c.l.b16 %v6186
    %v6487 = vunpack.c.h.b16 %v6186
    %v6488 = vunpack.c.l.b16 %v6187
    %v6489 = vunpack.c.h.b16 %v6187
    %v6490 = vunpack.c.l.b16 %v6188
    %v6491 = vunpack.c.h.b16 %v6188
    %v6492 = vunpack.c.l.b16 %v6189
    %v6493 = vunpack.c.h.b16 %v6189
    %v6494 = vunpack.c.l.b16 %v6190
    %v6495 = vunpack.c.h.b16 %v6190
    %v6496 = vunpack.c.l.b16 %v6191
    %v6497 = vunpack.c.h.b16 %v6191
    %v6498 = vunpack.c.l.b16 %v6192
    %v6499 = vunpack.c.h.b16 %v6192
    %v6500 = vunpack.c.l.b16 %v6193
    %v6501 = vunpack.c.h.b16 %v6193
    %v6502 = vunpack.c.l.b16 %v6194
    %v6503 = vunpack.c.h.b16 %v6194
    %v6504 = vunpack.c.l.b16 %v6195
    %v6505 = vunpack.c.h.b16 %v6195
    %v6506 = vunpack.c.l.b16 %v6196
    %v6507 = vunpack.c.h.b16 %v6196
    %v6508 = vunpack.c.l.b16 %v6197
    %v6509 = vunpack.c.h.b16 %v6197
    %v6510 = vunpack.c.l.b16 %v6198
    %v6511 = vunpack.c.h.b16 %v6198
    %v6512 = vunpack.c.l.b16 %v6199
    %v6513 = vunpack.c.h.b16 %v6199
    %v6514 = vunpack.c.l.b16 %v6200
    %v6515 = vunpack.c.h.b16 %v6200
    %v6516 = vunpack.c.l.b16 %v6201
    %v6517 = vunpack.c.h.b16 %v6201
    %v6518 = vunpack.c.l.b16 %v6202
    %v6519 = vunpack.c.h.b16 %v6202
    %v6520 = vunpack.c.l.b16 %v6203
    %v6521 = vunpack.c.h.b16 %v6203
    %v6522 = vunpack.c.l.b16 %v6204
    %v6523 = vunpack.c.h.b16 %v6204
    %v6524 = vunpack.c.l.b16 %v6205
    %v6525 = vunpack.c.h.b16 %v6205
    %v6526 = vunpack.c.l.b16 %v6206
    %v6527 = vunpack.c.h.b16 %v6206
    %v6528 = vunpack.c.l.b16 %v6207
    %v6529 = vunpack.c.h.b16 %v6207
    %v6530 = vunpack.c.l.b16 %v6208
    %v6531 = vunpack.c.h.b16 %v6208
    %v6532 = vunpack.c.l.b16 %v6209
    %v6533 = vunpack.c.h.b16 %v6209
    %v6534 = vunpack.c.l.b16 %v6210
    %v6535 = vunpack.c.h.b16 %v6210
    %v6536 = vunpack.c.l.b16 %v6211
    %v6537 = vunpack.c.h.b16 %v6211
    %v6538 = vunpack.c.l.b16 %v6212
    %v6539 = vunpack.c.h.b16 %v6212
    %v6540 = vunpack.c.l.b16 %v6213
    %v6541 = vunpack.c.h.b16 %v6213
    %v6542 = vunpack.c.l.b16 %v6214
    %v6543 = vunpack.c.h.b16 %v6214
    %v6544 = vunpack.c.l.b16 %v6215
    %v6545 = vunpack.c.h.b16 %v6215
    %v6546 = vunpack.c.l.b16 %v6216
    %v6547 = vunpack.c.h.b16 %v6216
    %v6548 = vunpack.c.l.b16 %v6217
    %v6549 = vunpack.c.h.b16 %v6217
    %v6550 = vunpack.c.l.b16 %v6218
    %v6551 = vunpack.c.h.b16 %v6218
    %v6552 = vunpack.c.l.b16 %v6219
    %v6553 = vunpack.c.h.b16 %v6219
    %v6554 = vunpack.c.l.b16 %v6220
    %v6555 = vunpack.c.h.b16 %v6220
    %v6556 = vunpack.c.l.b16 %v6221
    %v6557 = vunpack.c.h.b16 %v6221
    %v6558 = vunpack.c.l.b16 %v6222
    %v6559 = vunpack.c.h.b16 %v6222
    %v6560 = vunpack.c.l.b16 %v6223
    %v6561 = vunpack.c.h.b16 %v6223
    %v6562 = vunpack.c.l.b16 %v6224
    %v6563 = vunpack.c.h.b16 %v6224
    %v6564 = vunpack.c.l.b16 %v6225
    %v6565 = vunpack.c.h.b16 %v6225
    %v6566 = vunpack.c.l.b16 %v6226
    %v6567 = vunpack.c.h.b16 %v6226
    %v6568 = vunpack.c.l.b16 %v6227
    %v6569 = vunpack.c.h.b16 %v6227
    %v6570 = vunpack.c.l.b16 %v6228
    %v6571 = vunpack.c.h.b16 %v6228
    %v6572 = vunpack.c.l.b16 %v6229
    %v6573 = vunpack.c.h.b16 %v6229
    %v6574 = vunpack.c.l.b16 %v6230
    %v6575 = vunpack.c.h.b16 %v6230
    %v6576 = vunpack.c.l.b16 %v6231
    %v6577 = vunpack.c.h.b16 %v6231
    %v6578 = vunpack.c.l.b16 %v6232
    %v6579 = vunpack.c.h.b16 %v6232
    %v6580 = vunpack.c.l.b16 %v6233
    %v6581 = vunpack.c.h.b16 %v6233
    %v6582 = vunpack.c.l.b16 %v6234
    %v6583 = vunpack.c.h.b16 %v6234
    %v6584 = vunpack.c.l.b16 %v6235
    %v6585 = vunpack.c.h.b16 %v6235
    %v6586 = vunpack.c.l.b16 %v6236
    %v6587 = vunpack.c.h.b16 %v6236
    %v6588 = vunpack.c.l.b16 %v6237
    %v6589 = vunpack.c.h.b16 %v6237
    %v6590 = vunpack.c.l.b16 %v6238
    %v6591 = vunpack.c.h.b16 %v6238
    %v6592 = vunpack.c.l.b16 %v6239
    %v6593 = vunpack.c.h.b16 %v6239
    %v6594 = vunpack.c.l.b16 %v6240
    %v6595 = vunpack.c.h.b16 %v6240
    %v6596 = vunpack.c.l.b16 %v6241
    %v6597 = vunpack.c.h.b16 %v6241
    %v6598 = vunpack.c.l.b16 %v6242
    %v6599 = vunpack.c.h.b16 %v6242
    %v6600 = vunpack.c.l.b16 %v6243
    %v6601 = vunpack.c.h.b16 %v6243
    %v6602 = vunpack.c.l.b16 %v6244
    %v6603 = vunpack.c.h.b16 %v6244
    %v6604 = vunpack.c.l.b16 %v6245
    %v6605 = vunpack.c.h.b16 %v6245
    %v6606 = vunpack.c.l.b16 %v6246
    %v6607 = vunpack.c.h.b16 %v6246
    %v6608 = vunpack.c.l.b16 %v6247
    %v6609 = vunpack.c.h.b16 %v6247
    %v6610 = vunpack.c.l.b16 %v6248
    %v6611 = vunpack.c.h.b16 %v6248
    %v6612 = vunpack.c.l.b16 %v6249
    %v6613 = vunpack.c.h.b16 %v6249
    %v6614 = vunpack.c.l.b16 %v6250
    %v6615 = vunpack.c.h.b16 %v6250
    %v6616 = vunpack.c.l.b16 %v6251
    %v6617 = vunpack.c.h.b16 %v6251
    %v6618 = vunpack.c.l.b16 %v6252
    %v6619 = vunpack.c.h.b16 %v6252
    %v6620 = vunpack.c.l.b16 %v6253
    %v6621 = vunpack.c.h.b16 %v6253
    %v6622 = vunpack.c.l.b16 %v6254
    %v6623 = vunpack.c.h.b16 %v6254
    %v6624 = vunpack.c.l.b16 %v6255
    %v6625 = vunpack.c.h.b16 %v6255
    %v6626 = vunpack.c.l.b16 %v6256
    %v6627 = vunpack.c.h.b16 %v6256
    %v6628 = vunpack.c.l.b16 %v6257
    %v6629 = vunpack.c.h.b16 %v6257
    %v6630 = vunpack.c.l.b16 %v6258
    %v6631 = vunpack.c.h.b16 %v6258
    %v6632 = vunpack.c.l.b16 %v6259
    %v6633 = vunpack.c.h.b16 %v6259
    %v6634 = vunpack.c.l.b16 %v6260
    %v6635 = vunpack.c.h.b16 %v6260
    %v6636 = vunpack.c.l.b16 %v6261
    %v6637 = vunpack.c.h.b16 %v6261
    %v6638 = vunpack.c.l.b16 %v6262
    %v6639 = vunpack.c.h.b16 %v6262
    %v6640 = vunpack.c.l.b16 %v6263
    %v6641 = vunpack.c.h.b16 %v6263
    %v6642 = vunpack.c.l.b16 %v6264
    %v6643 = vunpack.c.h.b16 %v6264
    %v6644 = vunpack.c.l.b16 %v6265
    %v6645 = vunpack.c.h.b16 %v6265
    %v6646 = vunpack.c.l.b16 %v6266
    %v6647 = vunpack.c.h.b16 %v6266
    %v6648 = vunpack.c.l.b16 %v6267
    %v6649 = vunpack.c.h.b16 %v6267
    %v6650 = vunpack.c.l.b16 %v6268
    %v6651 = vunpack.c.h.b16 %v6268
    %v6652 = vunpack.c.l.b16 %v6269
    %v6653 = vunpack.c.h.b16 %v6269
    %v6654 = vunpack.c.l.b16 %v6270
    %v6655 = vunpack.c.h.b16 %v6270
    %v6656 = vunpack.c.l.b16 %v6271
    %v6657 = vunpack.c.h.b16 %v6271
    %v6658 = vunpack.c.l.b16 %v6272
    %v6659 = vunpack.c.h.b16 %v6272
    %v6660 = vunpack.c.l.b16 %v6273
    %v6661 = vunpack.c.h.b16 %v6273
    %v6662 = vunpack.c.l.b16 %v6274
    %v6663 = vunpack.c.h.b16 %v6274
    %v6664 = vunpack.c.l.b16 %v6275
    %v6665 = vunpack.c.h.b16 %v6275
    %v6666 = vunpack.c.l.b16 %v6276
    %v6667 = vunpack.c.h.b16 %v6276
    %v6668 = vunpack.c.l.b16 %v6277
    %v6669 = vunpack.c.h.b16 %v6277
    %v6670 = vunpack.c.l.b16 %v6278
    %v6671 = vunpack.c.h.b16 %v6278
    %v6672 = vunpack.c.l.b16 %v6279
    %v6673 = vunpack.c.h.b16 %v6279
    %v6674 = vunpack.c.l.b16 %v6280
    %v6675 = vunpack.c.h.b16 %v6280
    %v6676 = vunpack.c.l.b16 %v6281
    %v6677 = vunpack.c.h.b16 %v6281
    %v6678 = vunpack.c.l.b16 %v6282
    %v6679 = vunpack.c.h.b16 %v6282
    %v6680 = vunpack.c.l.b16 %v6283
    %v6681 = vunpack.c.h.b16 %v6283
    %v6682 = vunpack.c.l.b16 %v6284
    %v6683 = vunpack.c.h.b16 %v6284
    %v6684 = vunpack.c.l.b16 %v6285
    %v6685 = vunpack.c.h.b16 %v6285
    %v6686 = vunpack.c.l.b16 %v6286
    %v6687 = vunpack.c.h.b16 %v6286
    %v6688 = vunpack.c.l.b16 %v6287
    %v6689 = vunpack.c.h.b16 %v6287
    %v6690 = vunpack.c.l.b16 %v6288
    %v6691 = vunpack.c.h.b16 %v6288
    %v6692 = vunpack.c.l.b16 %v6289
    %v6693 = vunpack.c.h.b16 %v6289
    %v6694 = vunpack.c.l.b16 %v6290
    %v6695 = vunpack.c.h.b16 %v6290
    %v6696 = vunpack.c.l.b16 %v6291
    %v6697 = vunpack.c.h.b16 %v6291
    %v6698 = vunpack.c.l.b16 %v6292
    %v6699 = vunpack.c.h.b16 %v6292
    %v6700 = vpack.c.b16 %v6448, %v6444
    %v6701 = vpack.c.b16 %v6449, %v6445
    %v6702 = vpack.c.b16 %v6450, %v6446
    %v6703 = vpack.c.b16 %v6451, %v6447
    %v6704 = vpack.c.b16 %v6456, %v6452
    %v6705 = vpack.c.b16 %v6457, %v6453
    %v6706 = vpack.c.b16 %v6458, %v6454
    %v6707 = vpack.c.b16 %v6459, %v6455
    %v6708 = vpack.c.b16 %v6464, %v6460
    %v6709 = vpack.c.b16 %v6465, %v6461
    %v6710 = vpack.c.b16 %v6466, %v6462
    %v6711 = vpack.c.b16 %v6467, %v6463
    %v6712 = vpack.c.b16 %v6472, %v6468
    %v6713 = vpack.c.b16 %v6473, %v6469
    %v6714 = vpack.c.b16 %v6474, %v6470
    %v6715 = vpack.c.b16 %v6475, %v6471
    %v6716 = vpack.c.b16 %v6480, %v6476
    %v6717 = vpack.c.b16 %v6481, %v6477
    %v6718 = vpack.c.b16 %v6482, %v6478
    %v6719 = vpack.c.b16 %v6483, %v6479
    %v6720 = vpack.c.b16 %v6488, %v6484
    %v6721 = vpack.c.b16 %v6489, %v6485
    %v6722 = vpack.c.b16 %v6490, %v6486
    %v6723 = vpack.c.b16 %v6491, %v6487
    %v6724 = vpack.c.b16 %v6496, %v6492
    %v6725 = vpack.c.b16 %v6497, %v6493
    %v6726 = vpack.c.b16 %v6498, %v6494
    %v6727 = vpack.c.b16 %v6499, %v6495
    %v6728 = vpack.c.b16 %v6504, %v6500
    %v6729 = vpack.c.b16 %v6505, %v6501
    %v6730 = vpack.c.b16 %v6506, %v6502
    %v6731 = vpack.c.b16 %v6507, %v6503
    %v6732 = vpack.c.b16 %v6512, %v6508
    %v6733 = vpack.c.b16 %v6513, %v6509
    %v6734 = vpack.c.b16 %v6514, %v6510
    %v6735 = vpack.c.b16 %v6515, %v6511
    %v6736 = vpack.c.b16 %v6520, %v6516
    %v6737 = vpack.c.b16 %v6521, %v6517
    %v6738 = vpack.c.b16 %v6522, %v6518
    %v6739 = vpack.c.b16 %v6523, %v6519
    %v6740 = vpack.c.b16 %v6528, %v6524
    %v6741 = vpack.c.b16 %v6529, %v6525
    %v6742 = vpack.c.b16 %v6530, %v6526
    %v6743 = vpack.c.b16 %v6531, %v6527
    %v6744 = vpack.c.b16 %v6536, %v6532
    %v6745 = vpack.c.b16 %v6537, %v6533
    %v6746 = vpack.c.b16 %v6538, %v6534
    %v6747 = vpack.c.b16 %v6539, %v6535
    %v6748 = vpack.c.b16 %v6544, %v6540
    %v6749 = vpack.c.b16 %v6545, %v6541
    %v6750 = vpack.c.b16 %v6546, %v6542
    %v6751 = vpack.c.b16 %v6547, %v6543
    %v6752 = vpack.c.b16 %v6552, %v6548
    %v6753 = vpack.c.b16 %v6553, %v6549
    %v6754 = vpack.c.b16 %v6554, %v6550
    %v6755 = vpack.c.b16 %v6555, %v6551
    %v6756 = vpack.c.b16 %v6560, %v6556
    %v6757 = vpack.c.b16 %v6561, %v6557
    %v6758 = vpack.c.b16 %v6562, %v6558
    %v6759 = vpack.c.b16 %v6563, %v6559
    %v6760 = vpack.c.b16 %v6568, %v6564
    %v6761 = vpack.c.b16 %v6569, %v6565
    %v6762 = vpack.c.b16 %v6570, %v6566
    %v6763 = vpack.c.b16 %v6571, %v6567
    %v6764 = vpack.c.b16 %v6576, %v6572
    %v6765 = vpack.c.b16 %v6577, %v6573
    %v6766 = vpack.c.b16 %v6578, %v6574
    %v6767 = vpack.c.b16 %v6579, %v6575
    %v6768 = vpack.c.b16 %v6584, %v6580
    %v6769 = vpack.c.b16 %v6585, %v6581
    %v6770 = vpack.c.b16 %v6586, %v6582
    %v6771 = vpack.c.b16 %v6587, %v6583
    %v6772 = vpack.c.b16 %v6592, %v6588
    %v6773 = vpack.c.b16 %v6593, %v6589
    %v6774 = vpack.c.b16 %v6594, %v6590
    %v6775 = vpack.c.b16 %v6595, %v6591
    %v6776 = vpack.c.b16 %v6600, %v6596
    %v6777 = vpack.c.b16 %v6601, %v6597
    %v6778 = vpack.c.b16 %v6602, %v6598
    %v6779 = vpack.c.b16 %v6603, %v6599
    %v6780 = vpack.c.b16 %v6608, %v6604
    %v6781 = vpack.c.b16 %v6609, %v6605
    %v6782 = vpack.c.b16 %v6610, %v6606
    %v6783 = vpack.c.b16 %v6611, %v6607
    %v6784 = vpack.c.b16 %v6616, %v6612
    %v6785 = vpack.c.b16 %v6617, %v6613
    %v6786 = vpack.c.b16 %v6618, %v6614
    %v6787 = vpack.c.b16 %v6619, %v6615
    %v6788 = vpack.c.b16 %v6624, %v6620
    %v6789 = vpack.c.b16 %v6625, %v6621
    %v6790 = vpack.c.b16 %v6626, %v6622
    %v6791 = vpack.c.b16 %v6627, %v6623
    %v6792 = vpack.c.b16 %v6632, %v6628
    %v6793 = vpack.c.b16 %v6633, %v6629
    %v6794 = vpack.c.b16 %v6634, %v6630
    %v6795 = vpack.c.b16 %v6635, %v6631
    %v6796 = vpack.c.b16 %v6640, %v6636
    %v6797 = vpack.c.b16 %v6641, %v6637
    %v6798 = vpack.c.b16 %v6642, %v6638
    %v6799 = vpack.c.b16 %v6643, %v6639
    %v6800 = vpack.c.b16 %v6648, %v6644
    %v6801 = vpack.c.b16 %v6649, %v6645
    %v6802 = vpack.c.b16 %v6650, %v6646
    %v6803 = vpack.c.b16 %v6651, %v6647
    %v6804 = vpack.c.b16 %v6656, %v6652
    %v6805 = vpack.c.b16 %v6657, %v6653
    %v6806 = vpack.c.b16 %v6658, %v6654
    %v6807 = vpack.c.b16 %v6659, %v6655
    %v6808 = vpack.c.b16 %v6664, %v6660
    %v6809 = vpack.c.b16 %v6665, %v6661
    %v6810 = vpack.c.b16 %v6666, %v6662
    %v6811 = vpack.c.b16 %v6667, %v6663
    %v6812 = vpack.c.b16 %v6672, %v6668
    %v6813 = vpack.c.b16 %v6673, %v6669
    %v6814 = vpack.c.b16 %v6674, %v6670
    %v6815 = vpack.c.b16 %v6675, %v6671
    %v6816 = vpack.c.b16 %v6680, %v6676
    %v6817 = vpack.c.b16 %v6681, %v6677
    %v6818 = vpack.c.b16 %v6682, %v6678
    %v6819 = vpack.c.b16 %v6683, %v6679
    %v6820 = vpack.c.b16 %v6688, %v6684
    %v6821 = vpack.c.b16 %v6689, %v6685
    %v6822 = vpack.c.b16 %v6690, %v6686
    %v6823 = vpack.c.b16 %v6691, %v6687
    %v6824 = vpack.c.b16 %v6696, %v6692
    %v6825 = vpack.c.b16 %v6697, %v6693
    %v6826 = vpack.c.b16 %v6698, %v6694
    %v6827 = vpack.c.b16 %v6699, %v6695
    %6956 = vmatprep.subr.bf16.mxu0 %v6729
    %6957 = vmatpush1.bf16.msra.mxu0 %v6728
    %6958 = vmatprep.subr.bf16.mxu0 %v6725
    %6959 = vmatpush1.bf16.msra.mxu0 %v6724
    %6960 = vmatprep.subr.bf16.mxu0 %v6721
    %6961 = vmatpush1.bf16.msra.mxu0 %v6720
    %6962 = vmatprep.subr.bf16.mxu0 %v6717
    %6963 = vmatpush1.bf16.msra.mxu0 %v6716
    %6964 = vmatprep.subr.bf16.mxu0 %v6713
    %6965 = vmatpush1.bf16.msra.mxu0 %v6712
    %6966 = vmatprep.subr.bf16.mxu0 %v6709
    %6967 = vmatpush1.bf16.msra.mxu0 %v6708
    %6968 = vmatprep.subr.bf16.mxu0 %v6705
    %6969 = vmatpush1.bf16.msra.mxu0 %v6704
    %6970 = vmatprep.subr.bf16.mxu0 %v6701
    %6971 = vmatpush1.bf16.msra.mxu0 %v6700
    %6972 = vmatprep.subr.bf16.mxu0 %v6761
    %6973 = vmatpush2.bf16.msra.mxu0 %v6760
    %6974 = vmatprep.subr.bf16.mxu0 %v6757
    %6975 = vmatpush2.bf16.msra.mxu0 %v6756
    %6976 = vmatprep.subr.bf16.mxu0 %v6753
    %6977 = vmatpush2.bf16.msra.mxu0 %v6752
    %6978 = vmatprep.subr.bf16.mxu0 %v6749
    %6979 = vmatpush2.bf16.msra.mxu0 %v6748
    %6980 = vmatprep.subr.bf16.mxu0 %v6745
    %6981 = vmatpush2.bf16.msra.mxu0 %v6744
    %6982 = vmatprep.subr.bf16.mxu0 %v6741
    %6983 = vmatpush2.bf16.msra.mxu0 %v6740
    %6984 = vmatprep.subr.bf16.mxu0 %v6737
    %6985 = vmatpush2.bf16.msra.mxu0 %v6736
    %6986 = vmatprep.subr.bf16.mxu0 %v6733
    %6987 = vmatpush2.bf16.msra.mxu0 %v6732
    %6988 = vmatprep.mubr.bf16.mxu0 %v6161
    %6989 = vmatmul.mubr.bf16.gmra.mxu0 %v6160
    %v6990 = vpop.f32.mrf.mxu0
    %v6991 = vadd.f32 %v6299, %v6990
    %v6992 = vpop.f32.mrf.mxu0
    %v6993 = vadd.f32 %v6303, %v6992
    %v6994 = vpop.f32.mrf.mxu0
    %v6995 = vpop.f32.mrf.mxu0
    %6996 = vdwg.mxu0
    %6997 = vmatprep.subr.bf16.mxu0 %v6793
    %6998 = vmatpush1.bf16.msra.mxu0 %v6792
    %6999 = vmatprep.subr.bf16.mxu0 %v6789
    %7000 = vmatpush1.bf16.msra.mxu0 %v6788
    %7001 = vmatprep.subr.bf16.mxu0 %v6785
    %7002 = vmatpush1.bf16.msra.mxu0 %v6784
    %7003 = vmatprep.subr.bf16.mxu0 %v6781
    %7004 = vmatpush1.bf16.msra.mxu0 %v6780
    %7005 = vmatprep.subr.bf16.mxu0 %v6777
    %7006 = vmatpush1.bf16.msra.mxu0 %v6776
    %7007 = vmatprep.subr.bf16.mxu0 %v6773
    %7008 = vmatpush1.bf16.msra.mxu0 %v6772
    %7009 = vmatprep.subr.bf16.mxu0 %v6769
    %7010 = vmatpush1.bf16.msra.mxu0 %v6768
    %7011 = vmatprep.subr.bf16.mxu0 %v6765
    %7012 = vmatpush1.bf16.msra.mxu0 %v6764
    %7013 = vmatprep.subr.bf16.mxu0 %v6825
    %7014 = vmatpush2.bf16.msra.mxu0 %v6824
    %7015 = vmatprep.subr.bf16.mxu0 %v6821
    %7016 = vmatpush2.bf16.msra.mxu0 %v6820
    %7017 = vmatprep.subr.bf16.mxu0 %v6817
    %7018 = vmatpush2.bf16.msra.mxu0 %v6816
    %7019 = vmatprep.subr.bf16.mxu0 %v6813
    %7020 = vmatpush2.bf16.msra.mxu0 %v6812
    %7021 = vmatprep.subr.bf16.mxu0 %v6809
    %7022 = vmatpush2.bf16.msra.mxu0 %v6808
    %7023 = vmatprep.subr.bf16.mxu0 %v6805
    %7024 = vmatpush2.bf16.msra.mxu0 %v6804
    %7025 = vmatprep.subr.bf16.mxu0 %v6801
    %7026 = vmatpush2.bf16.msra.mxu0 %v6800
    %7027 = vmatprep.subr.bf16.mxu0 %v6797
    %7028 = vmatpush2.bf16.msra.mxu0 %v6796
    %7029 = vmatprep.mubr.bf16.mxu0 %v6163
    %7030 = vmatmul.mubr.bf16.gmra.mxu0 %v6162
    %v7031 = vpop.f32.mrf.mxu0
    %v7032 = vadd.f32 %v6991, %v7031
    %v7033 = vpop.f32.mrf.mxu0
    %v7034 = vadd.f32 %v6993, %v7033
    %v7035 = vpop.f32.mrf.mxu0
    %v7036 = vpop.f32.mrf.mxu0
    %7037 = vdwg.mxu0
    %7038 = vmatprep.subr.bf16.mxu0 %v6731
    %7039 = vmatpush1.bf16.msra.mxu0 %v6730
    %7040 = vmatprep.subr.bf16.mxu0 %v6727
    %7041 = vmatpush1.bf16.msra.mxu0 %v6726
    %7042 = vmatprep.subr.bf16.mxu0 %v6723
    %7043 = vmatpush1.bf16.msra.mxu0 %v6722
    %7044 = vmatprep.subr.bf16.mxu0 %v6719
    %7045 = vmatpush1.bf16.msra.mxu0 %v6718
    %7046 = vmatprep.subr.bf16.mxu0 %v6715
    %7047 = vmatpush1.bf16.msra.mxu0 %v6714
    %7048 = vmatprep.subr.bf16.mxu0 %v6711
    %7049 = vmatpush1.bf16.msra.mxu0 %v6710
    %7050 = vmatprep.subr.bf16.mxu0 %v6707
    %7051 = vmatpush1.bf16.msra.mxu0 %v6706
    %7052 = vmatprep.subr.bf16.mxu0 %v6703
    %7053 = vmatpush1.bf16.msra.mxu0 %v6702
    %7054 = vmatprep.subr.bf16.mxu0 %v6763
    %7055 = vmatpush2.bf16.msra.mxu0 %v6762
    %7056 = vmatprep.subr.bf16.mxu0 %v6759
    %7057 = vmatpush2.bf16.msra.mxu0 %v6758
    %7058 = vmatprep.subr.bf16.mxu0 %v6755
    %7059 = vmatpush2.bf16.msra.mxu0 %v6754
    %7060 = vmatprep.subr.bf16.mxu0 %v6751
    %7061 = vmatpush2.bf16.msra.mxu0 %v6750
    %7062 = vmatprep.subr.bf16.mxu0 %v6747
    %7063 = vmatpush2.bf16.msra.mxu0 %v6746
    %7064 = vmatprep.subr.bf16.mxu0 %v6743
    %7065 = vmatpush2.bf16.msra.mxu0 %v6742
    %7066 = vmatprep.subr.bf16.mxu0 %v6739
    %7067 = vmatpush2.bf16.msra.mxu0 %v6738
    %7068 = vmatprep.subr.bf16.mxu0 %v6735
    %7069 = vmatpush2.bf16.msra.mxu0 %v6734
    %7070 = vmatprep.mubr.bf16.mxu0 %v6161
    %7071 = vmatmul.mubr.bf16.gmra.mxu0 %v6160
    %v7072 = vpop.f32.mrf.mxu0
    %v7073 = vadd.f32 %v6307, %v7072
    %v7074 = vpop.f32.mrf.mxu0
    %v7075 = vadd.f32 %v6311, %v7074
    %v7076 = vpop.f32.mrf.mxu0
    %v7077 = vpop.f32.mrf.mxu0
    %7078 = vdwg.mxu0
    %7079 = vmatprep.subr.bf16.mxu0 %v6795
    %7080 = vmatpush1.bf16.msra.mxu0 %v6794
    %7081 = vmatprep.subr.bf16.mxu0 %v6791
    %7082 = vmatpush1.bf16.msra.mxu0 %v6790
    %7083 = vmatprep.subr.bf16.mxu0 %v6787
    %7084 = vmatpush1.bf16.msra.mxu0 %v6786
    %7085 = vmatprep.subr.bf16.mxu0 %v6783
    %7086 = vmatpush1.bf16.msra.mxu0 %v6782
    %7087 = vmatprep.subr.bf16.mxu0 %v6779
    %7088 = vmatpush1.bf16.msra.mxu0 %v6778
    %7089 = vmatprep.subr.bf16.mxu0 %v6775
    %7090 = vmatpush1.bf16.msra.mxu0 %v6774
    %7091 = vmatprep.subr.bf16.mxu0 %v6771
    %7092 = vmatpush1.bf16.msra.mxu0 %v6770
    %7093 = vmatprep.subr.bf16.mxu0 %v6767
    %7094 = vmatpush1.bf16.msra.mxu0 %v6766
    %7095 = vmatprep.subr.bf16.mxu0 %v6827
    %7096 = vmatpush2.bf16.msra.mxu0 %v6826
    %7097 = vmatprep.subr.bf16.mxu0 %v6823
    %7098 = vmatpush2.bf16.msra.mxu0 %v6822
    %7099 = vmatprep.subr.bf16.mxu0 %v6819
    %7100 = vmatpush2.bf16.msra.mxu0 %v6818
    %7101 = vmatprep.subr.bf16.mxu0 %v6815
    %7102 = vmatpush2.bf16.msra.mxu0 %v6814
    %7103 = vmatprep.subr.bf16.mxu0 %v6811
    %7104 = vmatpush2.bf16.msra.mxu0 %v6810
    %7105 = vmatprep.subr.bf16.mxu0 %v6807
    %7106 = vmatpush2.bf16.msra.mxu0 %v6806
    %7107 = vmatprep.subr.bf16.mxu0 %v6803
    %7108 = vmatpush2.bf16.msra.mxu0 %v6802
    %7109 = vmatprep.subr.bf16.mxu0 %v6799
    %7110 = vmatpush2.bf16.msra.mxu0 %v6798
    %7111 = vmatprep.mubr.bf16.mxu0 %v6163
    %7112 = vmatmul.mubr.bf16.gmra.mxu0 %v6162
    %v7113 = vpop.f32.mrf.mxu0
    %v7114 = vadd.f32 %v7073, %v7113
    %v7115 = vpop.f32.mrf.mxu0
    %v7116 = vadd.f32 %v7075, %v7115
    %v7117 = vpop.f32.mrf.mxu0
    %v7118 = vpop.f32.mrf.mxu0
    %7119 = vdwg.mxu0
    %v7120 = vmax.f32 %v7032, 0.0
    %v7121 = vmax.f32 %v7034, 0.0
    %v7122 = vmax.f32 %v7114, 0.0
    %v7123 = vmax.f32 %v7116, 0.0
    %v7124 = vpack.c.bf16 %v7120, %v7120
    %v7125 = vpack.c.bf16 %v7121, %v7121
    %v7126 = vpack.c.bf16 %v7122, %v7122
    %v7127 = vpack.c.bf16 %v7123, %v7123
    %s7128 = scalar_lea.vmem [#allocation10], 3072
    %v7129 = vld [vmem:[%s7128] sm:$0xff]
    %v7130 = vld [vmem:[%s7128 + $0x8] sm:$0xff]
    %v7131 = vld [vmem:[%s7128 + $0x10] sm:$0xff]
    %v7132 = vld [vmem:[%s7128 + $0x18] sm:$0xff]
    %v7133 = vld [vmem:[%s7128 + $0x20] sm:$0xff]
    %v7134 = vld [vmem:[%s7128 + $0x28] sm:$0xff]
    %v7135 = vld [vmem:[%s7128 + $0x30] sm:$0xff]
    %v7136 = vld [vmem:[%s7128 + $0x38] sm:$0xff]
    %v7137 = vld [vmem:[%s7128 + $0x40] sm:$0xff]
    %v7138 = vld [vmem:[%s7128 + $0x48] sm:$0xff]
    %v7139 = vld [vmem:[%s7128 + $0x50] sm:$0xff]
    %v7140 = vld [vmem:[%s7128 + $0x58] sm:$0xff]
    %v7141 = vld [vmem:[%s7128 + $0x60] sm:$0xff]
    %v7142 = vld [vmem:[%s7128 + $0x68] sm:$0xff]
    %v7143 = vld [vmem:[%s7128 + $0x70] sm:$0xff]
    %v7144 = vld [vmem:[%s7128 + $0x78] sm:$0xff]
    %v7145 = vld [vmem:[%s7128 + $0x80] sm:$0xff]
    %v7146 = vld [vmem:[%s7128 + $0x88] sm:$0xff]
    %v7147 = vld [vmem:[%s7128 + $0x90] sm:$0xff]
    %v7148 = vld [vmem:[%s7128 + $0x98] sm:$0xff]
    %v7149 = vld [vmem:[%s7128 + $0xa0] sm:$0xff]
    %v7150 = vld [vmem:[%s7128 + $0xa8] sm:$0xff]
    %v7151 = vld [vmem:[%s7128 + $0xb0] sm:$0xff]
    %v7152 = vld [vmem:[%s7128 + $0xb8] sm:$0xff]
    %v7153 = vld [vmem:[%s7128 + $0xc0] sm:$0xff]
    %v7154 = vld [vmem:[%s7128 + $0xc8] sm:$0xff]
    %v7155 = vld [vmem:[%s7128 + $0xd0] sm:$0xff]
    %v7156 = vld [vmem:[%s7128 + $0xd8] sm:$0xff]
    %v7157 = vld [vmem:[%s7128 + $0xe0] sm:$0xff]
    %v7158 = vld [vmem:[%s7128 + $0xe8] sm:$0xff]
    %v7159 = vld [vmem:[%s7128 + $0xf0] sm:$0xff]
    %v7160 = vld [vmem:[%s7128 + $0xf8] sm:$0xff]
    %v7161 = vld [vmem:[%s7128 + $0x100] sm:$0xff]
    %v7162 = vld [vmem:[%s7128 + $0x108] sm:$0xff]
    %v7163 = vld [vmem:[%s7128 + $0x110] sm:$0xff]
    %v7164 = vld [vmem:[%s7128 + $0x118] sm:$0xff]
    %v7165 = vld [vmem:[%s7128 + $0x120] sm:$0xff]
    %v7166 = vld [vmem:[%s7128 + $0x128] sm:$0xff]
    %v7167 = vld [vmem:[%s7128 + $0x130] sm:$0xff]
    %v7168 = vld [vmem:[%s7128 + $0x138] sm:$0xff]
    %v7169 = vld [vmem:[%s7128 + $0x140] sm:$0xff]
    %v7170 = vld [vmem:[%s7128 + $0x148] sm:$0xff]
    %v7171 = vld [vmem:[%s7128 + $0x150] sm:$0xff]
    %v7172 = vld [vmem:[%s7128 + $0x158] sm:$0xff]
    %v7173 = vld [vmem:[%s7128 + $0x160] sm:$0xff]
    %v7174 = vld [vmem:[%s7128 + $0x168] sm:$0xff]
    %v7175 = vld [vmem:[%s7128 + $0x170] sm:$0xff]
    %v7176 = vld [vmem:[%s7128 + $0x178] sm:$0xff]
    %v7177 = vld [vmem:[%s7128 + $0x180] sm:$0xff]
    %v7178 = vld [vmem:[%s7128 + $0x188] sm:$0xff]
    %v7179 = vld [vmem:[%s7128 + $0x190] sm:$0xff]
    %v7180 = vld [vmem:[%s7128 + $0x198] sm:$0xff]
    %v7181 = vld [vmem:[%s7128 + $0x1a0] sm:$0xff]
    %v7182 = vld [vmem:[%s7128 + $0x1a8] sm:$0xff]
    %v7183 = vld [vmem:[%s7128 + $0x1b0] sm:$0xff]
    %v7184 = vld [vmem:[%s7128 + $0x1b8] sm:$0xff]
    %v7185 = vld [vmem:[%s7128 + $0x1c0] sm:$0xff]
    %v7186 = vld [vmem:[%s7128 + $0x1c8] sm:$0xff]
    %v7187 = vld [vmem:[%s7128 + $0x1d0] sm:$0xff]
    %v7188 = vld [vmem:[%s7128 + $0x1d8] sm:$0xff]
    %v7189 = vld [vmem:[%s7128 + $0x1e0] sm:$0xff]
    %v7190 = vld [vmem:[%s7128 + $0x1e8] sm:$0xff]
    %v7191 = vld [vmem:[%s7128 + $0x1f0] sm:$0xff]
    %v7192 = vld [vmem:[%s7128 + $0x1f8] sm:$0xff]
    %v7193 = vld [vmem:[%s7128 + $0x200] sm:$0xff]
    %v7194 = vld [vmem:[%s7128 + $0x208] sm:$0xff]
    %v7195 = vld [vmem:[%s7128 + $0x210] sm:$0xff]
    %v7196 = vld [vmem:[%s7128 + $0x218] sm:$0xff]
    %v7197 = vld [vmem:[%s7128 + $0x220] sm:$0xff]
    %v7198 = vld [vmem:[%s7128 + $0x228] sm:$0xff]
    %v7199 = vld [vmem:[%s7128 + $0x230] sm:$0xff]
    %v7200 = vld [vmem:[%s7128 + $0x238] sm:$0xff]
    %v7201 = vld [vmem:[%s7128 + $0x240] sm:$0xff]
    %v7202 = vld [vmem:[%s7128 + $0x248] sm:$0xff]
    %v7203 = vld [vmem:[%s7128 + $0x250] sm:$0xff]
    %v7204 = vld [vmem:[%s7128 + $0x258] sm:$0xff]
    %v7205 = vld [vmem:[%s7128 + $0x260] sm:$0xff]
    %v7206 = vld [vmem:[%s7128 + $0x268] sm:$0xff]
    %v7207 = vld [vmem:[%s7128 + $0x270] sm:$0xff]
    %v7208 = vld [vmem:[%s7128 + $0x278] sm:$0xff]
    %v7209 = vld [vmem:[%s7128 + $0x280] sm:$0xff]
    %v7210 = vld [vmem:[%s7128 + $0x288] sm:$0xff]
    %v7211 = vld [vmem:[%s7128 + $0x290] sm:$0xff]
    %v7212 = vld [vmem:[%s7128 + $0x298] sm:$0xff]
    %v7213 = vld [vmem:[%s7128 + $0x2a0] sm:$0xff]
    %v7214 = vld [vmem:[%s7128 + $0x2a8] sm:$0xff]
    %v7215 = vld [vmem:[%s7128 + $0x2b0] sm:$0xff]
    %v7216 = vld [vmem:[%s7128 + $0x2b8] sm:$0xff]
    %v7217 = vld [vmem:[%s7128 + $0x2c0] sm:$0xff]
    %v7218 = vld [vmem:[%s7128 + $0x2c8] sm:$0xff]
    %v7219 = vld [vmem:[%s7128 + $0x2d0] sm:$0xff]
    %v7220 = vld [vmem:[%s7128 + $0x2d8] sm:$0xff]
    %v7221 = vld [vmem:[%s7128 + $0x2e0] sm:$0xff]
    %v7222 = vld [vmem:[%s7128 + $0x2e8] sm:$0xff]
    %v7223 = vld [vmem:[%s7128 + $0x2f0] sm:$0xff]
    %v7224 = vld [vmem:[%s7128 + $0x2f8] sm:$0xff]
    %v7225 = vld [vmem:[%s7128 + $0x300] sm:$0xff]
    %v7226 = vld [vmem:[%s7128 + $0x308] sm:$0xff]
    %v7227 = vld [vmem:[%s7128 + $0x310] sm:$0xff]
    %v7228 = vld [vmem:[%s7128 + $0x318] sm:$0xff]
    %v7229 = vld [vmem:[%s7128 + $0x320] sm:$0xff]
    %v7230 = vld [vmem:[%s7128 + $0x328] sm:$0xff]
    %v7231 = vld [vmem:[%s7128 + $0x330] sm:$0xff]
    %v7232 = vld [vmem:[%s7128 + $0x338] sm:$0xff]
    %v7233 = vld [vmem:[%s7128 + $0x340] sm:$0xff]
    %v7234 = vld [vmem:[%s7128 + $0x348] sm:$0xff]
    %v7235 = vld [vmem:[%s7128 + $0x350] sm:$0xff]
    %v7236 = vld [vmem:[%s7128 + $0x358] sm:$0xff]
    %v7237 = vld [vmem:[%s7128 + $0x360] sm:$0xff]
    %v7238 = vld [vmem:[%s7128 + $0x368] sm:$0xff]
    %v7239 = vld [vmem:[%s7128 + $0x370] sm:$0xff]
    %v7240 = vld [vmem:[%s7128 + $0x378] sm:$0xff]
    %v7241 = vld [vmem:[%s7128 + $0x380] sm:$0xff]
    %v7242 = vld [vmem:[%s7128 + $0x388] sm:$0xff]
    %v7243 = vld [vmem:[%s7128 + $0x390] sm:$0xff]
    %v7244 = vld [vmem:[%s7128 + $0x398] sm:$0xff]
    %v7245 = vld [vmem:[%s7128 + $0x3a0] sm:$0xff]
    %v7246 = vld [vmem:[%s7128 + $0x3a8] sm:$0xff]
    %v7247 = vld [vmem:[%s7128 + $0x3b0] sm:$0xff]
    %v7248 = vld [vmem:[%s7128 + $0x3b8] sm:$0xff]
    %v7249 = vld [vmem:[%s7128 + $0x3c0] sm:$0xff]
    %v7250 = vld [vmem:[%s7128 + $0x3c8] sm:$0xff]
    %v7251 = vld [vmem:[%s7128 + $0x3d0] sm:$0xff]
    %v7252 = vld [vmem:[%s7128 + $0x3d8] sm:$0xff]
    %v7253 = vld [vmem:[%s7128 + $0x3e0] sm:$0xff]
    %v7254 = vld [vmem:[%s7128 + $0x3e8] sm:$0xff]
    %v7255 = vld [vmem:[%s7128 + $0x3f0] sm:$0xff]
    %v7256 = vld [vmem:[%s7128 + $0x3f8] sm:$0xff]
    %s7257 = scalar_lea.vmem [#allocation11], 12
    %v7258 = vld [vmem:[%s7257] sm:$0xf]
    %v7260 = vlaneseq
    %v7261 = vshrl.u32 %v7260, 7
    %v7262 = vsub.s32 0, %v7261
    %v7263 = vrot.slane %v7258, %v7262
    %v7264 = vlaneseq
    %v7265 = vshrl.u32 %v7264, 7
    %v7266 = vsub.s32 1, %v7265
    %v7267 = vrot.slane %v7258, %v7266
    %v7268 = vlaneseq
    %v7269 = vshrl.u32 %v7268, 7
    %v7270 = vsub.s32 2, %v7269
    %v7271 = vrot.slane %v7258, %v7270
    %v7272 = vlaneseq
    %v7273 = vshrl.u32 %v7272, 7
    %v7274 = vsub.s32 3, %v7273
    %v7275 = vrot.slane %v7258, %v7274
    %v7408 = vunpack.c.l.b16 %v7129
    %v7409 = vunpack.c.h.b16 %v7129
    %v7410 = vunpack.c.l.b16 %v7130
    %v7411 = vunpack.c.h.b16 %v7130
    %v7412 = vunpack.c.l.b16 %v7131
    %v7413 = vunpack.c.h.b16 %v7131
    %v7414 = vunpack.c.l.b16 %v7132
    %v7415 = vunpack.c.h.b16 %v7132
    %v7416 = vunpack.c.l.b16 %v7133
    %v7417 = vunpack.c.h.b16 %v7133
    %v7418 = vunpack.c.l.b16 %v7134
    %v7419 = vunpack.c.h.b16 %v7134
    %v7420 = vunpack.c.l.b16 %v7135
    %v7421 = vunpack.c.h.b16 %v7135
    %v7422 = vunpack.c.l.b16 %v7136
    %v7423 = vunpack.c.h.b16 %v7136
    %v7424 = vunpack.c.l.b16 %v7137
    %v7425 = vunpack.c.h.b16 %v7137
    %v7426 = vunpack.c.l.b16 %v7138
    %v7427 = vunpack.c.h.b16 %v7138
    %v7428 = vunpack.c.l.b16 %v7139
    %v7429 = vunpack.c.h.b16 %v7139
    %v7430 = vunpack.c.l.b16 %v7140
    %v7431 = vunpack.c.h.b16 %v7140
    %v7432 = vunpack.c.l.b16 %v7141
    %v7433 = vunpack.c.h.b16 %v7141
    %v7434 = vunpack.c.l.b16 %v7142
    %v7435 = vunpack.c.h.b16 %v7142
    %v7436 = vunpack.c.l.b16 %v7143
    %v7437 = vunpack.c.h.b16 %v7143
    %v7438 = vunpack.c.l.b16 %v7144
    %v7439 = vunpack.c.h.b16 %v7144
    %v7440 = vunpack.c.l.b16 %v7145
    %v7441 = vunpack.c.h.b16 %v7145
    %v7442 = vunpack.c.l.b16 %v7146
    %v7443 = vunpack.c.h.b16 %v7146
    %v7444 = vunpack.c.l.b16 %v7147
    %v7445 = vunpack.c.h.b16 %v7147
    %v7446 = vunpack.c.l.b16 %v7148
    %v7447 = vunpack.c.h.b16 %v7148
    %v7448 = vunpack.c.l.b16 %v7149
    %v7449 = vunpack.c.h.b16 %v7149
    %v7450 = vunpack.c.l.b16 %v7150
    %v7451 = vunpack.c.h.b16 %v7150
    %v7452 = vunpack.c.l.b16 %v7151
    %v7453 = vunpack.c.h.b16 %v7151
    %v7454 = vunpack.c.l.b16 %v7152
    %v7455 = vunpack.c.h.b16 %v7152
    %v7456 = vunpack.c.l.b16 %v7153
    %v7457 = vunpack.c.h.b16 %v7153
    %v7458 = vunpack.c.l.b16 %v7154
    %v7459 = vunpack.c.h.b16 %v7154
    %v7460 = vunpack.c.l.b16 %v7155
    %v7461 = vunpack.c.h.b16 %v7155
    %v7462 = vunpack.c.l.b16 %v7156
    %v7463 = vunpack.c.h.b16 %v7156
    %v7464 = vunpack.c.l.b16 %v7157
    %v7465 = vunpack.c.h.b16 %v7157
    %v7466 = vunpack.c.l.b16 %v7158
    %v7467 = vunpack.c.h.b16 %v7158
    %v7468 = vunpack.c.l.b16 %v7159
    %v7469 = vunpack.c.h.b16 %v7159
    %v7470 = vunpack.c.l.b16 %v7160
    %v7471 = vunpack.c.h.b16 %v7160
    %v7472 = vunpack.c.l.b16 %v7161
    %v7473 = vunpack.c.h.b16 %v7161
    %v7474 = vunpack.c.l.b16 %v7162
    %v7475 = vunpack.c.h.b16 %v7162
    %v7476 = vunpack.c.l.b16 %v7163
    %v7477 = vunpack.c.h.b16 %v7163
    %v7478 = vunpack.c.l.b16 %v7164
    %v7479 = vunpack.c.h.b16 %v7164
    %v7480 = vunpack.c.l.b16 %v7165
    %v7481 = vunpack.c.h.b16 %v7165
    %v7482 = vunpack.c.l.b16 %v7166
    %v7483 = vunpack.c.h.b16 %v7166
    %v7484 = vunpack.c.l.b16 %v7167
    %v7485 = vunpack.c.h.b16 %v7167
    %v7486 = vunpack.c.l.b16 %v7168
    %v7487 = vunpack.c.h.b16 %v7168
    %v7488 = vunpack.c.l.b16 %v7169
    %v7489 = vunpack.c.h.b16 %v7169
    %v7490 = vunpack.c.l.b16 %v7170
    %v7491 = vunpack.c.h.b16 %v7170
    %v7492 = vunpack.c.l.b16 %v7171
    %v7493 = vunpack.c.h.b16 %v7171
    %v7494 = vunpack.c.l.b16 %v7172
    %v7495 = vunpack.c.h.b16 %v7172
    %v7496 = vunpack.c.l.b16 %v7173
    %v7497 = vunpack.c.h.b16 %v7173
    %v7498 = vunpack.c.l.b16 %v7174
    %v7499 = vunpack.c.h.b16 %v7174
    %v7500 = vunpack.c.l.b16 %v7175
    %v7501 = vunpack.c.h.b16 %v7175
    %v7502 = vunpack.c.l.b16 %v7176
    %v7503 = vunpack.c.h.b16 %v7176
    %v7504 = vunpack.c.l.b16 %v7177
    %v7505 = vunpack.c.h.b16 %v7177
    %v7506 = vunpack.c.l.b16 %v7178
    %v7507 = vunpack.c.h.b16 %v7178
    %v7508 = vunpack.c.l.b16 %v7179
    %v7509 = vunpack.c.h.b16 %v7179
    %v7510 = vunpack.c.l.b16 %v7180
    %v7511 = vunpack.c.h.b16 %v7180
    %v7512 = vunpack.c.l.b16 %v7181
    %v7513 = vunpack.c.h.b16 %v7181
    %v7514 = vunpack.c.l.b16 %v7182
    %v7515 = vunpack.c.h.b16 %v7182
    %v7516 = vunpack.c.l.b16 %v7183
    %v7517 = vunpack.c.h.b16 %v7183
    %v7518 = vunpack.c.l.b16 %v7184
    %v7519 = vunpack.c.h.b16 %v7184
    %v7520 = vunpack.c.l.b16 %v7185
    %v7521 = vunpack.c.h.b16 %v7185
    %v7522 = vunpack.c.l.b16 %v7186
    %v7523 = vunpack.c.h.b16 %v7186
    %v7524 = vunpack.c.l.b16 %v7187
    %v7525 = vunpack.c.h.b16 %v7187
    %v7526 = vunpack.c.l.b16 %v7188
    %v7527 = vunpack.c.h.b16 %v7188
    %v7528 = vunpack.c.l.b16 %v7189
    %v7529 = vunpack.c.h.b16 %v7189
    %v7530 = vunpack.c.l.b16 %v7190
    %v7531 = vunpack.c.h.b16 %v7190
    %v7532 = vunpack.c.l.b16 %v7191
    %v7533 = vunpack.c.h.b16 %v7191
    %v7534 = vunpack.c.l.b16 %v7192
    %v7535 = vunpack.c.h.b16 %v7192
    %v7536 = vunpack.c.l.b16 %v7193
    %v7537 = vunpack.c.h.b16 %v7193
    %v7538 = vunpack.c.l.b16 %v7194
    %v7539 = vunpack.c.h.b16 %v7194
    %v7540 = vunpack.c.l.b16 %v7195
    %v7541 = vunpack.c.h.b16 %v7195
    %v7542 = vunpack.c.l.b16 %v7196
    %v7543 = vunpack.c.h.b16 %v7196
    %v7544 = vunpack.c.l.b16 %v7197
    %v7545 = vunpack.c.h.b16 %v7197
    %v7546 = vunpack.c.l.b16 %v7198
    %v7547 = vunpack.c.h.b16 %v7198
    %v7548 = vunpack.c.l.b16 %v7199
    %v7549 = vunpack.c.h.b16 %v7199
    %v7550 = vunpack.c.l.b16 %v7200
    %v7551 = vunpack.c.h.b16 %v7200
    %v7552 = vunpack.c.l.b16 %v7201
    %v7553 = vunpack.c.h.b16 %v7201
    %v7554 = vunpack.c.l.b16 %v7202
    %v7555 = vunpack.c.h.b16 %v7202
    %v7556 = vunpack.c.l.b16 %v7203
    %v7557 = vunpack.c.h.b16 %v7203
    %v7558 = vunpack.c.l.b16 %v7204
    %v7559 = vunpack.c.h.b16 %v7204
    %v7560 = vunpack.c.l.b16 %v7205
    %v7561 = vunpack.c.h.b16 %v7205
    %v7562 = vunpack.c.l.b16 %v7206
    %v7563 = vunpack.c.h.b16 %v7206
    %v7564 = vunpack.c.l.b16 %v7207
    %v7565 = vunpack.c.h.b16 %v7207
    %v7566 = vunpack.c.l.b16 %v7208
    %v7567 = vunpack.c.h.b16 %v7208
    %v7568 = vunpack.c.l.b16 %v7209
    %v7569 = vunpack.c.h.b16 %v7209
    %v7570 = vunpack.c.l.b16 %v7210
    %v7571 = vunpack.c.h.b16 %v7210
    %v7572 = vunpack.c.l.b16 %v7211
    %v7573 = vunpack.c.h.b16 %v7211
    %v7574 = vunpack.c.l.b16 %v7212
    %v7575 = vunpack.c.h.b16 %v7212
    %v7576 = vunpack.c.l.b16 %v7213
    %v7577 = vunpack.c.h.b16 %v7213
    %v7578 = vunpack.c.l.b16 %v7214
    %v7579 = vunpack.c.h.b16 %v7214
    %v7580 = vunpack.c.l.b16 %v7215
    %v7581 = vunpack.c.h.b16 %v7215
    %v7582 = vunpack.c.l.b16 %v7216
    %v7583 = vunpack.c.h.b16 %v7216
    %v7584 = vunpack.c.l.b16 %v7217
    %v7585 = vunpack.c.h.b16 %v7217
    %v7586 = vunpack.c.l.b16 %v7218
    %v7587 = vunpack.c.h.b16 %v7218
    %v7588 = vunpack.c.l.b16 %v7219
    %v7589 = vunpack.c.h.b16 %v7219
    %v7590 = vunpack.c.l.b16 %v7220
    %v7591 = vunpack.c.h.b16 %v7220
    %v7592 = vunpack.c.l.b16 %v7221
    %v7593 = vunpack.c.h.b16 %v7221
    %v7594 = vunpack.c.l.b16 %v7222
    %v7595 = vunpack.c.h.b16 %v7222
    %v7596 = vunpack.c.l.b16 %v7223
    %v7597 = vunpack.c.h.b16 %v7223
    %v7598 = vunpack.c.l.b16 %v7224
    %v7599 = vunpack.c.h.b16 %v7224
    %v7600 = vunpack.c.l.b16 %v7225
    %v7601 = vunpack.c.h.b16 %v7225
    %v7602 = vunpack.c.l.b16 %v7226
    %v7603 = vunpack.c.h.b16 %v7226
    %v7604 = vunpack.c.l.b16 %v7227
    %v7605 = vunpack.c.h.b16 %v7227
    %v7606 = vunpack.c.l.b16 %v7228
    %v7607 = vunpack.c.h.b16 %v7228
    %v7608 = vunpack.c.l.b16 %v7229
    %v7609 = vunpack.c.h.b16 %v7229
    %v7610 = vunpack.c.l.b16 %v7230
    %v7611 = vunpack.c.h.b16 %v7230
    %v7612 = vunpack.c.l.b16 %v7231
    %v7613 = vunpack.c.h.b16 %v7231
    %v7614 = vunpack.c.l.b16 %v7232
    %v7615 = vunpack.c.h.b16 %v7232
    %v7616 = vunpack.c.l.b16 %v7233
    %v7617 = vunpack.c.h.b16 %v7233
    %v7618 = vunpack.c.l.b16 %v7234
    %v7619 = vunpack.c.h.b16 %v7234
    %v7620 = vunpack.c.l.b16 %v7235
    %v7621 = vunpack.c.h.b16 %v7235
    %v7622 = vunpack.c.l.b16 %v7236
    %v7623 = vunpack.c.h.b16 %v7236
    %v7624 = vunpack.c.l.b16 %v7237
    %v7625 = vunpack.c.h.b16 %v7237
    %v7626 = vunpack.c.l.b16 %v7238
    %v7627 = vunpack.c.h.b16 %v7238
    %v7628 = vunpack.c.l.b16 %v7239
    %v7629 = vunpack.c.h.b16 %v7239
    %v7630 = vunpack.c.l.b16 %v7240
    %v7631 = vunpack.c.h.b16 %v7240
    %v7632 = vunpack.c.l.b16 %v7241
    %v7633 = vunpack.c.h.b16 %v7241
    %v7634 = vunpack.c.l.b16 %v7242
    %v7635 = vunpack.c.h.b16 %v7242
    %v7636 = vunpack.c.l.b16 %v7243
    %v7637 = vunpack.c.h.b16 %v7243
    %v7638 = vunpack.c.l.b16 %v7244
    %v7639 = vunpack.c.h.b16 %v7244
    %v7640 = vunpack.c.l.b16 %v7245
    %v7641 = vunpack.c.h.b16 %v7245
    %v7642 = vunpack.c.l.b16 %v7246
    %v7643 = vunpack.c.h.b16 %v7246
    %v7644 = vunpack.c.l.b16 %v7247
    %v7645 = vunpack.c.h.b16 %v7247
    %v7646 = vunpack.c.l.b16 %v7248
    %v7647 = vunpack.c.h.b16 %v7248
    %v7648 = vunpack.c.l.b16 %v7249
    %v7649 = vunpack.c.h.b16 %v7249
    %v7650 = vunpack.c.l.b16 %v7250
    %v7651 = vunpack.c.h.b16 %v7250
    %v7652 = vunpack.c.l.b16 %v7251
    %v7653 = vunpack.c.h.b16 %v7251
    %v7654 = vunpack.c.l.b16 %v7252
    %v7655 = vunpack.c.h.b16 %v7252
    %v7656 = vunpack.c.l.b16 %v7253
    %v7657 = vunpack.c.h.b16 %v7253
    %v7658 = vunpack.c.l.b16 %v7254
    %v7659 = vunpack.c.h.b16 %v7254
    %v7660 = vunpack.c.l.b16 %v7255
    %v7661 = vunpack.c.h.b16 %v7255
    %v7662 = vunpack.c.l.b16 %v7256
    %v7663 = vunpack.c.h.b16 %v7256
    %v7664 = vpack.c.b16 %v7412, %v7408
    %v7665 = vpack.c.b16 %v7413, %v7409
    %v7666 = vpack.c.b16 %v7414, %v7410
    %v7667 = vpack.c.b16 %v7415, %v7411
    %v7668 = vpack.c.b16 %v7420, %v7416
    %v7669 = vpack.c.b16 %v7421, %v7417
    %v7670 = vpack.c.b16 %v7422, %v7418
    %v7671 = vpack.c.b16 %v7423, %v7419
    %v7672 = vpack.c.b16 %v7428, %v7424
    %v7673 = vpack.c.b16 %v7429, %v7425
    %v7674 = vpack.c.b16 %v7430, %v7426
    %v7675 = vpack.c.b16 %v7431, %v7427
    %v7676 = vpack.c.b16 %v7436, %v7432
    %v7677 = vpack.c.b16 %v7437, %v7433
    %v7678 = vpack.c.b16 %v7438, %v7434
    %v7679 = vpack.c.b16 %v7439, %v7435
    %v7680 = vpack.c.b16 %v7444, %v7440
    %v7681 = vpack.c.b16 %v7445, %v7441
    %v7682 = vpack.c.b16 %v7446, %v7442
    %v7683 = vpack.c.b16 %v7447, %v7443
    %v7684 = vpack.c.b16 %v7452, %v7448
    %v7685 = vpack.c.b16 %v7453, %v7449
    %v7686 = vpack.c.b16 %v7454, %v7450
    %v7687 = vpack.c.b16 %v7455, %v7451
    %v7688 = vpack.c.b16 %v7460, %v7456
    %v7689 = vpack.c.b16 %v7461, %v7457
    %v7690 = vpack.c.b16 %v7462, %v7458
    %v7691 = vpack.c.b16 %v7463, %v7459
    %v7692 = vpack.c.b16 %v7468, %v7464
    %v7693 = vpack.c.b16 %v7469, %v7465
    %v7694 = vpack.c.b16 %v7470, %v7466
    %v7695 = vpack.c.b16 %v7471, %v7467
    %v7696 = vpack.c.b16 %v7476, %v7472
    %v7697 = vpack.c.b16 %v7477, %v7473
    %v7698 = vpack.c.b16 %v7478, %v7474
    %v7699 = vpack.c.b16 %v7479, %v7475
    %v7700 = vpack.c.b16 %v7484, %v7480
    %v7701 = vpack.c.b16 %v7485, %v7481
    %v7702 = vpack.c.b16 %v7486, %v7482
    %v7703 = vpack.c.b16 %v7487, %v7483
    %v7704 = vpack.c.b16 %v7492, %v7488
    %v7705 = vpack.c.b16 %v7493, %v7489
    %v7706 = vpack.c.b16 %v7494, %v7490
    %v7707 = vpack.c.b16 %v7495, %v7491
    %v7708 = vpack.c.b16 %v7500, %v7496
    %v7709 = vpack.c.b16 %v7501, %v7497
    %v7710 = vpack.c.b16 %v7502, %v7498
    %v7711 = vpack.c.b16 %v7503, %v7499
    %v7712 = vpack.c.b16 %v7508, %v7504
    %v7713 = vpack.c.b16 %v7509, %v7505
    %v7714 = vpack.c.b16 %v7510, %v7506
    %v7715 = vpack.c.b16 %v7511, %v7507
    %v7716 = vpack.c.b16 %v7516, %v7512
    %v7717 = vpack.c.b16 %v7517, %v7513
    %v7718 = vpack.c.b16 %v7518, %v7514
    %v7719 = vpack.c.b16 %v7519, %v7515
    %v7720 = vpack.c.b16 %v7524, %v7520
    %v7721 = vpack.c.b16 %v7525, %v7521
    %v7722 = vpack.c.b16 %v7526, %v7522
    %v7723 = vpack.c.b16 %v7527, %v7523
    %v7724 = vpack.c.b16 %v7532, %v7528
    %v7725 = vpack.c.b16 %v7533, %v7529
    %v7726 = vpack.c.b16 %v7534, %v7530
    %v7727 = vpack.c.b16 %v7535, %v7531
    %v7728 = vpack.c.b16 %v7540, %v7536
    %v7729 = vpack.c.b16 %v7541, %v7537
    %v7730 = vpack.c.b16 %v7542, %v7538
    %v7731 = vpack.c.b16 %v7543, %v7539
    %v7732 = vpack.c.b16 %v7548, %v7544
    %v7733 = vpack.c.b16 %v7549, %v7545
    %v7734 = vpack.c.b16 %v7550, %v7546
    %v7735 = vpack.c.b16 %v7551, %v7547
    %v7736 = vpack.c.b16 %v7556, %v7552
    %v7737 = vpack.c.b16 %v7557, %v7553
    %v7738 = vpack.c.b16 %v7558, %v7554
    %v7739 = vpack.c.b16 %v7559, %v7555
    %v7740 = vpack.c.b16 %v7564, %v7560
    %v7741 = vpack.c.b16 %v7565, %v7561
    %v7742 = vpack.c.b16 %v7566, %v7562
    %v7743 = vpack.c.b16 %v7567, %v7563
    %v7744 = vpack.c.b16 %v7572, %v7568
    %v7745 = vpack.c.b16 %v7573, %v7569
    %v7746 = vpack.c.b16 %v7574, %v7570
    %v7747 = vpack.c.b16 %v7575, %v7571
    %v7748 = vpack.c.b16 %v7580, %v7576
    %v7749 = vpack.c.b16 %v7581, %v7577
    %v7750 = vpack.c.b16 %v7582, %v7578
    %v7751 = vpack.c.b16 %v7583, %v7579
    %v7752 = vpack.c.b16 %v7588, %v7584
    %v7753 = vpack.c.b16 %v7589, %v7585
    %v7754 = vpack.c.b16 %v7590, %v7586
    %v7755 = vpack.c.b16 %v7591, %v7587
    %v7756 = vpack.c.b16 %v7596, %v7592
    %v7757 = vpack.c.b16 %v7597, %v7593
    %v7758 = vpack.c.b16 %v7598, %v7594
    %v7759 = vpack.c.b16 %v7599, %v7595
    %v7760 = vpack.c.b16 %v7604, %v7600
    %v7761 = vpack.c.b16 %v7605, %v7601
    %v7762 = vpack.c.b16 %v7606, %v7602
    %v7763 = vpack.c.b16 %v7607, %v7603
    %v7764 = vpack.c.b16 %v7612, %v7608
    %v7765 = vpack.c.b16 %v7613, %v7609
    %v7766 = vpack.c.b16 %v7614, %v7610
    %v7767 = vpack.c.b16 %v7615, %v7611
    %v7768 = vpack.c.b16 %v7620, %v7616
    %v7769 = vpack.c.b16 %v7621, %v7617
    %v7770 = vpack.c.b16 %v7622, %v7618
    %v7771 = vpack.c.b16 %v7623, %v7619
    %v7772 = vpack.c.b16 %v7628, %v7624
    %v7773 = vpack.c.b16 %v7629, %v7625
    %v7774 = vpack.c.b16 %v7630, %v7626
    %v7775 = vpack.c.b16 %v7631, %v7627
    %v7776 = vpack.c.b16 %v7636, %v7632
    %v7777 = vpack.c.b16 %v7637, %v7633
    %v7778 = vpack.c.b16 %v7638, %v7634
    %v7779 = vpack.c.b16 %v7639, %v7635
    %v7780 = vpack.c.b16 %v7644, %v7640
    %v7781 = vpack.c.b16 %v7645, %v7641
    %v7782 = vpack.c.b16 %v7646, %v7642
    %v7783 = vpack.c.b16 %v7647, %v7643
    %v7784 = vpack.c.b16 %v7652, %v7648
    %v7785 = vpack.c.b16 %v7653, %v7649
    %v7786 = vpack.c.b16 %v7654, %v7650
    %v7787 = vpack.c.b16 %v7655, %v7651
    %v7788 = vpack.c.b16 %v7660, %v7656
    %v7789 = vpack.c.b16 %v7661, %v7657
    %v7790 = vpack.c.b16 %v7662, %v7658
    %v7791 = vpack.c.b16 %v7663, %v7659
    %7920 = vmatprep.subr.bf16.mxu0 %v7693
    %7921 = vmatpush1.bf16.msra.mxu0 %v7692
    %7922 = vmatprep.subr.bf16.mxu0 %v7689
    %7923 = vmatpush1.bf16.msra.mxu0 %v7688
    %7924 = vmatprep.subr.bf16.mxu0 %v7685
    %7925 = vmatpush1.bf16.msra.mxu0 %v7684
    %7926 = vmatprep.subr.bf16.mxu0 %v7681
    %7927 = vmatpush1.bf16.msra.mxu0 %v7680
    %7928 = vmatprep.subr.bf16.mxu0 %v7677
    %7929 = vmatpush1.bf16.msra.mxu0 %v7676
    %7930 = vmatprep.subr.bf16.mxu0 %v7673
    %7931 = vmatpush1.bf16.msra.mxu0 %v7672
    %7932 = vmatprep.subr.bf16.mxu0 %v7669
    %7933 = vmatpush1.bf16.msra.mxu0 %v7668
    %7934 = vmatprep.subr.bf16.mxu0 %v7665
    %7935 = vmatpush1.bf16.msra.mxu0 %v7664
    %7936 = vmatprep.subr.bf16.mxu0 %v7725
    %7937 = vmatpush2.bf16.msra.mxu0 %v7724
    %7938 = vmatprep.subr.bf16.mxu0 %v7721
    %7939 = vmatpush2.bf16.msra.mxu0 %v7720
    %7940 = vmatprep.subr.bf16.mxu0 %v7717
    %7941 = vmatpush2.bf16.msra.mxu0 %v7716
    %7942 = vmatprep.subr.bf16.mxu0 %v7713
    %7943 = vmatpush2.bf16.msra.mxu0 %v7712
    %7944 = vmatprep.subr.bf16.mxu0 %v7709
    %7945 = vmatpush2.bf16.msra.mxu0 %v7708
    %7946 = vmatprep.subr.bf16.mxu0 %v7705
    %7947 = vmatpush2.bf16.msra.mxu0 %v7704
    %7948 = vmatprep.subr.bf16.mxu0 %v7701
    %7949 = vmatpush2.bf16.msra.mxu0 %v7700
    %7950 = vmatprep.subr.bf16.mxu0 %v7697
    %7951 = vmatpush2.bf16.msra.mxu0 %v7696
    %7952 = vmatprep.mubr.bf16.mxu0 %v7125
    %7953 = vmatmul.mubr.bf16.gmra.mxu0 %v7124
    %v7954 = vpop.f32.mrf.mxu0
    %v7955 = vadd.f32 %v7263, %v7954
    %v7956 = vpop.f32.mrf.mxu0
    %v7957 = vadd.f32 %v7267, %v7956
    %v7958 = vpop.f32.mrf.mxu0
    %v7959 = vpop.f32.mrf.mxu0
    %7960 = vdwg.mxu0
    %7961 = vmatprep.subr.bf16.mxu0 %v7757
    %7962 = vmatpush1.bf16.msra.mxu0 %v7756
    %7963 = vmatprep.subr.bf16.mxu0 %v7753
    %7964 = vmatpush1.bf16.msra.mxu0 %v7752
    %7965 = vmatprep.subr.bf16.mxu0 %v7749
    %7966 = vmatpush1.bf16.msra.mxu0 %v7748
    %7967 = vmatprep.subr.bf16.mxu0 %v7745
    %7968 = vmatpush1.bf16.msra.mxu0 %v7744
    %7969 = vmatprep.subr.bf16.mxu0 %v7741
    %7970 = vmatpush1.bf16.msra.mxu0 %v7740
    %7971 = vmatprep.subr.bf16.mxu0 %v7737
    %7972 = vmatpush1.bf16.msra.mxu0 %v7736
    %7973 = vmatprep.subr.bf16.mxu0 %v7733
    %7974 = vmatpush1.bf16.msra.mxu0 %v7732
    %7975 = vmatprep.subr.bf16.mxu0 %v7729
    %7976 = vmatpush1.bf16.msra.mxu0 %v7728
    %7977 = vmatprep.subr.bf16.mxu0 %v7789
    %7978 = vmatpush2.bf16.msra.mxu0 %v7788
    %7979 = vmatprep.subr.bf16.mxu0 %v7785
    %7980 = vmatpush2.bf16.msra.mxu0 %v7784
    %7981 = vmatprep.subr.bf16.mxu0 %v7781
    %7982 = vmatpush2.bf16.msra.mxu0 %v7780
    %7983 = vmatprep.subr.bf16.mxu0 %v7777
    %7984 = vmatpush2.bf16.msra.mxu0 %v7776
    %7985 = vmatprep.subr.bf16.mxu0 %v7773
    %7986 = vmatpush2.bf16.msra.mxu0 %v7772
    %7987 = vmatprep.subr.bf16.mxu0 %v7769
    %7988 = vmatpush2.bf16.msra.mxu0 %v7768
    %7989 = vmatprep.subr.bf16.mxu0 %v7765
    %7990 = vmatpush2.bf16.msra.mxu0 %v7764
    %7991 = vmatprep.subr.bf16.mxu0 %v7761
    %7992 = vmatpush2.bf16.msra.mxu0 %v7760
    %7993 = vmatprep.mubr.bf16.mxu0 %v7127
    %7994 = vmatmul.mubr.bf16.gmra.mxu0 %v7126
    %v7995 = vpop.f32.mrf.mxu0
    %v7996 = vadd.f32 %v7955, %v7995
    %v7997 = vpop.f32.mrf.mxu0
    %v7998 = vadd.f32 %v7957, %v7997
    %v7999 = vpop.f32.mrf.mxu0
    %v8000 = vpop.f32.mrf.mxu0
    %8001 = vdwg.mxu0
    %8002 = vmatprep.subr.bf16.mxu0 %v7695
    %8003 = vmatpush1.bf16.msra.mxu0 %v7694
    %8004 = vmatprep.subr.bf16.mxu0 %v7691
    %8005 = vmatpush1.bf16.msra.mxu0 %v7690
    %8006 = vmatprep.subr.bf16.mxu0 %v7687
    %8007 = vmatpush1.bf16.msra.mxu0 %v7686
    %8008 = vmatprep.subr.bf16.mxu0 %v7683
    %8009 = vmatpush1.bf16.msra.mxu0 %v7682
    %8010 = vmatprep.subr.bf16.mxu0 %v7679
    %8011 = vmatpush1.bf16.msra.mxu0 %v7678
    %8012 = vmatprep.subr.bf16.mxu0 %v7675
    %8013 = vmatpush1.bf16.msra.mxu0 %v7674
    %8014 = vmatprep.subr.bf16.mxu0 %v7671
    %8015 = vmatpush1.bf16.msra.mxu0 %v7670
    %8016 = vmatprep.subr.bf16.mxu0 %v7667
    %8017 = vmatpush1.bf16.msra.mxu0 %v7666
    %8018 = vmatprep.subr.bf16.mxu0 %v7727
    %8019 = vmatpush2.bf16.msra.mxu0 %v7726
    %8020 = vmatprep.subr.bf16.mxu0 %v7723
    %8021 = vmatpush2.bf16.msra.mxu0 %v7722
    %8022 = vmatprep.subr.bf16.mxu0 %v7719
    %8023 = vmatpush2.bf16.msra.mxu0 %v7718
    %8024 = vmatprep.subr.bf16.mxu0 %v7715
    %8025 = vmatpush2.bf16.msra.mxu0 %v7714
    %8026 = vmatprep.subr.bf16.mxu0 %v7711
    %8027 = vmatpush2.bf16.msra.mxu0 %v7710
    %8028 = vmatprep.subr.bf16.mxu0 %v7707
    %8029 = vmatpush2.bf16.msra.mxu0 %v7706
    %8030 = vmatprep.subr.bf16.mxu0 %v7703
    %8031 = vmatpush2.bf16.msra.mxu0 %v7702
    %8032 = vmatprep.subr.bf16.mxu0 %v7699
    %8033 = vmatpush2.bf16.msra.mxu0 %v7698
    %8034 = vmatprep.mubr.bf16.mxu0 %v7125
    %8035 = vmatmul.mubr.bf16.gmra.mxu0 %v7124
    %v8036 = vpop.f32.mrf.mxu0
    %v8037 = vadd.f32 %v7271, %v8036
    %v8038 = vpop.f32.mrf.mxu0
    %v8039 = vadd.f32 %v7275, %v8038
    %v8040 = vpop.f32.mrf.mxu0
    %v8041 = vpop.f32.mrf.mxu0
    %8042 = vdwg.mxu0
    %8043 = vmatprep.subr.bf16.mxu0 %v7759
    %8044 = vmatpush1.bf16.msra.mxu0 %v7758
    %8045 = vmatprep.subr.bf16.mxu0 %v7755
    %8046 = vmatpush1.bf16.msra.mxu0 %v7754
    %8047 = vmatprep.subr.bf16.mxu0 %v7751
    %8048 = vmatpush1.bf16.msra.mxu0 %v7750
    %8049 = vmatprep.subr.bf16.mxu0 %v7747
    %8050 = vmatpush1.bf16.msra.mxu0 %v7746
    %8051 = vmatprep.subr.bf16.mxu0 %v7743
    %8052 = vmatpush1.bf16.msra.mxu0 %v7742
    %8053 = vmatprep.subr.bf16.mxu0 %v7739
    %8054 = vmatpush1.bf16.msra.mxu0 %v7738
    %8055 = vmatprep.subr.bf16.mxu0 %v7735
    %8056 = vmatpush1.bf16.msra.mxu0 %v7734
    %8057 = vmatprep.subr.bf16.mxu0 %v7731
    %8058 = vmatpush1.bf16.msra.mxu0 %v7730
    %8059 = vmatprep.subr.bf16.mxu0 %v7791
    %8060 = vmatpush2.bf16.msra.mxu0 %v7790
    %8061 = vmatprep.subr.bf16.mxu0 %v7787
    %8062 = vmatpush2.bf16.msra.mxu0 %v7786
    %8063 = vmatprep.subr.bf16.mxu0 %v7783
    %8064 = vmatpush2.bf16.msra.mxu0 %v7782
    %8065 = vmatprep.subr.bf16.mxu0 %v7779
    %8066 = vmatpush2.bf16.msra.mxu0 %v7778
    %8067 = vmatprep.subr.bf16.mxu0 %v7775
    %8068 = vmatpush2.bf16.msra.mxu0 %v7774
    %8069 = vmatprep.subr.bf16.mxu0 %v7771
    %8070 = vmatpush2.bf16.msra.mxu0 %v7770
    %8071 = vmatprep.subr.bf16.mxu0 %v7767
    %8072 = vmatpush2.bf16.msra.mxu0 %v7766
    %8073 = vmatprep.subr.bf16.mxu0 %v7763
    %8074 = vmatpush2.bf16.msra.mxu0 %v7762
    %8075 = vmatprep.mubr.bf16.mxu0 %v7127
    %8076 = vmatmul.mubr.bf16.gmra.mxu0 %v7126
    %v8077 = vpop.f32.mrf.mxu0
    %v8078 = vadd.f32 %v8037, %v8077
    %v8079 = vpop.f32.mrf.mxu0
    %v8080 = vadd.f32 %v8039, %v8079
    %v8081 = vpop.f32.mrf.mxu0
    %v8082 = vpop.f32.mrf.mxu0
    %8083 = vdwg.mxu0
    %v8084 = vadd.f32 %v6156, %v7996
    %v8085 = vadd.f32 %v6157, %v7998
    %v8086 = vadd.f32 %v6158, %v8078
    %v8087 = vadd.f32 %v6159, %v8080
    %v8088 = vmax.f32 %v8084, 0.0
    %v8089 = vmax.f32 %v8085, 0.0
    %v8090 = vmax.f32 %v8086, 0.0
    %v8091 = vmax.f32 %v8087, 0.0
    %v8092 = vpack.c.bf16 %v8088, %v8088
    %v8093 = vpack.c.bf16 %v8089, %v8089
    %v8094 = vpack.c.bf16 %v8090, %v8090
    %v8095 = vpack.c.bf16 %v8091, %v8091
    %s8096 = scalar_lea.vmem [#allocation7], 4096
    %v8097 = vld [vmem:[%s8096] sm:$0xff]
    %v8098 = vld [vmem:[%s8096 + $0x8] sm:$0xff]
    %v8099 = vld [vmem:[%s8096 + $0x10] sm:$0xff]
    %v8100 = vld [vmem:[%s8096 + $0x18] sm:$0xff]
    %v8101 = vld [vmem:[%s8096 + $0x20] sm:$0xff]
    %v8102 = vld [vmem:[%s8096 + $0x28] sm:$0xff]
    %v8103 = vld [vmem:[%s8096 + $0x30] sm:$0xff]
    %v8104 = vld [vmem:[%s8096 + $0x38] sm:$0xff]
    %v8105 = vld [vmem:[%s8096 + $0x40] sm:$0xff]
    %v8106 = vld [vmem:[%s8096 + $0x48] sm:$0xff]
    %v8107 = vld [vmem:[%s8096 + $0x50] sm:$0xff]
    %v8108 = vld [vmem:[%s8096 + $0x58] sm:$0xff]
    %v8109 = vld [vmem:[%s8096 + $0x60] sm:$0xff]
    %v8110 = vld [vmem:[%s8096 + $0x68] sm:$0xff]
    %v8111 = vld [vmem:[%s8096 + $0x70] sm:$0xff]
    %v8112 = vld [vmem:[%s8096 + $0x78] sm:$0xff]
    %v8113 = vld [vmem:[%s8096 + $0x80] sm:$0xff]
    %v8114 = vld [vmem:[%s8096 + $0x88] sm:$0xff]
    %v8115 = vld [vmem:[%s8096 + $0x90] sm:$0xff]
    %v8116 = vld [vmem:[%s8096 + $0x98] sm:$0xff]
    %v8117 = vld [vmem:[%s8096 + $0xa0] sm:$0xff]
    %v8118 = vld [vmem:[%s8096 + $0xa8] sm:$0xff]
    %v8119 = vld [vmem:[%s8096 + $0xb0] sm:$0xff]
    %v8120 = vld [vmem:[%s8096 + $0xb8] sm:$0xff]
    %v8121 = vld [vmem:[%s8096 + $0xc0] sm:$0xff]
    %v8122 = vld [vmem:[%s8096 + $0xc8] sm:$0xff]
    %v8123 = vld [vmem:[%s8096 + $0xd0] sm:$0xff]
    %v8124 = vld [vmem:[%s8096 + $0xd8] sm:$0xff]
    %v8125 = vld [vmem:[%s8096 + $0xe0] sm:$0xff]
    %v8126 = vld [vmem:[%s8096 + $0xe8] sm:$0xff]
    %v8127 = vld [vmem:[%s8096 + $0xf0] sm:$0xff]
    %v8128 = vld [vmem:[%s8096 + $0xf8] sm:$0xff]
    %v8129 = vld [vmem:[%s8096 + $0x100] sm:$0xff]
    %v8130 = vld [vmem:[%s8096 + $0x108] sm:$0xff]
    %v8131 = vld [vmem:[%s8096 + $0x110] sm:$0xff]
    %v8132 = vld [vmem:[%s8096 + $0x118] sm:$0xff]
    %v8133 = vld [vmem:[%s8096 + $0x120] sm:$0xff]
    %v8134 = vld [vmem:[%s8096 + $0x128] sm:$0xff]
    %v8135 = vld [vmem:[%s8096 + $0x130] sm:$0xff]
    %v8136 = vld [vmem:[%s8096 + $0x138] sm:$0xff]
    %v8137 = vld [vmem:[%s8096 + $0x140] sm:$0xff]
    %v8138 = vld [vmem:[%s8096 + $0x148] sm:$0xff]
    %v8139 = vld [vmem:[%s8096 + $0x150] sm:$0xff]
    %v8140 = vld [vmem:[%s8096 + $0x158] sm:$0xff]
    %v8141 = vld [vmem:[%s8096 + $0x160] sm:$0xff]
    %v8142 = vld [vmem:[%s8096 + $0x168] sm:$0xff]
    %v8143 = vld [vmem:[%s8096 + $0x170] sm:$0xff]
    %v8144 = vld [vmem:[%s8096 + $0x178] sm:$0xff]
    %v8145 = vld [vmem:[%s8096 + $0x180] sm:$0xff]
    %v8146 = vld [vmem:[%s8096 + $0x188] sm:$0xff]
    %v8147 = vld [vmem:[%s8096 + $0x190] sm:$0xff]
    %v8148 = vld [vmem:[%s8096 + $0x198] sm:$0xff]
    %v8149 = vld [vmem:[%s8096 + $0x1a0] sm:$0xff]
    %v8150 = vld [vmem:[%s8096 + $0x1a8] sm:$0xff]
    %v8151 = vld [vmem:[%s8096 + $0x1b0] sm:$0xff]
    %v8152 = vld [vmem:[%s8096 + $0x1b8] sm:$0xff]
    %v8153 = vld [vmem:[%s8096 + $0x1c0] sm:$0xff]
    %v8154 = vld [vmem:[%s8096 + $0x1c8] sm:$0xff]
    %v8155 = vld [vmem:[%s8096 + $0x1d0] sm:$0xff]
    %v8156 = vld [vmem:[%s8096 + $0x1d8] sm:$0xff]
    %v8157 = vld [vmem:[%s8096 + $0x1e0] sm:$0xff]
    %v8158 = vld [vmem:[%s8096 + $0x1e8] sm:$0xff]
    %v8159 = vld [vmem:[%s8096 + $0x1f0] sm:$0xff]
    %v8160 = vld [vmem:[%s8096 + $0x1f8] sm:$0xff]
    %v8161 = vld [vmem:[%s8096 + $0x200] sm:$0xff]
    %v8162 = vld [vmem:[%s8096 + $0x208] sm:$0xff]
    %v8163 = vld [vmem:[%s8096 + $0x210] sm:$0xff]
    %v8164 = vld [vmem:[%s8096 + $0x218] sm:$0xff]
    %v8165 = vld [vmem:[%s8096 + $0x220] sm:$0xff]
    %v8166 = vld [vmem:[%s8096 + $0x228] sm:$0xff]
    %v8167 = vld [vmem:[%s8096 + $0x230] sm:$0xff]
    %v8168 = vld [vmem:[%s8096 + $0x238] sm:$0xff]
    %v8169 = vld [vmem:[%s8096 + $0x240] sm:$0xff]
    %v8170 = vld [vmem:[%s8096 + $0x248] sm:$0xff]
    %v8171 = vld [vmem:[%s8096 + $0x250] sm:$0xff]
    %v8172 = vld [vmem:[%s8096 + $0x258] sm:$0xff]
    %v8173 = vld [vmem:[%s8096 + $0x260] sm:$0xff]
    %v8174 = vld [vmem:[%s8096 + $0x268] sm:$0xff]
    %v8175 = vld [vmem:[%s8096 + $0x270] sm:$0xff]
    %v8176 = vld [vmem:[%s8096 + $0x278] sm:$0xff]
    %v8177 = vld [vmem:[%s8096 + $0x280] sm:$0xff]
    %v8178 = vld [vmem:[%s8096 + $0x288] sm:$0xff]
    %v8179 = vld [vmem:[%s8096 + $0x290] sm:$0xff]
    %v8180 = vld [vmem:[%s8096 + $0x298] sm:$0xff]
    %v8181 = vld [vmem:[%s8096 + $0x2a0] sm:$0xff]
    %v8182 = vld [vmem:[%s8096 + $0x2a8] sm:$0xff]
    %v8183 = vld [vmem:[%s8096 + $0x2b0] sm:$0xff]
    %v8184 = vld [vmem:[%s8096 + $0x2b8] sm:$0xff]
    %v8185 = vld [vmem:[%s8096 + $0x2c0] sm:$0xff]
    %v8186 = vld [vmem:[%s8096 + $0x2c8] sm:$0xff]
    %v8187 = vld [vmem:[%s8096 + $0x2d0] sm:$0xff]
    %v8188 = vld [vmem:[%s8096 + $0x2d8] sm:$0xff]
    %v8189 = vld [vmem:[%s8096 + $0x2e0] sm:$0xff]
    %v8190 = vld [vmem:[%s8096 + $0x2e8] sm:$0xff]
    %v8191 = vld [vmem:[%s8096 + $0x2f0] sm:$0xff]
    %v8192 = vld [vmem:[%s8096 + $0x2f8] sm:$0xff]
    %v8193 = vld [vmem:[%s8096 + $0x300] sm:$0xff]
    %v8194 = vld [vmem:[%s8096 + $0x308] sm:$0xff]
    %v8195 = vld [vmem:[%s8096 + $0x310] sm:$0xff]
    %v8196 = vld [vmem:[%s8096 + $0x318] sm:$0xff]
    %v8197 = vld [vmem:[%s8096 + $0x320] sm:$0xff]
    %v8198 = vld [vmem:[%s8096 + $0x328] sm:$0xff]
    %v8199 = vld [vmem:[%s8096 + $0x330] sm:$0xff]
    %v8200 = vld [vmem:[%s8096 + $0x338] sm:$0xff]
    %v8201 = vld [vmem:[%s8096 + $0x340] sm:$0xff]
    %v8202 = vld [vmem:[%s8096 + $0x348] sm:$0xff]
    %v8203 = vld [vmem:[%s8096 + $0x350] sm:$0xff]
    %v8204 = vld [vmem:[%s8096 + $0x358] sm:$0xff]
    %v8205 = vld [vmem:[%s8096 + $0x360] sm:$0xff]
    %v8206 = vld [vmem:[%s8096 + $0x368] sm:$0xff]
    %v8207 = vld [vmem:[%s8096 + $0x370] sm:$0xff]
    %v8208 = vld [vmem:[%s8096 + $0x378] sm:$0xff]
    %v8209 = vld [vmem:[%s8096 + $0x380] sm:$0xff]
    %v8210 = vld [vmem:[%s8096 + $0x388] sm:$0xff]
    %v8211 = vld [vmem:[%s8096 + $0x390] sm:$0xff]
    %v8212 = vld [vmem:[%s8096 + $0x398] sm:$0xff]
    %v8213 = vld [vmem:[%s8096 + $0x3a0] sm:$0xff]
    %v8214 = vld [vmem:[%s8096 + $0x3a8] sm:$0xff]
    %v8215 = vld [vmem:[%s8096 + $0x3b0] sm:$0xff]
    %v8216 = vld [vmem:[%s8096 + $0x3b8] sm:$0xff]
    %v8217 = vld [vmem:[%s8096 + $0x3c0] sm:$0xff]
    %v8218 = vld [vmem:[%s8096 + $0x3c8] sm:$0xff]
    %v8219 = vld [vmem:[%s8096 + $0x3d0] sm:$0xff]
    %v8220 = vld [vmem:[%s8096 + $0x3d8] sm:$0xff]
    %v8221 = vld [vmem:[%s8096 + $0x3e0] sm:$0xff]
    %v8222 = vld [vmem:[%s8096 + $0x3e8] sm:$0xff]
    %v8223 = vld [vmem:[%s8096 + $0x3f0] sm:$0xff]
    %v8224 = vld [vmem:[%s8096 + $0x3f8] sm:$0xff]
    %s8225 = scalar_lea.vmem [#allocation8], 16
    %v8226 = vld [vmem:[%s8225] sm:$0xf]
    %v8228 = vlaneseq
    %v8229 = vshrl.u32 %v8228, 7
    %v8230 = vsub.s32 0, %v8229
    %v8231 = vrot.slane %v8226, %v8230
    %v8232 = vlaneseq
    %v8233 = vshrl.u32 %v8232, 7
    %v8234 = vsub.s32 1, %v8233
    %v8235 = vrot.slane %v8226, %v8234
    %v8236 = vlaneseq
    %v8237 = vshrl.u32 %v8236, 7
    %v8238 = vsub.s32 2, %v8237
    %v8239 = vrot.slane %v8226, %v8238
    %v8240 = vlaneseq
    %v8241 = vshrl.u32 %v8240, 7
    %v8242 = vsub.s32 3, %v8241
    %v8243 = vrot.slane %v8226, %v8242
    %v8376 = vunpack.c.l.b16 %v8097
    %v8377 = vunpack.c.h.b16 %v8097
    %v8378 = vunpack.c.l.b16 %v8098
    %v8379 = vunpack.c.h.b16 %v8098
    %v8380 = vunpack.c.l.b16 %v8099
    %v8381 = vunpack.c.h.b16 %v8099
    %v8382 = vunpack.c.l.b16 %v8100
    %v8383 = vunpack.c.h.b16 %v8100
    %v8384 = vunpack.c.l.b16 %v8101
    %v8385 = vunpack.c.h.b16 %v8101
    %v8386 = vunpack.c.l.b16 %v8102
    %v8387 = vunpack.c.h.b16 %v8102
    %v8388 = vunpack.c.l.b16 %v8103
    %v8389 = vunpack.c.h.b16 %v8103
    %v8390 = vunpack.c.l.b16 %v8104
    %v8391 = vunpack.c.h.b16 %v8104
    %v8392 = vunpack.c.l.b16 %v8105
    %v8393 = vunpack.c.h.b16 %v8105
    %v8394 = vunpack.c.l.b16 %v8106
    %v8395 = vunpack.c.h.b16 %v8106
    %v8396 = vunpack.c.l.b16 %v8107
    %v8397 = vunpack.c.h.b16 %v8107
    %v8398 = vunpack.c.l.b16 %v8108
    %v8399 = vunpack.c.h.b16 %v8108
    %v8400 = vunpack.c.l.b16 %v8109
    %v8401 = vunpack.c.h.b16 %v8109
    %v8402 = vunpack.c.l.b16 %v8110
    %v8403 = vunpack.c.h.b16 %v8110
    %v8404 = vunpack.c.l.b16 %v8111
    %v8405 = vunpack.c.h.b16 %v8111
    %v8406 = vunpack.c.l.b16 %v8112
    %v8407 = vunpack.c.h.b16 %v8112
    %v8408 = vunpack.c.l.b16 %v8113
    %v8409 = vunpack.c.h.b16 %v8113
    %v8410 = vunpack.c.l.b16 %v8114
    %v8411 = vunpack.c.h.b16 %v8114
    %v8412 = vunpack.c.l.b16 %v8115
    %v8413 = vunpack.c.h.b16 %v8115
    %v8414 = vunpack.c.l.b16 %v8116
    %v8415 = vunpack.c.h.b16 %v8116
    %v8416 = vunpack.c.l.b16 %v8117
    %v8417 = vunpack.c.h.b16 %v8117
    %v8418 = vunpack.c.l.b16 %v8118
    %v8419 = vunpack.c.h.b16 %v8118
    %v8420 = vunpack.c.l.b16 %v8119
    %v8421 = vunpack.c.h.b16 %v8119
    %v8422 = vunpack.c.l.b16 %v8120
    %v8423 = vunpack.c.h.b16 %v8120
    %v8424 = vunpack.c.l.b16 %v8121
    %v8425 = vunpack.c.h.b16 %v8121
    %v8426 = vunpack.c.l.b16 %v8122
    %v8427 = vunpack.c.h.b16 %v8122
    %v8428 = vunpack.c.l.b16 %v8123
    %v8429 = vunpack.c.h.b16 %v8123
    %v8430 = vunpack.c.l.b16 %v8124
    %v8431 = vunpack.c.h.b16 %v8124
    %v8432 = vunpack.c.l.b16 %v8125
    %v8433 = vunpack.c.h.b16 %v8125
    %v8434 = vunpack.c.l.b16 %v8126
    %v8435 = vunpack.c.h.b16 %v8126
    %v8436 = vunpack.c.l.b16 %v8127
    %v8437 = vunpack.c.h.b16 %v8127
    %v8438 = vunpack.c.l.b16 %v8128
    %v8439 = vunpack.c.h.b16 %v8128
    %v8440 = vunpack.c.l.b16 %v8129
    %v8441 = vunpack.c.h.b16 %v8129
    %v8442 = vunpack.c.l.b16 %v8130
    %v8443 = vunpack.c.h.b16 %v8130
    %v8444 = vunpack.c.l.b16 %v8131
    %v8445 = vunpack.c.h.b16 %v8131
    %v8446 = vunpack.c.l.b16 %v8132
    %v8447 = vunpack.c.h.b16 %v8132
    %v8448 = vunpack.c.l.b16 %v8133
    %v8449 = vunpack.c.h.b16 %v8133
    %v8450 = vunpack.c.l.b16 %v8134
    %v8451 = vunpack.c.h.b16 %v8134
    %v8452 = vunpack.c.l.b16 %v8135
    %v8453 = vunpack.c.h.b16 %v8135
    %v8454 = vunpack.c.l.b16 %v8136
    %v8455 = vunpack.c.h.b16 %v8136
    %v8456 = vunpack.c.l.b16 %v8137
    %v8457 = vunpack.c.h.b16 %v8137
    %v8458 = vunpack.c.l.b16 %v8138
    %v8459 = vunpack.c.h.b16 %v8138
    %v8460 = vunpack.c.l.b16 %v8139
    %v8461 = vunpack.c.h.b16 %v8139
    %v8462 = vunpack.c.l.b16 %v8140
    %v8463 = vunpack.c.h.b16 %v8140
    %v8464 = vunpack.c.l.b16 %v8141
    %v8465 = vunpack.c.h.b16 %v8141
    %v8466 = vunpack.c.l.b16 %v8142
    %v8467 = vunpack.c.h.b16 %v8142
    %v8468 = vunpack.c.l.b16 %v8143
    %v8469 = vunpack.c.h.b16 %v8143
    %v8470 = vunpack.c.l.b16 %v8144
    %v8471 = vunpack.c.h.b16 %v8144
    %v8472 = vunpack.c.l.b16 %v8145
    %v8473 = vunpack.c.h.b16 %v8145
    %v8474 = vunpack.c.l.b16 %v8146
    %v8475 = vunpack.c.h.b16 %v8146
    %v8476 = vunpack.c.l.b16 %v8147
    %v8477 = vunpack.c.h.b16 %v8147
    %v8478 = vunpack.c.l.b16 %v8148
    %v8479 = vunpack.c.h.b16 %v8148
    %v8480 = vunpack.c.l.b16 %v8149
    %v8481 = vunpack.c.h.b16 %v8149
    %v8482 = vunpack.c.l.b16 %v8150
    %v8483 = vunpack.c.h.b16 %v8150
    %v8484 = vunpack.c.l.b16 %v8151
    %v8485 = vunpack.c.h.b16 %v8151
    %v8486 = vunpack.c.l.b16 %v8152
    %v8487 = vunpack.c.h.b16 %v8152
    %v8488 = vunpack.c.l.b16 %v8153
    %v8489 = vunpack.c.h.b16 %v8153
    %v8490 = vunpack.c.l.b16 %v8154
    %v8491 = vunpack.c.h.b16 %v8154
    %v8492 = vunpack.c.l.b16 %v8155
    %v8493 = vunpack.c.h.b16 %v8155
    %v8494 = vunpack.c.l.b16 %v8156
    %v8495 = vunpack.c.h.b16 %v8156
    %v8496 = vunpack.c.l.b16 %v8157
    %v8497 = vunpack.c.h.b16 %v8157
    %v8498 = vunpack.c.l.b16 %v8158
    %v8499 = vunpack.c.h.b16 %v8158
    %v8500 = vunpack.c.l.b16 %v8159
    %v8501 = vunpack.c.h.b16 %v8159
    %v8502 = vunpack.c.l.b16 %v8160
    %v8503 = vunpack.c.h.b16 %v8160
    %v8504 = vunpack.c.l.b16 %v8161
    %v8505 = vunpack.c.h.b16 %v8161
    %v8506 = vunpack.c.l.b16 %v8162
    %v8507 = vunpack.c.h.b16 %v8162
    %v8508 = vunpack.c.l.b16 %v8163
    %v8509 = vunpack.c.h.b16 %v8163
    %v8510 = vunpack.c.l.b16 %v8164
    %v8511 = vunpack.c.h.b16 %v8164
    %v8512 = vunpack.c.l.b16 %v8165
    %v8513 = vunpack.c.h.b16 %v8165
    %v8514 = vunpack.c.l.b16 %v8166
    %v8515 = vunpack.c.h.b16 %v8166
    %v8516 = vunpack.c.l.b16 %v8167
    %v8517 = vunpack.c.h.b16 %v8167
    %v8518 = vunpack.c.l.b16 %v8168
    %v8519 = vunpack.c.h.b16 %v8168
    %v8520 = vunpack.c.l.b16 %v8169
    %v8521 = vunpack.c.h.b16 %v8169
    %v8522 = vunpack.c.l.b16 %v8170
    %v8523 = vunpack.c.h.b16 %v8170
    %v8524 = vunpack.c.l.b16 %v8171
    %v8525 = vunpack.c.h.b16 %v8171
    %v8526 = vunpack.c.l.b16 %v8172
    %v8527 = vunpack.c.h.b16 %v8172
    %v8528 = vunpack.c.l.b16 %v8173
    %v8529 = vunpack.c.h.b16 %v8173
    %v8530 = vunpack.c.l.b16 %v8174
    %v8531 = vunpack.c.h.b16 %v8174
    %v8532 = vunpack.c.l.b16 %v8175
    %v8533 = vunpack.c.h.b16 %v8175
    %v8534 = vunpack.c.l.b16 %v8176
    %v8535 = vunpack.c.h.b16 %v8176
    %v8536 = vunpack.c.l.b16 %v8177
    %v8537 = vunpack.c.h.b16 %v8177
    %v8538 = vunpack.c.l.b16 %v8178
    %v8539 = vunpack.c.h.b16 %v8178
    %v8540 = vunpack.c.l.b16 %v8179
    %v8541 = vunpack.c.h.b16 %v8179
    %v8542 = vunpack.c.l.b16 %v8180
    %v8543 = vunpack.c.h.b16 %v8180
    %v8544 = vunpack.c.l.b16 %v8181
    %v8545 = vunpack.c.h.b16 %v8181
    %v8546 = vunpack.c.l.b16 %v8182
    %v8547 = vunpack.c.h.b16 %v8182
    %v8548 = vunpack.c.l.b16 %v8183
    %v8549 = vunpack.c.h.b16 %v8183
    %v8550 = vunpack.c.l.b16 %v8184
    %v8551 = vunpack.c.h.b16 %v8184
    %v8552 = vunpack.c.l.b16 %v8185
    %v8553 = vunpack.c.h.b16 %v8185
    %v8554 = vunpack.c.l.b16 %v8186
    %v8555 = vunpack.c.h.b16 %v8186
    %v8556 = vunpack.c.l.b16 %v8187
    %v8557 = vunpack.c.h.b16 %v8187
    %v8558 = vunpack.c.l.b16 %v8188
    %v8559 = vunpack.c.h.b16 %v8188
    %v8560 = vunpack.c.l.b16 %v8189
    %v8561 = vunpack.c.h.b16 %v8189
    %v8562 = vunpack.c.l.b16 %v8190
    %v8563 = vunpack.c.h.b16 %v8190
    %v8564 = vunpack.c.l.b16 %v8191
    %v8565 = vunpack.c.h.b16 %v8191
    %v8566 = vunpack.c.l.b16 %v8192
    %v8567 = vunpack.c.h.b16 %v8192
    %v8568 = vunpack.c.l.b16 %v8193
    %v8569 = vunpack.c.h.b16 %v8193
    %v8570 = vunpack.c.l.b16 %v8194
    %v8571 = vunpack.c.h.b16 %v8194
    %v8572 = vunpack.c.l.b16 %v8195
    %v8573 = vunpack.c.h.b16 %v8195
    %v8574 = vunpack.c.l.b16 %v8196
    %v8575 = vunpack.c.h.b16 %v8196
    %v8576 = vunpack.c.l.b16 %v8197
    %v8577 = vunpack.c.h.b16 %v8197
    %v8578 = vunpack.c.l.b16 %v8198
    %v8579 = vunpack.c.h.b16 %v8198
    %v8580 = vunpack.c.l.b16 %v8199
    %v8581 = vunpack.c.h.b16 %v8199
    %v8582 = vunpack.c.l.b16 %v8200
    %v8583 = vunpack.c.h.b16 %v8200
    %v8584 = vunpack.c.l.b16 %v8201
    %v8585 = vunpack.c.h.b16 %v8201
    %v8586 = vunpack.c.l.b16 %v8202
    %v8587 = vunpack.c.h.b16 %v8202
    %v8588 = vunpack.c.l.b16 %v8203
    %v8589 = vunpack.c.h.b16 %v8203
    %v8590 = vunpack.c.l.b16 %v8204
    %v8591 = vunpack.c.h.b16 %v8204
    %v8592 = vunpack.c.l.b16 %v8205
    %v8593 = vunpack.c.h.b16 %v8205
    %v8594 = vunpack.c.l.b16 %v8206
    %v8595 = vunpack.c.h.b16 %v8206
    %v8596 = vunpack.c.l.b16 %v8207
    %v8597 = vunpack.c.h.b16 %v8207
    %v8598 = vunpack.c.l.b16 %v8208
    %v8599 = vunpack.c.h.b16 %v8208
    %v8600 = vunpack.c.l.b16 %v8209
    %v8601 = vunpack.c.h.b16 %v8209
    %v8602 = vunpack.c.l.b16 %v8210
    %v8603 = vunpack.c.h.b16 %v8210
    %v8604 = vunpack.c.l.b16 %v8211
    %v8605 = vunpack.c.h.b16 %v8211
    %v8606 = vunpack.c.l.b16 %v8212
    %v8607 = vunpack.c.h.b16 %v8212
    %v8608 = vunpack.c.l.b16 %v8213
    %v8609 = vunpack.c.h.b16 %v8213
    %v8610 = vunpack.c.l.b16 %v8214
    %v8611 = vunpack.c.h.b16 %v8214
    %v8612 = vunpack.c.l.b16 %v8215
    %v8613 = vunpack.c.h.b16 %v8215
    %v8614 = vunpack.c.l.b16 %v8216
    %v8615 = vunpack.c.h.b16 %v8216
    %v8616 = vunpack.c.l.b16 %v8217
    %v8617 = vunpack.c.h.b16 %v8217
    %v8618 = vunpack.c.l.b16 %v8218
    %v8619 = vunpack.c.h.b16 %v8218
    %v8620 = vunpack.c.l.b16 %v8219
    %v8621 = vunpack.c.h.b16 %v8219
    %v8622 = vunpack.c.l.b16 %v8220
    %v8623 = vunpack.c.h.b16 %v8220
    %v8624 = vunpack.c.l.b16 %v8221
    %v8625 = vunpack.c.h.b16 %v8221
    %v8626 = vunpack.c.l.b16 %v8222
    %v8627 = vunpack.c.h.b16 %v8222
    %v8628 = vunpack.c.l.b16 %v8223
    %v8629 = vunpack.c.h.b16 %v8223
    %v8630 = vunpack.c.l.b16 %v8224
    %v8631 = vunpack.c.h.b16 %v8224
    %v8632 = vpack.c.b16 %v8380, %v8376
    %v8633 = vpack.c.b16 %v8381, %v8377
    %v8634 = vpack.c.b16 %v8382, %v8378
    %v8635 = vpack.c.b16 %v8383, %v8379
    %v8636 = vpack.c.b16 %v8388, %v8384
    %v8637 = vpack.c.b16 %v8389, %v8385
    %v8638 = vpack.c.b16 %v8390, %v8386
    %v8639 = vpack.c.b16 %v8391, %v8387
    %v8640 = vpack.c.b16 %v8396, %v8392
    %v8641 = vpack.c.b16 %v8397, %v8393
    %v8642 = vpack.c.b16 %v8398, %v8394
    %v8643 = vpack.c.b16 %v8399, %v8395
    %v8644 = vpack.c.b16 %v8404, %v8400
    %v8645 = vpack.c.b16 %v8405, %v8401
    %v8646 = vpack.c.b16 %v8406, %v8402
    %v8647 = vpack.c.b16 %v8407, %v8403
    %v8648 = vpack.c.b16 %v8412, %v8408
    %v8649 = vpack.c.b16 %v8413, %v8409
    %v8650 = vpack.c.b16 %v8414, %v8410
    %v8651 = vpack.c.b16 %v8415, %v8411
    %v8652 = vpack.c.b16 %v8420, %v8416
    %v8653 = vpack.c.b16 %v8421, %v8417
    %v8654 = vpack.c.b16 %v8422, %v8418
    %v8655 = vpack.c.b16 %v8423, %v8419
    %v8656 = vpack.c.b16 %v8428, %v8424
    %v8657 = vpack.c.b16 %v8429, %v8425
    %v8658 = vpack.c.b16 %v8430, %v8426
    %v8659 = vpack.c.b16 %v8431, %v8427
    %v8660 = vpack.c.b16 %v8436, %v8432
    %v8661 = vpack.c.b16 %v8437, %v8433
    %v8662 = vpack.c.b16 %v8438, %v8434
    %v8663 = vpack.c.b16 %v8439, %v8435
    %v8664 = vpack.c.b16 %v8444, %v8440
    %v8665 = vpack.c.b16 %v8445, %v8441
    %v8666 = vpack.c.b16 %v8446, %v8442
    %v8667 = vpack.c.b16 %v8447, %v8443
    %v8668 = vpack.c.b16 %v8452, %v8448
    %v8669 = vpack.c.b16 %v8453, %v8449
    %v8670 = vpack.c.b16 %v8454, %v8450
    %v8671 = vpack.c.b16 %v8455, %v8451
    %v8672 = vpack.c.b16 %v8460, %v8456
    %v8673 = vpack.c.b16 %v8461, %v8457
    %v8674 = vpack.c.b16 %v8462, %v8458
    %v8675 = vpack.c.b16 %v8463, %v8459
    %v8676 = vpack.c.b16 %v8468, %v8464
    %v8677 = vpack.c.b16 %v8469, %v8465
    %v8678 = vpack.c.b16 %v8470, %v8466
    %v8679 = vpack.c.b16 %v8471, %v8467
    %v8680 = vpack.c.b16 %v8476, %v8472
    %v8681 = vpack.c.b16 %v8477, %v8473
    %v8682 = vpack.c.b16 %v8478, %v8474
    %v8683 = vpack.c.b16 %v8479, %v8475
    %v8684 = vpack.c.b16 %v8484, %v8480
    %v8685 = vpack.c.b16 %v8485, %v8481
    %v8686 = vpack.c.b16 %v8486, %v8482
    %v8687 = vpack.c.b16 %v8487, %v8483
    %v8688 = vpack.c.b16 %v8492, %v8488
    %v8689 = vpack.c.b16 %v8493, %v8489
    %v8690 = vpack.c.b16 %v8494, %v8490
    %v8691 = vpack.c.b16 %v8495, %v8491
    %v8692 = vpack.c.b16 %v8500, %v8496
    %v8693 = vpack.c.b16 %v8501, %v8497
    %v8694 = vpack.c.b16 %v8502, %v8498
    %v8695 = vpack.c.b16 %v8503, %v8499
    %v8696 = vpack.c.b16 %v8508, %v8504
    %v8697 = vpack.c.b16 %v8509, %v8505
    %v8698 = vpack.c.b16 %v8510, %v8506
    %v8699 = vpack.c.b16 %v8511, %v8507
    %v8700 = vpack.c.b16 %v8516, %v8512
    %v8701 = vpack.c.b16 %v8517, %v8513
    %v8702 = vpack.c.b16 %v8518, %v8514
    %v8703 = vpack.c.b16 %v8519, %v8515
    %v8704 = vpack.c.b16 %v8524, %v8520
    %v8705 = vpack.c.b16 %v8525, %v8521
    %v8706 = vpack.c.b16 %v8526, %v8522
    %v8707 = vpack.c.b16 %v8527, %v8523
    %v8708 = vpack.c.b16 %v8532, %v8528
    %v8709 = vpack.c.b16 %v8533, %v8529
    %v8710 = vpack.c.b16 %v8534, %v8530
    %v8711 = vpack.c.b16 %v8535, %v8531
    %v8712 = vpack.c.b16 %v8540, %v8536
    %v8713 = vpack.c.b16 %v8541, %v8537
    %v8714 = vpack.c.b16 %v8542, %v8538
    %v8715 = vpack.c.b16 %v8543, %v8539
    %v8716 = vpack.c.b16 %v8548, %v8544
    %v8717 = vpack.c.b16 %v8549, %v8545
    %v8718 = vpack.c.b16 %v8550, %v8546
    %v8719 = vpack.c.b16 %v8551, %v8547
    %v8720 = vpack.c.b16 %v8556, %v8552
    %v8721 = vpack.c.b16 %v8557, %v8553
    %v8722 = vpack.c.b16 %v8558, %v8554
    %v8723 = vpack.c.b16 %v8559, %v8555
    %v8724 = vpack.c.b16 %v8564, %v8560
    %v8725 = vpack.c.b16 %v8565, %v8561
    %v8726 = vpack.c.b16 %v8566, %v8562
    %v8727 = vpack.c.b16 %v8567, %v8563
    %v8728 = vpack.c.b16 %v8572, %v8568
    %v8729 = vpack.c.b16 %v8573, %v8569
    %v8730 = vpack.c.b16 %v8574, %v8570
    %v8731 = vpack.c.b16 %v8575, %v8571
    %v8732 = vpack.c.b16 %v8580, %v8576
    %v8733 = vpack.c.b16 %v8581, %v8577
    %v8734 = vpack.c.b16 %v8582, %v8578
    %v8735 = vpack.c.b16 %v8583, %v8579
    %v8736 = vpack.c.b16 %v8588, %v8584
    %v8737 = vpack.c.b16 %v8589, %v8585
    %v8738 = vpack.c.b16 %v8590, %v8586
    %v8739 = vpack.c.b16 %v8591, %v8587
    %v8740 = vpack.c.b16 %v8596, %v8592
    %v8741 = vpack.c.b16 %v8597, %v8593
    %v8742 = vpack.c.b16 %v8598, %v8594
    %v8743 = vpack.c.b16 %v8599, %v8595
    %v8744 = vpack.c.b16 %v8604, %v8600
    %v8745 = vpack.c.b16 %v8605, %v8601
    %v8746 = vpack.c.b16 %v8606, %v8602
    %v8747 = vpack.c.b16 %v8607, %v8603
    %v8748 = vpack.c.b16 %v8612, %v8608
    %v8749 = vpack.c.b16 %v8613, %v8609
    %v8750 = vpack.c.b16 %v8614, %v8610
    %v8751 = vpack.c.b16 %v8615, %v8611
    %v8752 = vpack.c.b16 %v8620, %v8616
    %v8753 = vpack.c.b16 %v8621, %v8617
    %v8754 = vpack.c.b16 %v8622, %v8618
    %v8755 = vpack.c.b16 %v8623, %v8619
    %v8756 = vpack.c.b16 %v8628, %v8624
    %v8757 = vpack.c.b16 %v8629, %v8625
    %v8758 = vpack.c.b16 %v8630, %v8626
    %v8759 = vpack.c.b16 %v8631, %v8627
    %8888 = vmatprep.subr.bf16.mxu0 %v8661
    %8889 = vmatpush1.bf16.msra.mxu0 %v8660
    %8890 = vmatprep.subr.bf16.mxu0 %v8657
    %8891 = vmatpush1.bf16.msra.mxu0 %v8656
    %8892 = vmatprep.subr.bf16.mxu0 %v8653
    %8893 = vmatpush1.bf16.msra.mxu0 %v8652
    %8894 = vmatprep.subr.bf16.mxu0 %v8649
    %8895 = vmatpush1.bf16.msra.mxu0 %v8648
    %8896 = vmatprep.subr.bf16.mxu0 %v8645
    %8897 = vmatpush1.bf16.msra.mxu0 %v8644
    %8898 = vmatprep.subr.bf16.mxu0 %v8641
    %8899 = vmatpush1.bf16.msra.mxu0 %v8640
    %8900 = vmatprep.subr.bf16.mxu0 %v8637
    %8901 = vmatpush1.bf16.msra.mxu0 %v8636
    %8902 = vmatprep.subr.bf16.mxu0 %v8633
    %8903 = vmatpush1.bf16.msra.mxu0 %v8632
    %8904 = vmatprep.subr.bf16.mxu0 %v8693
    %8905 = vmatpush2.bf16.msra.mxu0 %v8692
    %8906 = vmatprep.subr.bf16.mxu0 %v8689
    %8907 = vmatpush2.bf16.msra.mxu0 %v8688
    %8908 = vmatprep.subr.bf16.mxu0 %v8685
    %8909 = vmatpush2.bf16.msra.mxu0 %v8684
    %8910 = vmatprep.subr.bf16.mxu0 %v8681
    %8911 = vmatpush2.bf16.msra.mxu0 %v8680
    %8912 = vmatprep.subr.bf16.mxu0 %v8677
    %8913 = vmatpush2.bf16.msra.mxu0 %v8676
    %8914 = vmatprep.subr.bf16.mxu0 %v8673
    %8915 = vmatpush2.bf16.msra.mxu0 %v8672
    %8916 = vmatprep.subr.bf16.mxu0 %v8669
    %8917 = vmatpush2.bf16.msra.mxu0 %v8668
    %8918 = vmatprep.subr.bf16.mxu0 %v8665
    %8919 = vmatpush2.bf16.msra.mxu0 %v8664
    %8920 = vmatprep.mubr.bf16.mxu0 %v8093
    %8921 = vmatmul.mubr.bf16.gmra.mxu0 %v8092
    %v8922 = vpop.f32.mrf.mxu0
    %v8923 = vadd.f32 %v8231, %v8922
    %v8924 = vpop.f32.mrf.mxu0
    %v8925 = vadd.f32 %v8235, %v8924
    %v8926 = vpop.f32.mrf.mxu0
    %v8927 = vpop.f32.mrf.mxu0
    %8928 = vdwg.mxu0
    %8929 = vmatprep.subr.bf16.mxu0 %v8725
    %8930 = vmatpush1.bf16.msra.mxu0 %v8724
    %8931 = vmatprep.subr.bf16.mxu0 %v8721
    %8932 = vmatpush1.bf16.msra.mxu0 %v8720
    %8933 = vmatprep.subr.bf16.mxu0 %v8717
    %8934 = vmatpush1.bf16.msra.mxu0 %v8716
    %8935 = vmatprep.subr.bf16.mxu0 %v8713
    %8936 = vmatpush1.bf16.msra.mxu0 %v8712
    %8937 = vmatprep.subr.bf16.mxu0 %v8709
    %8938 = vmatpush1.bf16.msra.mxu0 %v8708
    %8939 = vmatprep.subr.bf16.mxu0 %v8705
    %8940 = vmatpush1.bf16.msra.mxu0 %v8704
    %8941 = vmatprep.subr.bf16.mxu0 %v8701
    %8942 = vmatpush1.bf16.msra.mxu0 %v8700
    %8943 = vmatprep.subr.bf16.mxu0 %v8697
    %8944 = vmatpush1.bf16.msra.mxu0 %v8696
    %8945 = vmatprep.subr.bf16.mxu0 %v8757
    %8946 = vmatpush2.bf16.msra.mxu0 %v8756
    %8947 = vmatprep.subr.bf16.mxu0 %v8753
    %8948 = vmatpush2.bf16.msra.mxu0 %v8752
    %8949 = vmatprep.subr.bf16.mxu0 %v8749
    %8950 = vmatpush2.bf16.msra.mxu0 %v8748
    %8951 = vmatprep.subr.bf16.mxu0 %v8745
    %8952 = vmatpush2.bf16.msra.mxu0 %v8744
    %8953 = vmatprep.subr.bf16.mxu0 %v8741
    %8954 = vmatpush2.bf16.msra.mxu0 %v8740
    %8955 = vmatprep.subr.bf16.mxu0 %v8737
    %8956 = vmatpush2.bf16.msra.mxu0 %v8736
    %8957 = vmatprep.subr.bf16.mxu0 %v8733
    %8958 = vmatpush2.bf16.msra.mxu0 %v8732
    %8959 = vmatprep.subr.bf16.mxu0 %v8729
    %8960 = vmatpush2.bf16.msra.mxu0 %v8728
    %8961 = vmatprep.mubr.bf16.mxu0 %v8095
    %8962 = vmatmul.mubr.bf16.gmra.mxu0 %v8094
    %v8963 = vpop.f32.mrf.mxu0
    %v8964 = vadd.f32 %v8923, %v8963
    %v8965 = vpop.f32.mrf.mxu0
    %v8966 = vadd.f32 %v8925, %v8965
    %v8967 = vpop.f32.mrf.mxu0
    %v8968 = vpop.f32.mrf.mxu0
    %8969 = vdwg.mxu0
    %8970 = vmatprep.subr.bf16.mxu0 %v8663
    %8971 = vmatpush1.bf16.msra.mxu0 %v8662
    %8972 = vmatprep.subr.bf16.mxu0 %v8659
    %8973 = vmatpush1.bf16.msra.mxu0 %v8658
    %8974 = vmatprep.subr.bf16.mxu0 %v8655
    %8975 = vmatpush1.bf16.msra.mxu0 %v8654
    %8976 = vmatprep.subr.bf16.mxu0 %v8651
    %8977 = vmatpush1.bf16.msra.mxu0 %v8650
    %8978 = vmatprep.subr.bf16.mxu0 %v8647
    %8979 = vmatpush1.bf16.msra.mxu0 %v8646
    %8980 = vmatprep.subr.bf16.mxu0 %v8643
    %8981 = vmatpush1.bf16.msra.mxu0 %v8642
    %8982 = vmatprep.subr.bf16.mxu0 %v8639
    %8983 = vmatpush1.bf16.msra.mxu0 %v8638
    %8984 = vmatprep.subr.bf16.mxu0 %v8635
    %8985 = vmatpush1.bf16.msra.mxu0 %v8634
    %8986 = vmatprep.subr.bf16.mxu0 %v8695
    %8987 = vmatpush2.bf16.msra.mxu0 %v8694
    %8988 = vmatprep.subr.bf16.mxu0 %v8691
    %8989 = vmatpush2.bf16.msra.mxu0 %v8690
    %8990 = vmatprep.subr.bf16.mxu0 %v8687
    %8991 = vmatpush2.bf16.msra.mxu0 %v8686
    %8992 = vmatprep.subr.bf16.mxu0 %v8683
    %8993 = vmatpush2.bf16.msra.mxu0 %v8682
    %8994 = vmatprep.subr.bf16.mxu0 %v8679
    %8995 = vmatpush2.bf16.msra.mxu0 %v8678
    %8996 = vmatprep.subr.bf16.mxu0 %v8675
    %8997 = vmatpush2.bf16.msra.mxu0 %v8674
    %8998 = vmatprep.subr.bf16.mxu0 %v8671
    %8999 = vmatpush2.bf16.msra.mxu0 %v8670
    %9000 = vmatprep.subr.bf16.mxu0 %v8667
    %9001 = vmatpush2.bf16.msra.mxu0 %v8666
    %9002 = vmatprep.mubr.bf16.mxu0 %v8093
    %9003 = vmatmul.mubr.bf16.gmra.mxu0 %v8092
    %v9004 = vpop.f32.mrf.mxu0
    %v9005 = vadd.f32 %v8239, %v9004
    %v9006 = vpop.f32.mrf.mxu0
    %v9007 = vadd.f32 %v8243, %v9006
    %v9008 = vpop.f32.mrf.mxu0
    %v9009 = vpop.f32.mrf.mxu0
    %9010 = vdwg.mxu0
    %9011 = vmatprep.subr.bf16.mxu0 %v8727
    %9012 = vmatpush1.bf16.msra.mxu0 %v8726
    %9013 = vmatprep.subr.bf16.mxu0 %v8723
    %9014 = vmatpush1.bf16.msra.mxu0 %v8722
    %9015 = vmatprep.subr.bf16.mxu0 %v8719
    %9016 = vmatpush1.bf16.msra.mxu0 %v8718
    %9017 = vmatprep.subr.bf16.mxu0 %v8715
    %9018 = vmatpush1.bf16.msra.mxu0 %v8714
    %9019 = vmatprep.subr.bf16.mxu0 %v8711
    %9020 = vmatpush1.bf16.msra.mxu0 %v8710
    %9021 = vmatprep.subr.bf16.mxu0 %v8707
    %9022 = vmatpush1.bf16.msra.mxu0 %v8706
    %9023 = vmatprep.subr.bf16.mxu0 %v8703
    %9024 = vmatpush1.bf16.msra.mxu0 %v8702
    %9025 = vmatprep.subr.bf16.mxu0 %v8699
    %9026 = vmatpush1.bf16.msra.mxu0 %v8698
    %9027 = vmatprep.subr.bf16.mxu0 %v8759
    %9028 = vmatpush2.bf16.msra.mxu0 %v8758
    %9029 = vmatprep.subr.bf16.mxu0 %v8755
    %9030 = vmatpush2.bf16.msra.mxu0 %v8754
    %9031 = vmatprep.subr.bf16.mxu0 %v8751
    %9032 = vmatpush2.bf16.msra.mxu0 %v8750
    %9033 = vmatprep.subr.bf16.mxu0 %v8747
    %9034 = vmatpush2.bf16.msra.mxu0 %v8746
    %9035 = vmatprep.subr.bf16.mxu0 %v8743
    %9036 = vmatpush2.bf16.msra.mxu0 %v8742
    %9037 = vmatprep.subr.bf16.mxu0 %v8739
    %9038 = vmatpush2.bf16.msra.mxu0 %v8738
    %9039 = vmatprep.subr.bf16.mxu0 %v8735
    %9040 = vmatpush2.bf16.msra.mxu0 %v8734
    %9041 = vmatprep.subr.bf16.mxu0 %v8731
    %9042 = vmatpush2.bf16.msra.mxu0 %v8730
    %9043 = vmatprep.mubr.bf16.mxu0 %v8095
    %9044 = vmatmul.mubr.bf16.gmra.mxu0 %v8094
    %v9045 = vpop.f32.mrf.mxu0
    %v9046 = vadd.f32 %v9005, %v9045
    %v9047 = vpop.f32.mrf.mxu0
    %v9048 = vadd.f32 %v9007, %v9047
    %v9049 = vpop.f32.mrf.mxu0
    %v9050 = vpop.f32.mrf.mxu0
    %9051 = vdwg.mxu0
    %v9052 = vmax.f32 %v8964, 0.0
    %v9053 = vmax.f32 %v8966, 0.0
    %v9054 = vmax.f32 %v9046, 0.0
    %v9055 = vmax.f32 %v9048, 0.0
    %v9056 = vpack.c.bf16 %v9052, %v9052
    %v9057 = vpack.c.bf16 %v9053, %v9053
    %v9058 = vpack.c.bf16 %v9054, %v9054
    %v9059 = vpack.c.bf16 %v9055, %v9055
    %s9060 = scalar_lea.vmem [#allocation10], 4096
    %v9061 = vld [vmem:[%s9060] sm:$0xff]
    %v9062 = vld [vmem:[%s9060 + $0x8] sm:$0xff]
    %v9063 = vld [vmem:[%s9060 + $0x10] sm:$0xff]
    %v9064 = vld [vmem:[%s9060 + $0x18] sm:$0xff]
    %v9065 = vld [vmem:[%s9060 + $0x20] sm:$0xff]
    %v9066 = vld [vmem:[%s9060 + $0x28] sm:$0xff]
    %v9067 = vld [vmem:[%s9060 + $0x30] sm:$0xff]
    %v9068 = vld [vmem:[%s9060 + $0x38] sm:$0xff]
    %v9069 = vld [vmem:[%s9060 + $0x40] sm:$0xff]
    %v9070 = vld [vmem:[%s9060 + $0x48] sm:$0xff]
    %v9071 = vld [vmem:[%s9060 + $0x50] sm:$0xff]
    %v9072 = vld [vmem:[%s9060 + $0x58] sm:$0xff]
    %v9073 = vld [vmem:[%s9060 + $0x60] sm:$0xff]
    %v9074 = vld [vmem:[%s9060 + $0x68] sm:$0xff]
    %v9075 = vld [vmem:[%s9060 + $0x70] sm:$0xff]
    %v9076 = vld [vmem:[%s9060 + $0x78] sm:$0xff]
    %v9077 = vld [vmem:[%s9060 + $0x80] sm:$0xff]
    %v9078 = vld [vmem:[%s9060 + $0x88] sm:$0xff]
    %v9079 = vld [vmem:[%s9060 + $0x90] sm:$0xff]
    %v9080 = vld [vmem:[%s9060 + $0x98] sm:$0xff]
    %v9081 = vld [vmem:[%s9060 + $0xa0] sm:$0xff]
    %v9082 = vld [vmem:[%s9060 + $0xa8] sm:$0xff]
    %v9083 = vld [vmem:[%s9060 + $0xb0] sm:$0xff]
    %v9084 = vld [vmem:[%s9060 + $0xb8] sm:$0xff]
    %v9085 = vld [vmem:[%s9060 + $0xc0] sm:$0xff]
    %v9086 = vld [vmem:[%s9060 + $0xc8] sm:$0xff]
    %v9087 = vld [vmem:[%s9060 + $0xd0] sm:$0xff]
    %v9088 = vld [vmem:[%s9060 + $0xd8] sm:$0xff]
    %v9089 = vld [vmem:[%s9060 + $0xe0] sm:$0xff]
    %v9090 = vld [vmem:[%s9060 + $0xe8] sm:$0xff]
    %v9091 = vld [vmem:[%s9060 + $0xf0] sm:$0xff]
    %v9092 = vld [vmem:[%s9060 + $0xf8] sm:$0xff]
    %v9093 = vld [vmem:[%s9060 + $0x100] sm:$0xff]
    %v9094 = vld [vmem:[%s9060 + $0x108] sm:$0xff]
    %v9095 = vld [vmem:[%s9060 + $0x110] sm:$0xff]
    %v9096 = vld [vmem:[%s9060 + $0x118] sm:$0xff]
    %v9097 = vld [vmem:[%s9060 + $0x120] sm:$0xff]
    %v9098 = vld [vmem:[%s9060 + $0x128] sm:$0xff]
    %v9099 = vld [vmem:[%s9060 + $0x130] sm:$0xff]
    %v9100 = vld [vmem:[%s9060 + $0x138] sm:$0xff]
    %v9101 = vld [vmem:[%s9060 + $0x140] sm:$0xff]
    %v9102 = vld [vmem:[%s9060 + $0x148] sm:$0xff]
    %v9103 = vld [vmem:[%s9060 + $0x150] sm:$0xff]
    %v9104 = vld [vmem:[%s9060 + $0x158] sm:$0xff]
    %v9105 = vld [vmem:[%s9060 + $0x160] sm:$0xff]
    %v9106 = vld [vmem:[%s9060 + $0x168] sm:$0xff]
    %v9107 = vld [vmem:[%s9060 + $0x170] sm:$0xff]
    %v9108 = vld [vmem:[%s9060 + $0x178] sm:$0xff]
    %v9109 = vld [vmem:[%s9060 + $0x180] sm:$0xff]
    %v9110 = vld [vmem:[%s9060 + $0x188] sm:$0xff]
    %v9111 = vld [vmem:[%s9060 + $0x190] sm:$0xff]
    %v9112 = vld [vmem:[%s9060 + $0x198] sm:$0xff]
    %v9113 = vld [vmem:[%s9060 + $0x1a0] sm:$0xff]
    %v9114 = vld [vmem:[%s9060 + $0x1a8] sm:$0xff]
    %v9115 = vld [vmem:[%s9060 + $0x1b0] sm:$0xff]
    %v9116 = vld [vmem:[%s9060 + $0x1b8] sm:$0xff]
    %v9117 = vld [vmem:[%s9060 + $0x1c0] sm:$0xff]
    %v9118 = vld [vmem:[%s9060 + $0x1c8] sm:$0xff]
    %v9119 = vld [vmem:[%s9060 + $0x1d0] sm:$0xff]
    %v9120 = vld [vmem:[%s9060 + $0x1d8] sm:$0xff]
    %v9121 = vld [vmem:[%s9060 + $0x1e0] sm:$0xff]
    %v9122 = vld [vmem:[%s9060 + $0x1e8] sm:$0xff]
    %v9123 = vld [vmem:[%s9060 + $0x1f0] sm:$0xff]
    %v9124 = vld [vmem:[%s9060 + $0x1f8] sm:$0xff]
    %v9125 = vld [vmem:[%s9060 + $0x200] sm:$0xff]
    %v9126 = vld [vmem:[%s9060 + $0x208] sm:$0xff]
    %v9127 = vld [vmem:[%s9060 + $0x210] sm:$0xff]
    %v9128 = vld [vmem:[%s9060 + $0x218] sm:$0xff]
    %v9129 = vld [vmem:[%s9060 + $0x220] sm:$0xff]
    %v9130 = vld [vmem:[%s9060 + $0x228] sm:$0xff]
    %v9131 = vld [vmem:[%s9060 + $0x230] sm:$0xff]
    %v9132 = vld [vmem:[%s9060 + $0x238] sm:$0xff]
    %v9133 = vld [vmem:[%s9060 + $0x240] sm:$0xff]
    %v9134 = vld [vmem:[%s9060 + $0x248] sm:$0xff]
    %v9135 = vld [vmem:[%s9060 + $0x250] sm:$0xff]
    %v9136 = vld [vmem:[%s9060 + $0x258] sm:$0xff]
    %v9137 = vld [vmem:[%s9060 + $0x260] sm:$0xff]
    %v9138 = vld [vmem:[%s9060 + $0x268] sm:$0xff]
    %v9139 = vld [vmem:[%s9060 + $0x270] sm:$0xff]
    %v9140 = vld [vmem:[%s9060 + $0x278] sm:$0xff]
    %v9141 = vld [vmem:[%s9060 + $0x280] sm:$0xff]
    %v9142 = vld [vmem:[%s9060 + $0x288] sm:$0xff]
    %v9143 = vld [vmem:[%s9060 + $0x290] sm:$0xff]
    %v9144 = vld [vmem:[%s9060 + $0x298] sm:$0xff]
    %v9145 = vld [vmem:[%s9060 + $0x2a0] sm:$0xff]
    %v9146 = vld [vmem:[%s9060 + $0x2a8] sm:$0xff]
    %v9147 = vld [vmem:[%s9060 + $0x2b0] sm:$0xff]
    %v9148 = vld [vmem:[%s9060 + $0x2b8] sm:$0xff]
    %v9149 = vld [vmem:[%s9060 + $0x2c0] sm:$0xff]
    %v9150 = vld [vmem:[%s9060 + $0x2c8] sm:$0xff]
    %v9151 = vld [vmem:[%s9060 + $0x2d0] sm:$0xff]
    %v9152 = vld [vmem:[%s9060 + $0x2d8] sm:$0xff]
    %v9153 = vld [vmem:[%s9060 + $0x2e0] sm:$0xff]
    %v9154 = vld [vmem:[%s9060 + $0x2e8] sm:$0xff]
    %v9155 = vld [vmem:[%s9060 + $0x2f0] sm:$0xff]
    %v9156 = vld [vmem:[%s9060 + $0x2f8] sm:$0xff]
    %v9157 = vld [vmem:[%s9060 + $0x300] sm:$0xff]
    %v9158 = vld [vmem:[%s9060 + $0x308] sm:$0xff]
    %v9159 = vld [vmem:[%s9060 + $0x310] sm:$0xff]
    %v9160 = vld [vmem:[%s9060 + $0x318] sm:$0xff]
    %v9161 = vld [vmem:[%s9060 + $0x320] sm:$0xff]
    %v9162 = vld [vmem:[%s9060 + $0x328] sm:$0xff]
    %v9163 = vld [vmem:[%s9060 + $0x330] sm:$0xff]
    %v9164 = vld [vmem:[%s9060 + $0x338] sm:$0xff]
    %v9165 = vld [vmem:[%s9060 + $0x340] sm:$0xff]
    %v9166 = vld [vmem:[%s9060 + $0x348] sm:$0xff]
    %v9167 = vld [vmem:[%s9060 + $0x350] sm:$0xff]
    %v9168 = vld [vmem:[%s9060 + $0x358] sm:$0xff]
    %v9169 = vld [vmem:[%s9060 + $0x360] sm:$0xff]
    %v9170 = vld [vmem:[%s9060 + $0x368] sm:$0xff]
    %v9171 = vld [vmem:[%s9060 + $0x370] sm:$0xff]
    %v9172 = vld [vmem:[%s9060 + $0x378] sm:$0xff]
    %v9173 = vld [vmem:[%s9060 + $0x380] sm:$0xff]
    %v9174 = vld [vmem:[%s9060 + $0x388] sm:$0xff]
    %v9175 = vld [vmem:[%s9060 + $0x390] sm:$0xff]
    %v9176 = vld [vmem:[%s9060 + $0x398] sm:$0xff]
    %v9177 = vld [vmem:[%s9060 + $0x3a0] sm:$0xff]
    %v9178 = vld [vmem:[%s9060 + $0x3a8] sm:$0xff]
    %v9179 = vld [vmem:[%s9060 + $0x3b0] sm:$0xff]
    %v9180 = vld [vmem:[%s9060 + $0x3b8] sm:$0xff]
    %v9181 = vld [vmem:[%s9060 + $0x3c0] sm:$0xff]
    %v9182 = vld [vmem:[%s9060 + $0x3c8] sm:$0xff]
    %v9183 = vld [vmem:[%s9060 + $0x3d0] sm:$0xff]
    %v9184 = vld [vmem:[%s9060 + $0x3d8] sm:$0xff]
    %v9185 = vld [vmem:[%s9060 + $0x3e0] sm:$0xff]
    %v9186 = vld [vmem:[%s9060 + $0x3e8] sm:$0xff]
    %v9187 = vld [vmem:[%s9060 + $0x3f0] sm:$0xff]
    %v9188 = vld [vmem:[%s9060 + $0x3f8] sm:$0xff]
    %s9189 = scalar_lea.vmem [#allocation11], 16
    %v9190 = vld [vmem:[%s9189] sm:$0xf]
    %v9192 = vlaneseq
    %v9193 = vshrl.u32 %v9192, 7
    %v9194 = vsub.s32 0, %v9193
    %v9195 = vrot.slane %v9190, %v9194
    %v9196 = vlaneseq
    %v9197 = vshrl.u32 %v9196, 7
    %v9198 = vsub.s32 1, %v9197
    %v9199 = vrot.slane %v9190, %v9198
    %v9200 = vlaneseq
    %v9201 = vshrl.u32 %v9200, 7
    %v9202 = vsub.s32 2, %v9201
    %v9203 = vrot.slane %v9190, %v9202
    %v9204 = vlaneseq
    %v9205 = vshrl.u32 %v9204, 7
    %v9206 = vsub.s32 3, %v9205
    %v9207 = vrot.slane %v9190, %v9206
    %v9340 = vunpack.c.l.b16 %v9061
    %v9341 = vunpack.c.h.b16 %v9061
    %v9342 = vunpack.c.l.b16 %v9062
    %v9343 = vunpack.c.h.b16 %v9062
    %v9344 = vunpack.c.l.b16 %v9063
    %v9345 = vunpack.c.h.b16 %v9063
    %v9346 = vunpack.c.l.b16 %v9064
    %v9347 = vunpack.c.h.b16 %v9064
    %v9348 = vunpack.c.l.b16 %v9065
    %v9349 = vunpack.c.h.b16 %v9065
    %v9350 = vunpack.c.l.b16 %v9066
    %v9351 = vunpack.c.h.b16 %v9066
    %v9352 = vunpack.c.l.b16 %v9067
    %v9353 = vunpack.c.h.b16 %v9067
    %v9354 = vunpack.c.l.b16 %v9068
    %v9355 = vunpack.c.h.b16 %v9068
    %v9356 = vunpack.c.l.b16 %v9069
    %v9357 = vunpack.c.h.b16 %v9069
    %v9358 = vunpack.c.l.b16 %v9070
    %v9359 = vunpack.c.h.b16 %v9070
    %v9360 = vunpack.c.l.b16 %v9071
    %v9361 = vunpack.c.h.b16 %v9071
    %v9362 = vunpack.c.l.b16 %v9072
    %v9363 = vunpack.c.h.b16 %v9072
    %v9364 = vunpack.c.l.b16 %v9073
    %v9365 = vunpack.c.h.b16 %v9073
    %v9366 = vunpack.c.l.b16 %v9074
    %v9367 = vunpack.c.h.b16 %v9074
    %v9368 = vunpack.c.l.b16 %v9075
    %v9369 = vunpack.c.h.b16 %v9075
    %v9370 = vunpack.c.l.b16 %v9076
    %v9371 = vunpack.c.h.b16 %v9076
    %v9372 = vunpack.c.l.b16 %v9077
    %v9373 = vunpack.c.h.b16 %v9077
    %v9374 = vunpack.c.l.b16 %v9078
    %v9375 = vunpack.c.h.b16 %v9078
    %v9376 = vunpack.c.l.b16 %v9079
    %v9377 = vunpack.c.h.b16 %v9079
    %v9378 = vunpack.c.l.b16 %v9080
    %v9379 = vunpack.c.h.b16 %v9080
    %v9380 = vunpack.c.l.b16 %v9081
    %v9381 = vunpack.c.h.b16 %v9081
    %v9382 = vunpack.c.l.b16 %v9082
    %v9383 = vunpack.c.h.b16 %v9082
    %v9384 = vunpack.c.l.b16 %v9083
    %v9385 = vunpack.c.h.b16 %v9083
    %v9386 = vunpack.c.l.b16 %v9084
    %v9387 = vunpack.c.h.b16 %v9084
    %v9388 = vunpack.c.l.b16 %v9085
    %v9389 = vunpack.c.h.b16 %v9085
    %v9390 = vunpack.c.l.b16 %v9086
    %v9391 = vunpack.c.h.b16 %v9086
    %v9392 = vunpack.c.l.b16 %v9087
    %v9393 = vunpack.c.h.b16 %v9087
    %v9394 = vunpack.c.l.b16 %v9088
    %v9395 = vunpack.c.h.b16 %v9088
    %v9396 = vunpack.c.l.b16 %v9089
    %v9397 = vunpack.c.h.b16 %v9089
    %v9398 = vunpack.c.l.b16 %v9090
    %v9399 = vunpack.c.h.b16 %v9090
    %v9400 = vunpack.c.l.b16 %v9091
    %v9401 = vunpack.c.h.b16 %v9091
    %v9402 = vunpack.c.l.b16 %v9092
    %v9403 = vunpack.c.h.b16 %v9092
    %v9404 = vunpack.c.l.b16 %v9093
    %v9405 = vunpack.c.h.b16 %v9093
    %v9406 = vunpack.c.l.b16 %v9094
    %v9407 = vunpack.c.h.b16 %v9094
    %v9408 = vunpack.c.l.b16 %v9095
    %v9409 = vunpack.c.h.b16 %v9095
    %v9410 = vunpack.c.l.b16 %v9096
    %v9411 = vunpack.c.h.b16 %v9096
    %v9412 = vunpack.c.l.b16 %v9097
    %v9413 = vunpack.c.h.b16 %v9097
    %v9414 = vunpack.c.l.b16 %v9098
    %v9415 = vunpack.c.h.b16 %v9098
    %v9416 = vunpack.c.l.b16 %v9099
    %v9417 = vunpack.c.h.b16 %v9099
    %v9418 = vunpack.c.l.b16 %v9100
    %v9419 = vunpack.c.h.b16 %v9100
    %v9420 = vunpack.c.l.b16 %v9101
    %v9421 = vunpack.c.h.b16 %v9101
    %v9422 = vunpack.c.l.b16 %v9102
    %v9423 = vunpack.c.h.b16 %v9102
    %v9424 = vunpack.c.l.b16 %v9103
    %v9425 = vunpack.c.h.b16 %v9103
    %v9426 = vunpack.c.l.b16 %v9104
    %v9427 = vunpack.c.h.b16 %v9104
    %v9428 = vunpack.c.l.b16 %v9105
    %v9429 = vunpack.c.h.b16 %v9105
    %v9430 = vunpack.c.l.b16 %v9106
    %v9431 = vunpack.c.h.b16 %v9106
    %v9432 = vunpack.c.l.b16 %v9107
    %v9433 = vunpack.c.h.b16 %v9107
    %v9434 = vunpack.c.l.b16 %v9108
    %v9435 = vunpack.c.h.b16 %v9108
    %v9436 = vunpack.c.l.b16 %v9109
    %v9437 = vunpack.c.h.b16 %v9109
    %v9438 = vunpack.c.l.b16 %v9110
    %v9439 = vunpack.c.h.b16 %v9110
    %v9440 = vunpack.c.l.b16 %v9111
    %v9441 = vunpack.c.h.b16 %v9111
    %v9442 = vunpack.c.l.b16 %v9112
    %v9443 = vunpack.c.h.b16 %v9112
    %v9444 = vunpack.c.l.b16 %v9113
    %v9445 = vunpack.c.h.b16 %v9113
    %v9446 = vunpack.c.l.b16 %v9114
    %v9447 = vunpack.c.h.b16 %v9114
    %v9448 = vunpack.c.l.b16 %v9115
    %v9449 = vunpack.c.h.b16 %v9115
    %v9450 = vunpack.c.l.b16 %v9116
    %v9451 = vunpack.c.h.b16 %v9116
    %v9452 = vunpack.c.l.b16 %v9117
    %v9453 = vunpack.c.h.b16 %v9117
    %v9454 = vunpack.c.l.b16 %v9118
    %v9455 = vunpack.c.h.b16 %v9118
    %v9456 = vunpack.c.l.b16 %v9119
    %v9457 = vunpack.c.h.b16 %v9119
    %v9458 = vunpack.c.l.b16 %v9120
    %v9459 = vunpack.c.h.b16 %v9120
    %v9460 = vunpack.c.l.b16 %v9121
    %v9461 = vunpack.c.h.b16 %v9121
    %v9462 = vunpack.c.l.b16 %v9122
    %v9463 = vunpack.c.h.b16 %v9122
    %v9464 = vunpack.c.l.b16 %v9123
    %v9465 = vunpack.c.h.b16 %v9123
    %v9466 = vunpack.c.l.b16 %v9124
    %v9467 = vunpack.c.h.b16 %v9124
    %v9468 = vunpack.c.l.b16 %v9125
    %v9469 = vunpack.c.h.b16 %v9125
    %v9470 = vunpack.c.l.b16 %v9126
    %v9471 = vunpack.c.h.b16 %v9126
    %v9472 = vunpack.c.l.b16 %v9127
    %v9473 = vunpack.c.h.b16 %v9127
    %v9474 = vunpack.c.l.b16 %v9128
    %v9475 = vunpack.c.h.b16 %v9128
    %v9476 = vunpack.c.l.b16 %v9129
    %v9477 = vunpack.c.h.b16 %v9129
    %v9478 = vunpack.c.l.b16 %v9130
    %v9479 = vunpack.c.h.b16 %v9130
    %v9480 = vunpack.c.l.b16 %v9131
    %v9481 = vunpack.c.h.b16 %v9131
    %v9482 = vunpack.c.l.b16 %v9132
    %v9483 = vunpack.c.h.b16 %v9132
    %v9484 = vunpack.c.l.b16 %v9133
    %v9485 = vunpack.c.h.b16 %v9133
    %v9486 = vunpack.c.l.b16 %v9134
    %v9487 = vunpack.c.h.b16 %v9134
    %v9488 = vunpack.c.l.b16 %v9135
    %v9489 = vunpack.c.h.b16 %v9135
    %v9490 = vunpack.c.l.b16 %v9136
    %v9491 = vunpack.c.h.b16 %v9136
    %v9492 = vunpack.c.l.b16 %v9137
    %v9493 = vunpack.c.h.b16 %v9137
    %v9494 = vunpack.c.l.b16 %v9138
    %v9495 = vunpack.c.h.b16 %v9138
    %v9496 = vunpack.c.l.b16 %v9139
    %v9497 = vunpack.c.h.b16 %v9139
    %v9498 = vunpack.c.l.b16 %v9140
    %v9499 = vunpack.c.h.b16 %v9140
    %v9500 = vunpack.c.l.b16 %v9141
    %v9501 = vunpack.c.h.b16 %v9141
    %v9502 = vunpack.c.l.b16 %v9142
    %v9503 = vunpack.c.h.b16 %v9142
    %v9504 = vunpack.c.l.b16 %v9143
    %v9505 = vunpack.c.h.b16 %v9143
    %v9506 = vunpack.c.l.b16 %v9144
    %v9507 = vunpack.c.h.b16 %v9144
    %v9508 = vunpack.c.l.b16 %v9145
    %v9509 = vunpack.c.h.b16 %v9145
    %v9510 = vunpack.c.l.b16 %v9146
    %v9511 = vunpack.c.h.b16 %v9146
    %v9512 = vunpack.c.l.b16 %v9147
    %v9513 = vunpack.c.h.b16 %v9147
    %v9514 = vunpack.c.l.b16 %v9148
    %v9515 = vunpack.c.h.b16 %v9148
    %v9516 = vunpack.c.l.b16 %v9149
    %v9517 = vunpack.c.h.b16 %v9149
    %v9518 = vunpack.c.l.b16 %v9150
    %v9519 = vunpack.c.h.b16 %v9150
    %v9520 = vunpack.c.l.b16 %v9151
    %v9521 = vunpack.c.h.b16 %v9151
    %v9522 = vunpack.c.l.b16 %v9152
    %v9523 = vunpack.c.h.b16 %v9152
    %v9524 = vunpack.c.l.b16 %v9153
    %v9525 = vunpack.c.h.b16 %v9153
    %v9526 = vunpack.c.l.b16 %v9154
    %v9527 = vunpack.c.h.b16 %v9154
    %v9528 = vunpack.c.l.b16 %v9155
    %v9529 = vunpack.c.h.b16 %v9155
    %v9530 = vunpack.c.l.b16 %v9156
    %v9531 = vunpack.c.h.b16 %v9156
    %v9532 = vunpack.c.l.b16 %v9157
    %v9533 = vunpack.c.h.b16 %v9157
    %v9534 = vunpack.c.l.b16 %v9158
    %v9535 = vunpack.c.h.b16 %v9158
    %v9536 = vunpack.c.l.b16 %v9159
    %v9537 = vunpack.c.h.b16 %v9159
    %v9538 = vunpack.c.l.b16 %v9160
    %v9539 = vunpack.c.h.b16 %v9160
    %v9540 = vunpack.c.l.b16 %v9161
    %v9541 = vunpack.c.h.b16 %v9161
    %v9542 = vunpack.c.l.b16 %v9162
    %v9543 = vunpack.c.h.b16 %v9162
    %v9544 = vunpack.c.l.b16 %v9163
    %v9545 = vunpack.c.h.b16 %v9163
    %v9546 = vunpack.c.l.b16 %v9164
    %v9547 = vunpack.c.h.b16 %v9164
    %v9548 = vunpack.c.l.b16 %v9165
    %v9549 = vunpack.c.h.b16 %v9165
    %v9550 = vunpack.c.l.b16 %v9166
    %v9551 = vunpack.c.h.b16 %v9166
    %v9552 = vunpack.c.l.b16 %v9167
    %v9553 = vunpack.c.h.b16 %v9167
    %v9554 = vunpack.c.l.b16 %v9168
    %v9555 = vunpack.c.h.b16 %v9168
    %v9556 = vunpack.c.l.b16 %v9169
    %v9557 = vunpack.c.h.b16 %v9169
    %v9558 = vunpack.c.l.b16 %v9170
    %v9559 = vunpack.c.h.b16 %v9170
    %v9560 = vunpack.c.l.b16 %v9171
    %v9561 = vunpack.c.h.b16 %v9171
    %v9562 = vunpack.c.l.b16 %v9172
    %v9563 = vunpack.c.h.b16 %v9172
    %v9564 = vunpack.c.l.b16 %v9173
    %v9565 = vunpack.c.h.b16 %v9173
    %v9566 = vunpack.c.l.b16 %v9174
    %v9567 = vunpack.c.h.b16 %v9174
    %v9568 = vunpack.c.l.b16 %v9175
    %v9569 = vunpack.c.h.b16 %v9175
    %v9570 = vunpack.c.l.b16 %v9176
    %v9571 = vunpack.c.h.b16 %v9176
    %v9572 = vunpack.c.l.b16 %v9177
    %v9573 = vunpack.c.h.b16 %v9177
    %v9574 = vunpack.c.l.b16 %v9178
    %v9575 = vunpack.c.h.b16 %v9178
    %v9576 = vunpack.c.l.b16 %v9179
    %v9577 = vunpack.c.h.b16 %v9179
    %v9578 = vunpack.c.l.b16 %v9180
    %v9579 = vunpack.c.h.b16 %v9180
    %v9580 = vunpack.c.l.b16 %v9181
    %v9581 = vunpack.c.h.b16 %v9181
    %v9582 = vunpack.c.l.b16 %v9182
    %v9583 = vunpack.c.h.b16 %v9182
    %v9584 = vunpack.c.l.b16 %v9183
    %v9585 = vunpack.c.h.b16 %v9183
    %v9586 = vunpack.c.l.b16 %v9184
    %v9587 = vunpack.c.h.b16 %v9184
    %v9588 = vunpack.c.l.b16 %v9185
    %v9589 = vunpack.c.h.b16 %v9185
    %v9590 = vunpack.c.l.b16 %v9186
    %v9591 = vunpack.c.h.b16 %v9186
    %v9592 = vunpack.c.l.b16 %v9187
    %v9593 = vunpack.c.h.b16 %v9187
    %v9594 = vunpack.c.l.b16 %v9188
    %v9595 = vunpack.c.h.b16 %v9188
    %v9596 = vpack.c.b16 %v9344, %v9340
    %v9597 = vpack.c.b16 %v9345, %v9341
    %v9598 = vpack.c.b16 %v9346, %v9342
    %v9599 = vpack.c.b16 %v9347, %v9343
    %v9600 = vpack.c.b16 %v9352, %v9348
    %v9601 = vpack.c.b16 %v9353, %v9349
    %v9602 = vpack.c.b16 %v9354, %v9350
    %v9603 = vpack.c.b16 %v9355, %v9351
    %v9604 = vpack.c.b16 %v9360, %v9356
    %v9605 = vpack.c.b16 %v9361, %v9357
    %v9606 = vpack.c.b16 %v9362, %v9358
    %v9607 = vpack.c.b16 %v9363, %v9359
    %v9608 = vpack.c.b16 %v9368, %v9364
    %v9609 = vpack.c.b16 %v9369, %v9365
    %v9610 = vpack.c.b16 %v9370, %v9366
    %v9611 = vpack.c.b16 %v9371, %v9367
    %v9612 = vpack.c.b16 %v9376, %v9372
    %v9613 = vpack.c.b16 %v9377, %v9373
    %v9614 = vpack.c.b16 %v9378, %v9374
    %v9615 = vpack.c.b16 %v9379, %v9375
    %v9616 = vpack.c.b16 %v9384, %v9380
    %v9617 = vpack.c.b16 %v9385, %v9381
    %v9618 = vpack.c.b16 %v9386, %v9382
    %v9619 = vpack.c.b16 %v9387, %v9383
    %v9620 = vpack.c.b16 %v9392, %v9388
    %v9621 = vpack.c.b16 %v9393, %v9389
    %v9622 = vpack.c.b16 %v9394, %v9390
    %v9623 = vpack.c.b16 %v9395, %v9391
    %v9624 = vpack.c.b16 %v9400, %v9396
    %v9625 = vpack.c.b16 %v9401, %v9397
    %v9626 = vpack.c.b16 %v9402, %v9398
    %v9627 = vpack.c.b16 %v9403, %v9399
    %v9628 = vpack.c.b16 %v9408, %v9404
    %v9629 = vpack.c.b16 %v9409, %v9405
    %v9630 = vpack.c.b16 %v9410, %v9406
    %v9631 = vpack.c.b16 %v9411, %v9407
    %v9632 = vpack.c.b16 %v9416, %v9412
    %v9633 = vpack.c.b16 %v9417, %v9413
    %v9634 = vpack.c.b16 %v9418, %v9414
    %v9635 = vpack.c.b16 %v9419, %v9415
    %v9636 = vpack.c.b16 %v9424, %v9420
    %v9637 = vpack.c.b16 %v9425, %v9421
    %v9638 = vpack.c.b16 %v9426, %v9422
    %v9639 = vpack.c.b16 %v9427, %v9423
    %v9640 = vpack.c.b16 %v9432, %v9428
    %v9641 = vpack.c.b16 %v9433, %v9429
    %v9642 = vpack.c.b16 %v9434, %v9430
    %v9643 = vpack.c.b16 %v9435, %v9431
    %v9644 = vpack.c.b16 %v9440, %v9436
    %v9645 = vpack.c.b16 %v9441, %v9437
    %v9646 = vpack.c.b16 %v9442, %v9438
    %v9647 = vpack.c.b16 %v9443, %v9439
    %v9648 = vpack.c.b16 %v9448, %v9444
    %v9649 = vpack.c.b16 %v9449, %v9445
    %v9650 = vpack.c.b16 %v9450, %v9446
    %v9651 = vpack.c.b16 %v9451, %v9447
    %v9652 = vpack.c.b16 %v9456, %v9452
    %v9653 = vpack.c.b16 %v9457, %v9453
    %v9654 = vpack.c.b16 %v9458, %v9454
    %v9655 = vpack.c.b16 %v9459, %v9455
    %v9656 = vpack.c.b16 %v9464, %v9460
    %v9657 = vpack.c.b16 %v9465, %v9461
    %v9658 = vpack.c.b16 %v9466, %v9462
    %v9659 = vpack.c.b16 %v9467, %v9463
    %v9660 = vpack.c.b16 %v9472, %v9468
    %v9661 = vpack.c.b16 %v9473, %v9469
    %v9662 = vpack.c.b16 %v9474, %v9470
    %v9663 = vpack.c.b16 %v9475, %v9471
    %v9664 = vpack.c.b16 %v9480, %v9476
    %v9665 = vpack.c.b16 %v9481, %v9477
    %v9666 = vpack.c.b16 %v9482, %v9478
    %v9667 = vpack.c.b16 %v9483, %v9479
    %v9668 = vpack.c.b16 %v9488, %v9484
    %v9669 = vpack.c.b16 %v9489, %v9485
    %v9670 = vpack.c.b16 %v9490, %v9486
    %v9671 = vpack.c.b16 %v9491, %v9487
    %v9672 = vpack.c.b16 %v9496, %v9492
    %v9673 = vpack.c.b16 %v9497, %v9493
    %v9674 = vpack.c.b16 %v9498, %v9494
    %v9675 = vpack.c.b16 %v9499, %v9495
    %v9676 = vpack.c.b16 %v9504, %v9500
    %v9677 = vpack.c.b16 %v9505, %v9501
    %v9678 = vpack.c.b16 %v9506, %v9502
    %v9679 = vpack.c.b16 %v9507, %v9503
    %v9680 = vpack.c.b16 %v9512, %v9508
    %v9681 = vpack.c.b16 %v9513, %v9509
    %v9682 = vpack.c.b16 %v9514, %v9510
    %v9683 = vpack.c.b16 %v9515, %v9511
    %v9684 = vpack.c.b16 %v9520, %v9516
    %v9685 = vpack.c.b16 %v9521, %v9517
    %v9686 = vpack.c.b16 %v9522, %v9518
    %v9687 = vpack.c.b16 %v9523, %v9519
    %v9688 = vpack.c.b16 %v9528, %v9524
    %v9689 = vpack.c.b16 %v9529, %v9525
    %v9690 = vpack.c.b16 %v9530, %v9526
    %v9691 = vpack.c.b16 %v9531, %v9527
    %v9692 = vpack.c.b16 %v9536, %v9532
    %v9693 = vpack.c.b16 %v9537, %v9533
    %v9694 = vpack.c.b16 %v9538, %v9534
    %v9695 = vpack.c.b16 %v9539, %v9535
    %v9696 = vpack.c.b16 %v9544, %v9540
    %v9697 = vpack.c.b16 %v9545, %v9541
    %v9698 = vpack.c.b16 %v9546, %v9542
    %v9699 = vpack.c.b16 %v9547, %v9543
    %v9700 = vpack.c.b16 %v9552, %v9548
    %v9701 = vpack.c.b16 %v9553, %v9549
    %v9702 = vpack.c.b16 %v9554, %v9550
    %v9703 = vpack.c.b16 %v9555, %v9551
    %v9704 = vpack.c.b16 %v9560, %v9556
    %v9705 = vpack.c.b16 %v9561, %v9557
    %v9706 = vpack.c.b16 %v9562, %v9558
    %v9707 = vpack.c.b16 %v9563, %v9559
    %v9708 = vpack.c.b16 %v9568, %v9564
    %v9709 = vpack.c.b16 %v9569, %v9565
    %v9710 = vpack.c.b16 %v9570, %v9566
    %v9711 = vpack.c.b16 %v9571, %v9567
    %v9712 = vpack.c.b16 %v9576, %v9572
    %v9713 = vpack.c.b16 %v9577, %v9573
    %v9714 = vpack.c.b16 %v9578, %v9574
    %v9715 = vpack.c.b16 %v9579, %v9575
    %v9716 = vpack.c.b16 %v9584, %v9580
    %v9717 = vpack.c.b16 %v9585, %v9581
    %v9718 = vpack.c.b16 %v9586, %v9582
    %v9719 = vpack.c.b16 %v9587, %v9583
    %v9720 = vpack.c.b16 %v9592, %v9588
    %v9721 = vpack.c.b16 %v9593, %v9589
    %v9722 = vpack.c.b16 %v9594, %v9590
    %v9723 = vpack.c.b16 %v9595, %v9591
    %9852 = vmatprep.subr.bf16.mxu0 %v9625
    %9853 = vmatpush1.bf16.msra.mxu0 %v9624
    %9854 = vmatprep.subr.bf16.mxu0 %v9621
    %9855 = vmatpush1.bf16.msra.mxu0 %v9620
    %9856 = vmatprep.subr.bf16.mxu0 %v9617
    %9857 = vmatpush1.bf16.msra.mxu0 %v9616
    %9858 = vmatprep.subr.bf16.mxu0 %v9613
    %9859 = vmatpush1.bf16.msra.mxu0 %v9612
    %9860 = vmatprep.subr.bf16.mxu0 %v9609
    %9861 = vmatpush1.bf16.msra.mxu0 %v9608
    %9862 = vmatprep.subr.bf16.mxu0 %v9605
    %9863 = vmatpush1.bf16.msra.mxu0 %v9604
    %9864 = vmatprep.subr.bf16.mxu0 %v9601
    %9865 = vmatpush1.bf16.msra.mxu0 %v9600
    %9866 = vmatprep.subr.bf16.mxu0 %v9597
    %9867 = vmatpush1.bf16.msra.mxu0 %v9596
    %9868 = vmatprep.subr.bf16.mxu0 %v9657
    %9869 = vmatpush2.bf16.msra.mxu0 %v9656
    %9870 = vmatprep.subr.bf16.mxu0 %v9653
    %9871 = vmatpush2.bf16.msra.mxu0 %v9652
    %9872 = vmatprep.subr.bf16.mxu0 %v9649
    %9873 = vmatpush2.bf16.msra.mxu0 %v9648
    %9874 = vmatprep.subr.bf16.mxu0 %v9645
    %9875 = vmatpush2.bf16.msra.mxu0 %v9644
    %9876 = vmatprep.subr.bf16.mxu0 %v9641
    %9877 = vmatpush2.bf16.msra.mxu0 %v9640
    %9878 = vmatprep.subr.bf16.mxu0 %v9637
    %9879 = vmatpush2.bf16.msra.mxu0 %v9636
    %9880 = vmatprep.subr.bf16.mxu0 %v9633
    %9881 = vmatpush2.bf16.msra.mxu0 %v9632
    %9882 = vmatprep.subr.bf16.mxu0 %v9629
    %9883 = vmatpush2.bf16.msra.mxu0 %v9628
    %9884 = vmatprep.mubr.bf16.mxu0 %v9057
    %9885 = vmatmul.mubr.bf16.gmra.mxu0 %v9056
    %v9886 = vpop.f32.mrf.mxu0
    %v9887 = vadd.f32 %v9195, %v9886
    %v9888 = vpop.f32.mrf.mxu0
    %v9889 = vadd.f32 %v9199, %v9888
    %v9890 = vpop.f32.mrf.mxu0
    %v9891 = vpop.f32.mrf.mxu0
    %9892 = vdwg.mxu0
    %9893 = vmatprep.subr.bf16.mxu0 %v9689
    %9894 = vmatpush1.bf16.msra.mxu0 %v9688
    %9895 = vmatprep.subr.bf16.mxu0 %v9685
    %9896 = vmatpush1.bf16.msra.mxu0 %v9684
    %9897 = vmatprep.subr.bf16.mxu0 %v9681
    %9898 = vmatpush1.bf16.msra.mxu0 %v9680
    %9899 = vmatprep.subr.bf16.mxu0 %v9677
    %9900 = vmatpush1.bf16.msra.mxu0 %v9676
    %9901 = vmatprep.subr.bf16.mxu0 %v9673
    %9902 = vmatpush1.bf16.msra.mxu0 %v9672
    %9903 = vmatprep.subr.bf16.mxu0 %v9669
    %9904 = vmatpush1.bf16.msra.mxu0 %v9668
    %9905 = vmatprep.subr.bf16.mxu0 %v9665
    %9906 = vmatpush1.bf16.msra.mxu0 %v9664
    %9907 = vmatprep.subr.bf16.mxu0 %v9661
    %9908 = vmatpush1.bf16.msra.mxu0 %v9660
    %9909 = vmatprep.subr.bf16.mxu0 %v9721
    %9910 = vmatpush2.bf16.msra.mxu0 %v9720
    %9911 = vmatprep.subr.bf16.mxu0 %v9717
    %9912 = vmatpush2.bf16.msra.mxu0 %v9716
    %9913 = vmatprep.subr.bf16.mxu0 %v9713
    %9914 = vmatpush2.bf16.msra.mxu0 %v9712
    %9915 = vmatprep.subr.bf16.mxu0 %v9709
    %9916 = vmatpush2.bf16.msra.mxu0 %v9708
    %9917 = vmatprep.subr.bf16.mxu0 %v9705
    %9918 = vmatpush2.bf16.msra.mxu0 %v9704
    %9919 = vmatprep.subr.bf16.mxu0 %v9701
    %9920 = vmatpush2.bf16.msra.mxu0 %v9700
    %9921 = vmatprep.subr.bf16.mxu0 %v9697
    %9922 = vmatpush2.bf16.msra.mxu0 %v9696
    %9923 = vmatprep.subr.bf16.mxu0 %v9693
    %9924 = vmatpush2.bf16.msra.mxu0 %v9692
    %9925 = vmatprep.mubr.bf16.mxu0 %v9059
    %9926 = vmatmul.mubr.bf16.gmra.mxu0 %v9058
    %v9927 = vpop.f32.mrf.mxu0
    %v9928 = vadd.f32 %v9887, %v9927
    %v9929 = vpop.f32.mrf.mxu0
    %v9930 = vadd.f32 %v9889, %v9929
    %v9931 = vpop.f32.mrf.mxu0
    %v9932 = vpop.f32.mrf.mxu0
    %9933 = vdwg.mxu0
    %9934 = vmatprep.subr.bf16.mxu0 %v9627
    %9935 = vmatpush1.bf16.msra.mxu0 %v9626
    %9936 = vmatprep.subr.bf16.mxu0 %v9623
    %9937 = vmatpush1.bf16.msra.mxu0 %v9622
    %9938 = vmatprep.subr.bf16.mxu0 %v9619
    %9939 = vmatpush1.bf16.msra.mxu0 %v9618
    %9940 = vmatprep.subr.bf16.mxu0 %v9615
    %9941 = vmatpush1.bf16.msra.mxu0 %v9614
    %9942 = vmatprep.subr.bf16.mxu0 %v9611
    %9943 = vmatpush1.bf16.msra.mxu0 %v9610
    %9944 = vmatprep.subr.bf16.mxu0 %v9607
    %9945 = vmatpush1.bf16.msra.mxu0 %v9606
    %9946 = vmatprep.subr.bf16.mxu0 %v9603
    %9947 = vmatpush1.bf16.msra.mxu0 %v9602
    %9948 = vmatprep.subr.bf16.mxu0 %v9599
    %9949 = vmatpush1.bf16.msra.mxu0 %v9598
    %9950 = vmatprep.subr.bf16.mxu0 %v9659
    %9951 = vmatpush2.bf16.msra.mxu0 %v9658
    %9952 = vmatprep.subr.bf16.mxu0 %v9655
    %9953 = vmatpush2.bf16.msra.mxu0 %v9654
    %9954 = vmatprep.subr.bf16.mxu0 %v9651
    %9955 = vmatpush2.bf16.msra.mxu0 %v9650
    %9956 = vmatprep.subr.bf16.mxu0 %v9647
    %9957 = vmatpush2.bf16.msra.mxu0 %v9646
    %9958 = vmatprep.subr.bf16.mxu0 %v9643
    %9959 = vmatpush2.bf16.msra.mxu0 %v9642
    %9960 = vmatprep.subr.bf16.mxu0 %v9639
    %9961 = vmatpush2.bf16.msra.mxu0 %v9638
    %9962 = vmatprep.subr.bf16.mxu0 %v9635
    %9963 = vmatpush2.bf16.msra.mxu0 %v9634
    %9964 = vmatprep.subr.bf16.mxu0 %v9631
    %9965 = vmatpush2.bf16.msra.mxu0 %v9630
    %9966 = vmatprep.mubr.bf16.mxu0 %v9057
    %9967 = vmatmul.mubr.bf16.gmra.mxu0 %v9056
    %v9968 = vpop.f32.mrf.mxu0
    %v9969 = vadd.f32 %v9203, %v9968
    %v9970 = vpop.f32.mrf.mxu0
    %v9971 = vadd.f32 %v9207, %v9970
    %v9972 = vpop.f32.mrf.mxu0
    %v9973 = vpop.f32.mrf.mxu0
    %9974 = vdwg.mxu0
    %9975 = vmatprep.subr.bf16.mxu0 %v9691
    %9976 = vmatpush1.bf16.msra.mxu0 %v9690
    %9977 = vmatprep.subr.bf16.mxu0 %v9687
    %9978 = vmatpush1.bf16.msra.mxu0 %v9686
    %9979 = vmatprep.subr.bf16.mxu0 %v9683
    %9980 = vmatpush1.bf16.msra.mxu0 %v9682
    %9981 = vmatprep.subr.bf16.mxu0 %v9679
    %9982 = vmatpush1.bf16.msra.mxu0 %v9678
    %9983 = vmatprep.subr.bf16.mxu0 %v9675
    %9984 = vmatpush1.bf16.msra.mxu0 %v9674
    %9985 = vmatprep.subr.bf16.mxu0 %v9671
    %9986 = vmatpush1.bf16.msra.mxu0 %v9670
    %9987 = vmatprep.subr.bf16.mxu0 %v9667
    %9988 = vmatpush1.bf16.msra.mxu0 %v9666
    %9989 = vmatprep.subr.bf16.mxu0 %v9663
    %9990 = vmatpush1.bf16.msra.mxu0 %v9662
    %9991 = vmatprep.subr.bf16.mxu0 %v9723
    %9992 = vmatpush2.bf16.msra.mxu0 %v9722
    %9993 = vmatprep.subr.bf16.mxu0 %v9719
    %9994 = vmatpush2.bf16.msra.mxu0 %v9718
    %9995 = vmatprep.subr.bf16.mxu0 %v9715
    %9996 = vmatpush2.bf16.msra.mxu0 %v9714
    %9997 = vmatprep.subr.bf16.mxu0 %v9711
    %9998 = vmatpush2.bf16.msra.mxu0 %v9710
    %9999 = vmatprep.subr.bf16.mxu0 %v9707
    %10000 = vmatpush2.bf16.msra.mxu0 %v9706
    %10001 = vmatprep.subr.bf16.mxu0 %v9703
    %10002 = vmatpush2.bf16.msra.mxu0 %v9702
    %10003 = vmatprep.subr.bf16.mxu0 %v9699
    %10004 = vmatpush2.bf16.msra.mxu0 %v9698
    %10005 = vmatprep.subr.bf16.mxu0 %v9695
    %10006 = vmatpush2.bf16.msra.mxu0 %v9694
    %10007 = vmatprep.mubr.bf16.mxu0 %v9059
    %10008 = vmatmul.mubr.bf16.gmra.mxu0 %v9058
    %v10009 = vpop.f32.mrf.mxu0
    %v10010 = vadd.f32 %v9969, %v10009
    %v10011 = vpop.f32.mrf.mxu0
    %v10012 = vadd.f32 %v9971, %v10011
    %v10013 = vpop.f32.mrf.mxu0
    %v10014 = vpop.f32.mrf.mxu0
    %10015 = vdwg.mxu0
    %v10016 = vadd.f32 %v8088, %v9928
    %v10017 = vadd.f32 %v8089, %v9930
    %v10018 = vadd.f32 %v8090, %v10010
    %v10019 = vadd.f32 %v8091, %v10012
    %v10020 = vmax.f32 %v10016, 0.0
    %v10021 = vmax.f32 %v10017, 0.0
    %v10022 = vmax.f32 %v10018, 0.0
    %v10023 = vmax.f32 %v10019, 0.0
    %v10024 = vpack.c.bf16 %v10020, %v10020
    %v10025 = vpack.c.bf16 %v10021, %v10021
    %v10026 = vpack.c.bf16 %v10022, %v10022
    %v10027 = vpack.c.bf16 %v10023, %v10023
    %s10028 = scalar_lea.vmem [#allocation7], 5120
    %v10029 = vld [vmem:[%s10028] sm:$0xff]
    %v10030 = vld [vmem:[%s10028 + $0x8] sm:$0xff]
    %v10031 = vld [vmem:[%s10028 + $0x10] sm:$0xff]
    %v10032 = vld [vmem:[%s10028 + $0x18] sm:$0xff]
    %v10033 = vld [vmem:[%s10028 + $0x20] sm:$0xff]
    %v10034 = vld [vmem:[%s10028 + $0x28] sm:$0xff]
    %v10035 = vld [vmem:[%s10028 + $0x30] sm:$0xff]
    %v10036 = vld [vmem:[%s10028 + $0x38] sm:$0xff]
    %v10037 = vld [vmem:[%s10028 + $0x40] sm:$0xff]
    %v10038 = vld [vmem:[%s10028 + $0x48] sm:$0xff]
    %v10039 = vld [vmem:[%s10028 + $0x50] sm:$0xff]
    %v10040 = vld [vmem:[%s10028 + $0x58] sm:$0xff]
    %v10041 = vld [vmem:[%s10028 + $0x60] sm:$0xff]
    %v10042 = vld [vmem:[%s10028 + $0x68] sm:$0xff]
    %v10043 = vld [vmem:[%s10028 + $0x70] sm:$0xff]
    %v10044 = vld [vmem:[%s10028 + $0x78] sm:$0xff]
    %v10045 = vld [vmem:[%s10028 + $0x80] sm:$0xff]
    %v10046 = vld [vmem:[%s10028 + $0x88] sm:$0xff]
    %v10047 = vld [vmem:[%s10028 + $0x90] sm:$0xff]
    %v10048 = vld [vmem:[%s10028 + $0x98] sm:$0xff]
    %v10049 = vld [vmem:[%s10028 + $0xa0] sm:$0xff]
    %v10050 = vld [vmem:[%s10028 + $0xa8] sm:$0xff]
    %v10051 = vld [vmem:[%s10028 + $0xb0] sm:$0xff]
    %v10052 = vld [vmem:[%s10028 + $0xb8] sm:$0xff]
    %v10053 = vld [vmem:[%s10028 + $0xc0] sm:$0xff]
    %v10054 = vld [vmem:[%s10028 + $0xc8] sm:$0xff]
    %v10055 = vld [vmem:[%s10028 + $0xd0] sm:$0xff]
    %v10056 = vld [vmem:[%s10028 + $0xd8] sm:$0xff]
    %v10057 = vld [vmem:[%s10028 + $0xe0] sm:$0xff]
    %v10058 = vld [vmem:[%s10028 + $0xe8] sm:$0xff]
    %v10059 = vld [vmem:[%s10028 + $0xf0] sm:$0xff]
    %v10060 = vld [vmem:[%s10028 + $0xf8] sm:$0xff]
    %v10061 = vld [vmem:[%s10028 + $0x100] sm:$0xff]
    %v10062 = vld [vmem:[%s10028 + $0x108] sm:$0xff]
    %v10063 = vld [vmem:[%s10028 + $0x110] sm:$0xff]
    %v10064 = vld [vmem:[%s10028 + $0x118] sm:$0xff]
    %v10065 = vld [vmem:[%s10028 + $0x120] sm:$0xff]
    %v10066 = vld [vmem:[%s10028 + $0x128] sm:$0xff]
    %v10067 = vld [vmem:[%s10028 + $0x130] sm:$0xff]
    %v10068 = vld [vmem:[%s10028 + $0x138] sm:$0xff]
    %v10069 = vld [vmem:[%s10028 + $0x140] sm:$0xff]
    %v10070 = vld [vmem:[%s10028 + $0x148] sm:$0xff]
    %v10071 = vld [vmem:[%s10028 + $0x150] sm:$0xff]
    %v10072 = vld [vmem:[%s10028 + $0x158] sm:$0xff]
    %v10073 = vld [vmem:[%s10028 + $0x160] sm:$0xff]
    %v10074 = vld [vmem:[%s10028 + $0x168] sm:$0xff]
    %v10075 = vld [vmem:[%s10028 + $0x170] sm:$0xff]
    %v10076 = vld [vmem:[%s10028 + $0x178] sm:$0xff]
    %v10077 = vld [vmem:[%s10028 + $0x180] sm:$0xff]
    %v10078 = vld [vmem:[%s10028 + $0x188] sm:$0xff]
    %v10079 = vld [vmem:[%s10028 + $0x190] sm:$0xff]
    %v10080 = vld [vmem:[%s10028 + $0x198] sm:$0xff]
    %v10081 = vld [vmem:[%s10028 + $0x1a0] sm:$0xff]
    %v10082 = vld [vmem:[%s10028 + $0x1a8] sm:$0xff]
    %v10083 = vld [vmem:[%s10028 + $0x1b0] sm:$0xff]
    %v10084 = vld [vmem:[%s10028 + $0x1b8] sm:$0xff]
    %v10085 = vld [vmem:[%s10028 + $0x1c0] sm:$0xff]
    %v10086 = vld [vmem:[%s10028 + $0x1c8] sm:$0xff]
    %v10087 = vld [vmem:[%s10028 + $0x1d0] sm:$0xff]
    %v10088 = vld [vmem:[%s10028 + $0x1d8] sm:$0xff]
    %v10089 = vld [vmem:[%s10028 + $0x1e0] sm:$0xff]
    %v10090 = vld [vmem:[%s10028 + $0x1e8] sm:$0xff]
    %v10091 = vld [vmem:[%s10028 + $0x1f0] sm:$0xff]
    %v10092 = vld [vmem:[%s10028 + $0x1f8] sm:$0xff]
    %v10093 = vld [vmem:[%s10028 + $0x200] sm:$0xff]
    %v10094 = vld [vmem:[%s10028 + $0x208] sm:$0xff]
    %v10095 = vld [vmem:[%s10028 + $0x210] sm:$0xff]
    %v10096 = vld [vmem:[%s10028 + $0x218] sm:$0xff]
    %v10097 = vld [vmem:[%s10028 + $0x220] sm:$0xff]
    %v10098 = vld [vmem:[%s10028 + $0x228] sm:$0xff]
    %v10099 = vld [vmem:[%s10028 + $0x230] sm:$0xff]
    %v10100 = vld [vmem:[%s10028 + $0x238] sm:$0xff]
    %v10101 = vld [vmem:[%s10028 + $0x240] sm:$0xff]
    %v10102 = vld [vmem:[%s10028 + $0x248] sm:$0xff]
    %v10103 = vld [vmem:[%s10028 + $0x250] sm:$0xff]
    %v10104 = vld [vmem:[%s10028 + $0x258] sm:$0xff]
    %v10105 = vld [vmem:[%s10028 + $0x260] sm:$0xff]
    %v10106 = vld [vmem:[%s10028 + $0x268] sm:$0xff]
    %v10107 = vld [vmem:[%s10028 + $0x270] sm:$0xff]
    %v10108 = vld [vmem:[%s10028 + $0x278] sm:$0xff]
    %v10109 = vld [vmem:[%s10028 + $0x280] sm:$0xff]
    %v10110 = vld [vmem:[%s10028 + $0x288] sm:$0xff]
    %v10111 = vld [vmem:[%s10028 + $0x290] sm:$0xff]
    %v10112 = vld [vmem:[%s10028 + $0x298] sm:$0xff]
    %v10113 = vld [vmem:[%s10028 + $0x2a0] sm:$0xff]
    %v10114 = vld [vmem:[%s10028 + $0x2a8] sm:$0xff]
    %v10115 = vld [vmem:[%s10028 + $0x2b0] sm:$0xff]
    %v10116 = vld [vmem:[%s10028 + $0x2b8] sm:$0xff]
    %v10117 = vld [vmem:[%s10028 + $0x2c0] sm:$0xff]
    %v10118 = vld [vmem:[%s10028 + $0x2c8] sm:$0xff]
    %v10119 = vld [vmem:[%s10028 + $0x2d0] sm:$0xff]
    %v10120 = vld [vmem:[%s10028 + $0x2d8] sm:$0xff]
    %v10121 = vld [vmem:[%s10028 + $0x2e0] sm:$0xff]
    %v10122 = vld [vmem:[%s10028 + $0x2e8] sm:$0xff]
    %v10123 = vld [vmem:[%s10028 + $0x2f0] sm:$0xff]
    %v10124 = vld [vmem:[%s10028 + $0x2f8] sm:$0xff]
    %v10125 = vld [vmem:[%s10028 + $0x300] sm:$0xff]
    %v10126 = vld [vmem:[%s10028 + $0x308] sm:$0xff]
    %v10127 = vld [vmem:[%s10028 + $0x310] sm:$0xff]
    %v10128 = vld [vmem:[%s10028 + $0x318] sm:$0xff]
    %v10129 = vld [vmem:[%s10028 + $0x320] sm:$0xff]
    %v10130 = vld [vmem:[%s10028 + $0x328] sm:$0xff]
    %v10131 = vld [vmem:[%s10028 + $0x330] sm:$0xff]
    %v10132 = vld [vmem:[%s10028 + $0x338] sm:$0xff]
    %v10133 = vld [vmem:[%s10028 + $0x340] sm:$0xff]
    %v10134 = vld [vmem:[%s10028 + $0x348] sm:$0xff]
    %v10135 = vld [vmem:[%s10028 + $0x350] sm:$0xff]
    %v10136 = vld [vmem:[%s10028 + $0x358] sm:$0xff]
    %v10137 = vld [vmem:[%s10028 + $0x360] sm:$0xff]
    %v10138 = vld [vmem:[%s10028 + $0x368] sm:$0xff]
    %v10139 = vld [vmem:[%s10028 + $0x370] sm:$0xff]
    %v10140 = vld [vmem:[%s10028 + $0x378] sm:$0xff]
    %v10141 = vld [vmem:[%s10028 + $0x380] sm:$0xff]
    %v10142 = vld [vmem:[%s10028 + $0x388] sm:$0xff]
    %v10143 = vld [vmem:[%s10028 + $0x390] sm:$0xff]
    %v10144 = vld [vmem:[%s10028 + $0x398] sm:$0xff]
    %v10145 = vld [vmem:[%s10028 + $0x3a0] sm:$0xff]
    %v10146 = vld [vmem:[%s10028 + $0x3a8] sm:$0xff]
    %v10147 = vld [vmem:[%s10028 + $0x3b0] sm:$0xff]
    %v10148 = vld [vmem:[%s10028 + $0x3b8] sm:$0xff]
    %v10149 = vld [vmem:[%s10028 + $0x3c0] sm:$0xff]
    %v10150 = vld [vmem:[%s10028 + $0x3c8] sm:$0xff]
    %v10151 = vld [vmem:[%s10028 + $0x3d0] sm:$0xff]
    %v10152 = vld [vmem:[%s10028 + $0x3d8] sm:$0xff]
    %v10153 = vld [vmem:[%s10028 + $0x3e0] sm:$0xff]
    %v10154 = vld [vmem:[%s10028 + $0x3e8] sm:$0xff]
    %v10155 = vld [vmem:[%s10028 + $0x3f0] sm:$0xff]
    %v10156 = vld [vmem:[%s10028 + $0x3f8] sm:$0xff]
    %s10157 = scalar_lea.vmem [#allocation8], 20
    %v10158 = vld [vmem:[%s10157] sm:$0xf]
    %v10160 = vlaneseq
    %v10161 = vshrl.u32 %v10160, 7
    %v10162 = vsub.s32 0, %v10161
    %v10163 = vrot.slane %v10158, %v10162
    %v10164 = vlaneseq
    %v10165 = vshrl.u32 %v10164, 7
    %v10166 = vsub.s32 1, %v10165
    %v10167 = vrot.slane %v10158, %v10166
    %v10168 = vlaneseq
    %v10169 = vshrl.u32 %v10168, 7
    %v10170 = vsub.s32 2, %v10169
    %v10171 = vrot.slane %v10158, %v10170
    %v10172 = vlaneseq
    %v10173 = vshrl.u32 %v10172, 7
    %v10174 = vsub.s32 3, %v10173
    %v10175 = vrot.slane %v10158, %v10174
    %v10308 = vunpack.c.l.b16 %v10029
    %v10309 = vunpack.c.h.b16 %v10029
    %v10310 = vunpack.c.l.b16 %v10030
    %v10311 = vunpack.c.h.b16 %v10030
    %v10312 = vunpack.c.l.b16 %v10031
    %v10313 = vunpack.c.h.b16 %v10031
    %v10314 = vunpack.c.l.b16 %v10032
    %v10315 = vunpack.c.h.b16 %v10032
    %v10316 = vunpack.c.l.b16 %v10033
    %v10317 = vunpack.c.h.b16 %v10033
    %v10318 = vunpack.c.l.b16 %v10034
    %v10319 = vunpack.c.h.b16 %v10034
    %v10320 = vunpack.c.l.b16 %v10035
    %v10321 = vunpack.c.h.b16 %v10035
    %v10322 = vunpack.c.l.b16 %v10036
    %v10323 = vunpack.c.h.b16 %v10036
    %v10324 = vunpack.c.l.b16 %v10037
    %v10325 = vunpack.c.h.b16 %v10037
    %v10326 = vunpack.c.l.b16 %v10038
    %v10327 = vunpack.c.h.b16 %v10038
    %v10328 = vunpack.c.l.b16 %v10039
    %v10329 = vunpack.c.h.b16 %v10039
    %v10330 = vunpack.c.l.b16 %v10040
    %v10331 = vunpack.c.h.b16 %v10040
    %v10332 = vunpack.c.l.b16 %v10041
    %v10333 = vunpack.c.h.b16 %v10041
    %v10334 = vunpack.c.l.b16 %v10042
    %v10335 = vunpack.c.h.b16 %v10042
    %v10336 = vunpack.c.l.b16 %v10043
    %v10337 = vunpack.c.h.b16 %v10043
    %v10338 = vunpack.c.l.b16 %v10044
    %v10339 = vunpack.c.h.b16 %v10044
    %v10340 = vunpack.c.l.b16 %v10045
    %v10341 = vunpack.c.h.b16 %v10045
    %v10342 = vunpack.c.l.b16 %v10046
    %v10343 = vunpack.c.h.b16 %v10046
    %v10344 = vunpack.c.l.b16 %v10047
    %v10345 = vunpack.c.h.b16 %v10047
    %v10346 = vunpack.c.l.b16 %v10048
    %v10347 = vunpack.c.h.b16 %v10048
    %v10348 = vunpack.c.l.b16 %v10049
    %v10349 = vunpack.c.h.b16 %v10049
    %v10350 = vunpack.c.l.b16 %v10050
    %v10351 = vunpack.c.h.b16 %v10050
    %v10352 = vunpack.c.l.b16 %v10051
    %v10353 = vunpack.c.h.b16 %v10051
    %v10354 = vunpack.c.l.b16 %v10052
    %v10355 = vunpack.c.h.b16 %v10052
    %v10356 = vunpack.c.l.b16 %v10053
    %v10357 = vunpack.c.h.b16 %v10053
    %v10358 = vunpack.c.l.b16 %v10054
    %v10359 = vunpack.c.h.b16 %v10054
    %v10360 = vunpack.c.l.b16 %v10055
    %v10361 = vunpack.c.h.b16 %v10055
    %v10362 = vunpack.c.l.b16 %v10056
    %v10363 = vunpack.c.h.b16 %v10056
    %v10364 = vunpack.c.l.b16 %v10057
    %v10365 = vunpack.c.h.b16 %v10057
    %v10366 = vunpack.c.l.b16 %v10058
    %v10367 = vunpack.c.h.b16 %v10058
    %v10368 = vunpack.c.l.b16 %v10059
    %v10369 = vunpack.c.h.b16 %v10059
    %v10370 = vunpack.c.l.b16 %v10060
    %v10371 = vunpack.c.h.b16 %v10060
    %v10372 = vunpack.c.l.b16 %v10061
    %v10373 = vunpack.c.h.b16 %v10061
    %v10374 = vunpack.c.l.b16 %v10062
    %v10375 = vunpack.c.h.b16 %v10062
    %v10376 = vunpack.c.l.b16 %v10063
    %v10377 = vunpack.c.h.b16 %v10063
    %v10378 = vunpack.c.l.b16 %v10064
    %v10379 = vunpack.c.h.b16 %v10064
    %v10380 = vunpack.c.l.b16 %v10065
    %v10381 = vunpack.c.h.b16 %v10065
    %v10382 = vunpack.c.l.b16 %v10066
    %v10383 = vunpack.c.h.b16 %v10066
    %v10384 = vunpack.c.l.b16 %v10067
    %v10385 = vunpack.c.h.b16 %v10067
    %v10386 = vunpack.c.l.b16 %v10068
    %v10387 = vunpack.c.h.b16 %v10068
    %v10388 = vunpack.c.l.b16 %v10069
    %v10389 = vunpack.c.h.b16 %v10069
    %v10390 = vunpack.c.l.b16 %v10070
    %v10391 = vunpack.c.h.b16 %v10070
    %v10392 = vunpack.c.l.b16 %v10071
    %v10393 = vunpack.c.h.b16 %v10071
    %v10394 = vunpack.c.l.b16 %v10072
    %v10395 = vunpack.c.h.b16 %v10072
    %v10396 = vunpack.c.l.b16 %v10073
    %v10397 = vunpack.c.h.b16 %v10073
    %v10398 = vunpack.c.l.b16 %v10074
    %v10399 = vunpack.c.h.b16 %v10074
    %v10400 = vunpack.c.l.b16 %v10075
    %v10401 = vunpack.c.h.b16 %v10075
    %v10402 = vunpack.c.l.b16 %v10076
    %v10403 = vunpack.c.h.b16 %v10076
    %v10404 = vunpack.c.l.b16 %v10077
    %v10405 = vunpack.c.h.b16 %v10077
    %v10406 = vunpack.c.l.b16 %v10078
    %v10407 = vunpack.c.h.b16 %v10078
    %v10408 = vunpack.c.l.b16 %v10079
    %v10409 = vunpack.c.h.b16 %v10079
    %v10410 = vunpack.c.l.b16 %v10080
    %v10411 = vunpack.c.h.b16 %v10080
    %v10412 = vunpack.c.l.b16 %v10081
    %v10413 = vunpack.c.h.b16 %v10081
    %v10414 = vunpack.c.l.b16 %v10082
    %v10415 = vunpack.c.h.b16 %v10082
    %v10416 = vunpack.c.l.b16 %v10083
    %v10417 = vunpack.c.h.b16 %v10083
    %v10418 = vunpack.c.l.b16 %v10084
    %v10419 = vunpack.c.h.b16 %v10084
    %v10420 = vunpack.c.l.b16 %v10085
    %v10421 = vunpack.c.h.b16 %v10085
    %v10422 = vunpack.c.l.b16 %v10086
    %v10423 = vunpack.c.h.b16 %v10086
    %v10424 = vunpack.c.l.b16 %v10087
    %v10425 = vunpack.c.h.b16 %v10087
    %v10426 = vunpack.c.l.b16 %v10088
    %v10427 = vunpack.c.h.b16 %v10088
    %v10428 = vunpack.c.l.b16 %v10089
    %v10429 = vunpack.c.h.b16 %v10089
    %v10430 = vunpack.c.l.b16 %v10090
    %v10431 = vunpack.c.h.b16 %v10090
    %v10432 = vunpack.c.l.b16 %v10091
    %v10433 = vunpack.c.h.b16 %v10091
    %v10434 = vunpack.c.l.b16 %v10092
    %v10435 = vunpack.c.h.b16 %v10092
    %v10436 = vunpack.c.l.b16 %v10093
    %v10437 = vunpack.c.h.b16 %v10093
    %v10438 = vunpack.c.l.b16 %v10094
    %v10439 = vunpack.c.h.b16 %v10094
    %v10440 = vunpack.c.l.b16 %v10095
    %v10441 = vunpack.c.h.b16 %v10095
    %v10442 = vunpack.c.l.b16 %v10096
    %v10443 = vunpack.c.h.b16 %v10096
    %v10444 = vunpack.c.l.b16 %v10097
    %v10445 = vunpack.c.h.b16 %v10097
    %v10446 = vunpack.c.l.b16 %v10098
    %v10447 = vunpack.c.h.b16 %v10098
    %v10448 = vunpack.c.l.b16 %v10099
    %v10449 = vunpack.c.h.b16 %v10099
    %v10450 = vunpack.c.l.b16 %v10100
    %v10451 = vunpack.c.h.b16 %v10100
    %v10452 = vunpack.c.l.b16 %v10101
    %v10453 = vunpack.c.h.b16 %v10101
    %v10454 = vunpack.c.l.b16 %v10102
    %v10455 = vunpack.c.h.b16 %v10102
    %v10456 = vunpack.c.l.b16 %v10103
    %v10457 = vunpack.c.h.b16 %v10103
    %v10458 = vunpack.c.l.b16 %v10104
    %v10459 = vunpack.c.h.b16 %v10104
    %v10460 = vunpack.c.l.b16 %v10105
    %v10461 = vunpack.c.h.b16 %v10105
    %v10462 = vunpack.c.l.b16 %v10106
    %v10463 = vunpack.c.h.b16 %v10106
    %v10464 = vunpack.c.l.b16 %v10107
    %v10465 = vunpack.c.h.b16 %v10107
    %v10466 = vunpack.c.l.b16 %v10108
    %v10467 = vunpack.c.h.b16 %v10108
    %v10468 = vunpack.c.l.b16 %v10109
    %v10469 = vunpack.c.h.b16 %v10109
    %v10470 = vunpack.c.l.b16 %v10110
    %v10471 = vunpack.c.h.b16 %v10110
    %v10472 = vunpack.c.l.b16 %v10111
    %v10473 = vunpack.c.h.b16 %v10111
    %v10474 = vunpack.c.l.b16 %v10112
    %v10475 = vunpack.c.h.b16 %v10112
    %v10476 = vunpack.c.l.b16 %v10113
    %v10477 = vunpack.c.h.b16 %v10113
    %v10478 = vunpack.c.l.b16 %v10114
    %v10479 = vunpack.c.h.b16 %v10114
    %v10480 = vunpack.c.l.b16 %v10115
    %v10481 = vunpack.c.h.b16 %v10115
    %v10482 = vunpack.c.l.b16 %v10116
    %v10483 = vunpack.c.h.b16 %v10116
    %v10484 = vunpack.c.l.b16 %v10117
    %v10485 = vunpack.c.h.b16 %v10117
    %v10486 = vunpack.c.l.b16 %v10118
    %v10487 = vunpack.c.h.b16 %v10118
    %v10488 = vunpack.c.l.b16 %v10119
    %v10489 = vunpack.c.h.b16 %v10119
    %v10490 = vunpack.c.l.b16 %v10120
    %v10491 = vunpack.c.h.b16 %v10120
    %v10492 = vunpack.c.l.b16 %v10121
    %v10493 = vunpack.c.h.b16 %v10121
    %v10494 = vunpack.c.l.b16 %v10122
    %v10495 = vunpack.c.h.b16 %v10122
    %v10496 = vunpack.c.l.b16 %v10123
    %v10497 = vunpack.c.h.b16 %v10123
    %v10498 = vunpack.c.l.b16 %v10124
    %v10499 = vunpack.c.h.b16 %v10124
    %v10500 = vunpack.c.l.b16 %v10125
    %v10501 = vunpack.c.h.b16 %v10125
    %v10502 = vunpack.c.l.b16 %v10126
    %v10503 = vunpack.c.h.b16 %v10126
    %v10504 = vunpack.c.l.b16 %v10127
    %v10505 = vunpack.c.h.b16 %v10127
    %v10506 = vunpack.c.l.b16 %v10128
    %v10507 = vunpack.c.h.b16 %v10128
    %v10508 = vunpack.c.l.b16 %v10129
    %v10509 = vunpack.c.h.b16 %v10129
    %v10510 = vunpack.c.l.b16 %v10130
    %v10511 = vunpack.c.h.b16 %v10130
    %v10512 = vunpack.c.l.b16 %v10131
    %v10513 = vunpack.c.h.b16 %v10131
    %v10514 = vunpack.c.l.b16 %v10132
    %v10515 = vunpack.c.h.b16 %v10132
    %v10516 = vunpack.c.l.b16 %v10133
    %v10517 = vunpack.c.h.b16 %v10133
    %v10518 = vunpack.c.l.b16 %v10134
    %v10519 = vunpack.c.h.b16 %v10134
    %v10520 = vunpack.c.l.b16 %v10135
    %v10521 = vunpack.c.h.b16 %v10135
    %v10522 = vunpack.c.l.b16 %v10136
    %v10523 = vunpack.c.h.b16 %v10136
    %v10524 = vunpack.c.l.b16 %v10137
    %v10525 = vunpack.c.h.b16 %v10137
    %v10526 = vunpack.c.l.b16 %v10138
    %v10527 = vunpack.c.h.b16 %v10138
    %v10528 = vunpack.c.l.b16 %v10139
    %v10529 = vunpack.c.h.b16 %v10139
    %v10530 = vunpack.c.l.b16 %v10140
    %v10531 = vunpack.c.h.b16 %v10140
    %v10532 = vunpack.c.l.b16 %v10141
    %v10533 = vunpack.c.h.b16 %v10141
    %v10534 = vunpack.c.l.b16 %v10142
    %v10535 = vunpack.c.h.b16 %v10142
    %v10536 = vunpack.c.l.b16 %v10143
    %v10537 = vunpack.c.h.b16 %v10143
    %v10538 = vunpack.c.l.b16 %v10144
    %v10539 = vunpack.c.h.b16 %v10144
    %v10540 = vunpack.c.l.b16 %v10145
    %v10541 = vunpack.c.h.b16 %v10145
    %v10542 = vunpack.c.l.b16 %v10146
    %v10543 = vunpack.c.h.b16 %v10146
    %v10544 = vunpack.c.l.b16 %v10147
    %v10545 = vunpack.c.h.b16 %v10147
    %v10546 = vunpack.c.l.b16 %v10148
    %v10547 = vunpack.c.h.b16 %v10148
    %v10548 = vunpack.c.l.b16 %v10149
    %v10549 = vunpack.c.h.b16 %v10149
    %v10550 = vunpack.c.l.b16 %v10150
    %v10551 = vunpack.c.h.b16 %v10150
    %v10552 = vunpack.c.l.b16 %v10151
    %v10553 = vunpack.c.h.b16 %v10151
    %v10554 = vunpack.c.l.b16 %v10152
    %v10555 = vunpack.c.h.b16 %v10152
    %v10556 = vunpack.c.l.b16 %v10153
    %v10557 = vunpack.c.h.b16 %v10153
    %v10558 = vunpack.c.l.b16 %v10154
    %v10559 = vunpack.c.h.b16 %v10154
    %v10560 = vunpack.c.l.b16 %v10155
    %v10561 = vunpack.c.h.b16 %v10155
    %v10562 = vunpack.c.l.b16 %v10156
    %v10563 = vunpack.c.h.b16 %v10156
    %v10564 = vpack.c.b16 %v10312, %v10308
    %v10565 = vpack.c.b16 %v10313, %v10309
    %v10566 = vpack.c.b16 %v10314, %v10310
    %v10567 = vpack.c.b16 %v10315, %v10311
    %v10568 = vpack.c.b16 %v10320, %v10316
    %v10569 = vpack.c.b16 %v10321, %v10317
    %v10570 = vpack.c.b16 %v10322, %v10318
    %v10571 = vpack.c.b16 %v10323, %v10319
    %v10572 = vpack.c.b16 %v10328, %v10324
    %v10573 = vpack.c.b16 %v10329, %v10325
    %v10574 = vpack.c.b16 %v10330, %v10326
    %v10575 = vpack.c.b16 %v10331, %v10327
    %v10576 = vpack.c.b16 %v10336, %v10332
    %v10577 = vpack.c.b16 %v10337, %v10333
    %v10578 = vpack.c.b16 %v10338, %v10334
    %v10579 = vpack.c.b16 %v10339, %v10335
    %v10580 = vpack.c.b16 %v10344, %v10340
    %v10581 = vpack.c.b16 %v10345, %v10341
    %v10582 = vpack.c.b16 %v10346, %v10342
    %v10583 = vpack.c.b16 %v10347, %v10343
    %v10584 = vpack.c.b16 %v10352, %v10348
    %v10585 = vpack.c.b16 %v10353, %v10349
    %v10586 = vpack.c.b16 %v10354, %v10350
    %v10587 = vpack.c.b16 %v10355, %v10351
    %v10588 = vpack.c.b16 %v10360, %v10356
    %v10589 = vpack.c.b16 %v10361, %v10357
    %v10590 = vpack.c.b16 %v10362, %v10358
    %v10591 = vpack.c.b16 %v10363, %v10359
    %v10592 = vpack.c.b16 %v10368, %v10364
    %v10593 = vpack.c.b16 %v10369, %v10365
    %v10594 = vpack.c.b16 %v10370, %v10366
    %v10595 = vpack.c.b16 %v10371, %v10367
    %v10596 = vpack.c.b16 %v10376, %v10372
    %v10597 = vpack.c.b16 %v10377, %v10373
    %v10598 = vpack.c.b16 %v10378, %v10374
    %v10599 = vpack.c.b16 %v10379, %v10375
    %v10600 = vpack.c.b16 %v10384, %v10380
    %v10601 = vpack.c.b16 %v10385, %v10381
    %v10602 = vpack.c.b16 %v10386, %v10382
    %v10603 = vpack.c.b16 %v10387, %v10383
    %v10604 = vpack.c.b16 %v10392, %v10388
    %v10605 = vpack.c.b16 %v10393, %v10389
    %v10606 = vpack.c.b16 %v10394, %v10390
    %v10607 = vpack.c.b16 %v10395, %v10391
    %v10608 = vpack.c.b16 %v10400, %v10396
    %v10609 = vpack.c.b16 %v10401, %v10397
    %v10610 = vpack.c.b16 %v10402, %v10398
    %v10611 = vpack.c.b16 %v10403, %v10399
    %v10612 = vpack.c.b16 %v10408, %v10404
    %v10613 = vpack.c.b16 %v10409, %v10405
    %v10614 = vpack.c.b16 %v10410, %v10406
    %v10615 = vpack.c.b16 %v10411, %v10407
    %v10616 = vpack.c.b16 %v10416, %v10412
    %v10617 = vpack.c.b16 %v10417, %v10413
    %v10618 = vpack.c.b16 %v10418, %v10414
    %v10619 = vpack.c.b16 %v10419, %v10415
    %v10620 = vpack.c.b16 %v10424, %v10420
    %v10621 = vpack.c.b16 %v10425, %v10421
    %v10622 = vpack.c.b16 %v10426, %v10422
    %v10623 = vpack.c.b16 %v10427, %v10423
    %v10624 = vpack.c.b16 %v10432, %v10428
    %v10625 = vpack.c.b16 %v10433, %v10429
    %v10626 = vpack.c.b16 %v10434, %v10430
    %v10627 = vpack.c.b16 %v10435, %v10431
    %v10628 = vpack.c.b16 %v10440, %v10436
    %v10629 = vpack.c.b16 %v10441, %v10437
    %v10630 = vpack.c.b16 %v10442, %v10438
    %v10631 = vpack.c.b16 %v10443, %v10439
    %v10632 = vpack.c.b16 %v10448, %v10444
    %v10633 = vpack.c.b16 %v10449, %v10445
    %v10634 = vpack.c.b16 %v10450, %v10446
    %v10635 = vpack.c.b16 %v10451, %v10447
    %v10636 = vpack.c.b16 %v10456, %v10452
    %v10637 = vpack.c.b16 %v10457, %v10453
    %v10638 = vpack.c.b16 %v10458, %v10454
    %v10639 = vpack.c.b16 %v10459, %v10455
    %v10640 = vpack.c.b16 %v10464, %v10460
    %v10641 = vpack.c.b16 %v10465, %v10461
    %v10642 = vpack.c.b16 %v10466, %v10462
    %v10643 = vpack.c.b16 %v10467, %v10463
    %v10644 = vpack.c.b16 %v10472, %v10468
    %v10645 = vpack.c.b16 %v10473, %v10469
    %v10646 = vpack.c.b16 %v10474, %v10470
    %v10647 = vpack.c.b16 %v10475, %v10471
    %v10648 = vpack.c.b16 %v10480, %v10476
    %v10649 = vpack.c.b16 %v10481, %v10477
    %v10650 = vpack.c.b16 %v10482, %v10478
    %v10651 = vpack.c.b16 %v10483, %v10479
    %v10652 = vpack.c.b16 %v10488, %v10484
    %v10653 = vpack.c.b16 %v10489, %v10485
    %v10654 = vpack.c.b16 %v10490, %v10486
    %v10655 = vpack.c.b16 %v10491, %v10487
    %v10656 = vpack.c.b16 %v10496, %v10492
    %v10657 = vpack.c.b16 %v10497, %v10493
    %v10658 = vpack.c.b16 %v10498, %v10494
    %v10659 = vpack.c.b16 %v10499, %v10495
    %v10660 = vpack.c.b16 %v10504, %v10500
    %v10661 = vpack.c.b16 %v10505, %v10501
    %v10662 = vpack.c.b16 %v10506, %v10502
    %v10663 = vpack.c.b16 %v10507, %v10503
    %v10664 = vpack.c.b16 %v10512, %v10508
    %v10665 = vpack.c.b16 %v10513, %v10509
    %v10666 = vpack.c.b16 %v10514, %v10510
    %v10667 = vpack.c.b16 %v10515, %v10511
    %v10668 = vpack.c.b16 %v10520, %v10516
    %v10669 = vpack.c.b16 %v10521, %v10517
    %v10670 = vpack.c.b16 %v10522, %v10518
    %v10671 = vpack.c.b16 %v10523, %v10519
    %v10672 = vpack.c.b16 %v10528, %v10524
    %v10673 = vpack.c.b16 %v10529, %v10525
    %v10674 = vpack.c.b16 %v10530, %v10526
    %v10675 = vpack.c.b16 %v10531, %v10527
    %v10676 = vpack.c.b16 %v10536, %v10532
    %v10677 = vpack.c.b16 %v10537, %v10533
    %v10678 = vpack.c.b16 %v10538, %v10534
    %v10679 = vpack.c.b16 %v10539, %v10535
    %v10680 = vpack.c.b16 %v10544, %v10540
    %v10681 = vpack.c.b16 %v10545, %v10541
    %v10682 = vpack.c.b16 %v10546, %v10542
    %v10683 = vpack.c.b16 %v10547, %v10543
    %v10684 = vpack.c.b16 %v10552, %v10548
    %v10685 = vpack.c.b16 %v10553, %v10549
    %v10686 = vpack.c.b16 %v10554, %v10550
    %v10687 = vpack.c.b16 %v10555, %v10551
    %v10688 = vpack.c.b16 %v10560, %v10556
    %v10689 = vpack.c.b16 %v10561, %v10557
    %v10690 = vpack.c.b16 %v10562, %v10558
    %v10691 = vpack.c.b16 %v10563, %v10559
    %10820 = vmatprep.subr.bf16.mxu0 %v10593
    %10821 = vmatpush1.bf16.msra.mxu0 %v10592
    %10822 = vmatprep.subr.bf16.mxu0 %v10589
    %10823 = vmatpush1.bf16.msra.mxu0 %v10588
    %10824 = vmatprep.subr.bf16.mxu0 %v10585
    %10825 = vmatpush1.bf16.msra.mxu0 %v10584
    %10826 = vmatprep.subr.bf16.mxu0 %v10581
    %10827 = vmatpush1.bf16.msra.mxu0 %v10580
    %10828 = vmatprep.subr.bf16.mxu0 %v10577
    %10829 = vmatpush1.bf16.msra.mxu0 %v10576
    %10830 = vmatprep.subr.bf16.mxu0 %v10573
    %10831 = vmatpush1.bf16.msra.mxu0 %v10572
    %10832 = vmatprep.subr.bf16.mxu0 %v10569
    %10833 = vmatpush1.bf16.msra.mxu0 %v10568
    %10834 = vmatprep.subr.bf16.mxu0 %v10565
    %10835 = vmatpush1.bf16.msra.mxu0 %v10564
    %10836 = vmatprep.subr.bf16.mxu0 %v10625
    %10837 = vmatpush2.bf16.msra.mxu0 %v10624
    %10838 = vmatprep.subr.bf16.mxu0 %v10621
    %10839 = vmatpush2.bf16.msra.mxu0 %v10620
    %10840 = vmatprep.subr.bf16.mxu0 %v10617
    %10841 = vmatpush2.bf16.msra.mxu0 %v10616
    %10842 = vmatprep.subr.bf16.mxu0 %v10613
    %10843 = vmatpush2.bf16.msra.mxu0 %v10612
    %10844 = vmatprep.subr.bf16.mxu0 %v10609
    %10845 = vmatpush2.bf16.msra.mxu0 %v10608
    %10846 = vmatprep.subr.bf16.mxu0 %v10605
    %10847 = vmatpush2.bf16.msra.mxu0 %v10604
    %10848 = vmatprep.subr.bf16.mxu0 %v10601
    %10849 = vmatpush2.bf16.msra.mxu0 %v10600
    %10850 = vmatprep.subr.bf16.mxu0 %v10597
    %10851 = vmatpush2.bf16.msra.mxu0 %v10596
    %10852 = vmatprep.mubr.bf16.mxu0 %v10025
    %10853 = vmatmul.mubr.bf16.gmra.mxu0 %v10024
    %v10854 = vpop.f32.mrf.mxu0
    %v10855 = vadd.f32 %v10163, %v10854
    %v10856 = vpop.f32.mrf.mxu0
    %v10857 = vadd.f32 %v10167, %v10856
    %v10858 = vpop.f32.mrf.mxu0
    %v10859 = vpop.f32.mrf.mxu0
    %10860 = vdwg.mxu0
    %10861 = vmatprep.subr.bf16.mxu0 %v10657
    %10862 = vmatpush1.bf16.msra.mxu0 %v10656
    %10863 = vmatprep.subr.bf16.mxu0 %v10653
    %10864 = vmatpush1.bf16.msra.mxu0 %v10652
    %10865 = vmatprep.subr.bf16.mxu0 %v10649
    %10866 = vmatpush1.bf16.msra.mxu0 %v10648
    %10867 = vmatprep.subr.bf16.mxu0 %v10645
    %10868 = vmatpush1.bf16.msra.mxu0 %v10644
    %10869 = vmatprep.subr.bf16.mxu0 %v10641
    %10870 = vmatpush1.bf16.msra.mxu0 %v10640
    %10871 = vmatprep.subr.bf16.mxu0 %v10637
    %10872 = vmatpush1.bf16.msra.mxu0 %v10636
    %10873 = vmatprep.subr.bf16.mxu0 %v10633
    %10874 = vmatpush1.bf16.msra.mxu0 %v10632
    %10875 = vmatprep.subr.bf16.mxu0 %v10629
    %10876 = vmatpush1.bf16.msra.mxu0 %v10628
    %10877 = vmatprep.subr.bf16.mxu0 %v10689
    %10878 = vmatpush2.bf16.msra.mxu0 %v10688
    %10879 = vmatprep.subr.bf16.mxu0 %v10685
    %10880 = vmatpush2.bf16.msra.mxu0 %v10684
    %10881 = vmatprep.subr.bf16.mxu0 %v10681
    %10882 = vmatpush2.bf16.msra.mxu0 %v10680
    %10883 = vmatprep.subr.bf16.mxu0 %v10677
    %10884 = vmatpush2.bf16.msra.mxu0 %v10676
    %10885 = vmatprep.subr.bf16.mxu0 %v10673
    %10886 = vmatpush2.bf16.msra.mxu0 %v10672
    %10887 = vmatprep.subr.bf16.mxu0 %v10669
    %10888 = vmatpush2.bf16.msra.mxu0 %v10668
    %10889 = vmatprep.subr.bf16.mxu0 %v10665
    %10890 = vmatpush2.bf16.msra.mxu0 %v10664
    %10891 = vmatprep.subr.bf16.mxu0 %v10661
    %10892 = vmatpush2.bf16.msra.mxu0 %v10660
    %10893 = vmatprep.mubr.bf16.mxu0 %v10027
    %10894 = vmatmul.mubr.bf16.gmra.mxu0 %v10026
    %v10895 = vpop.f32.mrf.mxu0
    %v10896 = vadd.f32 %v10855, %v10895
    %v10897 = vpop.f32.mrf.mxu0
    %v10898 = vadd.f32 %v10857, %v10897
    %v10899 = vpop.f32.mrf.mxu0
    %v10900 = vpop.f32.mrf.mxu0
    %10901 = vdwg.mxu0
    %10902 = vmatprep.subr.bf16.mxu0 %v10595
    %10903 = vmatpush1.bf16.msra.mxu0 %v10594
    %10904 = vmatprep.subr.bf16.mxu0 %v10591
    %10905 = vmatpush1.bf16.msra.mxu0 %v10590
    %10906 = vmatprep.subr.bf16.mxu0 %v10587
    %10907 = vmatpush1.bf16.msra.mxu0 %v10586
    %10908 = vmatprep.subr.bf16.mxu0 %v10583
    %10909 = vmatpush1.bf16.msra.mxu0 %v10582
    %10910 = vmatprep.subr.bf16.mxu0 %v10579
    %10911 = vmatpush1.bf16.msra.mxu0 %v10578
    %10912 = vmatprep.subr.bf16.mxu0 %v10575
    %10913 = vmatpush1.bf16.msra.mxu0 %v10574
    %10914 = vmatprep.subr.bf16.mxu0 %v10571
    %10915 = vmatpush1.bf16.msra.mxu0 %v10570
    %10916 = vmatprep.subr.bf16.mxu0 %v10567
    %10917 = vmatpush1.bf16.msra.mxu0 %v10566
    %10918 = vmatprep.subr.bf16.mxu0 %v10627
    %10919 = vmatpush2.bf16.msra.mxu0 %v10626
    %10920 = vmatprep.subr.bf16.mxu0 %v10623
    %10921 = vmatpush2.bf16.msra.mxu0 %v10622
    %10922 = vmatprep.subr.bf16.mxu0 %v10619
    %10923 = vmatpush2.bf16.msra.mxu0 %v10618
    %10924 = vmatprep.subr.bf16.mxu0 %v10615
    %10925 = vmatpush2.bf16.msra.mxu0 %v10614
    %10926 = vmatprep.subr.bf16.mxu0 %v10611
    %10927 = vmatpush2.bf16.msra.mxu0 %v10610
    %10928 = vmatprep.subr.bf16.mxu0 %v10607
    %10929 = vmatpush2.bf16.msra.mxu0 %v10606
    %10930 = vmatprep.subr.bf16.mxu0 %v10603
    %10931 = vmatpush2.bf16.msra.mxu0 %v10602
    %10932 = vmatprep.subr.bf16.mxu0 %v10599
    %10933 = vmatpush2.bf16.msra.mxu0 %v10598
    %10934 = vmatprep.mubr.bf16.mxu0 %v10025
    %10935 = vmatmul.mubr.bf16.gmra.mxu0 %v10024
    %v10936 = vpop.f32.mrf.mxu0
    %v10937 = vadd.f32 %v10171, %v10936
    %v10938 = vpop.f32.mrf.mxu0
    %v10939 = vadd.f32 %v10175, %v10938
    %v10940 = vpop.f32.mrf.mxu0
    %v10941 = vpop.f32.mrf.mxu0
    %10942 = vdwg.mxu0
    %10943 = vmatprep.subr.bf16.mxu0 %v10659
    %10944 = vmatpush1.bf16.msra.mxu0 %v10658
    %10945 = vmatprep.subr.bf16.mxu0 %v10655
    %10946 = vmatpush1.bf16.msra.mxu0 %v10654
    %10947 = vmatprep.subr.bf16.mxu0 %v10651
    %10948 = vmatpush1.bf16.msra.mxu0 %v10650
    %10949 = vmatprep.subr.bf16.mxu0 %v10647
    %10950 = vmatpush1.bf16.msra.mxu0 %v10646
    %10951 = vmatprep.subr.bf16.mxu0 %v10643
    %10952 = vmatpush1.bf16.msra.mxu0 %v10642
    %10953 = vmatprep.subr.bf16.mxu0 %v10639
    %10954 = vmatpush1.bf16.msra.mxu0 %v10638
    %10955 = vmatprep.subr.bf16.mxu0 %v10635
    %10956 = vmatpush1.bf16.msra.mxu0 %v10634
    %10957 = vmatprep.subr.bf16.mxu0 %v10631
    %10958 = vmatpush1.bf16.msra.mxu0 %v10630
    %10959 = vmatprep.subr.bf16.mxu0 %v10691
    %10960 = vmatpush2.bf16.msra.mxu0 %v10690
    %10961 = vmatprep.subr.bf16.mxu0 %v10687
    %10962 = vmatpush2.bf16.msra.mxu0 %v10686
    %10963 = vmatprep.subr.bf16.mxu0 %v10683
    %10964 = vmatpush2.bf16.msra.mxu0 %v10682
    %10965 = vmatprep.subr.bf16.mxu0 %v10679
    %10966 = vmatpush2.bf16.msra.mxu0 %v10678
    %10967 = vmatprep.subr.bf16.mxu0 %v10675
    %10968 = vmatpush2.bf16.msra.mxu0 %v10674
    %10969 = vmatprep.subr.bf16.mxu0 %v10671
    %10970 = vmatpush2.bf16.msra.mxu0 %v10670
    %10971 = vmatprep.subr.bf16.mxu0 %v10667
    %10972 = vmatpush2.bf16.msra.mxu0 %v10666
    %10973 = vmatprep.subr.bf16.mxu0 %v10663
    %10974 = vmatpush2.bf16.msra.mxu0 %v10662
    %10975 = vmatprep.mubr.bf16.mxu0 %v10027
    %10976 = vmatmul.mubr.bf16.gmra.mxu0 %v10026
    %v10977 = vpop.f32.mrf.mxu0
    %v10978 = vadd.f32 %v10937, %v10977
    %v10979 = vpop.f32.mrf.mxu0
    %v10980 = vadd.f32 %v10939, %v10979
    %v10981 = vpop.f32.mrf.mxu0
    %v10982 = vpop.f32.mrf.mxu0
    %10983 = vdwg.mxu0
    %v10984 = vmax.f32 %v10896, 0.0
    %v10985 = vmax.f32 %v10898, 0.0
    %v10986 = vmax.f32 %v10978, 0.0
    %v10987 = vmax.f32 %v10980, 0.0
    %v10988 = vpack.c.bf16 %v10984, %v10984
    %v10989 = vpack.c.bf16 %v10985, %v10985
    %v10990 = vpack.c.bf16 %v10986, %v10986
    %v10991 = vpack.c.bf16 %v10987, %v10987
    %s10992 = scalar_lea.vmem [#allocation10], 5120
    %v10993 = vld [vmem:[%s10992] sm:$0xff]
    %v10994 = vld [vmem:[%s10992 + $0x8] sm:$0xff]
    %v10995 = vld [vmem:[%s10992 + $0x10] sm:$0xff]
    %v10996 = vld [vmem:[%s10992 + $0x18] sm:$0xff]
    %v10997 = vld [vmem:[%s10992 + $0x20] sm:$0xff]
    %v10998 = vld [vmem:[%s10992 + $0x28] sm:$0xff]
    %v10999 = vld [vmem:[%s10992 + $0x30] sm:$0xff]
    %v11000 = vld [vmem:[%s10992 + $0x38] sm:$0xff]
    %v11001 = vld [vmem:[%s10992 + $0x40] sm:$0xff]
    %v11002 = vld [vmem:[%s10992 + $0x48] sm:$0xff]
    %v11003 = vld [vmem:[%s10992 + $0x50] sm:$0xff]
    %v11004 = vld [vmem:[%s10992 + $0x58] sm:$0xff]
    %v11005 = vld [vmem:[%s10992 + $0x60] sm:$0xff]
    %v11006 = vld [vmem:[%s10992 + $0x68] sm:$0xff]
    %v11007 = vld [vmem:[%s10992 + $0x70] sm:$0xff]
    %v11008 = vld [vmem:[%s10992 + $0x78] sm:$0xff]
    %v11009 = vld [vmem:[%s10992 + $0x80] sm:$0xff]
    %v11010 = vld [vmem:[%s10992 + $0x88] sm:$0xff]
    %v11011 = vld [vmem:[%s10992 + $0x90] sm:$0xff]
    %v11012 = vld [vmem:[%s10992 + $0x98] sm:$0xff]
    %v11013 = vld [vmem:[%s10992 + $0xa0] sm:$0xff]
    %v11014 = vld [vmem:[%s10992 + $0xa8] sm:$0xff]
    %v11015 = vld [vmem:[%s10992 + $0xb0] sm:$0xff]
    %v11016 = vld [vmem:[%s10992 + $0xb8] sm:$0xff]
    %v11017 = vld [vmem:[%s10992 + $0xc0] sm:$0xff]
    %v11018 = vld [vmem:[%s10992 + $0xc8] sm:$0xff]
    %v11019 = vld [vmem:[%s10992 + $0xd0] sm:$0xff]
    %v11020 = vld [vmem:[%s10992 + $0xd8] sm:$0xff]
    %v11021 = vld [vmem:[%s10992 + $0xe0] sm:$0xff]
    %v11022 = vld [vmem:[%s10992 + $0xe8] sm:$0xff]
    %v11023 = vld [vmem:[%s10992 + $0xf0] sm:$0xff]
    %v11024 = vld [vmem:[%s10992 + $0xf8] sm:$0xff]
    %v11025 = vld [vmem:[%s10992 + $0x100] sm:$0xff]
    %v11026 = vld [vmem:[%s10992 + $0x108] sm:$0xff]
    %v11027 = vld [vmem:[%s10992 + $0x110] sm:$0xff]
    %v11028 = vld [vmem:[%s10992 + $0x118] sm:$0xff]
    %v11029 = vld [vmem:[%s10992 + $0x120] sm:$0xff]
    %v11030 = vld [vmem:[%s10992 + $0x128] sm:$0xff]
    %v11031 = vld [vmem:[%s10992 + $0x130] sm:$0xff]
    %v11032 = vld [vmem:[%s10992 + $0x138] sm:$0xff]
    %v11033 = vld [vmem:[%s10992 + $0x140] sm:$0xff]
    %v11034 = vld [vmem:[%s10992 + $0x148] sm:$0xff]
    %v11035 = vld [vmem:[%s10992 + $0x150] sm:$0xff]
    %v11036 = vld [vmem:[%s10992 + $0x158] sm:$0xff]
    %v11037 = vld [vmem:[%s10992 + $0x160] sm:$0xff]
    %v11038 = vld [vmem:[%s10992 + $0x168] sm:$0xff]
    %v11039 = vld [vmem:[%s10992 + $0x170] sm:$0xff]
    %v11040 = vld [vmem:[%s10992 + $0x178] sm:$0xff]
    %v11041 = vld [vmem:[%s10992 + $0x180] sm:$0xff]
    %v11042 = vld [vmem:[%s10992 + $0x188] sm:$0xff]
    %v11043 = vld [vmem:[%s10992 + $0x190] sm:$0xff]
    %v11044 = vld [vmem:[%s10992 + $0x198] sm:$0xff]
    %v11045 = vld [vmem:[%s10992 + $0x1a0] sm:$0xff]
    %v11046 = vld [vmem:[%s10992 + $0x1a8] sm:$0xff]
    %v11047 = vld [vmem:[%s10992 + $0x1b0] sm:$0xff]
    %v11048 = vld [vmem:[%s10992 + $0x1b8] sm:$0xff]
    %v11049 = vld [vmem:[%s10992 + $0x1c0] sm:$0xff]
    %v11050 = vld [vmem:[%s10992 + $0x1c8] sm:$0xff]
    %v11051 = vld [vmem:[%s10992 + $0x1d0] sm:$0xff]
    %v11052 = vld [vmem:[%s10992 + $0x1d8] sm:$0xff]
    %v11053 = vld [vmem:[%s10992 + $0x1e0] sm:$0xff]
    %v11054 = vld [vmem:[%s10992 + $0x1e8] sm:$0xff]
    %v11055 = vld [vmem:[%s10992 + $0x1f0] sm:$0xff]
    %v11056 = vld [vmem:[%s10992 + $0x1f8] sm:$0xff]
    %v11057 = vld [vmem:[%s10992 + $0x200] sm:$0xff]
    %v11058 = vld [vmem:[%s10992 + $0x208] sm:$0xff]
    %v11059 = vld [vmem:[%s10992 + $0x210] sm:$0xff]
    %v11060 = vld [vmem:[%s10992 + $0x218] sm:$0xff]
    %v11061 = vld [vmem:[%s10992 + $0x220] sm:$0xff]
    %v11062 = vld [vmem:[%s10992 + $0x228] sm:$0xff]
    %v11063 = vld [vmem:[%s10992 + $0x230] sm:$0xff]
    %v11064 = vld [vmem:[%s10992 + $0x238] sm:$0xff]
    %v11065 = vld [vmem:[%s10992 + $0x240] sm:$0xff]
    %v11066 = vld [vmem:[%s10992 + $0x248] sm:$0xff]
    %v11067 = vld [vmem:[%s10992 + $0x250] sm:$0xff]
    %v11068 = vld [vmem:[%s10992 + $0x258] sm:$0xff]
    %v11069 = vld [vmem:[%s10992 + $0x260] sm:$0xff]
    %v11070 = vld [vmem:[%s10992 + $0x268] sm:$0xff]
    %v11071 = vld [vmem:[%s10992 + $0x270] sm:$0xff]
    %v11072 = vld [vmem:[%s10992 + $0x278] sm:$0xff]
    %v11073 = vld [vmem:[%s10992 + $0x280] sm:$0xff]
    %v11074 = vld [vmem:[%s10992 + $0x288] sm:$0xff]
    %v11075 = vld [vmem:[%s10992 + $0x290] sm:$0xff]
    %v11076 = vld [vmem:[%s10992 + $0x298] sm:$0xff]
    %v11077 = vld [vmem:[%s10992 + $0x2a0] sm:$0xff]
    %v11078 = vld [vmem:[%s10992 + $0x2a8] sm:$0xff]
    %v11079 = vld [vmem:[%s10992 + $0x2b0] sm:$0xff]
    %v11080 = vld [vmem:[%s10992 + $0x2b8] sm:$0xff]
    %v11081 = vld [vmem:[%s10992 + $0x2c0] sm:$0xff]
    %v11082 = vld [vmem:[%s10992 + $0x2c8] sm:$0xff]
    %v11083 = vld [vmem:[%s10992 + $0x2d0] sm:$0xff]
    %v11084 = vld [vmem:[%s10992 + $0x2d8] sm:$0xff]
    %v11085 = vld [vmem:[%s10992 + $0x2e0] sm:$0xff]
    %v11086 = vld [vmem:[%s10992 + $0x2e8] sm:$0xff]
    %v11087 = vld [vmem:[%s10992 + $0x2f0] sm:$0xff]
    %v11088 = vld [vmem:[%s10992 + $0x2f8] sm:$0xff]
    %v11089 = vld [vmem:[%s10992 + $0x300] sm:$0xff]
    %v11090 = vld [vmem:[%s10992 + $0x308] sm:$0xff]
    %v11091 = vld [vmem:[%s10992 + $0x310] sm:$0xff]
    %v11092 = vld [vmem:[%s10992 + $0x318] sm:$0xff]
    %v11093 = vld [vmem:[%s10992 + $0x320] sm:$0xff]
    %v11094 = vld [vmem:[%s10992 + $0x328] sm:$0xff]
    %v11095 = vld [vmem:[%s10992 + $0x330] sm:$0xff]
    %v11096 = vld [vmem:[%s10992 + $0x338] sm:$0xff]
    %v11097 = vld [vmem:[%s10992 + $0x340] sm:$0xff]
    %v11098 = vld [vmem:[%s10992 + $0x348] sm:$0xff]
    %v11099 = vld [vmem:[%s10992 + $0x350] sm:$0xff]
    %v11100 = vld [vmem:[%s10992 + $0x358] sm:$0xff]
    %v11101 = vld [vmem:[%s10992 + $0x360] sm:$0xff]
    %v11102 = vld [vmem:[%s10992 + $0x368] sm:$0xff]
    %v11103 = vld [vmem:[%s10992 + $0x370] sm:$0xff]
    %v11104 = vld [vmem:[%s10992 + $0x378] sm:$0xff]
    %v11105 = vld [vmem:[%s10992 + $0x380] sm:$0xff]
    %v11106 = vld [vmem:[%s10992 + $0x388] sm:$0xff]
    %v11107 = vld [vmem:[%s10992 + $0x390] sm:$0xff]
    %v11108 = vld [vmem:[%s10992 + $0x398] sm:$0xff]
    %v11109 = vld [vmem:[%s10992 + $0x3a0] sm:$0xff]
    %v11110 = vld [vmem:[%s10992 + $0x3a8] sm:$0xff]
    %v11111 = vld [vmem:[%s10992 + $0x3b0] sm:$0xff]
    %v11112 = vld [vmem:[%s10992 + $0x3b8] sm:$0xff]
    %v11113 = vld [vmem:[%s10992 + $0x3c0] sm:$0xff]
    %v11114 = vld [vmem:[%s10992 + $0x3c8] sm:$0xff]
    %v11115 = vld [vmem:[%s10992 + $0x3d0] sm:$0xff]
    %v11116 = vld [vmem:[%s10992 + $0x3d8] sm:$0xff]
    %v11117 = vld [vmem:[%s10992 + $0x3e0] sm:$0xff]
    %v11118 = vld [vmem:[%s10992 + $0x3e8] sm:$0xff]
    %v11119 = vld [vmem:[%s10992 + $0x3f0] sm:$0xff]
    %v11120 = vld [vmem:[%s10992 + $0x3f8] sm:$0xff]
    %s11121 = scalar_lea.vmem [#allocation11], 20
    %v11122 = vld [vmem:[%s11121] sm:$0xf]
    %v11124 = vlaneseq
    %v11125 = vshrl.u32 %v11124, 7
    %v11126 = vsub.s32 0, %v11125
    %v11127 = vrot.slane %v11122, %v11126
    %v11128 = vlaneseq
    %v11129 = vshrl.u32 %v11128, 7
    %v11130 = vsub.s32 1, %v11129
    %v11131 = vrot.slane %v11122, %v11130
    %v11132 = vlaneseq
    %v11133 = vshrl.u32 %v11132, 7
    %v11134 = vsub.s32 2, %v11133
    %v11135 = vrot.slane %v11122, %v11134
    %v11136 = vlaneseq
    %v11137 = vshrl.u32 %v11136, 7
    %v11138 = vsub.s32 3, %v11137
    %v11139 = vrot.slane %v11122, %v11138
    %v11272 = vunpack.c.l.b16 %v10993
    %v11273 = vunpack.c.h.b16 %v10993
    %v11274 = vunpack.c.l.b16 %v10994
    %v11275 = vunpack.c.h.b16 %v10994
    %v11276 = vunpack.c.l.b16 %v10995
    %v11277 = vunpack.c.h.b16 %v10995
    %v11278 = vunpack.c.l.b16 %v10996
    %v11279 = vunpack.c.h.b16 %v10996
    %v11280 = vunpack.c.l.b16 %v10997
    %v11281 = vunpack.c.h.b16 %v10997
    %v11282 = vunpack.c.l.b16 %v10998
    %v11283 = vunpack.c.h.b16 %v10998
    %v11284 = vunpack.c.l.b16 %v10999
    %v11285 = vunpack.c.h.b16 %v10999
    %v11286 = vunpack.c.l.b16 %v11000
    %v11287 = vunpack.c.h.b16 %v11000
    %v11288 = vunpack.c.l.b16 %v11001
    %v11289 = vunpack.c.h.b16 %v11001
    %v11290 = vunpack.c.l.b16 %v11002
    %v11291 = vunpack.c.h.b16 %v11002
    %v11292 = vunpack.c.l.b16 %v11003
    %v11293 = vunpack.c.h.b16 %v11003
    %v11294 = vunpack.c.l.b16 %v11004
    %v11295 = vunpack.c.h.b16 %v11004
    %v11296 = vunpack.c.l.b16 %v11005
    %v11297 = vunpack.c.h.b16 %v11005
    %v11298 = vunpack.c.l.b16 %v11006
    %v11299 = vunpack.c.h.b16 %v11006
    %v11300 = vunpack.c.l.b16 %v11007
    %v11301 = vunpack.c.h.b16 %v11007
    %v11302 = vunpack.c.l.b16 %v11008
    %v11303 = vunpack.c.h.b16 %v11008
    %v11304 = vunpack.c.l.b16 %v11009
    %v11305 = vunpack.c.h.b16 %v11009
    %v11306 = vunpack.c.l.b16 %v11010
    %v11307 = vunpack.c.h.b16 %v11010
    %v11308 = vunpack.c.l.b16 %v11011
    %v11309 = vunpack.c.h.b16 %v11011
    %v11310 = vunpack.c.l.b16 %v11012
    %v11311 = vunpack.c.h.b16 %v11012
    %v11312 = vunpack.c.l.b16 %v11013
    %v11313 = vunpack.c.h.b16 %v11013
    %v11314 = vunpack.c.l.b16 %v11014
    %v11315 = vunpack.c.h.b16 %v11014
    %v11316 = vunpack.c.l.b16 %v11015
    %v11317 = vunpack.c.h.b16 %v11015
    %v11318 = vunpack.c.l.b16 %v11016
    %v11319 = vunpack.c.h.b16 %v11016
    %v11320 = vunpack.c.l.b16 %v11017
    %v11321 = vunpack.c.h.b16 %v11017
    %v11322 = vunpack.c.l.b16 %v11018
    %v11323 = vunpack.c.h.b16 %v11018
    %v11324 = vunpack.c.l.b16 %v11019
    %v11325 = vunpack.c.h.b16 %v11019
    %v11326 = vunpack.c.l.b16 %v11020
    %v11327 = vunpack.c.h.b16 %v11020
    %v11328 = vunpack.c.l.b16 %v11021
    %v11329 = vunpack.c.h.b16 %v11021
    %v11330 = vunpack.c.l.b16 %v11022
    %v11331 = vunpack.c.h.b16 %v11022
    %v11332 = vunpack.c.l.b16 %v11023
    %v11333 = vunpack.c.h.b16 %v11023
    %v11334 = vunpack.c.l.b16 %v11024
    %v11335 = vunpack.c.h.b16 %v11024
    %v11336 = vunpack.c.l.b16 %v11025
    %v11337 = vunpack.c.h.b16 %v11025
    %v11338 = vunpack.c.l.b16 %v11026
    %v11339 = vunpack.c.h.b16 %v11026
    %v11340 = vunpack.c.l.b16 %v11027
    %v11341 = vunpack.c.h.b16 %v11027
    %v11342 = vunpack.c.l.b16 %v11028
    %v11343 = vunpack.c.h.b16 %v11028
    %v11344 = vunpack.c.l.b16 %v11029
    %v11345 = vunpack.c.h.b16 %v11029
    %v11346 = vunpack.c.l.b16 %v11030
    %v11347 = vunpack.c.h.b16 %v11030
    %v11348 = vunpack.c.l.b16 %v11031
    %v11349 = vunpack.c.h.b16 %v11031
    %v11350 = vunpack.c.l.b16 %v11032
    %v11351 = vunpack.c.h.b16 %v11032
    %v11352 = vunpack.c.l.b16 %v11033
    %v11353 = vunpack.c.h.b16 %v11033
    %v11354 = vunpack.c.l.b16 %v11034
    %v11355 = vunpack.c.h.b16 %v11034
    %v11356 = vunpack.c.l.b16 %v11035
    %v11357 = vunpack.c.h.b16 %v11035
    %v11358 = vunpack.c.l.b16 %v11036
    %v11359 = vunpack.c.h.b16 %v11036
    %v11360 = vunpack.c.l.b16 %v11037
    %v11361 = vunpack.c.h.b16 %v11037
    %v11362 = vunpack.c.l.b16 %v11038
    %v11363 = vunpack.c.h.b16 %v11038
    %v11364 = vunpack.c.l.b16 %v11039
    %v11365 = vunpack.c.h.b16 %v11039
    %v11366 = vunpack.c.l.b16 %v11040
    %v11367 = vunpack.c.h.b16 %v11040
    %v11368 = vunpack.c.l.b16 %v11041
    %v11369 = vunpack.c.h.b16 %v11041
    %v11370 = vunpack.c.l.b16 %v11042
    %v11371 = vunpack.c.h.b16 %v11042
    %v11372 = vunpack.c.l.b16 %v11043
    %v11373 = vunpack.c.h.b16 %v11043
    %v11374 = vunpack.c.l.b16 %v11044
    %v11375 = vunpack.c.h.b16 %v11044
    %v11376 = vunpack.c.l.b16 %v11045
    %v11377 = vunpack.c.h.b16 %v11045
    %v11378 = vunpack.c.l.b16 %v11046
    %v11379 = vunpack.c.h.b16 %v11046
    %v11380 = vunpack.c.l.b16 %v11047
    %v11381 = vunpack.c.h.b16 %v11047
    %v11382 = vunpack.c.l.b16 %v11048
    %v11383 = vunpack.c.h.b16 %v11048
    %v11384 = vunpack.c.l.b16 %v11049
    %v11385 = vunpack.c.h.b16 %v11049
    %v11386 = vunpack.c.l.b16 %v11050
    %v11387 = vunpack.c.h.b16 %v11050
    %v11388 = vunpack.c.l.b16 %v11051
    %v11389 = vunpack.c.h.b16 %v11051
    %v11390 = vunpack.c.l.b16 %v11052
    %v11391 = vunpack.c.h.b16 %v11052
    %v11392 = vunpack.c.l.b16 %v11053
    %v11393 = vunpack.c.h.b16 %v11053
    %v11394 = vunpack.c.l.b16 %v11054
    %v11395 = vunpack.c.h.b16 %v11054
    %v11396 = vunpack.c.l.b16 %v11055
    %v11397 = vunpack.c.h.b16 %v11055
    %v11398 = vunpack.c.l.b16 %v11056
    %v11399 = vunpack.c.h.b16 %v11056
    %v11400 = vunpack.c.l.b16 %v11057
    %v11401 = vunpack.c.h.b16 %v11057
    %v11402 = vunpack.c.l.b16 %v11058
    %v11403 = vunpack.c.h.b16 %v11058
    %v11404 = vunpack.c.l.b16 %v11059
    %v11405 = vunpack.c.h.b16 %v11059
    %v11406 = vunpack.c.l.b16 %v11060
    %v11407 = vunpack.c.h.b16 %v11060
    %v11408 = vunpack.c.l.b16 %v11061
    %v11409 = vunpack.c.h.b16 %v11061
    %v11410 = vunpack.c.l.b16 %v11062
    %v11411 = vunpack.c.h.b16 %v11062
    %v11412 = vunpack.c.l.b16 %v11063
    %v11413 = vunpack.c.h.b16 %v11063
    %v11414 = vunpack.c.l.b16 %v11064
    %v11415 = vunpack.c.h.b16 %v11064
    %v11416 = vunpack.c.l.b16 %v11065
    %v11417 = vunpack.c.h.b16 %v11065
    %v11418 = vunpack.c.l.b16 %v11066
    %v11419 = vunpack.c.h.b16 %v11066
    %v11420 = vunpack.c.l.b16 %v11067
    %v11421 = vunpack.c.h.b16 %v11067
    %v11422 = vunpack.c.l.b16 %v11068
    %v11423 = vunpack.c.h.b16 %v11068
    %v11424 = vunpack.c.l.b16 %v11069
    %v11425 = vunpack.c.h.b16 %v11069
    %v11426 = vunpack.c.l.b16 %v11070
    %v11427 = vunpack.c.h.b16 %v11070
    %v11428 = vunpack.c.l.b16 %v11071
    %v11429 = vunpack.c.h.b16 %v11071
    %v11430 = vunpack.c.l.b16 %v11072
    %v11431 = vunpack.c.h.b16 %v11072
    %v11432 = vunpack.c.l.b16 %v11073
    %v11433 = vunpack.c.h.b16 %v11073
    %v11434 = vunpack.c.l.b16 %v11074
    %v11435 = vunpack.c.h.b16 %v11074
    %v11436 = vunpack.c.l.b16 %v11075
    %v11437 = vunpack.c.h.b16 %v11075
    %v11438 = vunpack.c.l.b16 %v11076
    %v11439 = vunpack.c.h.b16 %v11076
    %v11440 = vunpack.c.l.b16 %v11077
    %v11441 = vunpack.c.h.b16 %v11077
    %v11442 = vunpack.c.l.b16 %v11078
    %v11443 = vunpack.c.h.b16 %v11078
    %v11444 = vunpack.c.l.b16 %v11079
    %v11445 = vunpack.c.h.b16 %v11079
    %v11446 = vunpack.c.l.b16 %v11080
    %v11447 = vunpack.c.h.b16 %v11080
    %v11448 = vunpack.c.l.b16 %v11081
    %v11449 = vunpack.c.h.b16 %v11081
    %v11450 = vunpack.c.l.b16 %v11082
    %v11451 = vunpack.c.h.b16 %v11082
    %v11452 = vunpack.c.l.b16 %v11083
    %v11453 = vunpack.c.h.b16 %v11083
    %v11454 = vunpack.c.l.b16 %v11084
    %v11455 = vunpack.c.h.b16 %v11084
    %v11456 = vunpack.c.l.b16 %v11085
    %v11457 = vunpack.c.h.b16 %v11085
    %v11458 = vunpack.c.l.b16 %v11086
    %v11459 = vunpack.c.h.b16 %v11086
    %v11460 = vunpack.c.l.b16 %v11087
    %v11461 = vunpack.c.h.b16 %v11087
    %v11462 = vunpack.c.l.b16 %v11088
    %v11463 = vunpack.c.h.b16 %v11088
    %v11464 = vunpack.c.l.b16 %v11089
    %v11465 = vunpack.c.h.b16 %v11089
    %v11466 = vunpack.c.l.b16 %v11090
    %v11467 = vunpack.c.h.b16 %v11090
    %v11468 = vunpack.c.l.b16 %v11091
    %v11469 = vunpack.c.h.b16 %v11091
    %v11470 = vunpack.c.l.b16 %v11092
    %v11471 = vunpack.c.h.b16 %v11092
    %v11472 = vunpack.c.l.b16 %v11093
    %v11473 = vunpack.c.h.b16 %v11093
    %v11474 = vunpack.c.l.b16 %v11094
    %v11475 = vunpack.c.h.b16 %v11094
    %v11476 = vunpack.c.l.b16 %v11095
    %v11477 = vunpack.c.h.b16 %v11095
    %v11478 = vunpack.c.l.b16 %v11096
    %v11479 = vunpack.c.h.b16 %v11096
    %v11480 = vunpack.c.l.b16 %v11097
    %v11481 = vunpack.c.h.b16 %v11097
    %v11482 = vunpack.c.l.b16 %v11098
    %v11483 = vunpack.c.h.b16 %v11098
    %v11484 = vunpack.c.l.b16 %v11099
    %v11485 = vunpack.c.h.b16 %v11099
    %v11486 = vunpack.c.l.b16 %v11100
    %v11487 = vunpack.c.h.b16 %v11100
    %v11488 = vunpack.c.l.b16 %v11101
    %v11489 = vunpack.c.h.b16 %v11101
    %v11490 = vunpack.c.l.b16 %v11102
    %v11491 = vunpack.c.h.b16 %v11102
    %v11492 = vunpack.c.l.b16 %v11103
    %v11493 = vunpack.c.h.b16 %v11103
    %v11494 = vunpack.c.l.b16 %v11104
    %v11495 = vunpack.c.h.b16 %v11104
    %v11496 = vunpack.c.l.b16 %v11105
    %v11497 = vunpack.c.h.b16 %v11105
    %v11498 = vunpack.c.l.b16 %v11106
    %v11499 = vunpack.c.h.b16 %v11106
    %v11500 = vunpack.c.l.b16 %v11107
    %v11501 = vunpack.c.h.b16 %v11107
    %v11502 = vunpack.c.l.b16 %v11108
    %v11503 = vunpack.c.h.b16 %v11108
    %v11504 = vunpack.c.l.b16 %v11109
    %v11505 = vunpack.c.h.b16 %v11109
    %v11506 = vunpack.c.l.b16 %v11110
    %v11507 = vunpack.c.h.b16 %v11110
    %v11508 = vunpack.c.l.b16 %v11111
    %v11509 = vunpack.c.h.b16 %v11111
    %v11510 = vunpack.c.l.b16 %v11112
    %v11511 = vunpack.c.h.b16 %v11112
    %v11512 = vunpack.c.l.b16 %v11113
    %v11513 = vunpack.c.h.b16 %v11113
    %v11514 = vunpack.c.l.b16 %v11114
    %v11515 = vunpack.c.h.b16 %v11114
    %v11516 = vunpack.c.l.b16 %v11115
    %v11517 = vunpack.c.h.b16 %v11115
    %v11518 = vunpack.c.l.b16 %v11116
    %v11519 = vunpack.c.h.b16 %v11116
    %v11520 = vunpack.c.l.b16 %v11117
    %v11521 = vunpack.c.h.b16 %v11117
    %v11522 = vunpack.c.l.b16 %v11118
    %v11523 = vunpack.c.h.b16 %v11118
    %v11524 = vunpack.c.l.b16 %v11119
    %v11525 = vunpack.c.h.b16 %v11119
    %v11526 = vunpack.c.l.b16 %v11120
    %v11527 = vunpack.c.h.b16 %v11120
    %v11528 = vpack.c.b16 %v11276, %v11272
    %v11529 = vpack.c.b16 %v11277, %v11273
    %v11530 = vpack.c.b16 %v11278, %v11274
    %v11531 = vpack.c.b16 %v11279, %v11275
    %v11532 = vpack.c.b16 %v11284, %v11280
    %v11533 = vpack.c.b16 %v11285, %v11281
    %v11534 = vpack.c.b16 %v11286, %v11282
    %v11535 = vpack.c.b16 %v11287, %v11283
    %v11536 = vpack.c.b16 %v11292, %v11288
    %v11537 = vpack.c.b16 %v11293, %v11289
    %v11538 = vpack.c.b16 %v11294, %v11290
    %v11539 = vpack.c.b16 %v11295, %v11291
    %v11540 = vpack.c.b16 %v11300, %v11296
    %v11541 = vpack.c.b16 %v11301, %v11297
    %v11542 = vpack.c.b16 %v11302, %v11298
    %v11543 = vpack.c.b16 %v11303, %v11299
    %v11544 = vpack.c.b16 %v11308, %v11304
    %v11545 = vpack.c.b16 %v11309, %v11305
    %v11546 = vpack.c.b16 %v11310, %v11306
    %v11547 = vpack.c.b16 %v11311, %v11307
    %v11548 = vpack.c.b16 %v11316, %v11312
    %v11549 = vpack.c.b16 %v11317, %v11313
    %v11550 = vpack.c.b16 %v11318, %v11314
    %v11551 = vpack.c.b16 %v11319, %v11315
    %v11552 = vpack.c.b16 %v11324, %v11320
    %v11553 = vpack.c.b16 %v11325, %v11321
    %v11554 = vpack.c.b16 %v11326, %v11322
    %v11555 = vpack.c.b16 %v11327, %v11323
    %v11556 = vpack.c.b16 %v11332, %v11328
    %v11557 = vpack.c.b16 %v11333, %v11329
    %v11558 = vpack.c.b16 %v11334, %v11330
    %v11559 = vpack.c.b16 %v11335, %v11331
    %v11560 = vpack.c.b16 %v11340, %v11336
    %v11561 = vpack.c.b16 %v11341, %v11337
    %v11562 = vpack.c.b16 %v11342, %v11338
    %v11563 = vpack.c.b16 %v11343, %v11339
    %v11564 = vpack.c.b16 %v11348, %v11344
    %v11565 = vpack.c.b16 %v11349, %v11345
    %v11566 = vpack.c.b16 %v11350, %v11346
    %v11567 = vpack.c.b16 %v11351, %v11347
    %v11568 = vpack.c.b16 %v11356, %v11352
    %v11569 = vpack.c.b16 %v11357, %v11353
    %v11570 = vpack.c.b16 %v11358, %v11354
    %v11571 = vpack.c.b16 %v11359, %v11355
    %v11572 = vpack.c.b16 %v11364, %v11360
    %v11573 = vpack.c.b16 %v11365, %v11361
    %v11574 = vpack.c.b16 %v11366, %v11362
    %v11575 = vpack.c.b16 %v11367, %v11363
    %v11576 = vpack.c.b16 %v11372, %v11368
    %v11577 = vpack.c.b16 %v11373, %v11369
    %v11578 = vpack.c.b16 %v11374, %v11370
    %v11579 = vpack.c.b16 %v11375, %v11371
    %v11580 = vpack.c.b16 %v11380, %v11376
    %v11581 = vpack.c.b16 %v11381, %v11377
    %v11582 = vpack.c.b16 %v11382, %v11378
    %v11583 = vpack.c.b16 %v11383, %v11379
    %v11584 = vpack.c.b16 %v11388, %v11384
    %v11585 = vpack.c.b16 %v11389, %v11385
    %v11586 = vpack.c.b16 %v11390, %v11386
    %v11587 = vpack.c.b16 %v11391, %v11387
    %v11588 = vpack.c.b16 %v11396, %v11392
    %v11589 = vpack.c.b16 %v11397, %v11393
    %v11590 = vpack.c.b16 %v11398, %v11394
    %v11591 = vpack.c.b16 %v11399, %v11395
    %v11592 = vpack.c.b16 %v11404, %v11400
    %v11593 = vpack.c.b16 %v11405, %v11401
    %v11594 = vpack.c.b16 %v11406, %v11402
    %v11595 = vpack.c.b16 %v11407, %v11403
    %v11596 = vpack.c.b16 %v11412, %v11408
    %v11597 = vpack.c.b16 %v11413, %v11409
    %v11598 = vpack.c.b16 %v11414, %v11410
    %v11599 = vpack.c.b16 %v11415, %v11411
    %v11600 = vpack.c.b16 %v11420, %v11416
    %v11601 = vpack.c.b16 %v11421, %v11417
    %v11602 = vpack.c.b16 %v11422, %v11418
    %v11603 = vpack.c.b16 %v11423, %v11419
    %v11604 = vpack.c.b16 %v11428, %v11424
    %v11605 = vpack.c.b16 %v11429, %v11425
    %v11606 = vpack.c.b16 %v11430, %v11426
    %v11607 = vpack.c.b16 %v11431, %v11427
    %v11608 = vpack.c.b16 %v11436, %v11432
    %v11609 = vpack.c.b16 %v11437, %v11433
    %v11610 = vpack.c.b16 %v11438, %v11434
    %v11611 = vpack.c.b16 %v11439, %v11435
    %v11612 = vpack.c.b16 %v11444, %v11440
    %v11613 = vpack.c.b16 %v11445, %v11441
    %v11614 = vpack.c.b16 %v11446, %v11442
    %v11615 = vpack.c.b16 %v11447, %v11443
    %v11616 = vpack.c.b16 %v11452, %v11448
    %v11617 = vpack.c.b16 %v11453, %v11449
    %v11618 = vpack.c.b16 %v11454, %v11450
    %v11619 = vpack.c.b16 %v11455, %v11451
    %v11620 = vpack.c.b16 %v11460, %v11456
    %v11621 = vpack.c.b16 %v11461, %v11457
    %v11622 = vpack.c.b16 %v11462, %v11458
    %v11623 = vpack.c.b16 %v11463, %v11459
    %v11624 = vpack.c.b16 %v11468, %v11464
    %v11625 = vpack.c.b16 %v11469, %v11465
    %v11626 = vpack.c.b16 %v11470, %v11466
    %v11627 = vpack.c.b16 %v11471, %v11467
    %v11628 = vpack.c.b16 %v11476, %v11472
    %v11629 = vpack.c.b16 %v11477, %v11473
    %v11630 = vpack.c.b16 %v11478, %v11474
    %v11631 = vpack.c.b16 %v11479, %v11475
    %v11632 = vpack.c.b16 %v11484, %v11480
    %v11633 = vpack.c.b16 %v11485, %v11481
    %v11634 = vpack.c.b16 %v11486, %v11482
    %v11635 = vpack.c.b16 %v11487, %v11483
    %v11636 = vpack.c.b16 %v11492, %v11488
    %v11637 = vpack.c.b16 %v11493, %v11489
    %v11638 = vpack.c.b16 %v11494, %v11490
    %v11639 = vpack.c.b16 %v11495, %v11491
    %v11640 = vpack.c.b16 %v11500, %v11496
    %v11641 = vpack.c.b16 %v11501, %v11497
    %v11642 = vpack.c.b16 %v11502, %v11498
    %v11643 = vpack.c.b16 %v11503, %v11499
    %v11644 = vpack.c.b16 %v11508, %v11504
    %v11645 = vpack.c.b16 %v11509, %v11505
    %v11646 = vpack.c.b16 %v11510, %v11506
    %v11647 = vpack.c.b16 %v11511, %v11507
    %v11648 = vpack.c.b16 %v11516, %v11512
    %v11649 = vpack.c.b16 %v11517, %v11513
    %v11650 = vpack.c.b16 %v11518, %v11514
    %v11651 = vpack.c.b16 %v11519, %v11515
    %v11652 = vpack.c.b16 %v11524, %v11520
    %v11653 = vpack.c.b16 %v11525, %v11521
    %v11654 = vpack.c.b16 %v11526, %v11522
    %v11655 = vpack.c.b16 %v11527, %v11523
    %11784 = vmatprep.subr.bf16.mxu0 %v11557
    %11785 = vmatpush1.bf16.msra.mxu0 %v11556
    %11786 = vmatprep.subr.bf16.mxu0 %v11553
    %11787 = vmatpush1.bf16.msra.mxu0 %v11552
    %11788 = vmatprep.subr.bf16.mxu0 %v11549
    %11789 = vmatpush1.bf16.msra.mxu0 %v11548
    %11790 = vmatprep.subr.bf16.mxu0 %v11545
    %11791 = vmatpush1.bf16.msra.mxu0 %v11544
    %11792 = vmatprep.subr.bf16.mxu0 %v11541
    %11793 = vmatpush1.bf16.msra.mxu0 %v11540
    %11794 = vmatprep.subr.bf16.mxu0 %v11537
    %11795 = vmatpush1.bf16.msra.mxu0 %v11536
    %11796 = vmatprep.subr.bf16.mxu0 %v11533
    %11797 = vmatpush1.bf16.msra.mxu0 %v11532
    %11798 = vmatprep.subr.bf16.mxu0 %v11529
    %11799 = vmatpush1.bf16.msra.mxu0 %v11528
    %11800 = vmatprep.subr.bf16.mxu0 %v11589
    %11801 = vmatpush2.bf16.msra.mxu0 %v11588
    %11802 = vmatprep.subr.bf16.mxu0 %v11585
    %11803 = vmatpush2.bf16.msra.mxu0 %v11584
    %11804 = vmatprep.subr.bf16.mxu0 %v11581
    %11805 = vmatpush2.bf16.msra.mxu0 %v11580
    %11806 = vmatprep.subr.bf16.mxu0 %v11577
    %11807 = vmatpush2.bf16.msra.mxu0 %v11576
    %11808 = vmatprep.subr.bf16.mxu0 %v11573
    %11809 = vmatpush2.bf16.msra.mxu0 %v11572
    %11810 = vmatprep.subr.bf16.mxu0 %v11569
    %11811 = vmatpush2.bf16.msra.mxu0 %v11568
    %11812 = vmatprep.subr.bf16.mxu0 %v11565
    %11813 = vmatpush2.bf16.msra.mxu0 %v11564
    %11814 = vmatprep.subr.bf16.mxu0 %v11561
    %11815 = vmatpush2.bf16.msra.mxu0 %v11560
    %11816 = vmatprep.mubr.bf16.mxu0 %v10989
    %11817 = vmatmul.mubr.bf16.gmra.mxu0 %v10988
    %v11818 = vpop.f32.mrf.mxu0
    %v11819 = vadd.f32 %v11127, %v11818
    %v11820 = vpop.f32.mrf.mxu0
    %v11821 = vadd.f32 %v11131, %v11820
    %v11822 = vpop.f32.mrf.mxu0
    %v11823 = vpop.f32.mrf.mxu0
    %11824 = vdwg.mxu0
    %11825 = vmatprep.subr.bf16.mxu0 %v11621
    %11826 = vmatpush1.bf16.msra.mxu0 %v11620
    %11827 = vmatprep.subr.bf16.mxu0 %v11617
    %11828 = vmatpush1.bf16.msra.mxu0 %v11616
    %11829 = vmatprep.subr.bf16.mxu0 %v11613
    %11830 = vmatpush1.bf16.msra.mxu0 %v11612
    %11831 = vmatprep.subr.bf16.mxu0 %v11609
    %11832 = vmatpush1.bf16.msra.mxu0 %v11608
    %11833 = vmatprep.subr.bf16.mxu0 %v11605
    %11834 = vmatpush1.bf16.msra.mxu0 %v11604
    %11835 = vmatprep.subr.bf16.mxu0 %v11601
    %11836 = vmatpush1.bf16.msra.mxu0 %v11600
    %11837 = vmatprep.subr.bf16.mxu0 %v11597
    %11838 = vmatpush1.bf16.msra.mxu0 %v11596
    %11839 = vmatprep.subr.bf16.mxu0 %v11593
    %11840 = vmatpush1.bf16.msra.mxu0 %v11592
    %11841 = vmatprep.subr.bf16.mxu0 %v11653
    %11842 = vmatpush2.bf16.msra.mxu0 %v11652
    %11843 = vmatprep.subr.bf16.mxu0 %v11649
    %11844 = vmatpush2.bf16.msra.mxu0 %v11648
    %11845 = vmatprep.subr.bf16.mxu0 %v11645
    %11846 = vmatpush2.bf16.msra.mxu0 %v11644
    %11847 = vmatprep.subr.bf16.mxu0 %v11641
    %11848 = vmatpush2.bf16.msra.mxu0 %v11640
    %11849 = vmatprep.subr.bf16.mxu0 %v11637
    %11850 = vmatpush2.bf16.msra.mxu0 %v11636
    %11851 = vmatprep.subr.bf16.mxu0 %v11633
    %11852 = vmatpush2.bf16.msra.mxu0 %v11632
    %11853 = vmatprep.subr.bf16.mxu0 %v11629
    %11854 = vmatpush2.bf16.msra.mxu0 %v11628
    %11855 = vmatprep.subr.bf16.mxu0 %v11625
    %11856 = vmatpush2.bf16.msra.mxu0 %v11624
    %11857 = vmatprep.mubr.bf16.mxu0 %v10991
    %11858 = vmatmul.mubr.bf16.gmra.mxu0 %v10990
    %v11859 = vpop.f32.mrf.mxu0
    %v11860 = vadd.f32 %v11819, %v11859
    %v11861 = vpop.f32.mrf.mxu0
    %v11862 = vadd.f32 %v11821, %v11861
    %v11863 = vpop.f32.mrf.mxu0
    %v11864 = vpop.f32.mrf.mxu0
    %11865 = vdwg.mxu0
    %11866 = vmatprep.subr.bf16.mxu0 %v11559
    %11867 = vmatpush1.bf16.msra.mxu0 %v11558
    %11868 = vmatprep.subr.bf16.mxu0 %v11555
    %11869 = vmatpush1.bf16.msra.mxu0 %v11554
    %11870 = vmatprep.subr.bf16.mxu0 %v11551
    %11871 = vmatpush1.bf16.msra.mxu0 %v11550
    %11872 = vmatprep.subr.bf16.mxu0 %v11547
    %11873 = vmatpush1.bf16.msra.mxu0 %v11546
    %11874 = vmatprep.subr.bf16.mxu0 %v11543
    %11875 = vmatpush1.bf16.msra.mxu0 %v11542
    %11876 = vmatprep.subr.bf16.mxu0 %v11539
    %11877 = vmatpush1.bf16.msra.mxu0 %v11538
    %11878 = vmatprep.subr.bf16.mxu0 %v11535
    %11879 = vmatpush1.bf16.msra.mxu0 %v11534
    %11880 = vmatprep.subr.bf16.mxu0 %v11531
    %11881 = vmatpush1.bf16.msra.mxu0 %v11530
    %11882 = vmatprep.subr.bf16.mxu0 %v11591
    %11883 = vmatpush2.bf16.msra.mxu0 %v11590
    %11884 = vmatprep.subr.bf16.mxu0 %v11587
    %11885 = vmatpush2.bf16.msra.mxu0 %v11586
    %11886 = vmatprep.subr.bf16.mxu0 %v11583
    %11887 = vmatpush2.bf16.msra.mxu0 %v11582
    %11888 = vmatprep.subr.bf16.mxu0 %v11579
    %11889 = vmatpush2.bf16.msra.mxu0 %v11578
    %11890 = vmatprep.subr.bf16.mxu0 %v11575
    %11891 = vmatpush2.bf16.msra.mxu0 %v11574
    %11892 = vmatprep.subr.bf16.mxu0 %v11571
    %11893 = vmatpush2.bf16.msra.mxu0 %v11570
    %11894 = vmatprep.subr.bf16.mxu0 %v11567
    %11895 = vmatpush2.bf16.msra.mxu0 %v11566
    %11896 = vmatprep.subr.bf16.mxu0 %v11563
    %11897 = vmatpush2.bf16.msra.mxu0 %v11562
    %11898 = vmatprep.mubr.bf16.mxu0 %v10989
    %11899 = vmatmul.mubr.bf16.gmra.mxu0 %v10988
    %v11900 = vpop.f32.mrf.mxu0
    %v11901 = vadd.f32 %v11135, %v11900
    %v11902 = vpop.f32.mrf.mxu0
    %v11903 = vadd.f32 %v11139, %v11902
    %v11904 = vpop.f32.mrf.mxu0
    %v11905 = vpop.f32.mrf.mxu0
    %11906 = vdwg.mxu0
    %11907 = vmatprep.subr.bf16.mxu0 %v11623
    %11908 = vmatpush1.bf16.msra.mxu0 %v11622
    %11909 = vmatprep.subr.bf16.mxu0 %v11619
    %11910 = vmatpush1.bf16.msra.mxu0 %v11618
    %11911 = vmatprep.subr.bf16.mxu0 %v11615
    %11912 = vmatpush1.bf16.msra.mxu0 %v11614
    %11913 = vmatprep.subr.bf16.mxu0 %v11611
    %11914 = vmatpush1.bf16.msra.mxu0 %v11610
    %11915 = vmatprep.subr.bf16.mxu0 %v11607
    %11916 = vmatpush1.bf16.msra.mxu0 %v11606
    %11917 = vmatprep.subr.bf16.mxu0 %v11603
    %11918 = vmatpush1.bf16.msra.mxu0 %v11602
    %11919 = vmatprep.subr.bf16.mxu0 %v11599
    %11920 = vmatpush1.bf16.msra.mxu0 %v11598
    %11921 = vmatprep.subr.bf16.mxu0 %v11595
    %11922 = vmatpush1.bf16.msra.mxu0 %v11594
    %11923 = vmatprep.subr.bf16.mxu0 %v11655
    %11924 = vmatpush2.bf16.msra.mxu0 %v11654
    %11925 = vmatprep.subr.bf16.mxu0 %v11651
    %11926 = vmatpush2.bf16.msra.mxu0 %v11650
    %11927 = vmatprep.subr.bf16.mxu0 %v11647
    %11928 = vmatpush2.bf16.msra.mxu0 %v11646
    %11929 = vmatprep.subr.bf16.mxu0 %v11643
    %11930 = vmatpush2.bf16.msra.mxu0 %v11642
    %11931 = vmatprep.subr.bf16.mxu0 %v11639
    %11932 = vmatpush2.bf16.msra.mxu0 %v11638
    %11933 = vmatprep.subr.bf16.mxu0 %v11635
    %11934 = vmatpush2.bf16.msra.mxu0 %v11634
    %11935 = vmatprep.subr.bf16.mxu0 %v11631
    %11936 = vmatpush2.bf16.msra.mxu0 %v11630
    %11937 = vmatprep.subr.bf16.mxu0 %v11627
    %11938 = vmatpush2.bf16.msra.mxu0 %v11626
    %11939 = vmatprep.mubr.bf16.mxu0 %v10991
    %11940 = vmatmul.mubr.bf16.gmra.mxu0 %v10990
    %v11941 = vpop.f32.mrf.mxu0
    %v11942 = vadd.f32 %v11901, %v11941
    %v11943 = vpop.f32.mrf.mxu0
    %v11944 = vadd.f32 %v11903, %v11943
    %v11945 = vpop.f32.mrf.mxu0
    %v11946 = vpop.f32.mrf.mxu0
    %11947 = vdwg.mxu0
    %v11948 = vadd.f32 %v10020, %v11860
    %v11949 = vadd.f32 %v10021, %v11862
    %v11950 = vadd.f32 %v10022, %v11942
    %v11951 = vadd.f32 %v10023, %v11944
    %v11952 = vmax.f32 %v11948, 0.0
    %v11953 = vmax.f32 %v11949, 0.0
    %v11954 = vmax.f32 %v11950, 0.0
    %v11955 = vmax.f32 %v11951, 0.0
    %v11956 = vpack.c.bf16 %v11952, %v11952
    %v11957 = vpack.c.bf16 %v11953, %v11953
    %v11958 = vpack.c.bf16 %v11954, %v11954
    %v11959 = vpack.c.bf16 %v11955, %v11955
    %v11960 = vld [vmem:[#allocation13] sm:$0xf]
    %v11961 = vld [vmem:[#allocation13 + $0x4] sm:$0xf]
    %v11962 = vld [vmem:[#allocation13 + $0x8] sm:$0xf]
    %v11963 = vld [vmem:[#allocation13 + $0xc] sm:$0xf]
    %v11964 = vld [vmem:[#allocation13 + $0x10] sm:$0xf]
    %v11965 = vld [vmem:[#allocation13 + $0x14] sm:$0xf]
    %v11966 = vld [vmem:[#allocation13 + $0x18] sm:$0xf]
    %v11967 = vld [vmem:[#allocation13 + $0x1c] sm:$0xf]
    %v11968 = vld [vmem:[#allocation13 + $0x20] sm:$0xf]
    %v11969 = vld [vmem:[#allocation13 + $0x24] sm:$0xf]
    %v11970 = vld [vmem:[#allocation13 + $0x28] sm:$0xf]
    %v11971 = vld [vmem:[#allocation13 + $0x2c] sm:$0xf]
    %v11972 = vld [vmem:[#allocation13 + $0x30] sm:$0xf]
    %v11973 = vld [vmem:[#allocation13 + $0x34] sm:$0xf]
    %v11974 = vld [vmem:[#allocation13 + $0x38] sm:$0xf]
    %v11975 = vld [vmem:[#allocation13 + $0x3c] sm:$0xf]
    %v11976 = vld [vmem:[#allocation13 + $0x40] sm:$0xf]
    %v11977 = vld [vmem:[#allocation13 + $0x44] sm:$0xf]
    %v11978 = vld [vmem:[#allocation13 + $0x48] sm:$0xf]
    %v11979 = vld [vmem:[#allocation13 + $0x4c] sm:$0xf]
    %v11980 = vld [vmem:[#allocation13 + $0x50] sm:$0xf]
    %v11981 = vld [vmem:[#allocation13 + $0x54] sm:$0xf]
    %v11982 = vld [vmem:[#allocation13 + $0x58] sm:$0xf]
    %v11983 = vld [vmem:[#allocation13 + $0x5c] sm:$0xf]
    %v11984 = vld [vmem:[#allocation13 + $0x60] sm:$0xf]
    %v11985 = vld [vmem:[#allocation13 + $0x64] sm:$0xf]
    %v11986 = vld [vmem:[#allocation13 + $0x68] sm:$0xf]
    %v11987 = vld [vmem:[#allocation13 + $0x6c] sm:$0xf]
    %v11988 = vld [vmem:[#allocation13 + $0x70] sm:$0xf]
    %v11989 = vld [vmem:[#allocation13 + $0x74] sm:$0xf]
    %v11990 = vld [vmem:[#allocation13 + $0x78] sm:$0xf]
    %v11991 = vld [vmem:[#allocation13 + $0x7c] sm:$0xf]
    %v11992 = vld [vmem:[#allocation13 + $0x80] sm:$0xf]
    %v11993 = vld [vmem:[#allocation13 + $0x84] sm:$0xf]
    %v11994 = vld [vmem:[#allocation13 + $0x88] sm:$0xf]
    %v11995 = vld [vmem:[#allocation13 + $0x8c] sm:$0xf]
    %v11996 = vld [vmem:[#allocation13 + $0x90] sm:$0xf]
    %v11997 = vld [vmem:[#allocation13 + $0x94] sm:$0xf]
    %v11998 = vld [vmem:[#allocation13 + $0x98] sm:$0xf]
    %v11999 = vld [vmem:[#allocation13 + $0x9c] sm:$0xf]
    %v12000 = vld [vmem:[#allocation13 + $0xa0] sm:$0xf]
    %v12001 = vld [vmem:[#allocation13 + $0xa4] sm:$0xf]
    %v12002 = vld [vmem:[#allocation13 + $0xa8] sm:$0xf]
    %v12003 = vld [vmem:[#allocation13 + $0xac] sm:$0xf]
    %v12004 = vld [vmem:[#allocation13 + $0xb0] sm:$0xf]
    %v12005 = vld [vmem:[#allocation13 + $0xb4] sm:$0xf]
    %v12006 = vld [vmem:[#allocation13 + $0xb8] sm:$0xf]
    %v12007 = vld [vmem:[#allocation13 + $0xbc] sm:$0xf]
    %v12008 = vld [vmem:[#allocation13 + $0xc0] sm:$0xf]
    %v12009 = vld [vmem:[#allocation13 + $0xc4] sm:$0xf]
    %v12010 = vld [vmem:[#allocation13 + $0xc8] sm:$0xf]
    %v12011 = vld [vmem:[#allocation13 + $0xcc] sm:$0xf]
    %v12012 = vld [vmem:[#allocation13 + $0xd0] sm:$0xf]
    %v12013 = vld [vmem:[#allocation13 + $0xd4] sm:$0xf]
    %v12014 = vld [vmem:[#allocation13 + $0xd8] sm:$0xf]
    %v12015 = vld [vmem:[#allocation13 + $0xdc] sm:$0xf]
    %v12016 = vld [vmem:[#allocation13 + $0xe0] sm:$0xf]
    %v12017 = vld [vmem:[#allocation13 + $0xe4] sm:$0xf]
    %v12018 = vld [vmem:[#allocation13 + $0xe8] sm:$0xf]
    %v12019 = vld [vmem:[#allocation13 + $0xec] sm:$0xf]
    %v12020 = vld [vmem:[#allocation13 + $0xf0] sm:$0xf]
    %v12021 = vld [vmem:[#allocation13 + $0xf4] sm:$0xf]
    %v12022 = vld [vmem:[#allocation13 + $0xf8] sm:$0xf]
    %v12023 = vld [vmem:[#allocation13 + $0xfc] sm:$0xf]
    %v12024 = vld [vmem:[#allocation14] sm:$0x1]
    %v12026 = vlaneseq
    %v12027 = vshrl.u32 %v12026, 7
    %v12028 = vsub.s32 0, %v12027
    %v12029 = vrot.slane %v12024, %v12028
    %v12095 = vunpack.c.l.b16 %v11960
    %v12096 = vunpack.c.l.b16 %v11961
    %v12097 = vunpack.c.l.b16 %v11962
    %v12098 = vunpack.c.l.b16 %v11963
    %v12099 = vunpack.c.l.b16 %v11964
    %v12100 = vunpack.c.l.b16 %v11965
    %v12101 = vunpack.c.l.b16 %v11966
    %v12102 = vunpack.c.l.b16 %v11967
    %v12103 = vunpack.c.l.b16 %v11968
    %v12104 = vunpack.c.l.b16 %v11969
    %v12105 = vunpack.c.l.b16 %v11970
    %v12106 = vunpack.c.l.b16 %v11971
    %v12107 = vunpack.c.l.b16 %v11972
    %v12108 = vunpack.c.l.b16 %v11973
    %v12109 = vunpack.c.l.b16 %v11974
    %v12110 = vunpack.c.l.b16 %v11975
    %v12111 = vunpack.c.l.b16 %v11976
    %v12112 = vunpack.c.l.b16 %v11977
    %v12113 = vunpack.c.l.b16 %v11978
    %v12114 = vunpack.c.l.b16 %v11979
    %v12115 = vunpack.c.l.b16 %v11980
    %v12116 = vunpack.c.l.b16 %v11981
    %v12117 = vunpack.c.l.b16 %v11982
    %v12118 = vunpack.c.l.b16 %v11983
    %v12119 = vunpack.c.l.b16 %v11984
    %v12120 = vunpack.c.l.b16 %v11985
    %v12121 = vunpack.c.l.b16 %v11986
    %v12122 = vunpack.c.l.b16 %v11987
    %v12123 = vunpack.c.l.b16 %v11988
    %v12124 = vunpack.c.l.b16 %v11989
    %v12125 = vunpack.c.l.b16 %v11990
    %v12126 = vunpack.c.l.b16 %v11991
    %v12127 = vunpack.c.l.b16 %v11992
    %v12128 = vunpack.c.l.b16 %v11993
    %v12129 = vunpack.c.l.b16 %v11994
    %v12130 = vunpack.c.l.b16 %v11995
    %v12131 = vunpack.c.l.b16 %v11996
    %v12132 = vunpack.c.l.b16 %v11997
    %v12133 = vunpack.c.l.b16 %v11998
    %v12134 = vunpack.c.l.b16 %v11999
    %v12135 = vunpack.c.l.b16 %v12000
    %v12136 = vunpack.c.l.b16 %v12001
    %v12137 = vunpack.c.l.b16 %v12002
    %v12138 = vunpack.c.l.b16 %v12003
    %v12139 = vunpack.c.l.b16 %v12004
    %v12140 = vunpack.c.l.b16 %v12005
    %v12141 = vunpack.c.l.b16 %v12006
    %v12142 = vunpack.c.l.b16 %v12007
    %v12143 = vunpack.c.l.b16 %v12008
    %v12144 = vunpack.c.l.b16 %v12009
    %v12145 = vunpack.c.l.b16 %v12010
    %v12146 = vunpack.c.l.b16 %v12011
    %v12147 = vunpack.c.l.b16 %v12012
    %v12148 = vunpack.c.l.b16 %v12013
    %v12149 = vunpack.c.l.b16 %v12014
    %v12150 = vunpack.c.l.b16 %v12015
    %v12151 = vunpack.c.l.b16 %v12016
    %v12152 = vunpack.c.l.b16 %v12017
    %v12153 = vunpack.c.l.b16 %v12018
    %v12154 = vunpack.c.l.b16 %v12019
    %v12155 = vunpack.c.l.b16 %v12020
    %v12156 = vunpack.c.l.b16 %v12021
    %v12157 = vunpack.c.l.b16 %v12022
    %v12158 = vunpack.c.l.b16 %v12023
    %v12159 = vpack.c.b16 %v12096, %v12095
    %v12160 = vpack.c.b16 %v12098, %v12097
    %v12161 = vpack.c.b16 %v12100, %v12099
    %v12162 = vpack.c.b16 %v12102, %v12101
    %v12163 = vpack.c.b16 %v12104, %v12103
    %v12164 = vpack.c.b16 %v12106, %v12105
    %v12165 = vpack.c.b16 %v12108, %v12107
    %v12166 = vpack.c.b16 %v12110, %v12109
    %v12167 = vpack.c.b16 %v12112, %v12111
    %v12168 = vpack.c.b16 %v12114, %v12113
    %v12169 = vpack.c.b16 %v12116, %v12115
    %v12170 = vpack.c.b16 %v12118, %v12117
    %v12171 = vpack.c.b16 %v12120, %v12119
    %v12172 = vpack.c.b16 %v12122, %v12121
    %v12173 = vpack.c.b16 %v12124, %v12123
    %v12174 = vpack.c.b16 %v12126, %v12125
    %v12175 = vpack.c.b16 %v12128, %v12127
    %v12176 = vpack.c.b16 %v12130, %v12129
    %v12177 = vpack.c.b16 %v12132, %v12131
    %v12178 = vpack.c.b16 %v12134, %v12133
    %v12179 = vpack.c.b16 %v12136, %v12135
    %v12180 = vpack.c.b16 %v12138, %v12137
    %v12181 = vpack.c.b16 %v12140, %v12139
    %v12182 = vpack.c.b16 %v12142, %v12141
    %v12183 = vpack.c.b16 %v12144, %v12143
    %v12184 = vpack.c.b16 %v12146, %v12145
    %v12185 = vpack.c.b16 %v12148, %v12147
    %v12186 = vpack.c.b16 %v12150, %v12149
    %v12187 = vpack.c.b16 %v12152, %v12151
    %v12188 = vpack.c.b16 %v12154, %v12153
    %v12189 = vpack.c.b16 %v12156, %v12155
    %v12190 = vpack.c.b16 %v12158, %v12157
    %12223 = vmatprep.subr.bf16.mxu0 0
    %12224 = vmatpush1.bf16.msra.mxu0 %v12166
    %12225 = vmatprep.subr.bf16.mxu0 0
    %12226 = vmatpush1.bf16.msra.mxu0 %v12165
    %12227 = vmatprep.subr.bf16.mxu0 0
    %12228 = vmatpush1.bf16.msra.mxu0 %v12164
    %12229 = vmatprep.subr.bf16.mxu0 0
    %12230 = vmatpush1.bf16.msra.mxu0 %v12163
    %12231 = vmatprep.subr.bf16.mxu0 0
    %12232 = vmatpush1.bf16.msra.mxu0 %v12162
    %12233 = vmatprep.subr.bf16.mxu0 0
    %12234 = vmatpush1.bf16.msra.mxu0 %v12161
    %12235 = vmatprep.subr.bf16.mxu0 0
    %12236 = vmatpush1.bf16.msra.mxu0 %v12160
    %12237 = vmatprep.subr.bf16.mxu0 0
    %12238 = vmatpush1.bf16.msra.mxu0 %v12159
    %12239 = vmatprep.subr.bf16.mxu0 0
    %12240 = vmatpush2.bf16.msra.mxu0 %v12174
    %12241 = vmatprep.subr.bf16.mxu0 0
    %12242 = vmatpush2.bf16.msra.mxu0 %v12173
    %12243 = vmatprep.subr.bf16.mxu0 0
    %12244 = vmatpush2.bf16.msra.mxu0 %v12172
    %12245 = vmatprep.subr.bf16.mxu0 0
    %12246 = vmatpush2.bf16.msra.mxu0 %v12171
    %12247 = vmatprep.subr.bf16.mxu0 0
    %12248 = vmatpush2.bf16.msra.mxu0 %v12170
    %12249 = vmatprep.subr.bf16.mxu0 0
    %12250 = vmatpush2.bf16.msra.mxu0 %v12169
    %12251 = vmatprep.subr.bf16.mxu0 0
    %12252 = vmatpush2.bf16.msra.mxu0 %v12168
    %12253 = vmatprep.subr.bf16.mxu0 0
    %12254 = vmatpush2.bf16.msra.mxu0 %v12167
    %12255 = vmatprep.mubr.bf16.mxu0 %v11957
    %12256 = vmatmul.mubr.bf16.gmra.mxu0 %v11956
    %v12257 = vpop.f32.mrf.mxu0
    %v12258 = vadd.f32 %v12029, %v12257
    %v12259 = vpop.f32.mrf.mxu0
    %v12260 = vpop.f32.mrf.mxu0
    %v12261 = vpop.f32.mrf.mxu0
    %12262 = vdwg.mxu0
    %12263 = vmatprep.subr.bf16.mxu0 0
    %12264 = vmatpush1.bf16.msra.mxu0 %v12182
    %12265 = vmatprep.subr.bf16.mxu0 0
    %12266 = vmatpush1.bf16.msra.mxu0 %v12181
    %12267 = vmatprep.subr.bf16.mxu0 0
    %12268 = vmatpush1.bf16.msra.mxu0 %v12180
    %12269 = vmatprep.subr.bf16.mxu0 0
    %12270 = vmatpush1.bf16.msra.mxu0 %v12179
    %12271 = vmatprep.subr.bf16.mxu0 0
    %12272 = vmatpush1.bf16.msra.mxu0 %v12178
    %12273 = vmatprep.subr.bf16.mxu0 0
    %12274 = vmatpush1.bf16.msra.mxu0 %v12177
    %12275 = vmatprep.subr.bf16.mxu0 0
    %12276 = vmatpush1.bf16.msra.mxu0 %v12176
    %12277 = vmatprep.subr.bf16.mxu0 0
    %12278 = vmatpush1.bf16.msra.mxu0 %v12175
    %12279 = vmatprep.subr.bf16.mxu0 0
    %12280 = vmatpush2.bf16.msra.mxu0 %v12190
    %12281 = vmatprep.subr.bf16.mxu0 0
    %12282 = vmatpush2.bf16.msra.mxu0 %v12189
    %12283 = vmatprep.subr.bf16.mxu0 0
    %12284 = vmatpush2.bf16.msra.mxu0 %v12188
    %12285 = vmatprep.subr.bf16.mxu0 0
    %12286 = vmatpush2.bf16.msra.mxu0 %v12187
    %12287 = vmatprep.subr.bf16.mxu0 0
    %12288 = vmatpush2.bf16.msra.mxu0 %v12186
    %12289 = vmatprep.subr.bf16.mxu0 0
    %12290 = vmatpush2.bf16.msra.mxu0 %v12185
    %12291 = vmatprep.subr.bf16.mxu0 0
    %12292 = vmatpush2.bf16.msra.mxu0 %v12184
    %12293 = vmatprep.subr.bf16.mxu0 0
    %12294 = vmatpush2.bf16.msra.mxu0 %v12183
    %12295 = vmatprep.mubr.bf16.mxu0 %v11959
    %12296 = vmatmul.mubr.bf16.gmra.mxu0 %v11958
    %v12297 = vpop.f32.mrf.mxu0
    %v12298 = vadd.f32 %v12258, %v12297
    %v12299 = vpop.f32.mrf.mxu0
    %v12300 = vpop.f32.mrf.mxu0
    %v12301 = vpop.f32.mrf.mxu0
    %12302 = vdwg.mxu0
    %12303 = vst [vmem:[#allocation16] sm:$0xff] %v12298
    // Predicated region
    $region70: #{fwd.1} parent=1 // pred_check
      _
    $region71: #{fwd.1} parent=1 // pred_check_branch
      %12305 = sbr.rel (0) target = $region73
    $region72: #{fwd.1} parent=1 // pred_region
      %s12307 = ssub.s32 128, 128
      %12308 = vsyncadd [#allocation4], %s12307
      %s12310 = sshll.u32 [#allocation16], 4
      %s12311 = int_to_ptr.vmem [resolvable:$true] %s12310
      %12313 = dma.vmem_to_hbm [thread:$0]  %s12311, 128, %s9, [#allocation4]
    $region73: #{fwd.1} parent=1 // pred_fallthru
      _
    // Predicated region
    $region74: #{fwd.1} parent=1 // pred_check
      _
    $region75: #{fwd.1} parent=1 // pred_check_branch
      %12315 = sbr.rel (0) target = $region77
    $region76: #{fwd.1} parent=1 // pred_region
      %12316 = dma.done [#allocation4], 128
    $region77: #{fwd.1} parent=1 // pred_fallthru
      _
    %12317 = vsyncpa [#allocation3], 1
    %12318 = vsyncpa [#allocation6], 1
    %12319 = vsyncpa [#allocation9], 1
    %12320 = vsyncpa [#allocation12], 1
    %12321 = vsyncpa [#allocation15], 1
    %12322 = vsyncpa [#allocation4], 1

</llo_original>
